<compile_context>
chip_gen: v6e
topology: v6e:2x2x1
jax: 0.10.0
libtpu: 0.0.40
codegen_flags: <defaults>
</compile_context>

<pallas_src>
import jax
import jax.numpy as jnp
from jax.experimental import pallas as pl
from jax.experimental.pallas import tpu as pltpu

BN_EPS = 1e-5
KSIZE = 4
LANE = 128                       # lane-dense output padding unit
_TM_PREFS = (512, 256, 128, 64, 32, 16, 8)
_TK_PREFS = (512, 256, 128)      # prefer >=256 K-tiles (v6e/v7x MXU is 256 deep)


def _round_up(x, m):
    return (x + m - 1) // m * m


def _pick_tile(n, prefs):
    for t in prefs:
        if n % t == 0:
            return t
    return n


# ----------------------------- Pallas kernels ------------------------------

def _matmul_stats_kernel(p_ref, w_ref, o_ref, s_ref):
    """(tm,kt)@(kt,Cpad) accumulated over the K axis directly into o_ref (f32).

    At the last K step also emits per-tile [sum; sum_of_squares] over the tile
    rows for the two-pass BatchNorm.
    """
    k = pl.program_id(2)

    @pl.when(k == 0)
    def _():
        o_ref[...] = jnp.zeros_like(o_ref)

    o_ref[...] += jnp.dot(p_ref[...], w_ref[...],
                          preferred_element_type=jnp.float32)

    @pl.when(k == pl.num_programs(2) - 1)
    def _():
        x = o_ref[...]
        s_ref[...] = jnp.concatenate(
            [jnp.sum(x, axis=0, keepdims=True),
             jnp.sum(x * x, axis=0, keepdims=True)], axis=0)


def _matmul_tanh_kernel(p_ref, w_ref, o_ref):
    """Same accumulation, finalize = tanh (last layer)."""
    k = pl.program_id(2)

    @pl.when(k == 0)
    def _():
        o_ref[...] = jnp.zeros_like(o_ref)

    o_ref[...] += jnp.dot(p_ref[...], w_ref[...],
                          preferred_element_type=jnp.float32)

    @pl.when(k == pl.num_programs(2) - 1)
    def _():
        o_ref[...] = jnp.tanh(o_ref[...])


def _bn_relu_kernel(x_ref, scale_ref, shift_ref, o_ref):
    """Elementwise BN-apply + ReLU per M tile; emits bf16 activations."""
    y = x_ref[...] * scale_ref[...] + shift_ref[...]
    o_ref[...] = jnp.maximum(y, 0.0).astype(o_ref.dtype)


# ------------------------------ pallas wrappers ------------------------------

def _fused_matmul(patches, wmats, *, mode):
    """Batched (P, M, K) @ (P, K, Cpad) matmul, M-tiled + K-accumulated.

    mode == "bn":   returns (raw f32 (P,M,Cpad), stats f32 (P,Mt,2,Cpad))
    mode == "tanh": returns tanh(raw) f32 (P,M,Cpad)
    """
    P, M, K = patches.shape
    cpad = wmats.shape[2]
    tm = _pick_tile(M, _TM_PREFS)
    kt = _pick_tile(K, _TK_PREFS)
    mt, ktn = M // tm, K // kt

    in_specs = [
        pl.BlockSpec((None, tm, kt), lambda p, m, k: (p, m, k)),
        pl.BlockSpec((None, kt, cpad), lambda p, m, k: (p, k, 0)),
    ]
    raw_spec = pl.BlockSpec((None, tm, cpad), lambda p, m, k: (p, m, 0))

    # Explicit VMEM budget: double-buffered bf16 inputs + resident f32 out tile.
    vmem = 2 * (tm * kt * 2 + kt * cpad * 2) + 2 * (tm * cpad * 4) + 2 * (2 * cpad * 4)
    vmem_limit = min(max(4 * vmem, 32 << 20), 64 << 20)   # fits v7x's 64 MiB VMEM

    if mode == "bn":
        kernel = _matmul_stats_kernel
        out_shape = (jax.ShapeDtypeStruct((P, M, cpad), jnp.float32),
                     jax.ShapeDtypeStruct((P, mt, 2, cpad), jnp.float32))
        out_specs = (raw_spec,
                     pl.BlockSpec((None, None, 2, cpad),
                                  lambda p, m, k: (p, m, 0, 0)))
    elif mode == "tanh":
        kernel = _matmul_tanh_kernel
        out_shape = jax.ShapeDtypeStruct((P, M, cpad), jnp.float32)
        out_specs = raw_spec
    else:
        raise ValueError(mode)

    return pl.pallas_call(
        kernel,
        out_shape=out_shape,
        grid_spec=pltpu.PrefetchScalarGridSpec(
            num_scalar_prefetch=0,
            grid=(P, mt, ktn),
            in_specs=in_specs,
            out_specs=out_specs,
        ),
        compiler_params=pltpu.CompilerParams(
            dimension_semantics=("parallel", "parallel", "arbitrary"),
            vmem_limit_bytes=vmem_limit),
    )(patches, wmats)


def _bn_relu_apply(x2d, scale, shift):
    """y = max(x*scale + shift, 0), tiled over M; x f32 -> y bf16."""
    M, cpad = x2d.shape
    tm = _pick_tile(M, _TM_PREFS)
    vmem = 2 * (tm * cpad * 4) + 2 * (tm * cpad * 2) + 4 * cpad * 4
    vmem_limit = min(max(4 * vmem, 32 << 20), 64 << 20)
    return pl.pallas_call(
        _bn_relu_kernel,
        out_shape=jax.ShapeDtypeStruct((M, cpad), jnp.bfloat16),
        grid_spec=pltpu.PrefetchScalarGridSpec(
            num_scalar_prefetch=0,
            grid=(M // tm,),
            in_specs=[pl.BlockSpec((tm, cpad), lambda m: (m, 0)),
                      pl.BlockSpec((1, cpad), lambda m: (0, 0)),
                      pl.BlockSpec((1, cpad), lambda m: (0, 0))],
            out_specs=pl.BlockSpec((tm, cpad), lambda m: (m, 0)),
        ),
        compiler_params=pltpu.CompilerParams(
            dimension_semantics=("parallel",),
            vmem_limit_bytes=vmem_limit),
    )(x2d, scale.reshape(1, cpad).astype(jnp.float32),
      shift.reshape(1, cpad).astype(jnp.float32))


# ------------------------------- JAX glue -----------------------------------

def _bn_relu_finalize(raw, stats, gamma, beta, cout):
    """Combine per-tile stats, build per-channel scale/shift, apply BN+ReLU."""
    P, M, cpad = raw.shape
    n = P * M
    s = jnp.sum(stats[:, :, 0, :], axis=(0, 1))
    ss = jnp.sum(stats[:, :, 1, :], axis=(0, 1))
    mean = s / n
    var = jnp.maximum(ss / n - mean * mean, 0.0)        # one-pass var, clamped
    g = jnp.pad(gamma, (0, cpad - cout))
    b = jnp.pad(beta, (0, cpad - cout))
    scale = g * jax.lax.rsqrt(var + BN_EPS)
    shift = b - mean * scale
    act = _bn_relu_apply(raw.reshape(n, cpad), scale, shift)
    return act.reshape(P, M, cpad)                      # bf16


def _subpixel_patches_weights(x, w, cpad):
    """ConvTranspose2d(k=4, s=2, p=1) as 4 sub-pixel 2x2 convs (NHWC).

    x: (N,H,W,Cin) bf16 activation; w: (Cin,Cout,4,4) f32.
    Returns patches (4, N*H*W, Cin*4) bf16 and weights (4, Cin*4, cpad) bf16.
    Parity p = a*2 + b produces output pixels (2r+a, 2c+b).
    """
    N, H, W_, Cin = x.shape
    Cout = w.shape[1]
    xp = jnp.pad(x, ((0, 0), (1, 1), (1, 1), (0, 0)))
    patches, wmats = [], []
    for a in (0, 1):
        for b in (0, 1):
            wins = [xp[:, a + d:a + d + H, b + e:b + e + W_, :]
                    for d in (0, 1) for e in (0, 1)]
            p = jnp.stack(wins, axis=-1)                 # (N,H,W,Cin,4) (d,e) order
            patches.append(p.reshape(N * H * W_, Cin * 4))
            # effective 2x2 kernel taps: kh = (3-a)-2d, kw = (3-b)-2e
            wsub = w[:, :, (3 - a, 1 - a), :][:, :, :, (3 - b, 1 - b)]
            wm = wsub.transpose(0, 2, 3, 1).reshape(Cin * 4, Cout)
            wmats.append(jnp.pad(wm, ((0, 0), (0, cpad - Cout))))
    return (jnp.stack(patches).astype(jnp.bfloat16),
            jnp.stack(wmats).astype(jnp.bfloat16))


def netg_forward(z, params):
    """z: (N, z_size, 1, 1) NCHW f32 -> (N, out_size, 64, 64) f32."""
    N = z.shape[0]
    x = jnp.transpose(z, (0, 2, 3, 1))                   # NHWC (N,1,1,z)

    # ----- layer 0: ConvTranspose2d(z, ngf*8, 4, 1, 0) + BN + ReLU (tiny layer)
    w0 = params["w0"]
    Cin0, Cout0 = w0.shape[0], w0.shape[1]
    cpad = _round_up(Cout0, LANE)
    xp = jnp.pad(x, ((0, 0), (3, 3), (3, 3), (0, 0)))
    wins = [xp[:, i:i + 4, j:j + 4, :] for i in range(4) for j in range(4)]
    patches = jnp.stack(wins, axis=-1).reshape(N * 16, Cin0 * 16).astype(jnp.bfloat16)
    wmat = jnp.flip(w0, (2, 3)).transpose(0, 2, 3, 1).reshape(Cin0 * 16, Cout0)
    wmat = jnp.pad(wmat, ((0, 0), (0, cpad - Cout0))).astype(jnp.bfloat16)
    raw, stats = _fused_matmul(patches[None], wmat[None], mode="bn")
    act = _bn_relu_finalize(raw, stats, params["gamma0"], params["beta0"], Cout0)
    x = act[0].reshape(N, 4, 4, cpad)[..., :Cout0]       # (N,4,4,Cout0) bf16

    # ----- layers 1..4: ConvTranspose2d(k=4, s=2, p=1) via sub-pixel decomposition
    for i in range(1, 5):
        w = params[f"w{i}"]
        Cout = w.shape[1]
        cpad = _round_up(Cout, LANE)
        Nb, H, W_, _ = x.shape
        patches, wmats = _subpixel_patches_weights(x, w, cpad)
        if i < 4:
            raw, stats = _fused_matmul(patches, wmats, mode="bn")
            y = _bn_relu_finalize(raw, stats,
                                  params[f"gamma{i}"], params[f"beta{i}"], Cout)
        else:
            y = _fused_matmul(patches, wmats, mode="tanh")   # f32
        y = y[..., :Cout]                                # drop lane padding
        # interleave parities: out[n, 2r+a, 2c+b, :] = y[a*2+b, n*H*W + r*W + c, :]
        y = y.reshape(2, 2, Nb, H, W_, Cout)
        y = y.transpose(2, 3, 0, 4, 1, 5).reshape(Nb, 2 * H, 2 * W_, Cout)
        x = y
    return jnp.transpose(x, (0, 3, 1, 2))                # NCHW


def init_params(key, z_size, ngf, out_size):
    chans = [z_size, ngf * 8, ngf * 4, ngf * 2, ngf, out_size]
    params = {}
    for i in range(5):
        key, kw, kg = jax.random.split(key, 3)
        params[f"w{i}"] = 0.02 * jax.random.normal(
            kw, (chans[i], chans[i + 1], KSIZE, KSIZE), jnp.float32)
        if i < 4:
            params[f"gamma{i}"] = 1.0 + 0.02 * jax.random.normal(
                kg, (chans[i + 1],), jnp.float32)
            params[f"beta{i}"] = jnp.zeros((chans[i + 1],), jnp.float32)
    return params


# ------------------------- pure-JAX reference check --------------------------

def ref_forward(z, params):
    cfgs = [(1, 0), (2, 1), (2, 1), (2, 1), (2, 1)]
    x = z
    for i, (s, p) in enumerate(cfgs):
        w = params[f"w{i}"]                                      # (Cin, Cout, k, k)
        wc = jnp.flip(w, axis=(2, 3)).transpose(1, 0, 2, 3)      # OIHW for regular conv
        pad = KSIZE - 1 - p
        x = jax.lax.conv_general_dilated(
            x, wc, window_strides=(1, 1),
            padding=[(pad, pad), (pad, pad)], lhs_dilation=(s, s),
            dimension_numbers=("NCHW", "OIHW", "NCHW"),
            precision=jax.lax.Precision.HIGHEST)
        if i < 4:
            mean = x.mean(axis=(0, 2, 3), keepdims=True)
            var = ((x - mean) ** 2).mean(axis=(0, 2, 3), keepdims=True)
            g = params[f"gamma{i}"].reshape(1, -1, 1, 1)
            b = params[f"beta{i}"].reshape(1, -1, 1, 1)
            x = jnp.maximum((x - mean) * jax.lax.rsqrt(var + BN_EPS) * g + b, 0.0)
        else:
            x = jnp.tanh(x)
    return x


# ----------------------------------- main ------------------------------------

if __name__ == "__main__":
    # Small-but-consistent config: z_size=16, ngf=8, out_size=3, batch=2.
    Z_SIZE, NGF, OUT = 16, 8, 3
    key = jax.random.PRNGKey(0)
    key, kz = jax.random.split(key)
    z = jax.random.normal(kz, (2, Z_SIZE, 1, 1), jnp.float32)
    params = init_params(key, Z_SIZE, NGF, OUT)

    out = jax.jit(netg_forward)(z, params)
    out = jax.block_until_ready(out)
    assert out.shape == (2, OUT, 64, 64), out.shape

    ref = ref_forward(z, params)
    max_err = float(jnp.max(jnp.abs(out - ref)))
    # bf16 MXU inputs + bf16 inter-layer activations -> compare at bf16 tolerance.
    assert max_err < 5e-2, f"mismatch vs reference: {max_err}"

    print("KERNEL_OK")
</pallas_src>

<mosaic_0001>
module attributes {stable_mosaic.version = 11 : i64} {
  func.func @_matmul_stats_kernel(%arg0: i32, %arg1: i32, %arg2: i32, %arg3: memref<1x32x256xbf16, #tpu.memory_space<vmem>>, %arg4: memref<1x256x128xbf16, #tpu.memory_space<vmem>>, %arg5: memref<1x32x128xf32, #tpu.memory_space<vmem>>, %arg6: memref<1x1x2x128xf32, #tpu.memory_space<vmem>>) attributes {dimension_semantics = [#tpu.dimension_semantics<parallel>, #tpu.dimension_semantics<parallel>, #tpu.dimension_semantics<arbitrary>], iteration_bounds = array<i64: 1, 1, 1>, scalar_prefetch = 0 : i64, scratch_operands = 0 : i64, tpu.core_type = #tpu.core_type<tc>, window_params = [{transform_indices = @transform_0, window_bounds = array<i64: 1, 32, 256>}, {transform_indices = @transform_1, window_bounds = array<i64: 1, 256, 128>}, {transform_indices = @transform_2, window_bounds = array<i64: 1, 32, 128>}, {transform_indices = @transform_3, window_bounds = array<i64: 1, 1, 2, 128>}]} {
    %c0_i32 = arith.constant 0 : i32
    %0 = arith.cmpi eq, %arg2, %c0_i32 : i32
    %1 = arith.extui %0 : i1 to i32
    %c0_i32_0 = arith.constant 0 : i32
    %2 = arith.cmpi ne, %1, %c0_i32_0 : i32
    scf.if %2 {
      %cst_14 = arith.constant 0.000000e+00 : f32
      %17 = vector.broadcast %cst_14 : f32 to vector<32x128xf32>
      %c0_15 = arith.constant 0 : index
      %c0_16 = arith.constant 0 : index
      %c0_17 = arith.constant 0 : index
      %18 = vector.load %arg5[%c0_15, %c0_16, %c0_17] : memref<1x32x128xf32, #tpu.memory_space<vmem>>, vector<1x32x128xf32>
      %19 = vector.shape_cast %18 : vector<1x32x128xf32> to vector<32x128xf32>
      %20 = vector.shape_cast %17 : vector<32x128xf32> to vector<1x32x128xf32>
      tpu.vector_store %arg5[%c0_15, %c0_16, %c0_17], %20 {strides = array<i32>} : memref<1x32x128xf32, #tpu.memory_space<vmem>>, vector<1x32x128xf32>,
    } else {
    }
    %c0 = arith.constant 0 : index
    %c0_1 = arith.constant 0 : index
    %c0_2 = arith.constant 0 : index
    %3 = vector.load %arg5[%c0, %c0_1, %c0_2] : memref<1x32x128xf32, #tpu.memory_space<vmem>>, vector<1x32x128xf32>
    %4 = vector.shape_cast %3 : vector<1x32x128xf32> to vector<32x128xf32>
    %c0_3 = arith.constant 0 : index
    %c0_4 = arith.constant 0 : index
    %c0_5 = arith.constant 0 : index
    %5 = vector.load %arg3[%c0_3, %c0_4, %c0_5] : memref<1x32x256xbf16, #tpu.memory_space<vmem>>, vector<1x32x256xbf16>
    %6 = vector.shape_cast %5 : vector<1x32x256xbf16> to vector<32x256xbf16>
    %c0_6 = arith.constant 0 : index
    %c0_7 = arith.constant 0 : index
    %c0_8 = arith.constant 0 : index
    %7 = vector.load %arg4[%c0_6, %c0_7, %c0_8] : memref<1x256x128xbf16, #tpu.memory_space<vmem>>, vector<1x256x128xbf16>
    %8 = vector.shape_cast %7 : vector<1x256x128xbf16> to vector<256x128xbf16>
    %cst = arith.constant dense<0.000000e+00> : vector<32x128xf32>
    %9 = tpu.matmul %6, %8, %cst {dimension_numbers = #tpu.dot_dimension_numbers<[1], [0], [0], [1], [0, 0, 1, 1], [], []>} : vector<32x256xbf16>, vector<256x128xbf16>, vector<32x128xf32> -> vector<32x128xf32>
    %10 = arith.addf %4, %9 : vector<32x128xf32>
    %c0_9 = arith.constant 0 : index
    %c0_10 = arith.constant 0 : index
    %c0_11 = arith.constant 0 : index
    %11 = vector.load %arg5[%c0_9, %c0_10, %c0_11] : memref<1x32x128xf32, #tpu.memory_space<vmem>>, vector<1x32x128xf32>
    %12 = vector.shape_cast %11 : vector<1x32x128xf32> to vector<32x128xf32>
    %13 = vector.shape_cast %10 : vector<32x128xf32> to vector<1x32x128xf32>
    tpu.vector_store %arg5[%c0_9, %c0_10, %c0_11], %13 {strides = array<i32>} : memref<1x32x128xf32, #tpu.memory_space<vmem>>, vector<1x32x128xf32>,
    %c0_i32_12 = arith.constant 0 : i32
    %14 = arith.cmpi eq, %arg2, %c0_i32_12 : i32
    %15 = arith.extui %14 : i1 to i32
    %c0_i32_13 = arith.constant 0 : i32
    %16 = arith.cmpi ne, %15, %c0_i32_13 : i32
    scf.if %16 {
      %c0_14 = arith.constant 0 : index
      %c0_15 = arith.constant 0 : index
      %c0_16 = arith.constant 0 : index
      %17 = vector.load %arg5[%c0_14, %c0_15, %c0_16] : memref<1x32x128xf32, #tpu.memory_space<vmem>>, vector<1x32x128xf32>
      %18 = vector.shape_cast %17 : vector<1x32x128xf32> to vector<32x128xf32>
      %cst_17 = arith.constant dense<0.000000e+00> : vector<128xf32>
      %19 = vector.multi_reduction <add>, %18, %cst_17 [0] : vector<32x128xf32> to vector<128xf32>
      %20 = vector.shape_cast %19 : vector<128xf32> to vector<1x128xf32>
      %21 = arith.mulf %18, %18 : vector<32x128xf32>
      %cst_18 = arith.constant dense<0.000000e+00> : vector<128xf32>
      %22 = vector.multi_reduction <add>, %21, %cst_18 [0] : vector<32x128xf32> to vector<128xf32>
      %23 = vector.shape_cast %22 : vector<128xf32> to vector<1x128xf32>
      %24 = tpu.concatenate %20, %23 in 0 : vector<1x128xf32>, vector<1x128xf32> -> vector<2x128xf32>
      %c0_19 = arith.constant 0 : index
      %c0_20 = arith.constant 0 : index
      %c0_21 = arith.constant 0 : index
      %c0_22 = arith.constant 0 : index
      %25 = vector.load %arg6[%c0_19, %c0_20, %c0_21, %c0_22] : memref<1x1x2x128xf32, #tpu.memory_space<vmem>>, vector<1x1x2x128xf32>
      %26 = vector.shape_cast %25 : vector<1x1x2x128xf32> to vector<2x128xf32>
      %27 = vector.shape_cast %24 : vector<2x128xf32> to vector<1x1x2x128xf32>
      tpu.vector_store %arg6[%c0_19, %c0_20, %c0_21, %c0_22], %27 {strides = array<i32>} : memref<1x1x2x128xf32, #tpu.memory_space<vmem>>, vector<1x1x2x128xf32>,
    } else {
    }
    return
  }
  func.func @transform_0(%arg0: i32, %arg1: i32, %arg2: i32) -> (i32, i32, i32) {
    %c0_i32 = arith.constant 0 : i32
    return %arg0, %arg1, %arg2 : i32, i32, i32
  }
  func.func @transform_1(%arg0: i32, %arg1: i32, %arg2: i32) -> (i32, i32, i32) {
    %c0_i32 = arith.constant 0 : i32
    %c0_i32_0 = arith.constant 0 : i32
    return %arg0, %arg2, %c0_i32 : i32, i32, i32
  }
  func.func @transform_2(%arg0: i32, %arg1: i32, %arg2: i32) -> (i32, i32, i32) {
    %c0_i32 = arith.constant 0 : i32
    %c0_i32_0 = arith.constant 0 : i32
    return %arg0, %arg1, %c0_i32 : i32, i32, i32
  }
  func.func @transform_3(%arg0: i32, %arg1: i32, %arg2: i32) -> (i32, i32, i32, i32) {
    %c0_i32 = arith.constant 0 : i32
    %c0_i32_0 = arith.constant 0 : i32
    %c0_i32_1 = arith.constant 0 : i32
    return %arg0, %arg1, %c0_i32, %c0_i32_0 : i32, i32, i32, i32
  }
}

module attributes {stable_mosaic.version = 11 : i64} {
  func.func @_bn_relu_kernel(%arg0: i32, %arg1: memref<32x128xf32, #tpu.memory_space<vmem>>, %arg2: memref<1x128xf32, #tpu.memory_space<vmem>>, %arg3: memref<1x128xf32, #tpu.memory_space<vmem>>, %arg4: memref<32x128xbf16, #tpu.memory_space<vmem>>) attributes {dimension_semantics = [#tpu.dimension_semantics<parallel>], iteration_bounds = array<i64: 1>, scalar_prefetch = 0 : i64, scratch_operands = 0 : i64, tpu.core_type = #tpu.core_type<tc>, window_params = [{transform_indices = @transform_0, window_bounds = array<i64: 32, 128>}, {pipeline_mode = #tpu.pipeline_mode<synchronous>, transform_indices = @transform_1, window_bounds = array<i64: 1, 128>}, {pipeline_mode = #tpu.pipeline_mode<synchronous>, transform_indices = @transform_2, window_bounds = array<i64: 1, 128>}, {transform_indices = @transform_3, window_bounds = array<i64: 32, 128>}]} {
    %c0 = arith.constant 0 : index
    %c0_0 = arith.constant 0 : index
    %0 = vector.load %arg1[%c0, %c0_0] : memref<32x128xf32, #tpu.memory_space<vmem>>, vector<32x128xf32>
    %c0_1 = arith.constant 0 : index
    %c0_2 = arith.constant 0 : index
    %1 = vector.load %arg2[%c0_1, %c0_2] : memref<1x128xf32, #tpu.memory_space<vmem>>, vector<1x128xf32>
    %2 = vector.broadcast %1 : vector<1x128xf32> to vector<32x128xf32>
    %3 = arith.mulf %0, %2 : vector<32x128xf32>
    %c0_3 = arith.constant 0 : index
    %c0_4 = arith.constant 0 : index
    %4 = vector.load %arg3[%c0_3, %c0_4] : memref<1x128xf32, #tpu.memory_space<vmem>>, vector<1x128xf32>
    %5 = vector.broadcast %4 : vector<1x128xf32> to vector<32x128xf32>
    %6 = arith.addf %3, %5 : vector<32x128xf32>
    %cst = arith.constant 0.000000e+00 : f32
    %7 = vector.broadcast %cst : f32 to vector<32x128xf32>
    %8 = arith.maximumf %6, %7 : vector<32x128xf32>
    %9 = arith.truncf %8 : vector<32x128xf32> to vector<32x128xbf16>
    %c0_5 = arith.constant 0 : index
    %c0_6 = arith.constant 0 : index
    %10 = vector.load %arg4[%c0_5, %c0_6] : memref<32x128xbf16, #tpu.memory_space<vmem>>, vector<32x128xbf16>
    tpu.vector_store %arg4[%c0_5, %c0_6], %9 {strides = array<i32>} : memref<32x128xbf16, #tpu.memory_space<vmem>>, vector<32x128xbf16>,
    return
  }
  func.func @transform_0(%arg0: i32) -> (i32, i32) {
    %c0_i32 = arith.constant 0 : i32
    %c0_i32_0 = arith.constant 0 : i32
    return %arg0, %c0_i32 : i32, i32
  }
  func.func @transform_1(%arg0: i32) -> (i32, i32) {
    %c0_i32 = arith.constant 0 : i32
    %c0_i32_0 = arith.constant 0 : i32
    %c0_i32_1 = arith.constant 0 : i32
    return %c0_i32, %c0_i32_0 : i32, i32
  }
  func.func @transform_2(%arg0: i32) -> (i32, i32) {
    %c0_i32 = arith.constant 0 : i32
    %c0_i32_0 = arith.constant 0 : i32
    %c0_i32_1 = arith.constant 0 : i32
    return %c0_i32, %c0_i32_0 : i32, i32
  }
  func.func @transform_3(%arg0: i32) -> (i32, i32) {
    %c0_i32 = arith.constant 0 : i32
    %c0_i32_0 = arith.constant 0 : i32
    return %arg0, %c0_i32 : i32, i32
  }
}

module attributes {stable_mosaic.version = 11 : i64} {
  func.func @_matmul_stats_kernel(%arg0: i32, %arg1: i32, %arg2: i32, %arg3: memref<1x32x256xbf16, #tpu.memory_space<vmem>>, %arg4: memref<1x256x128xbf16, #tpu.memory_space<vmem>>, %arg5: memref<1x32x128xf32, #tpu.memory_space<vmem>>, %arg6: memref<1x1x2x128xf32, #tpu.memory_space<vmem>>) attributes {dimension_semantics = [#tpu.dimension_semantics<parallel>, #tpu.dimension_semantics<parallel>, #tpu.dimension_semantics<arbitrary>], iteration_bounds = array<i64: 4, 1, 1>, scalar_prefetch = 0 : i64, scratch_operands = 0 : i64, tpu.core_type = #tpu.core_type<tc>, window_params = [{transform_indices = @transform_0, window_bounds = array<i64: 1, 32, 256>}, {transform_indices = @transform_1, window_bounds = array<i64: 1, 256, 128>}, {transform_indices = @transform_2, window_bounds = array<i64: 1, 32, 128>}, {transform_indices = @transform_3, window_bounds = array<i64: 1, 1, 2, 128>}]} {
    %c0_i32 = arith.constant 0 : i32
    %0 = arith.cmpi eq, %arg2, %c0_i32 : i32
    %1 = arith.extui %0 : i1 to i32
    %c0_i32_0 = arith.constant 0 : i32
    %2 = arith.cmpi ne, %1, %c0_i32_0 : i32
    scf.if %2 {
      %cst_14 = arith.constant 0.000000e+00 : f32
      %17 = vector.broadcast %cst_14 : f32 to vector<32x128xf32>
      %c0_15 = arith.constant 0 : index
      %c0_16 = arith.constant 0 : index
      %c0_17 = arith.constant 0 : index
      %18 = vector.load %arg5[%c0_15, %c0_16, %c0_17] : memref<1x32x128xf32, #tpu.memory_space<vmem>>, vector<1x32x128xf32>
      %19 = vector.shape_cast %18 : vector<1x32x128xf32> to vector<32x128xf32>
      %20 = vector.shape_cast %17 : vector<32x128xf32> to vector<1x32x128xf32>
      tpu.vector_store %arg5[%c0_15, %c0_16, %c0_17], %20 {strides = array<i32>} : memref<1x32x128xf32, #tpu.memory_space<vmem>>, vector<1x32x128xf32>,
    } else {
    }
    %c0 = arith.constant 0 : index
    %c0_1 = arith.constant 0 : index
    %c0_2 = arith.constant 0 : index
    %3 = vector.load %arg5[%c0, %c0_1, %c0_2] : memref<1x32x128xf32, #tpu.memory_space<vmem>>, vector<1x32x128xf32>
    %4 = vector.shape_cast %3 : vector<1x32x128xf32> to vector<32x128xf32>
    %c0_3 = arith.constant 0 : index
    %c0_4 = arith.constant 0 : index
    %c0_5 = arith.constant 0 : index
    %5 = vector.load %arg3[%c0_3, %c0_4, %c0_5] : memref<1x32x256xbf16, #tpu.memory_space<vmem>>, vector<1x32x256xbf16>
    %6 = vector.shape_cast %5 : vector<1x32x256xbf16> to vector<32x256xbf16>
    %c0_6 = arith.constant 0 : index
    %c0_7 = arith.constant 0 : index
    %c0_8 = arith.constant 0 : index
    %7 = vector.load %arg4[%c0_6, %c0_7, %c0_8] : memref<1x256x128xbf16, #tpu.memory_space<vmem>>, vector<1x256x128xbf16>
    %8 = vector.shape_cast %7 : vector<1x256x128xbf16> to vector<256x128xbf16>
    %cst = arith.constant dense<0.000000e+00> : vector<32x128xf32>
    %9 = tpu.matmul %6, %8, %cst {dimension_numbers = #tpu.dot_dimension_numbers<[1], [0], [0], [1], [0, 0, 1, 1], [], []>} : vector<32x256xbf16>, vector<256x128xbf16>, vector<32x128xf32> -> vector<32x128xf32>
    %10 = arith.addf %4, %9 : vector<32x128xf32>
    %c0_9 = arith.constant 0 : index
    %c0_10 = arith.constant 0 : index
    %c0_11 = arith.constant 0 : index
    %11 = vector.load %arg5[%c0_9, %c0_10, %c0_11] : memref<1x32x128xf32, #tpu.memory_space<vmem>>, vector<1x32x128xf32>
    %12 = vector.shape_cast %11 : vector<1x32x128xf32> to vector<32x128xf32>
    %13 = vector.shape_cast %10 : vector<32x128xf32> to vector<1x32x128xf32>
    tpu.vector_store %arg5[%c0_9, %c0_10, %c0_11], %13 {strides = array<i32>} : memref<1x32x128xf32, #tpu.memory_space<vmem>>, vector<1x32x128xf32>,
    %c0_i32_12 = arith.constant 0 : i32
    %14 = arith.cmpi eq, %arg2, %c0_i32_12 : i32
    %15 = arith.extui %14 : i1 to i32
    %c0_i32_13 = arith.constant 0 : i32
    %16 = arith.cmpi ne, %15, %c0_i32_13 : i32
    scf.if %16 {
      %c0_14 = arith.constant 0 : index
      %c0_15 = arith.constant 0 : index
      %c0_16 = arith.constant 0 : index
      %17 = vector.load %arg5[%c0_14, %c0_15, %c0_16] : memref<1x32x128xf32, #tpu.memory_space<vmem>>, vector<1x32x128xf32>
      %18 = vector.shape_cast %17 : vector<1x32x128xf32> to vector<32x128xf32>
      %cst_17 = arith.constant dense<0.000000e+00> : vector<128xf32>
      %19 = vector.multi_reduction <add>, %18, %cst_17 [0] : vector<32x128xf32> to vector<128xf32>
      %20 = vector.shape_cast %19 : vector<128xf32> to vector<1x128xf32>
      %21 = arith.mulf %18, %18 : vector<32x128xf32>
      %cst_18 = arith.constant dense<0.000000e+00> : vector<128xf32>
      %22 = vector.multi_reduction <add>, %21, %cst_18 [0] : vector<32x128xf32> to vector<128xf32>
      %23 = vector.shape_cast %22 : vector<128xf32> to vector<1x128xf32>
      %24 = tpu.concatenate %20, %23 in 0 : vector<1x128xf32>, vector<1x128xf32> -> vector<2x128xf32>
      %c0_19 = arith.constant 0 : index
      %c0_20 = arith.constant 0 : index
      %c0_21 = arith.constant 0 : index
      %c0_22 = arith.constant 0 : index
      %25 = vector.load %arg6[%c0_19, %c0_20, %c0_21, %c0_22] : memref<1x1x2x128xf32, #tpu.memory_space<vmem>>, vector<1x1x2x128xf32>
      %26 = vector.shape_cast %25 : vector<1x1x2x128xf32> to vector<2x128xf32>
      %27 = vector.shape_cast %24 : vector<2x128xf32> to vector<1x1x2x128xf32>
      tpu.vector_store %arg6[%c0_19, %c0_20, %c0_21, %c0_22], %27 {strides = array<i32>} : memref<1x1x2x128xf32, #tpu.memory_space<vmem>>, vector<1x1x2x128xf32>,
    } else {
    }
    return
  }
  func.func @transform_0(%arg0: i32, %arg1: i32, %arg2: i32) -> (i32, i32, i32) {
    %c0_i32 = arith.constant 0 : i32
    return %arg0, %arg1, %arg2 : i32, i32, i32
  }
  func.func @transform_1(%arg0: i32, %arg1: i32, %arg2: i32) -> (i32, i32, i32) {
    %c0_i32 = arith.constant 0 : i32
    %c0_i32_0 = arith.constant 0 : i32
    return %arg0, %arg2, %c0_i32 : i32, i32, i32
  }
  func.func @transform_2(%arg0: i32, %arg1: i32, %arg2: i32) -> (i32, i32, i32) {
    %c0_i32 = arith.constant 0 : i32
    %c0_i32_0 = arith.constant 0 : i32
    return %arg0, %arg1, %c0_i32 : i32, i32, i32
  }
  func.func @transform_3(%arg0: i32, %arg1: i32, %arg2: i32) -> (i32, i32, i32, i32) {
    %c0_i32 = arith.constant 0 : i32
    %c0_i32_0 = arith.constant 0 : i32
    %c0_i32_1 = arith.constant 0 : i32
    return %arg0, %arg1, %c0_i32, %c0_i32_0 : i32, i32, i32, i32
  }
}

module attributes {stable_mosaic.version = 11 : i64} {
  func.func @_bn_relu_kernel(%arg0: i32, %arg1: memref<128x128xf32, #tpu.memory_space<vmem>>, %arg2: memref<1x128xf32, #tpu.memory_space<vmem>>, %arg3: memref<1x128xf32, #tpu.memory_space<vmem>>, %arg4: memref<128x128xbf16, #tpu.memory_space<vmem>>) attributes {dimension_semantics = [#tpu.dimension_semantics<parallel>], iteration_bounds = array<i64: 1>, scalar_prefetch = 0 : i64, scratch_operands = 0 : i64, tpu.core_type = #tpu.core_type<tc>, window_params = [{transform_indices = @transform_0, window_bounds = array<i64: 128, 128>}, {pipeline_mode = #tpu.pipeline_mode<synchronous>, transform_indices = @transform_1, window_bounds = array<i64: 1, 128>}, {pipeline_mode = #tpu.pipeline_mode<synchronous>, transform_indices = @transform_2, window_bounds = array<i64: 1, 128>}, {transform_indices = @transform_3, window_bounds = array<i64: 128, 128>}]} {
    %c0 = arith.constant 0 : index
    %c0_0 = arith.constant 0 : index
    %0 = vector.load %arg1[%c0, %c0_0] : memref<128x128xf32, #tpu.memory_space<vmem>>, vector<128x128xf32>
    %c0_1 = arith.constant 0 : index
    %c0_2 = arith.constant 0 : index
    %1 = vector.load %arg2[%c0_1, %c0_2] : memref<1x128xf32, #tpu.memory_space<vmem>>, vector<1x128xf32>
    %2 = vector.broadcast %1 : vector<1x128xf32> to vector<128x128xf32>
    %3 = arith.mulf %0, %2 : vector<128x128xf32>
    %c0_3 = arith.constant 0 : index
    %c0_4 = arith.constant 0 : index
    %4 = vector.load %arg3[%c0_3, %c0_4] : memref<1x128xf32, #tpu.memory_space<vmem>>, vector<1x128xf32>
    %5 = vector.broadcast %4 : vector<1x128xf32> to vector<128x128xf32>
    %6 = arith.addf %3, %5 : vector<128x128xf32>
    %cst = arith.constant 0.000000e+00 : f32
    %7 = vector.broadcast %cst : f32 to vector<128x128xf32>
    %8 = arith.maximumf %6, %7 : vector<128x128xf32>
    %9 = arith.truncf %8 : vector<128x128xf32> to vector<128x128xbf16>
    %c0_5 = arith.constant 0 : index
    %c0_6 = arith.constant 0 : index
    %10 = vector.load %arg4[%c0_5, %c0_6] : memref<128x128xbf16, #tpu.memory_space<vmem>>, vector<128x128xbf16>
    tpu.vector_store %arg4[%c0_5, %c0_6], %9 {strides = array<i32>} : memref<128x128xbf16, #tpu.memory_space<vmem>>, vector<128x128xbf16>,
    return
  }
  func.func @transform_0(%arg0: i32) -> (i32, i32) {
    %c0_i32 = arith.constant 0 : i32
    %c0_i32_0 = arith.constant 0 : i32
    return %arg0, %c0_i32 : i32, i32
  }
  func.func @transform_1(%arg0: i32) -> (i32, i32) {
    %c0_i32 = arith.constant 0 : i32
    %c0_i32_0 = arith.constant 0 : i32
    %c0_i32_1 = arith.constant 0 : i32
    return %c0_i32, %c0_i32_0 : i32, i32
  }
  func.func @transform_2(%arg0: i32) -> (i32, i32) {
    %c0_i32 = arith.constant 0 : i32
    %c0_i32_0 = arith.constant 0 : i32
    %c0_i32_1 = arith.constant 0 : i32
    return %c0_i32, %c0_i32_0 : i32, i32
  }
  func.func @transform_3(%arg0: i32) -> (i32, i32) {
    %c0_i32 = arith.constant 0 : i32
    %c0_i32_0 = arith.constant 0 : i32
    return %arg0, %c0_i32 : i32, i32
  }
}

module attributes {stable_mosaic.version = 11 : i64} {
  func.func @_matmul_stats_kernel(%arg0: i32, %arg1: i32, %arg2: i32, %arg3: memref<1x128x128xbf16, #tpu.memory_space<vmem>>, %arg4: memref<1x128x128xbf16, #tpu.memory_space<vmem>>, %arg5: memref<1x128x128xf32, #tpu.memory_space<vmem>>, %arg6: memref<1x1x2x128xf32, #tpu.memory_space<vmem>>) attributes {dimension_semantics = [#tpu.dimension_semantics<parallel>, #tpu.dimension_semantics<parallel>, #tpu.dimension_semantics<arbitrary>], iteration_bounds = array<i64: 4, 1, 1>, scalar_prefetch = 0 : i64, scratch_operands = 0 : i64, tpu.core_type = #tpu.core_type<tc>, window_params = [{transform_indices = @transform_0, window_bounds = array<i64: 1, 128, 128>}, {transform_indices = @transform_1, window_bounds = array<i64: 1, 128, 128>}, {transform_indices = @transform_2, window_bounds = array<i64: 1, 128, 128>}, {transform_indices = @transform_3, window_bounds = array<i64: 1, 1, 2, 128>}]} {
    %c0_i32 = arith.constant 0 : i32
    %0 = arith.cmpi eq, %arg2, %c0_i32 : i32
    %1 = arith.extui %0 : i1 to i32
    %c0_i32_0 = arith.constant 0 : i32
    %2 = arith.cmpi ne, %1, %c0_i32_0 : i32
    scf.if %2 {
      %cst_14 = arith.constant 0.000000e+00 : f32
      %17 = vector.broadcast %cst_14 : f32 to vector<128x128xf32>
      %c0_15 = arith.constant 0 : index
      %c0_16 = arith.constant 0 : index
      %c0_17 = arith.constant 0 : index
      %18 = vector.load %arg5[%c0_15, %c0_16, %c0_17] : memref<1x128x128xf32, #tpu.memory_space<vmem>>, vector<1x128x128xf32>
      %19 = vector.shape_cast %18 : vector<1x128x128xf32> to vector<128x128xf32>
      %20 = vector.shape_cast %17 : vector<128x128xf32> to vector<1x128x128xf32>
      tpu.vector_store %arg5[%c0_15, %c0_16, %c0_17], %20 {strides = array<i32>} : memref<1x128x128xf32, #tpu.memory_space<vmem>>, vector<1x128x128xf32>,
    } else {
    }
    %c0 = arith.constant 0 : index
    %c0_1 = arith.constant 0 : index
    %c0_2 = arith.constant 0 : index
    %3 = vector.load %arg5[%c0, %c0_1, %c0_2] : memref<1x128x128xf32, #tpu.memory_space<vmem>>, vector<1x128x128xf32>
    %4 = vector.shape_cast %3 : vector<1x128x128xf32> to vector<128x128xf32>
    %c0_3 = arith.constant 0 : index
    %c0_4 = arith.constant 0 : index
    %c0_5 = arith.constant 0 : index
    %5 = vector.load %arg3[%c0_3, %c0_4, %c0_5] : memref<1x128x128xbf16, #tpu.memory_space<vmem>>, vector<1x128x128xbf16>
    %6 = vector.shape_cast %5 : vector<1x128x128xbf16> to vector<128x128xbf16>
    %c0_6 = arith.constant 0 : index
    %c0_7 = arith.constant 0 : index
    %c0_8 = arith.constant 0 : index
    %7 = vector.load %arg4[%c0_6, %c0_7, %c0_8] : memref<1x128x128xbf16, #tpu.memory_space<vmem>>, vector<1x128x128xbf16>
    %8 = vector.shape_cast %7 : vector<1x128x128xbf16> to vector<128x128xbf16>
    %cst = arith.constant dense<0.000000e+00> : vector<128x128xf32>
    %9 = tpu.matmul %6, %8, %cst {dimension_numbers = #tpu.dot_dimension_numbers<[1], [0], [0], [1], [0, 0, 1, 1], [], []>} : vector<128x128xbf16>, vector<128x128xbf16>, vector<128x128xf32> -> vector<128x128xf32>
    %10 = arith.addf %4, %9 : vector<128x128xf32>
    %c0_9 = arith.constant 0 : index
    %c0_10 = arith.constant 0 : index
    %c0_11 = arith.constant 0 : index
    %11 = vector.load %arg5[%c0_9, %c0_10, %c0_11] : memref<1x128x128xf32, #tpu.memory_space<vmem>>, vector<1x128x128xf32>
    %12 = vector.shape_cast %11 : vector<1x128x128xf32> to vector<128x128xf32>
    %13 = vector.shape_cast %10 : vector<128x128xf32> to vector<1x128x128xf32>
    tpu.vector_store %arg5[%c0_9, %c0_10, %c0_11], %13 {strides = array<i32>} : memref<1x128x128xf32, #tpu.memory_space<vmem>>, vector<1x128x128xf32>,
    %c0_i32_12 = arith.constant 0 : i32
    %14 = arith.cmpi eq, %arg2, %c0_i32_12 : i32
    %15 = arith.extui %14 : i1 to i32
    %c0_i32_13 = arith.constant 0 : i32
    %16 = arith.cmpi ne, %15, %c0_i32_13 : i32
    scf.if %16 {
      %c0_14 = arith.constant 0 : index
      %c0_15 = arith.constant 0 : index
      %c0_16 = arith.constant 0 : index
      %17 = vector.load %arg5[%c0_14, %c0_15, %c0_16] : memref<1x128x128xf32, #tpu.memory_space<vmem>>, vector<1x128x128xf32>
      %18 = vector.shape_cast %17 : vector<1x128x128xf32> to vector<128x128xf32>
      %cst_17 = arith.constant dense<0.000000e+00> : vector<128xf32>
      %19 = vector.multi_reduction <add>, %18, %cst_17 [0] : vector<128x128xf32> to vector<128xf32>
      %20 = vector.shape_cast %19 : vector<128xf32> to vector<1x128xf32>
      %21 = arith.mulf %18, %18 : vector<128x128xf32>
      %cst_18 = arith.constant dense<0.000000e+00> : vector<128xf32>
      %22 = vector.multi_reduction <add>, %21, %cst_18 [0] : vector<128x128xf32> to vector<128xf32>
      %23 = vector.shape_cast %22 : vector<128xf32> to vector<1x128xf32>
      %24 = tpu.concatenate %20, %23 in 0 : vector<1x128xf32>, vector<1x128xf32> -> vector<2x128xf32>
      %c0_19 = arith.constant 0 : index
      %c0_20 = arith.constant 0 : index
      %c0_21 = arith.constant 0 : index
      %c0_22 = arith.constant 0 : index
      %25 = vector.load %arg6[%c0_19, %c0_20, %c0_21, %c0_22] : memref<1x1x2x128xf32, #tpu.memory_space<vmem>>, vector<1x1x2x128xf32>
      %26 = vector.shape_cast %25 : vector<1x1x2x128xf32> to vector<2x128xf32>
      %27 = vector.shape_cast %24 : vector<2x128xf32> to vector<1x1x2x128xf32>
      tpu.vector_store %arg6[%c0_19, %c0_20, %c0_21, %c0_22], %27 {strides = array<i32>} : memref<1x1x2x128xf32, #tpu.memory_space<vmem>>, vector<1x1x2x128xf32>,
    } else {
    }
    return
  }
  func.func @transform_0(%arg0: i32, %arg1: i32, %arg2: i32) -> (i32, i32, i32) {
    %c0_i32 = arith.constant 0 : i32
    return %arg0, %arg1, %arg2 : i32, i32, i32
  }
  func.func @transform_1(%arg0: i32, %arg1: i32, %arg2: i32) -> (i32, i32, i32) {
    %c0_i32 = arith.constant 0 : i32
    %c0_i32_0 = arith.constant 0 : i32
    return %arg0, %arg2, %c0_i32 : i32, i32, i32
  }
  func.func @transform_2(%arg0: i32, %arg1: i32, %arg2: i32) -> (i32, i32, i32) {
    %c0_i32 = arith.constant 0 : i32
    %c0_i32_0 = arith.constant 0 : i32
    return %arg0, %arg1, %c0_i32 : i32, i32, i32
  }
  func.func @transform_3(%arg0: i32, %arg1: i32, %arg2: i32) -> (i32, i32, i32, i32) {
    %c0_i32 = arith.constant 0 : i32
    %c0_i32_0 = arith.constant 0 : i32
    %c0_i32_1 = arith.constant 0 : i32
    return %arg0, %arg1, %c0_i32, %c0_i32_0 : i32, i32, i32, i32
  }
}

module attributes {stable_mosaic.version = 11 : i64} {
  func.func @_bn_relu_kernel(%arg0: i32, %arg1: memref<512x128xf32, #tpu.memory_space<vmem>>, %arg2: memref<1x128xf32, #tpu.memory_space<vmem>>, %arg3: memref<1x128xf32, #tpu.memory_space<vmem>>, %arg4: memref<512x128xbf16, #tpu.memory_space<vmem>>) attributes {dimension_semantics = [#tpu.dimension_semantics<parallel>], iteration_bounds = array<i64: 1>, scalar_prefetch = 0 : i64, scratch_operands = 0 : i64, tpu.core_type = #tpu.core_type<tc>, window_params = [{transform_indices = @transform_0, window_bounds = array<i64: 512, 128>}, {pipeline_mode = #tpu.pipeline_mode<synchronous>, transform_indices = @transform_1, window_bounds = array<i64: 1, 128>}, {pipeline_mode = #tpu.pipeline_mode<synchronous>, transform_indices = @transform_2, window_bounds = array<i64: 1, 128>}, {transform_indices = @transform_3, window_bounds = array<i64: 512, 128>}]} {
    %c0 = arith.constant 0 : index
    %c0_0 = arith.constant 0 : index
    %0 = vector.load %arg1[%c0, %c0_0] : memref<512x128xf32, #tpu.memory_space<vmem>>, vector<512x128xf32>
    %c0_1 = arith.constant 0 : index
    %c0_2 = arith.constant 0 : index
    %1 = vector.load %arg2[%c0_1, %c0_2] : memref<1x128xf32, #tpu.memory_space<vmem>>, vector<1x128xf32>
    %2 = vector.broadcast %1 : vector<1x128xf32> to vector<512x128xf32>
    %3 = arith.mulf %0, %2 : vector<512x128xf32>
    %c0_3 = arith.constant 0 : index
    %c0_4 = arith.constant 0 : index
    %4 = vector.load %arg3[%c0_3, %c0_4] : memref<1x128xf32, #tpu.memory_space<vmem>>, vector<1x128xf32>
    %5 = vector.broadcast %4 : vector<1x128xf32> to vector<512x128xf32>
    %6 = arith.addf %3, %5 : vector<512x128xf32>
    %cst = arith.constant 0.000000e+00 : f32
    %7 = vector.broadcast %cst : f32 to vector<512x128xf32>
    %8 = arith.maximumf %6, %7 : vector<512x128xf32>
    %9 = arith.truncf %8 : vector<512x128xf32> to vector<512x128xbf16>
    %c0_5 = arith.constant 0 : index
    %c0_6 = arith.constant 0 : index
    %10 = vector.load %arg4[%c0_5, %c0_6] : memref<512x128xbf16, #tpu.memory_space<vmem>>, vector<512x128xbf16>
    tpu.vector_store %arg4[%c0_5, %c0_6], %9 {strides = array<i32>} : memref<512x128xbf16, #tpu.memory_space<vmem>>, vector<512x128xbf16>,
    return
  }
  func.func @transform_0(%arg0: i32) -> (i32, i32) {
    %c0_i32 = arith.constant 0 : i32
    %c0_i32_0 = arith.constant 0 : i32
    return %arg0, %c0_i32 : i32, i32
  }
  func.func @transform_1(%arg0: i32) -> (i32, i32) {
    %c0_i32 = arith.constant 0 : i32
    %c0_i32_0 = arith.constant 0 : i32
    %c0_i32_1 = arith.constant 0 : i32
    return %c0_i32, %c0_i32_0 : i32, i32
  }
  func.func @transform_2(%arg0: i32) -> (i32, i32) {
    %c0_i32 = arith.constant 0 : i32
    %c0_i32_0 = arith.constant 0 : i32
    %c0_i32_1 = arith.constant 0 : i32
    return %c0_i32, %c0_i32_0 : i32, i32
  }
  func.func @transform_3(%arg0: i32) -> (i32, i32) {
    %c0_i32 = arith.constant 0 : i32
    %c0_i32_0 = arith.constant 0 : i32
    return %arg0, %c0_i32 : i32, i32
  }
}

module attributes {stable_mosaic.version = 11 : i64} {
  func.func @_matmul_stats_kernel(%arg0: i32, %arg1: i32, %arg2: i32, %arg3: memref<1x512x64xbf16, #tpu.memory_space<vmem>>, %arg4: memref<1x64x128xbf16, #tpu.memory_space<vmem>>, %arg5: memref<1x512x128xf32, #tpu.memory_space<vmem>>, %arg6: memref<1x1x2x128xf32, #tpu.memory_space<vmem>>) attributes {dimension_semantics = [#tpu.dimension_semantics<parallel>, #tpu.dimension_semantics<parallel>, #tpu.dimension_semantics<arbitrary>], iteration_bounds = array<i64: 4, 1, 1>, scalar_prefetch = 0 : i64, scratch_operands = 0 : i64, tpu.core_type = #tpu.core_type<tc>, window_params = [{transform_indices = @transform_0, window_bounds = array<i64: 1, 512, 64>}, {transform_indices = @transform_1, window_bounds = array<i64: 1, 64, 128>}, {transform_indices = @transform_2, window_bounds = array<i64: 1, 512, 128>}, {transform_indices = @transform_3, window_bounds = array<i64: 1, 1, 2, 128>}]} {
    %c0_i32 = arith.constant 0 : i32
    %0 = arith.cmpi eq, %arg2, %c0_i32 : i32
    %1 = arith.extui %0 : i1 to i32
    %c0_i32_0 = arith.constant 0 : i32
    %2 = arith.cmpi ne, %1, %c0_i32_0 : i32
    scf.if %2 {
      %cst_14 = arith.constant 0.000000e+00 : f32
      %17 = vector.broadcast %cst_14 : f32 to vector<512x128xf32>
      %c0_15 = arith.constant 0 : index
      %c0_16 = arith.constant 0 : index
      %c0_17 = arith.constant 0 : index
      %18 = vector.load %arg5[%c0_15, %c0_16, %c0_17] : memref<1x512x128xf32, #tpu.memory_space<vmem>>, vector<1x512x128xf32>
      %19 = vector.shape_cast %18 : vector<1x512x128xf32> to vector<512x128xf32>
      %20 = vector.shape_cast %17 : vector<512x128xf32> to vector<1x512x128xf32>
      tpu.vector_store %arg5[%c0_15, %c0_16, %c0_17], %20 {strides = array<i32>} : memref<1x512x128xf32, #tpu.memory_space<vmem>>, vector<1x512x128xf32>,
    } else {
    }
    %c0 = arith.constant 0 : index
    %c0_1 = arith.constant 0 : index
    %c0_2 = arith.constant 0 : index
    %3 = vector.load %arg5[%c0, %c0_1, %c0_2] : memref<1x512x128xf32, #tpu.memory_space<vmem>>, vector<1x512x128xf32>
    %4 = vector.shape_cast %3 : vector<1x512x128xf32> to vector<512x128xf32>
    %c0_3 = arith.constant 0 : index
    %c0_4 = arith.constant 0 : index
    %c0_5 = arith.constant 0 : index
    %5 = vector.load %arg3[%c0_3, %c0_4, %c0_5] : memref<1x512x64xbf16, #tpu.memory_space<vmem>>, vector<1x512x64xbf16>
    %6 = vector.shape_cast %5 : vector<1x512x64xbf16> to vector<512x64xbf16>
    %c0_6 = arith.constant 0 : index
    %c0_7 = arith.constant 0 : index
    %c0_8 = arith.constant 0 : index
    %7 = vector.load %arg4[%c0_6, %c0_7, %c0_8] : memref<1x64x128xbf16, #tpu.memory_space<vmem>>, vector<1x64x128xbf16>
    %8 = vector.shape_cast %7 : vector<1x64x128xbf16> to vector<64x128xbf16>
    %cst = arith.constant dense<0.000000e+00> : vector<512x128xf32>
    %9 = tpu.matmul %6, %8, %cst {dimension_numbers = #tpu.dot_dimension_numbers<[1], [0], [0], [1], [0, 0, 1, 1], [], []>} : vector<512x64xbf16>, vector<64x128xbf16>, vector<512x128xf32> -> vector<512x128xf32>
    %10 = arith.addf %4, %9 : vector<512x128xf32>
    %c0_9 = arith.constant 0 : index
    %c0_10 = arith.constant 0 : index
    %c0_11 = arith.constant 0 : index
    %11 = vector.load %arg5[%c0_9, %c0_10, %c0_11] : memref<1x512x128xf32, #tpu.memory_space<vmem>>, vector<1x512x128xf32>
    %12 = vector.shape_cast %11 : vector<1x512x128xf32> to vector<512x128xf32>
    %13 = vector.shape_cast %10 : vector<512x128xf32> to vector<1x512x128xf32>
    tpu.vector_store %arg5[%c0_9, %c0_10, %c0_11], %13 {strides = array<i32>} : memref<1x512x128xf32, #tpu.memory_space<vmem>>, vector<1x512x128xf32>,
    %c0_i32_12 = arith.constant 0 : i32
    %14 = arith.cmpi eq, %arg2, %c0_i32_12 : i32
    %15 = arith.extui %14 : i1 to i32
    %c0_i32_13 = arith.constant 0 : i32
    %16 = arith.cmpi ne, %15, %c0_i32_13 : i32
    scf.if %16 {
      %c0_14 = arith.constant 0 : index
      %c0_15 = arith.constant 0 : index
      %c0_16 = arith.constant 0 : index
      %17 = vector.load %arg5[%c0_14, %c0_15, %c0_16] : memref<1x512x128xf32, #tpu.memory_space<vmem>>, vector<1x512x128xf32>
      %18 = vector.shape_cast %17 : vector<1x512x128xf32> to vector<512x128xf32>
      %cst_17 = arith.constant dense<0.000000e+00> : vector<128xf32>
      %19 = vector.multi_reduction <add>, %18, %cst_17 [0] : vector<512x128xf32> to vector<128xf32>
      %20 = vector.shape_cast %19 : vector<128xf32> to vector<1x128xf32>
      %21 = arith.mulf %18, %18 : vector<512x128xf32>
      %cst_18 = arith.constant dense<0.000000e+00> : vector<128xf32>
      %22 = vector.multi_reduction <add>, %21, %cst_18 [0] : vector<512x128xf32> to vector<128xf32>
      %23 = vector.shape_cast %22 : vector<128xf32> to vector<1x128xf32>
      %24 = tpu.concatenate %20, %23 in 0 : vector<1x128xf32>, vector<1x128xf32> -> vector<2x128xf32>
      %c0_19 = arith.constant 0 : index
      %c0_20 = arith.constant 0 : index
      %c0_21 = arith.constant 0 : index
      %c0_22 = arith.constant 0 : index
      %25 = vector.load %arg6[%c0_19, %c0_20, %c0_21, %c0_22] : memref<1x1x2x128xf32, #tpu.memory_space<vmem>>, vector<1x1x2x128xf32>
      %26 = vector.shape_cast %25 : vector<1x1x2x128xf32> to vector<2x128xf32>
      %27 = vector.shape_cast %24 : vector<2x128xf32> to vector<1x1x2x128xf32>
      tpu.vector_store %arg6[%c0_19, %c0_20, %c0_21, %c0_22], %27 {strides = array<i32>} : memref<1x1x2x128xf32, #tpu.memory_space<vmem>>, vector<1x1x2x128xf32>,
    } else {
    }
    return
  }
  func.func @transform_0(%arg0: i32, %arg1: i32, %arg2: i32) -> (i32, i32, i32) {
    %c0_i32 = arith.constant 0 : i32
    return %arg0, %arg1, %arg2 : i32, i32, i32
  }
  func.func @transform_1(%arg0: i32, %arg1: i32, %arg2: i32) -> (i32, i32, i32) {
    %c0_i32 = arith.constant 0 : i32
    %c0_i32_0 = arith.constant 0 : i32
    return %arg0, %arg2, %c0_i32 : i32, i32, i32
  }
  func.func @transform_2(%arg0: i32, %arg1: i32, %arg2: i32) -> (i32, i32, i32) {
    %c0_i32 = arith.constant 0 : i32
    %c0_i32_0 = arith.constant 0 : i32
    return %arg0, %arg1, %c0_i32 : i32, i32, i32
  }
  func.func @transform_3(%arg0: i32, %arg1: i32, %arg2: i32) -> (i32, i32, i32, i32) {
    %c0_i32 = arith.constant 0 : i32
    %c0_i32_0 = arith.constant 0 : i32
    %c0_i32_1 = arith.constant 0 : i32
    return %arg0, %arg1, %c0_i32, %c0_i32_0 : i32, i32, i32, i32
  }
}

module attributes {stable_mosaic.version = 11 : i64} {
  func.func @_bn_relu_kernel(%arg0: i32, %arg1: memref<512x128xf32, #tpu.memory_space<vmem>>, %arg2: memref<1x128xf32, #tpu.memory_space<vmem>>, %arg3: memref<1x128xf32, #tpu.memory_space<vmem>>, %arg4: memref<512x128xbf16, #tpu.memory_space<vmem>>) attributes {dimension_semantics = [#tpu.dimension_semantics<parallel>], iteration_bounds = array<i64: 4>, scalar_prefetch = 0 : i64, scratch_operands = 0 : i64, tpu.core_type = #tpu.core_type<tc>, window_params = [{transform_indices = @transform_0, window_bounds = array<i64: 512, 128>}, {pipeline_mode = #tpu.pipeline_mode<synchronous>, transform_indices = @transform_1, window_bounds = array<i64: 1, 128>}, {pipeline_mode = #tpu.pipeline_mode<synchronous>, transform_indices = @transform_2, window_bounds = array<i64: 1, 128>}, {transform_indices = @transform_3, window_bounds = array<i64: 512, 128>}]} {
    %c0 = arith.constant 0 : index
    %c0_0 = arith.constant 0 : index
    %0 = vector.load %arg1[%c0, %c0_0] : memref<512x128xf32, #tpu.memory_space<vmem>>, vector<512x128xf32>
    %c0_1 = arith.constant 0 : index
    %c0_2 = arith.constant 0 : index
    %1 = vector.load %arg2[%c0_1, %c0_2] : memref<1x128xf32, #tpu.memory_space<vmem>>, vector<1x128xf32>
    %2 = vector.broadcast %1 : vector<1x128xf32> to vector<512x128xf32>
    %3 = arith.mulf %0, %2 : vector<512x128xf32>
    %c0_3 = arith.constant 0 : index
    %c0_4 = arith.constant 0 : index
    %4 = vector.load %arg3[%c0_3, %c0_4] : memref<1x128xf32, #tpu.memory_space<vmem>>, vector<1x128xf32>
    %5 = vector.broadcast %4 : vector<1x128xf32> to vector<512x128xf32>
    %6 = arith.addf %3, %5 : vector<512x128xf32>
    %cst = arith.constant 0.000000e+00 : f32
    %7 = vector.broadcast %cst : f32 to vector<512x128xf32>
    %8 = arith.maximumf %6, %7 : vector<512x128xf32>
    %9 = arith.truncf %8 : vector<512x128xf32> to vector<512x128xbf16>
    %c0_5 = arith.constant 0 : index
    %c0_6 = arith.constant 0 : index
    %10 = vector.load %arg4[%c0_5, %c0_6] : memref<512x128xbf16, #tpu.memory_space<vmem>>, vector<512x128xbf16>
    tpu.vector_store %arg4[%c0_5, %c0_6], %9 {strides = array<i32>} : memref<512x128xbf16, #tpu.memory_space<vmem>>, vector<512x128xbf16>,
    return
  }
  func.func @transform_0(%arg0: i32) -> (i32, i32) {
    %c0_i32 = arith.constant 0 : i32
    %c0_i32_0 = arith.constant 0 : i32
    return %arg0, %c0_i32 : i32, i32
  }
  func.func @transform_1(%arg0: i32) -> (i32, i32) {
    %c0_i32 = arith.constant 0 : i32
    %c0_i32_0 = arith.constant 0 : i32
    %c0_i32_1 = arith.constant 0 : i32
    return %c0_i32, %c0_i32_0 : i32, i32
  }
  func.func @transform_2(%arg0: i32) -> (i32, i32) {
    %c0_i32 = arith.constant 0 : i32
    %c0_i32_0 = arith.constant 0 : i32
    %c0_i32_1 = arith.constant 0 : i32
    return %c0_i32, %c0_i32_0 : i32, i32
  }
  func.func @transform_3(%arg0: i32) -> (i32, i32) {
    %c0_i32 = arith.constant 0 : i32
    %c0_i32_0 = arith.constant 0 : i32
    return %arg0, %c0_i32 : i32, i32
  }
}

module attributes {stable_mosaic.version = 11 : i64} {
  func.func @_matmul_tanh_kernel(%arg0: i32, %arg1: i32, %arg2: i32, %arg3: memref<1x512x32xbf16, #tpu.memory_space<vmem>>, %arg4: memref<1x32x128xbf16, #tpu.memory_space<vmem>>, %arg5: memref<1x512x128xf32, #tpu.memory_space<vmem>>) attributes {dimension_semantics = [#tpu.dimension_semantics<parallel>, #tpu.dimension_semantics<parallel>, #tpu.dimension_semantics<arbitrary>], iteration_bounds = array<i64: 4, 4, 1>, scalar_prefetch = 0 : i64, scratch_operands = 0 : i64, tpu.core_type = #tpu.core_type<tc>, window_params = [{transform_indices = @transform_0, window_bounds = array<i64: 1, 512, 32>}, {transform_indices = @transform_1, window_bounds = array<i64: 1, 32, 128>}, {transform_indices = @transform_2, window_bounds = array<i64: 1, 512, 128>}]} {
    %c0_i32 = arith.constant 0 : i32
    %0 = arith.cmpi eq, %arg2, %c0_i32 : i32
    %1 = arith.extui %0 : i1 to i32
    %c0_i32_0 = arith.constant 0 : i32
    %2 = arith.cmpi ne, %1, %c0_i32_0 : i32
    scf.if %2 {
      %cst_14 = arith.constant 0.000000e+00 : f32
      %17 = vector.broadcast %cst_14 : f32 to vector<512x128xf32>
      %c0_15 = arith.constant 0 : index
      %c0_16 = arith.constant 0 : index
      %c0_17 = arith.constant 0 : index
      %18 = vector.load %arg5[%c0_15, %c0_16, %c0_17] : memref<1x512x128xf32, #tpu.memory_space<vmem>>, vector<1x512x128xf32>
      %19 = vector.shape_cast %18 : vector<1x512x128xf32> to vector<512x128xf32>
      %20 = vector.shape_cast %17 : vector<512x128xf32> to vector<1x512x128xf32>
      tpu.vector_store %arg5[%c0_15, %c0_16, %c0_17], %20 {strides = array<i32>} : memref<1x512x128xf32, #tpu.memory_space<vmem>>, vector<1x512x128xf32>,
    } else {
    }
    %c0 = arith.constant 0 : index
    %c0_1 = arith.constant 0 : index
    %c0_2 = arith.constant 0 : index
    %3 = vector.load %arg5[%c0, %c0_1, %c0_2] : memref<1x512x128xf32, #tpu.memory_space<vmem>>, vector<1x512x128xf32>
    %4 = vector.shape_cast %3 : vector<1x512x128xf32> to vector<512x128xf32>
    %c0_3 = arith.constant 0 : index
    %c0_4 = arith.constant 0 : index
    %c0_5 = arith.constant 0 : index
    %5 = vector.load %arg3[%c0_3, %c0_4, %c0_5] : memref<1x512x32xbf16, #tpu.memory_space<vmem>>, vector<1x512x32xbf16>
    %6 = vector.shape_cast %5 : vector<1x512x32xbf16> to vector<512x32xbf16>
    %c0_6 = arith.constant 0 : index
    %c0_7 = arith.constant 0 : index
    %c0_8 = arith.constant 0 : index
    %7 = vector.load %arg4[%c0_6, %c0_7, %c0_8] : memref<1x32x128xbf16, #tpu.memory_space<vmem>>, vector<1x32x128xbf16>
    %8 = vector.shape_cast %7 : vector<1x32x128xbf16> to vector<32x128xbf16>
    %cst = arith.constant dense<0.000000e+00> : vector<512x128xf32>
    %9 = tpu.matmul %6, %8, %cst {dimension_numbers = #tpu.dot_dimension_numbers<[1], [0], [0], [1], [0, 0, 1, 1], [], []>} : vector<512x32xbf16>, vector<32x128xbf16>, vector<512x128xf32> -> vector<512x128xf32>
    %10 = arith.addf %4, %9 : vector<512x128xf32>
    %c0_9 = arith.constant 0 : index
    %c0_10 = arith.constant 0 : index
    %c0_11 = arith.constant 0 : index
    %11 = vector.load %arg5[%c0_9, %c0_10, %c0_11] : memref<1x512x128xf32, #tpu.memory_space<vmem>>, vector<1x512x128xf32>
    %12 = vector.shape_cast %11 : vector<1x512x128xf32> to vector<512x128xf32>
    %13 = vector.shape_cast %10 : vector<512x128xf32> to vector<1x512x128xf32>
    tpu.vector_store %arg5[%c0_9, %c0_10, %c0_11], %13 {strides = array<i32>} : memref<1x512x128xf32, #tpu.memory_space<vmem>>, vector<1x512x128xf32>,
    %c0_i32_12 = arith.constant 0 : i32
    %14 = arith.cmpi eq, %arg2, %c0_i32_12 : i32
    %15 = arith.extui %14 : i1 to i32
    %c0_i32_13 = arith.constant 0 : i32
    %16 = arith.cmpi ne, %15, %c0_i32_13 : i32
    scf.if %16 {
      %c0_14 = arith.constant 0 : index
      %c0_15 = arith.constant 0 : index
      %c0_16 = arith.constant 0 : index
      %17 = vector.load %arg5[%c0_14, %c0_15, %c0_16] : memref<1x512x128xf32, #tpu.memory_space<vmem>>, vector<1x512x128xf32>
      %18 = vector.shape_cast %17 : vector<1x512x128xf32> to vector<512x128xf32>
      %19 = math.tanh %18 : vector<512x128xf32>
      %c0_17 = arith.constant 0 : index
      %c0_18 = arith.constant 0 : index
      %c0_19 = arith.constant 0 : index
      %20 = vector.load %arg5[%c0_17, %c0_18, %c0_19] : memref<1x512x128xf32, #tpu.memory_space<vmem>>, vector<1x512x128xf32>
      %21 = vector.shape_cast %20 : vector<1x512x128xf32> to vector<512x128xf32>
      %22 = vector.shape_cast %19 : vector<512x128xf32> to vector<1x512x128xf32>
      tpu.vector_store %arg5[%c0_17, %c0_18, %c0_19], %22 {strides = array<i32>} : memref<1x512x128xf32, #tpu.memory_space<vmem>>, vector<1x512x128xf32>,
    } else {
    }
    return
  }
  func.func @transform_0(%arg0: i32, %arg1: i32, %arg2: i32) -> (i32, i32, i32) {
    %c0_i32 = arith.constant 0 : i32
    return %arg0, %arg1, %arg2 : i32, i32, i32
  }
  func.func @transform_1(%arg0: i32, %arg1: i32, %arg2: i32) -> (i32, i32, i32) {
    %c0_i32 = arith.constant 0 : i32
    %c0_i32_0 = arith.constant 0 : i32
    return %arg0, %arg2, %c0_i32 : i32, i32, i32
  }
  func.func @transform_2(%arg0: i32, %arg1: i32, %arg2: i32) -> (i32, i32, i32) {
    %c0_i32 = arith.constant 0 : i32
    %c0_i32_0 = arith.constant 0 : i32
    return %arg0, %arg1, %c0_i32 : i32, i32, i32
  }
}

</mosaic_0001>

<llo_original>
// kernel: netg_forward.9
$region0: #{netg_forward.9}
  #allocation0 [shape = 'u32[]', space=smem, size = 0x4, offset = 0x4, fixed_abs, tag = 'smem constant byte address 0x4 - core index']
  #allocation1 [shape = 'u32[144,128]{1,0:T(1,128)}', space=vmem, size = 0x12000, scoped, tag = 'internal scratch']
  %s0 = inlined_call_operand.vmem [shape: bf16[1,32,256], index: 0, kind: input, shape index: {}]
  %s1 = inlined_call_operand.vmem [shape: bf16[1,256,128], index: 1, kind: input, shape index: {}]
  %s2 = inlined_call_operand.vmem [shape: f32[1,32,128], index: 2, kind: output, shape index: {0}]
  %s3 = inlined_call_operand.vmem [shape: f32[1,1,2,128], index: 3, kind: output, shape index: {1}]
  %4 = xla_tuple %s2, %s3
  %s5 = sld [smem:[#allocation0]]
  $region34: #{netg_forward.9} parent=0
    _
  %s7 = ssub.s32 1, %s5
  %s8 = scalar_select 0, %s7, %s5
  // Predicated region
  $region2: #{netg_forward.9} parent=0 // pred_check
    _
  $region3: #{netg_forward.9} parent=0 // pred_check_branch
    %10 = sbr.rel (0) target = $region5
  $region4: #{netg_forward.9} parent=0 // pred_region
    _
  $region5: #{netg_forward.9} parent=0 // pred_fallthru
    _
  // Predicated region
  $region6: #{netg_forward.9} parent=0 // pred_check
    _
  $region7: #{netg_forward.9} parent=0 // pred_check_branch
    %12 = sbr.rel (0) target = $region9
  $region8: #{netg_forward.9} parent=0 // pred_region
    _
  $region9: #{netg_forward.9} parent=0 // pred_fallthru
    _
  %p14 = scmp.eq.s32.totalorder 0, 0
  // Predicated region
  $region10: #{netg_forward.9} parent=0 // pred_check
    %p15 = pneg %p14
  $region11: #{netg_forward.9} parent=0 // pred_check_branch
    %17 = sbr.rel (%p15) target = $region13
  $region12: #{netg_forward.9} parent=0 // pred_region
    %18 = vst [vmem:[%s2] sm:$0xff] 0.0
    %19 = vst [vmem:[%s2 + $0x8] sm:$0xff] 0.0
    %20 = vst [vmem:[%s2 + $0x10] sm:$0xff] 0.0
    %21 = vst [vmem:[%s2 + $0x18] sm:$0xff] 0.0
  $region13: #{netg_forward.9} parent=0 // pred_fallthru
    _
  %v22 = vld [vmem:[%s2] sm:$0xff]
  %v23 = vld [vmem:[%s2 + $0x8] sm:$0xff]
  %v24 = vld [vmem:[%s2 + $0x10] sm:$0xff]
  %v25 = vld [vmem:[%s2 + $0x18] sm:$0xff]
  %v26 = vld [vmem:[%s0] sm:$0xff]
  %v27 = vld [vmem:[%s0 + $0x8] sm:$0xff]
  %v28 = vld [vmem:[%s0 + $0x10] sm:$0xff]
  %v29 = vld [vmem:[%s0 + $0x18] sm:$0xff]
  %v30 = vld [vmem:[%s1] sm:$0xf]
  %v31 = vld [vmem:[%s1 + $0x4] sm:$0xf]
  %v32 = vld [vmem:[%s1 + $0x8] sm:$0xf]
  %v33 = vld [vmem:[%s1 + $0xc] sm:$0xf]
  %v34 = vld [vmem:[%s1 + $0x10] sm:$0xf]
  %v35 = vld [vmem:[%s1 + $0x14] sm:$0xf]
  %v36 = vld [vmem:[%s1 + $0x18] sm:$0xf]
  %v37 = vld [vmem:[%s1 + $0x1c] sm:$0xf]
  %v38 = vld [vmem:[%s1 + $0x20] sm:$0xf]
  %v39 = vld [vmem:[%s1 + $0x24] sm:$0xf]
  %v40 = vld [vmem:[%s1 + $0x28] sm:$0xf]
  %v41 = vld [vmem:[%s1 + $0x2c] sm:$0xf]
  %v42 = vld [vmem:[%s1 + $0x30] sm:$0xf]
  %v43 = vld [vmem:[%s1 + $0x34] sm:$0xf]
  %v44 = vld [vmem:[%s1 + $0x38] sm:$0xf]
  %v45 = vld [vmem:[%s1 + $0x3c] sm:$0xf]
  %v46 = vld [vmem:[%s1 + $0x40] sm:$0xf]
  %v47 = vld [vmem:[%s1 + $0x44] sm:$0xf]
  %v48 = vld [vmem:[%s1 + $0x48] sm:$0xf]
  %v49 = vld [vmem:[%s1 + $0x4c] sm:$0xf]
  %v50 = vld [vmem:[%s1 + $0x50] sm:$0xf]
  %v51 = vld [vmem:[%s1 + $0x54] sm:$0xf]
  %v52 = vld [vmem:[%s1 + $0x58] sm:$0xf]
  %v53 = vld [vmem:[%s1 + $0x5c] sm:$0xf]
  %v54 = vld [vmem:[%s1 + $0x60] sm:$0xf]
  %v55 = vld [vmem:[%s1 + $0x64] sm:$0xf]
  %v56 = vld [vmem:[%s1 + $0x68] sm:$0xf]
  %v57 = vld [vmem:[%s1 + $0x6c] sm:$0xf]
  %v58 = vld [vmem:[%s1 + $0x70] sm:$0xf]
  %v59 = vld [vmem:[%s1 + $0x74] sm:$0xf]
  %v60 = vld [vmem:[%s1 + $0x78] sm:$0xf]
  %v61 = vld [vmem:[%s1 + $0x7c] sm:$0xf]
  %v66 = vunpack.c.l.b16 %v26
  %v67 = vunpack.c.h.b16 %v26
  %v68 = vunpack.c.l.b16 %v27
  %v69 = vunpack.c.h.b16 %v27
  %v70 = vunpack.c.l.b16 %v28
  %v71 = vunpack.c.h.b16 %v28
  %v72 = vunpack.c.l.b16 %v29
  %v73 = vunpack.c.h.b16 %v29
  %v74 = vpack.c.b16 %v68, %v66
  %v75 = vpack.c.b16 %v69, %v67
  %v76 = vpack.c.b16 %v72, %v70
  %v77 = vpack.c.b16 %v73, %v71
  %v114 = vunpack.c.l.b16 %v30
  %v115 = vunpack.c.l.b16 %v31
  %v116 = vunpack.c.l.b16 %v32
  %v117 = vunpack.c.l.b16 %v33
  %v118 = vunpack.c.l.b16 %v34
  %v119 = vunpack.c.l.b16 %v35
  %v120 = vunpack.c.l.b16 %v36
  %v121 = vunpack.c.l.b16 %v37
  %v122 = vunpack.c.l.b16 %v38
  %v123 = vunpack.c.l.b16 %v39
  %v124 = vunpack.c.l.b16 %v40
  %v125 = vunpack.c.l.b16 %v41
  %v126 = vunpack.c.l.b16 %v42
  %v127 = vunpack.c.l.b16 %v43
  %v128 = vunpack.c.l.b16 %v44
  %v129 = vunpack.c.l.b16 %v45
  %v130 = vunpack.c.l.b16 %v46
  %v131 = vunpack.c.l.b16 %v47
  %v132 = vunpack.c.l.b16 %v48
  %v133 = vunpack.c.l.b16 %v49
  %v134 = vunpack.c.l.b16 %v50
  %v135 = vunpack.c.l.b16 %v51
  %v136 = vunpack.c.l.b16 %v52
  %v137 = vunpack.c.l.b16 %v53
  %v138 = vunpack.c.l.b16 %v54
  %v139 = vunpack.c.l.b16 %v55
  %v140 = vunpack.c.l.b16 %v56
  %v141 = vunpack.c.l.b16 %v57
  %v142 = vunpack.c.l.b16 %v58
  %v143 = vunpack.c.l.b16 %v59
  %v144 = vunpack.c.l.b16 %v60
  %v145 = vunpack.c.l.b16 %v61
  %v146 = vpack.c.b16 %v115, %v114
  %v147 = vpack.c.b16 %v117, %v116
  %v148 = vpack.c.b16 %v119, %v118
  %v149 = vpack.c.b16 %v121, %v120
  %v150 = vpack.c.b16 %v123, %v122
  %v151 = vpack.c.b16 %v125, %v124
  %v152 = vpack.c.b16 %v127, %v126
  %v153 = vpack.c.b16 %v129, %v128
  %v154 = vpack.c.b16 %v131, %v130
  %v155 = vpack.c.b16 %v133, %v132
  %v156 = vpack.c.b16 %v135, %v134
  %v157 = vpack.c.b16 %v137, %v136
  %v158 = vpack.c.b16 %v139, %v138
  %v159 = vpack.c.b16 %v141, %v140
  %v160 = vpack.c.b16 %v143, %v142
  %v161 = vpack.c.b16 %v145, %v144
  %178 = vmatprep.subr.bf16.mxu0 0
  %179 = vmatpush1.bf16.msra.mxu0 %v153
  %180 = vmatprep.subr.bf16.mxu0 0
  %181 = vmatpush1.bf16.msra.mxu0 %v152
  %182 = vmatprep.subr.bf16.mxu0 0
  %183 = vmatpush1.bf16.msra.mxu0 %v151
  %184 = vmatprep.subr.bf16.mxu0 0
  %185 = vmatpush1.bf16.msra.mxu0 %v150
  %186 = vmatprep.subr.bf16.mxu0 0
  %187 = vmatpush1.bf16.msra.mxu0 %v149
  %188 = vmatprep.subr.bf16.mxu0 0
  %189 = vmatpush1.bf16.msra.mxu0 %v148
  %190 = vmatprep.subr.bf16.mxu0 0
  %191 = vmatpush1.bf16.msra.mxu0 %v147
  %192 = vmatprep.subr.bf16.mxu0 0
  %193 = vmatpush1.bf16.msra.mxu0 %v146
  %194 = vmatprep.subr.bf16.mxu0 0
  %195 = vmatpush2.bf16.msra.mxu0 %v161
  %196 = vmatprep.subr.bf16.mxu0 0
  %197 = vmatpush2.bf16.msra.mxu0 %v160
  %198 = vmatprep.subr.bf16.mxu0 0
  %199 = vmatpush2.bf16.msra.mxu0 %v159
  %200 = vmatprep.subr.bf16.mxu0 0
  %201 = vmatpush2.bf16.msra.mxu0 %v158
  %202 = vmatprep.subr.bf16.mxu0 0
  %203 = vmatpush2.bf16.msra.mxu0 %v157
  %204 = vmatprep.subr.bf16.mxu0 0
  %205 = vmatpush2.bf16.msra.mxu0 %v156
  %206 = vmatprep.subr.bf16.mxu0 0
  %207 = vmatpush2.bf16.msra.mxu0 %v155
  %208 = vmatprep.subr.bf16.mxu0 0
  %209 = vmatpush2.bf16.msra.mxu0 %v154
  %210 = vmatprep.mubr.bf16.mxu0 %v75
  %211 = vmatmul.mubr.bf16.gmra.mxu0 %v74
  %v212 = vpop.f32.mrf.mxu0
  %v213 = vadd.f32 0.0, %v212
  %v214 = vpop.f32.mrf.mxu0
  %v215 = vpop.f32.mrf.mxu0
  %v216 = vadd.f32 0.0, %v215
  %v217 = vpop.f32.mrf.mxu0
  %218 = vmatprep.mubr.bf16.mxu0 %v77
  %219 = vmatmul.mubr.bf16.gmra.mxu0 %v76
  %v220 = vpop.f32.mrf.mxu0
  %v221 = vadd.f32 0.0, %v220
  %v222 = vpop.f32.mrf.mxu0
  %v223 = vpop.f32.mrf.mxu0
  %v224 = vadd.f32 0.0, %v223
  %v225 = vpop.f32.mrf.mxu0
  %226 = vdwg.mxu0
  %v227 = vadd.f32 %v22, %v213
  %v228 = vadd.f32 %v23, %v216
  %v229 = vadd.f32 %v24, %v221
  %v230 = vadd.f32 %v25, %v224
  %231 = vst [vmem:[%s2] sm:$0xff] %v227
  %232 = vst [vmem:[%s2 + $0x8] sm:$0xff] %v228
  %233 = vst [vmem:[%s2 + $0x10] sm:$0xff] %v229
  %234 = vst [vmem:[%s2 + $0x18] sm:$0xff] %v230
  // Predicated region
  $region14: #{netg_forward.9} parent=0 // pred_check
    %p235 = pneg %p14
  $region15: #{netg_forward.9} parent=0 // pred_check_branch
    %237 = sbr.rel (%p235) target = $region17
  $region16: #{netg_forward.9} parent=0 // pred_region
    %v238 = vld [vmem:[%s2] sm:$0xff]
    %v239 = vld [vmem:[%s2 + $0x8] sm:$0xff]
    %v240 = vld [vmem:[%s2 + $0x10] sm:$0xff]
    %v241 = vld [vmem:[%s2 + $0x18] sm:$0xff]
    %v242 = vadd.f32 %v238, %v239
    %v243 = vadd.f32 %v242, %v240
    %v244 = vadd.f32 %v243, %v241
    %v245 = vrot.slane %v244, 4
    %v246 = vadd.f32 %v244, %v245
    %v247 = vrot.slane %v246, 2
    %v248 = vadd.f32 %v246, %v247
    %v249 = vrot.slane %v248, 1
    %v250 = vadd.f32 %v248, %v249
    %v251 = vmul.f32 %v238, %v238
    %v252 = vmul.f32 %v239, %v239
    %v253 = vmul.f32 %v240, %v240
    %v254 = vmul.f32 %v241, %v241
    %v255 = vadd.f32 %v251, %v252
    %v256 = vadd.f32 %v255, %v253
    %v257 = vadd.f32 %v256, %v254
    %v258 = vrot.slane %v257, 4
    %v259 = vadd.f32 %v257, %v258
    %v260 = vrot.slane %v259, 2
    %v261 = vadd.f32 %v259, %v260
    %v262 = vrot.slane %v261, 1
    %v263 = vadd.f32 %v261, %v262
    %vm264 = vcmask 1040384
    %v265 = vsel %vm264, %v250, %v263
    %266 = vst [vmem:[%s3] sm:$0x3] %v265
  $region17: #{netg_forward.9} parent=0 // pred_fallthru
    _
  // Predicated region
  $region18: #{netg_forward.9} parent=0 // pred_check
    _
  $region19: #{netg_forward.9} parent=0 // pred_check_branch
    %268 = sbr.rel (0) target = $region21
  $region20: #{netg_forward.9} parent=0 // pred_region
    _
  $region21: #{netg_forward.9} parent=0 // pred_fallthru
    _
  // Predicated region
  $region22: #{netg_forward.9} parent=0 // pred_check
    _
  $region23: #{netg_forward.9} parent=0 // pred_check_branch
    %270 = sbr.rel (0) target = $region25
  $region24: #{netg_forward.9} parent=0 // pred_region
    _
  $region25: #{netg_forward.9} parent=0 // pred_fallthru
    _
  // Predicated region
  $region26: #{netg_forward.9} parent=0 // pred_check
    _
  $region27: #{netg_forward.9} parent=0 // pred_check_branch
    %272 = sbr.rel (0) target = $region29
  $region28: #{netg_forward.9} parent=0 // pred_region
    _
  $region29: #{netg_forward.9} parent=0 // pred_fallthru
    _
  // Predicated region
  $region30: #{netg_forward.9} parent=0 // pred_check
    _
  $region31: #{netg_forward.9} parent=0 // pred_check_branch
    %274 = sbr.rel (0) target = $region33
  $region32: #{netg_forward.9} parent=0 // pred_region
    _
  $region33: #{netg_forward.9} parent=0 // pred_fallthru
    _

// kernel: netg_forward.10
$region0: #{netg_forward.10}
  #allocation0 [shape = 'u32[]', space=smem, size = 0x4, offset = 0x4, fixed_abs, tag = 'smem constant byte address 0x4 - core index']
  #allocation1 [shape = 'u32[144,128]{1,0:T(1,128)}', space=vmem, size = 0x12000, scoped, tag = 'internal scratch']
  %s0 = inlined_call_operand.vmem [shape: f32[32,128], index: 0, kind: input, shape index: {}]
  %s1 = inlined_call_operand.vmem [shape: f32[1,128], index: 1, kind: input, shape index: {}]
  %s2 = inlined_call_operand.vmem [shape: f32[1,128], index: 2, kind: input, shape index: {}]
  %s3 = inlined_call_operand.vmem [shape: bf16[32,128], index: 3, kind: output, shape index: {}]
  %s4 = sld [smem:[#allocation0]]
  $region22: #{netg_forward.10} parent=0
    _
  %s6 = ssub.s32 1, %s4
  %s7 = scalar_select 0, %s6, %s4
  // Predicated region
  $region2: #{netg_forward.10} parent=0 // pred_check
    _
  $region3: #{netg_forward.10} parent=0 // pred_check_branch
    %9 = sbr.rel (0) target = $region5
  $region4: #{netg_forward.10} parent=0 // pred_region
    _
  $region5: #{netg_forward.10} parent=0 // pred_fallthru
    _
  // Predicated region
  $region6: #{netg_forward.10} parent=0 // pred_check
    _
  $region7: #{netg_forward.10} parent=0 // pred_check_branch
    %11 = sbr.rel (0) target = $region9
  $region8: #{netg_forward.10} parent=0 // pred_region
    _
  $region9: #{netg_forward.10} parent=0 // pred_fallthru
    _
  // Predicated region
  $region10: #{netg_forward.10} parent=0 // pred_check
    _
  $region11: #{netg_forward.10} parent=0 // pred_check_branch
    %13 = sbr.rel (0) target = $region13
  $region12: #{netg_forward.10} parent=0 // pred_region
    _
  $region13: #{netg_forward.10} parent=0 // pred_fallthru
    _
  %v14 = vld [vmem:[%s0] sm:$0xff]
  %v15 = vld [vmem:[%s0 + $0x8] sm:$0xff]
  %v16 = vld [vmem:[%s0 + $0x10] sm:$0xff]
  %v17 = vld [vmem:[%s0 + $0x18] sm:$0xff]
  %v18 = vld [vmem:[%s1] sm:$0x1]
  %v20 = vlaneseq
  %v21 = vshrl.u32 %v20, 7
  %v22 = vsub.s32 0, %v21
  %v23 = vrot.slane %v18, %v22
  %v25 = vmul.f32 %v14, %v23
  %v26 = vmul.f32 %v15, %v23
  %v27 = vmul.f32 %v16, %v23
  %v28 = vmul.f32 %v17, %v23
  %v29 = vld [vmem:[%s2] sm:$0x1]
  %v31 = vlaneseq
  %v32 = vshrl.u32 %v31, 7
  %v33 = vsub.s32 0, %v32
  %v34 = vrot.slane %v29, %v33
  %v36 = vadd.f32 %v25, %v34
  %v37 = vadd.f32 %v26, %v34
  %v38 = vadd.f32 %v27, %v34
  %v39 = vadd.f32 %v28, %v34
  %v40 = vmax.f32 %v36, 0.0
  %v41 = vmax.f32 %v37, 0.0
  %v42 = vmax.f32 %v38, 0.0
  %v43 = vmax.f32 %v39, 0.0
  %v44 = vpack.c.bf16 %v41, %v40
  %v45 = vpack.c.bf16 %v43, %v42
  %v48 = vunpack.c.l.b16 %v44
  %v49 = vunpack.c.h.b16 %v44
  %v50 = vunpack.c.l.b16 %v45
  %v51 = vunpack.c.h.b16 %v45
  %v52 = vpack.c.b16 %v48, %v48
  %v53 = vpack.c.b16 %v49, %v49
  %v54 = vpack.c.b16 %v50, %v50
  %v55 = vpack.c.b16 %v51, %v51
  %60 = vst [vmem:[%s3] sm:$0xf] %v52
  %61 = vst [vmem:[%s3 + $0x4] sm:$0xf] %v53
  %62 = vst [vmem:[%s3 + $0x8] sm:$0xf] %v54
  %63 = vst [vmem:[%s3 + $0xc] sm:$0xf] %v55
  // Predicated region
  $region14: #{netg_forward.10} parent=0 // pred_check
    _
  $region15: #{netg_forward.10} parent=0 // pred_check_branch
    %65 = sbr.rel (0) target = $region17
  $region16: #{netg_forward.10} parent=0 // pred_region
    _
  $region17: #{netg_forward.10} parent=0 // pred_fallthru
    _
  // Predicated region
  $region18: #{netg_forward.10} parent=0 // pred_check
    _
  $region19: #{netg_forward.10} parent=0 // pred_check_branch
    %67 = sbr.rel (0) target = $region21
  $region20: #{netg_forward.10} parent=0 // pred_region
    _
  $region21: #{netg_forward.10} parent=0 // pred_fallthru
    _

// kernel: netg_forward.11
$region0: #{netg_forward.11}
  #allocation0 [shape = 'u32[]', space=smem, size = 0x4, offset = 0x4, fixed_abs, tag = 'smem constant byte address 0x4 - core index']
  #allocation1 [shape = 'u32[144,128]{1,0:T(1,128)}', space=vmem, size = 0x12000, scoped, tag = 'internal scratch']
  %s0 = inlined_call_operand.vmem [shape: bf16[4,32,256], index: 0, kind: input, shape index: {}]
  %s1 = inlined_call_operand.vmem [shape: bf16[4,256,128], index: 1, kind: input, shape index: {}]
  %s2 = inlined_call_operand.vmem [shape: f32[4,32,128], index: 2, kind: output, shape index: {0}]
  %s3 = inlined_call_operand.vmem [shape: f32[4,1,2,128], index: 3, kind: output, shape index: {1}]
  %4 = xla_tuple %s2, %s3
  %s5 = sld [smem:[#allocation0]]
  $region57: #{netg_forward.11} parent=0
    _
  %s7 = ssub.s32 1, %s5
  %s8 = scalar_select 0, %s7, %s5
  loop: start=0, step=1, limit=6
  $region2: #{netg_forward.11} parent=0 // loop_pre_header
    _
  $region3: #{netg_forward.11} parent=0 // loop_header
    %s10 = sphi 0, %s14
    %p11 = scmp.ge.s32.totalorder %s10, 6
    %s17 = sphi 0, %s36
    %s18 = sphi 0, %s32
    %s19 = sphi 0, %s28
    %s20 = sphi 0, %s17
    %s21 = sphi 0, %s18
    %s22 = sphi 0, %s19
    %s23 = sphi 0, %s20
    %s24 = sphi 0, %s21
    %s25 = sphi 0, %s22
    %s43 = sphi 0, %s45
    %s46 = sphi 0, %s43
    %s47 = sphi 0, %s46
    %s63 = sphi 0, %s47
    %s71 = sphi 0, %s73
    %s74 = sphi 0, %s71
    %s75 = sphi 0, %s74
    %s91 = sphi 0, %s75
    %s99 = sphi 0, %s101
    %s102 = sphi 0, %s99
    %s103 = sphi 0, %s102
    %s119 = sphi 0, %s103
    %s127 = sphi 0, %s129
    %s130 = sphi 0, %s127
    %s131 = sphi 0, %s130
    %s147 = sphi 0, %s131
  $region4: #{netg_forward.11} parent=0 // loop_header_branch
    %13 = sbr.rel (%p11) target = $region8
  $region5: #{netg_forward.11} parent=0 // loop_body
    %s15 = ssub.s32 %s10, 1
    %s16 = ssub.s32 %s10, 2
    %s26 = sadd.s32 1, %s19
    %p27 = scmp.ge.s32.totalorder %s26, 1
    %s28 = scalar_select %p27, 0, %s26
    %s29 = sadd.s32 1, %s18
    %s30 = scalar_select %p27, %s29, %s18
    %p31 = scmp.ge.s32.totalorder %s30, 1
    %s32 = scalar_select %p31, 0, %s30
    %s33 = sadd.s32 1, %s17
    %s34 = scalar_select %p31, %s33, %s17
    %p35 = scmp.ge.s32.totalorder %s34, 4
    %s36 = scalar_select %p35, 0, %s34
    %s37 = ssub.s32 %s17, %s36
    %s38 = ssub.s32 %s18, %s32
    %s39 = sor.u32 %s37, %s38
    %s40 = ssub.s32 %s19, %s28
    %s41 = sor.u32 %s39, %s40
    %p42 = scmp.eq.s32.totalorder %s41, 0
    %s44 = sadd.s32 %s43, 1
    %s45 = scalar_select %p42, %s43, %s44
    %p48 = pneg %p42
    %p49 = scmp.eq.s32.totalorder %s10, 3
    %p50 = por %p48, %p49
    %p51 = scmp.ne.s32.totalorder %s43, %s46
    %p52 = scmp.eq.s32.totalorder %s10, 0
    %p53 = por %p51, %p52
    %p54 = scmp.ne.s32.totalorder %s43, %s46
    %p55 = scmp.eq.s32.totalorder %s15, 3
    %p56 = por %p54, %p55
    %p57 = scmp.ne.s32.totalorder %s46, %s47
    %p58 = scmp.eq.s32.totalorder %s15, 0
    %p59 = por %p57, %p58
    %p60 = scmp.ne.s32.totalorder %s46, %s47
    %p61 = scmp.eq.s32.totalorder %s16, 3
    %p62 = por %p60, %p61
    %p64 = scmp.ne.s32.totalorder %s47, %s63
    %p65 = scmp.eq.s32.totalorder %s16, 0
    %p66 = por %p64, %p65
    %s67 = ssub.s32 %s17, %s36
    %s68 = ssub.s32 %s19, %s28
    %s69 = sor.u32 %s67, %s68
    %p70 = scmp.eq.s32.totalorder %s69, 0
    %s72 = sadd.s32 %s71, 1
    %s73 = scalar_select %p70, %s71, %s72
    %p76 = pneg %p70
    %p77 = scmp.eq.s32.totalorder %s10, 3
    %p78 = por %p76, %p77
    %p79 = scmp.ne.s32.totalorder %s71, %s74
    %p80 = scmp.eq.s32.totalorder %s10, 0
    %p81 = por %p79, %p80
    %p82 = scmp.ne.s32.totalorder %s71, %s74
    %p83 = scmp.eq.s32.totalorder %s15, 3
    %p84 = por %p82, %p83
    %p85 = scmp.ne.s32.totalorder %s74, %s75
    %p86 = scmp.eq.s32.totalorder %s15, 0
    %p87 = por %p85, %p86
    %p88 = scmp.ne.s32.totalorder %s74, %s75
    %p89 = scmp.eq.s32.totalorder %s16, 3
    %p90 = por %p88, %p89
    %p92 = scmp.ne.s32.totalorder %s75, %s91
    %p93 = scmp.eq.s32.totalorder %s16, 0
    %p94 = por %p92, %p93
    %s95 = ssub.s32 %s17, %s36
    %s96 = ssub.s32 %s18, %s32
    %s97 = sor.u32 %s95, %s96
    %p98 = scmp.eq.s32.totalorder %s97, 0
    %s100 = sadd.s32 %s99, 1
    %s101 = scalar_select %p98, %s99, %s100
    %p104 = pneg %p98
    %p105 = scmp.eq.s32.totalorder %s10, 3
    %p106 = por %p104, %p105
    %p107 = scmp.ne.s32.totalorder %s99, %s102
    %p108 = scmp.eq.s32.totalorder %s10, 0
    %p109 = por %p107, %p108
    %p110 = scmp.ne.s32.totalorder %s99, %s102
    %p111 = scmp.eq.s32.totalorder %s15, 3
    %p112 = por %p110, %p111
    %p113 = scmp.ne.s32.totalorder %s102, %s103
    %p114 = scmp.eq.s32.totalorder %s15, 0
    %p115 = por %p113, %p114
    %p116 = scmp.ne.s32.totalorder %s102, %s103
    %p117 = scmp.eq.s32.totalorder %s16, 3
    %p118 = por %p116, %p117
    %p120 = scmp.ne.s32.totalorder %s103, %s119
    %p121 = scmp.eq.s32.totalorder %s16, 0
    %p122 = por %p120, %p121
    %s123 = ssub.s32 %s17, %s36
    %s124 = ssub.s32 %s18, %s32
    %s125 = sor.u32 %s123, %s124
    %p126 = scmp.eq.s32.totalorder %s125, 0
    %s128 = sadd.s32 %s127, 1
    %s129 = scalar_select %p126, %s127, %s128
    %p132 = pneg %p126
    %p133 = scmp.eq.s32.totalorder %s10, 3
    %p134 = por %p132, %p133
    %p135 = scmp.ne.s32.totalorder %s127, %s130
    %p136 = scmp.eq.s32.totalorder %s10, 0
    %p137 = por %p135, %p136
    %p138 = scmp.ne.s32.totalorder %s127, %s130
    %p139 = scmp.eq.s32.totalorder %s15, 3
    %p140 = por %p138, %p139
    %p141 = scmp.ne.s32.totalorder %s130, %s131
    %p142 = scmp.eq.s32.totalorder %s15, 0
    %p143 = por %p141, %p142
    %p144 = scmp.ne.s32.totalorder %s130, %s131
    %p145 = scmp.eq.s32.totalorder %s16, 3
    %p146 = por %p144, %p145
    %p148 = scmp.ne.s32.totalorder %s131, %s147
    %p149 = scmp.eq.s32.totalorder %s16, 0
    %p150 = por %p148, %p149
    %p151 = scmp.le.s32.totalorder 1, %s10
    %p152 = scmp.lt.s32.totalorder %s10, 5
    %p153 = pnand %p151, %p152
    %p154 = pneg %p153
    // Predicated region
    $region9: #{netg_forward.11} parent=5 // pred_check
      _
    $region10: #{netg_forward.11} parent=5 // pred_check_branch
      %156 = sbr.rel (%p153) target = $region12
    $region11: #{netg_forward.11} parent=5 // pred_region
      %s157 = ssub.s32 %s10, 1
    $region12: #{netg_forward.11} parent=5 // pred_fallthru
      _
    %p158 = scmp.lt.s32.totalorder %s10, 4
    // Predicated region
    $region13: #{netg_forward.11} parent=5 // pred_check
      %p159 = pneg %p158
    $region14: #{netg_forward.11} parent=5 // pred_check_branch
      %161 = sbr.rel (%p159) target = $region16
    $region15: #{netg_forward.11} parent=5 // pred_region
      // Predicated region
      $region17: #{netg_forward.11} parent=15 // pred_check
        %p162 = pneg %p53
      $region18: #{netg_forward.11} parent=15 // pred_check_branch
        %164 = sbr.rel (%p162) target = $region20
      $region19: #{netg_forward.11} parent=15 // pred_region
        %s165 = smul.u32 4, %s18
        %s166 = smul.u32 2, %s19
        %p167 = scmp.lt.s32.totalorder %s17, 3
        %s168 = scalar_select %p167, %s17, 3
        %p169 = scmp.lt.s32.totalorder %s165, 3
        %s170 = scalar_select %p169, %s165, 3
        %p171 = scmp.lt.s32.totalorder %s166, 1
        %s172 = scalar_select %p171, %s166, 1
        %s173 = smul.addr %s170, 2
        %s174 = sadd.s32 %s172, %s173
        %s175 = smul.addr %s168, 8
        %s176 = sadd.s32 %s174, %s175
        %s177 = smul.addr %s176, 4
        %s178 = scalar_lea.vmem %s0, %s177
        %s179 = smul.u32 4, %s18
        %s180 = smul.u32 2, %s19
      $region20: #{netg_forward.11} parent=15 // pred_fallthru
        _
      // Predicated region
      $region21: #{netg_forward.11} parent=15 // pred_check
        %p181 = pneg %p81
      $region22: #{netg_forward.11} parent=15 // pred_check_branch
        %183 = sbr.rel (%p181) target = $region24
      $region23: #{netg_forward.11} parent=15 // pred_region
        %s184 = smul.u32 32, %s19
        %p185 = scmp.lt.s32.totalorder %s17, 3
        %s186 = scalar_select %p185, %s17, 3
        %p187 = scmp.lt.s32.totalorder %s184, 31
        %s188 = scalar_select %p187, %s184, 31
        %s189 = smul.addr %s186, 32
        %s190 = sadd.s32 %s188, %s189
        %s191 = smul.addr %s190, 4
        %s192 = scalar_lea.vmem %s1, %s191
        %s193 = smul.u32 32, %s19
      $region24: #{netg_forward.11} parent=15 // pred_fallthru
        _
    $region16: #{netg_forward.11} parent=5 // pred_fallthru
      _
    %p194 = scmp.le.s32.totalorder 1, %s10
    %p195 = scmp.lt.s32.totalorder %s10, 5
    %p196 = pnand %p194, %p195
    %p197 = pneg %p196
    // Predicated region
    $region25: #{netg_forward.11} parent=5 // pred_check
      _
    $region26: #{netg_forward.11} parent=5 // pred_check_branch
      %199 = sbr.rel (%p196) target = $region28
    $region27: #{netg_forward.11} parent=5 // pred_region
      %s200 = ssub.s32 %s10, 1
      %s201 = smul.u32 4, %s21
      %s202 = smul.u32 2, %s22
      %p203 = scmp.lt.s32.totalorder %s20, 3
      %s204 = scalar_select %p203, %s20, 3
      %p205 = scmp.lt.s32.totalorder %s201, 3
      %s206 = scalar_select %p205, %s201, 3
      %p207 = scmp.lt.s32.totalorder %s202, 1
      %s208 = scalar_select %p207, %s202, 1
      %s209 = smul.addr %s206, 2
      %s210 = sadd.s32 %s208, %s209
      %s211 = smul.addr %s204, 8
      %s212 = sadd.s32 %s210, %s211
      %s213 = smul.addr %s212, 4
      %s214 = scalar_lea.vmem %s0, %s213
      %p215 = pneg %p59
      %p216 = pneg %p56
      %s217 = smul.u32 32, %s22
      %p218 = scmp.lt.s32.totalorder %s20, 3
      %s219 = scalar_select %p218, %s20, 3
      %p220 = scmp.lt.s32.totalorder %s217, 31
      %s221 = scalar_select %p220, %s217, 31
      %s222 = smul.addr %s219, 32
      %s223 = sadd.s32 %s221, %s222
      %s224 = smul.addr %s223, 4
      %s225 = scalar_lea.vmem %s1, %s224
      %p226 = pneg %p87
      %p227 = pneg %p84
      %p228 = pneg %p115
      %p229 = pneg %p112
      %s230 = smul.u32 4, %s21
      %p231 = scmp.lt.s32.totalorder %s20, 3
      %s232 = scalar_select %p231, %s20, 3
      %p233 = scmp.lt.s32.totalorder %s230, 3
      %s234 = scalar_select %p233, %s230, 3
      %s235 = smul.addr %s232, 4
      %s236 = sadd.s32 %s234, %s235
      %s237 = smul.addr %s236, 8
      %s238 = scalar_lea.vmem %s2, %s237
      %p239 = pneg %p143
      %p240 = pneg %p140
      %p241 = scmp.lt.s32.totalorder %s20, 3
      %s242 = scalar_select %p241, %s20, 3
      %p243 = scmp.lt.s32.totalorder %s21, 0
      %s244 = scalar_select %p243, %s21, 0
      %s245 = sadd.s32 %s244, %s242
      %s246 = smul.addr %s245, 2
      %s247 = scalar_lea.vmem %s3, %s246
      %s248 = smul.u32 4, %s21
      %s249 = smul.u32 2, %s22
      %p250 = scmp.lt.s32.totalorder %s20, 3
      %s251 = scalar_select %p250, %s20, 3
      %p252 = scmp.lt.s32.totalorder %s248, 3
      %s253 = scalar_select %p252, %s248, 3
      %p254 = scmp.lt.s32.totalorder %s249, 1
      %s255 = scalar_select %p254, %s249, 1
      %s256 = smul.addr %s253, 2
      %s257 = sadd.s32 %s255, %s256
      %s258 = smul.addr %s251, 8
      %s259 = sadd.s32 %s257, %s258
      %s260 = smul.addr %s259, 4
      %s261 = scalar_lea.vmem %s0, %s260
      %s262 = smul.u32 4, %s21
      %s263 = smul.u32 2, %s22
      %s264 = smul.u32 32, %s22
      %p265 = scmp.lt.s32.totalorder %s20, 3
      %s266 = scalar_select %p265, %s20, 3
      %p267 = scmp.lt.s32.totalorder %s264, 31
      %s268 = scalar_select %p267, %s264, 31
      %s269 = smul.addr %s266, 32
      %s270 = sadd.s32 %s268, %s269
      %s271 = smul.addr %s270, 4
      %s272 = scalar_lea.vmem %s1, %s271
      %s273 = smul.u32 32, %s22
      %s274 = smul.u32 4, %s21
      %p275 = scmp.lt.s32.totalorder %s20, 3
      %s276 = scalar_select %p275, %s20, 3
      %p277 = scmp.lt.s32.totalorder %s274, 3
      %s278 = scalar_select %p277, %s274, 3
      %s279 = smul.addr %s276, 4
      %s280 = sadd.s32 %s278, %s279
      %s281 = smul.addr %s280, 8
      %s282 = scalar_lea.vmem %s2, %s281
      %s283 = smul.u32 4, %s21
      %p284 = scmp.lt.s32.totalorder %s20, 3
      %s285 = scalar_select %p284, %s20, 3
      %p286 = scmp.lt.s32.totalorder %s21, 0
      %s287 = scalar_select %p286, %s21, 0
      %s288 = sadd.s32 %s287, %s285
      %s289 = smul.addr %s288, 2
      %s290 = scalar_lea.vmem %s3, %s289
      %p292 = scmp.eq.s32.totalorder %s22, 0
      // Predicated region
      $region29: #{netg_forward.11} parent=27 // pred_check
        %p293 = pneg %p292
      $region30: #{netg_forward.11} parent=27 // pred_check_branch
        %295 = sbr.rel (%p293) target = $region32
      $region31: #{netg_forward.11} parent=27 // pred_region
        %296 = vst [vmem:[%s282] sm:$0xff] 0.0
        %297 = vst [vmem:[%s282 + $0x8] sm:$0xff] 0.0
        %298 = vst [vmem:[%s282 + $0x10] sm:$0xff] 0.0
        %299 = vst [vmem:[%s282 + $0x18] sm:$0xff] 0.0
      $region32: #{netg_forward.11} parent=27 // pred_fallthru
        _
      %v300 = vld [vmem:[%s282] sm:$0xff]
      %v301 = vld [vmem:[%s282 + $0x8] sm:$0xff]
      %v302 = vld [vmem:[%s282 + $0x10] sm:$0xff]
      %v303 = vld [vmem:[%s282 + $0x18] sm:$0xff]
      %v304 = vld [vmem:[%s261] sm:$0xff]
      %v305 = vld [vmem:[%s261 + $0x8] sm:$0xff]
      %v306 = vld [vmem:[%s261 + $0x10] sm:$0xff]
      %v307 = vld [vmem:[%s261 + $0x18] sm:$0xff]
      %v308 = vld [vmem:[%s272] sm:$0xf]
      %v309 = vld [vmem:[%s272 + $0x4] sm:$0xf]
      %v310 = vld [vmem:[%s272 + $0x8] sm:$0xf]
      %v311 = vld [vmem:[%s272 + $0xc] sm:$0xf]
      %v312 = vld [vmem:[%s272 + $0x10] sm:$0xf]
      %v313 = vld [vmem:[%s272 + $0x14] sm:$0xf]
      %v314 = vld [vmem:[%s272 + $0x18] sm:$0xf]
      %v315 = vld [vmem:[%s272 + $0x1c] sm:$0xf]
      %v316 = vld [vmem:[%s272 + $0x20] sm:$0xf]
      %v317 = vld [vmem:[%s272 + $0x24] sm:$0xf]
      %v318 = vld [vmem:[%s272 + $0x28] sm:$0xf]
      %v319 = vld [vmem:[%s272 + $0x2c] sm:$0xf]
      %v320 = vld [vmem:[%s272 + $0x30] sm:$0xf]
      %v321 = vld [vmem:[%s272 + $0x34] sm:$0xf]
      %v322 = vld [vmem:[%s272 + $0x38] sm:$0xf]
      %v323 = vld [vmem:[%s272 + $0x3c] sm:$0xf]
      %v324 = vld [vmem:[%s272 + $0x40] sm:$0xf]
      %v325 = vld [vmem:[%s272 + $0x44] sm:$0xf]
      %v326 = vld [vmem:[%s272 + $0x48] sm:$0xf]
      %v327 = vld [vmem:[%s272 + $0x4c] sm:$0xf]
      %v328 = vld [vmem:[%s272 + $0x50] sm:$0xf]
      %v329 = vld [vmem:[%s272 + $0x54] sm:$0xf]
      %v330 = vld [vmem:[%s272 + $0x58] sm:$0xf]
      %v331 = vld [vmem:[%s272 + $0x5c] sm:$0xf]
      %v332 = vld [vmem:[%s272 + $0x60] sm:$0xf]
      %v333 = vld [vmem:[%s272 + $0x64] sm:$0xf]
      %v334 = vld [vmem:[%s272 + $0x68] sm:$0xf]
      %v335 = vld [vmem:[%s272 + $0x6c] sm:$0xf]
      %v336 = vld [vmem:[%s272 + $0x70] sm:$0xf]
      %v337 = vld [vmem:[%s272 + $0x74] sm:$0xf]
      %v338 = vld [vmem:[%s272 + $0x78] sm:$0xf]
      %v339 = vld [vmem:[%s272 + $0x7c] sm:$0xf]
      %v344 = vunpack.c.l.b16 %v304
      %v345 = vunpack.c.h.b16 %v304
      %v346 = vunpack.c.l.b16 %v305
      %v347 = vunpack.c.h.b16 %v305
      %v348 = vunpack.c.l.b16 %v306
      %v349 = vunpack.c.h.b16 %v306
      %v350 = vunpack.c.l.b16 %v307
      %v351 = vunpack.c.h.b16 %v307
      %v352 = vpack.c.b16 %v346, %v344
      %v353 = vpack.c.b16 %v347, %v345
      %v354 = vpack.c.b16 %v350, %v348
      %v355 = vpack.c.b16 %v351, %v349
      %v392 = vunpack.c.l.b16 %v308
      %v393 = vunpack.c.l.b16 %v309
      %v394 = vunpack.c.l.b16 %v310
      %v395 = vunpack.c.l.b16 %v311
      %v396 = vunpack.c.l.b16 %v312
      %v397 = vunpack.c.l.b16 %v313
      %v398 = vunpack.c.l.b16 %v314
      %v399 = vunpack.c.l.b16 %v315
      %v400 = vunpack.c.l.b16 %v316
      %v401 = vunpack.c.l.b16 %v317
      %v402 = vunpack.c.l.b16 %v318
      %v403 = vunpack.c.l.b16 %v319
      %v404 = vunpack.c.l.b16 %v320
      %v405 = vunpack.c.l.b16 %v321
      %v406 = vunpack.c.l.b16 %v322
      %v407 = vunpack.c.l.b16 %v323
      %v408 = vunpack.c.l.b16 %v324
      %v409 = vunpack.c.l.b16 %v325
      %v410 = vunpack.c.l.b16 %v326
      %v411 = vunpack.c.l.b16 %v327
      %v412 = vunpack.c.l.b16 %v328
      %v413 = vunpack.c.l.b16 %v329
      %v414 = vunpack.c.l.b16 %v330
      %v415 = vunpack.c.l.b16 %v331
      %v416 = vunpack.c.l.b16 %v332
      %v417 = vunpack.c.l.b16 %v333
      %v418 = vunpack.c.l.b16 %v334
      %v419 = vunpack.c.l.b16 %v335
      %v420 = vunpack.c.l.b16 %v336
      %v421 = vunpack.c.l.b16 %v337
      %v422 = vunpack.c.l.b16 %v338
      %v423 = vunpack.c.l.b16 %v339
      %v424 = vpack.c.b16 %v393, %v392
      %v425 = vpack.c.b16 %v395, %v394
      %v426 = vpack.c.b16 %v397, %v396
      %v427 = vpack.c.b16 %v399, %v398
      %v428 = vpack.c.b16 %v401, %v400
      %v429 = vpack.c.b16 %v403, %v402
      %v430 = vpack.c.b16 %v405, %v404
      %v431 = vpack.c.b16 %v407, %v406
      %v432 = vpack.c.b16 %v409, %v408
      %v433 = vpack.c.b16 %v411, %v410
      %v434 = vpack.c.b16 %v413, %v412
      %v435 = vpack.c.b16 %v415, %v414
      %v436 = vpack.c.b16 %v417, %v416
      %v437 = vpack.c.b16 %v419, %v418
      %v438 = vpack.c.b16 %v421, %v420
      %v439 = vpack.c.b16 %v423, %v422
      %456 = vmatprep.subr.bf16.mxu0 0
      %457 = vmatpush1.bf16.msra.mxu0 %v431
      %458 = vmatprep.subr.bf16.mxu0 0
      %459 = vmatpush1.bf16.msra.mxu0 %v430
      %460 = vmatprep.subr.bf16.mxu0 0
      %461 = vmatpush1.bf16.msra.mxu0 %v429
      %462 = vmatprep.subr.bf16.mxu0 0
      %463 = vmatpush1.bf16.msra.mxu0 %v428
      %464 = vmatprep.subr.bf16.mxu0 0
      %465 = vmatpush1.bf16.msra.mxu0 %v427
      %466 = vmatprep.subr.bf16.mxu0 0
      %467 = vmatpush1.bf16.msra.mxu0 %v426
      %468 = vmatprep.subr.bf16.mxu0 0
      %469 = vmatpush1.bf16.msra.mxu0 %v425
      %470 = vmatprep.subr.bf16.mxu0 0
      %471 = vmatpush1.bf16.msra.mxu0 %v424
      %472 = vmatprep.subr.bf16.mxu0 0
      %473 = vmatpush2.bf16.msra.mxu0 %v439
      %474 = vmatprep.subr.bf16.mxu0 0
      %475 = vmatpush2.bf16.msra.mxu0 %v438
      %476 = vmatprep.subr.bf16.mxu0 0
      %477 = vmatpush2.bf16.msra.mxu0 %v437
      %478 = vmatprep.subr.bf16.mxu0 0
      %479 = vmatpush2.bf16.msra.mxu0 %v436
      %480 = vmatprep.subr.bf16.mxu0 0
      %481 = vmatpush2.bf16.msra.mxu0 %v435
      %482 = vmatprep.subr.bf16.mxu0 0
      %483 = vmatpush2.bf16.msra.mxu0 %v434
      %484 = vmatprep.subr.bf16.mxu0 0
      %485 = vmatpush2.bf16.msra.mxu0 %v433
      %486 = vmatprep.subr.bf16.mxu0 0
      %487 = vmatpush2.bf16.msra.mxu0 %v432
      %488 = vmatprep.mubr.bf16.mxu0 %v353
      %489 = vmatmul.mubr.bf16.gmra.mxu0 %v352
      %v490 = vpop.f32.mrf.mxu0
      %v491 = vadd.f32 0.0, %v490
      %v492 = vpop.f32.mrf.mxu0
      %v493 = vpop.f32.mrf.mxu0
      %v494 = vadd.f32 0.0, %v493
      %v495 = vpop.f32.mrf.mxu0
      %496 = vmatprep.mubr.bf16.mxu0 %v355
      %497 = vmatmul.mubr.bf16.gmra.mxu0 %v354
      %v498 = vpop.f32.mrf.mxu0
      %v499 = vadd.f32 0.0, %v498
      %v500 = vpop.f32.mrf.mxu0
      %v501 = vpop.f32.mrf.mxu0
      %v502 = vadd.f32 0.0, %v501
      %v503 = vpop.f32.mrf.mxu0
      %504 = vdwg.mxu0
      %v505 = vadd.f32 %v300, %v491
      %v506 = vadd.f32 %v301, %v494
      %v507 = vadd.f32 %v302, %v499
      %v508 = vadd.f32 %v303, %v502
      %509 = vst [vmem:[%s282] sm:$0xff] %v505
      %510 = vst [vmem:[%s282 + $0x8] sm:$0xff] %v506
      %511 = vst [vmem:[%s282 + $0x10] sm:$0xff] %v507
      %512 = vst [vmem:[%s282 + $0x18] sm:$0xff] %v508
      // Predicated region
      $region33: #{netg_forward.11} parent=27 // pred_check
        %p513 = pneg %p292
      $region34: #{netg_forward.11} parent=27 // pred_check_branch
        %515 = sbr.rel (%p513) target = $region36
      $region35: #{netg_forward.11} parent=27 // pred_region
        %v516 = vld [vmem:[%s282] sm:$0xff]
        %v517 = vld [vmem:[%s282 + $0x8] sm:$0xff]
        %v518 = vld [vmem:[%s282 + $0x10] sm:$0xff]
        %v519 = vld [vmem:[%s282 + $0x18] sm:$0xff]
        %v520 = vadd.f32 %v516, %v517
        %v521 = vadd.f32 %v520, %v518
        %v522 = vadd.f32 %v521, %v519
        %v523 = vrot.slane %v522, 4
        %v524 = vadd.f32 %v522, %v523
        %v525 = vrot.slane %v524, 2
        %v526 = vadd.f32 %v524, %v525
        %v527 = vrot.slane %v526, 1
        %v528 = vadd.f32 %v526, %v527
        %v529 = vmul.f32 %v516, %v516
        %v530 = vmul.f32 %v517, %v517
        %v531 = vmul.f32 %v518, %v518
        %v532 = vmul.f32 %v519, %v519
        %v533 = vadd.f32 %v529, %v530
        %v534 = vadd.f32 %v533, %v531
        %v535 = vadd.f32 %v534, %v532
        %v536 = vrot.slane %v535, 4
        %v537 = vadd.f32 %v535, %v536
        %v538 = vrot.slane %v537, 2
        %v539 = vadd.f32 %v537, %v538
        %v540 = vrot.slane %v539, 1
        %v541 = vadd.f32 %v539, %v540
        %vm542 = vcmask 1040384
        %v543 = vsel %vm542, %v528, %v541
        %544 = vst [vmem:[%s290] sm:$0x3] %v543
      $region36: #{netg_forward.11} parent=27 // pred_fallthru
        _
      %s545 = smul.u32 4, %s21
      %p546 = scmp.lt.s32.totalorder %s20, 3
      %s547 = scalar_select %p546, %s20, 3
      %p548 = scmp.lt.s32.totalorder %s545, 3
      %s549 = scalar_select %p548, %s545, 3
      %s550 = smul.addr %s547, 4
      %s551 = sadd.s32 %s549, %s550
      %s552 = smul.addr %s551, 8
      %s553 = scalar_lea.vmem %s2, %s552
      %p554 = scmp.lt.s32.totalorder %s20, 3
      %s555 = scalar_select %p554, %s20, 3
      %p556 = scmp.lt.s32.totalorder %s21, 0
      %s557 = scalar_select %p556, %s21, 0
      %s558 = sadd.s32 %s557, %s555
      %s559 = smul.addr %s558, 2
      %s560 = scalar_lea.vmem %s3, %s559
      // Predicated region
      $region37: #{netg_forward.11} parent=27 // pred_check
        %p561 = pneg %p112
      $region38: #{netg_forward.11} parent=27 // pred_check_branch
        %563 = sbr.rel (%p561) target = $region40
      $region39: #{netg_forward.11} parent=27 // pred_region
        %s564 = smul.u32 4, %s21
      $region40: #{netg_forward.11} parent=27 // pred_fallthru
        _
      // Predicated region
      $region41: #{netg_forward.11} parent=27 // pred_check
        %p565 = pneg %p140
      $region42: #{netg_forward.11} parent=27 // pred_check_branch
        %567 = sbr.rel (%p565) target = $region44
      $region43: #{netg_forward.11} parent=27 // pred_region
        _
      $region44: #{netg_forward.11} parent=27 // pred_fallthru
        _
    $region28: #{netg_forward.11} parent=5 // pred_fallthru
      _
    %p568 = scmp.le.s32.totalorder 2, %s10
    // Predicated region
    $region45: #{netg_forward.11} parent=5 // pred_check
      %p569 = pneg %p568
    $region46: #{netg_forward.11} parent=5 // pred_check_branch
      %571 = sbr.rel (%p569) target = $region48
    $region47: #{netg_forward.11} parent=5 // pred_region
      %s572 = ssub.s32 %s10, 2
      // Predicated region
      $region49: #{netg_forward.11} parent=47 // pred_check
        %p573 = pneg %p118
      $region50: #{netg_forward.11} parent=47 // pred_check_branch
        %575 = sbr.rel (%p573) target = $region52
      $region51: #{netg_forward.11} parent=47 // pred_region
        %s576 = smul.u32 4, %s24
        %p577 = scmp.lt.s32.totalorder %s23, 3
        %s578 = scalar_select %p577, %s23, 3
        %p579 = scmp.lt.s32.totalorder %s576, 3
        %s580 = scalar_select %p579, %s576, 3
        %s581 = smul.addr %s578, 4
        %s582 = sadd.s32 %s580, %s581
        %s583 = smul.addr %s582, 8
        %s584 = scalar_lea.vmem %s2, %s583
      $region52: #{netg_forward.11} parent=47 // pred_fallthru
        _
      // Predicated region
      $region53: #{netg_forward.11} parent=47 // pred_check
        %p585 = pneg %p146
      $region54: #{netg_forward.11} parent=47 // pred_check_branch
        %587 = sbr.rel (%p585) target = $region56
      $region55: #{netg_forward.11} parent=47 // pred_region
        %p588 = scmp.lt.s32.totalorder %s23, 3
        %s589 = scalar_select %p588, %s23, 3
        %p590 = scmp.lt.s32.totalorder %s24, 0
        %s591 = scalar_select %p590, %s24, 0
        %s592 = sadd.s32 %s591, %s589
        %s593 = smul.addr %s592, 2
        %s594 = scalar_lea.vmem %s3, %s593
      $region56: #{netg_forward.11} parent=47 // pred_fallthru
        _
    $region48: #{netg_forward.11} parent=5 // pred_fallthru
      _
  $region6: #{netg_forward.11} parent=0 // loop_footer
    %s14 = sadd.s32 1, %s10
  $region7: #{netg_forward.11} parent=0 // loop_footer_branch
    %9 = sbr.rel target = $region3
  $region8: #{netg_forward.11} parent=0 // loop_exit
    _

// kernel: netg_forward.12
$region0: #{netg_forward.12}
  #allocation0 [shape = 'u32[]', space=smem, size = 0x4, offset = 0x4, fixed_abs, tag = 'smem constant byte address 0x4 - core index']
  #allocation1 [shape = 'u32[144,128]{1,0:T(1,128)}', space=vmem, size = 0x12000, scoped, tag = 'internal scratch']
  %s0 = inlined_call_operand.vmem [shape: f32[128,128], index: 0, kind: input, shape index: {}]
  %s1 = inlined_call_operand.vmem [shape: f32[1,128], index: 1, kind: input, shape index: {}]
  %s2 = inlined_call_operand.vmem [shape: f32[1,128], index: 2, kind: input, shape index: {}]
  %s3 = inlined_call_operand.vmem [shape: bf16[128,128], index: 3, kind: output, shape index: {}]
  %s4 = sld [smem:[#allocation0]]
  $region22: #{netg_forward.12} parent=0
    _
  %s6 = ssub.s32 1, %s4
  %s7 = scalar_select 0, %s6, %s4
  // Predicated region
  $region2: #{netg_forward.12} parent=0 // pred_check
    _
  $region3: #{netg_forward.12} parent=0 // pred_check_branch
    %9 = sbr.rel (0) target = $region5
  $region4: #{netg_forward.12} parent=0 // pred_region
    _
  $region5: #{netg_forward.12} parent=0 // pred_fallthru
    _
  // Predicated region
  $region6: #{netg_forward.12} parent=0 // pred_check
    _
  $region7: #{netg_forward.12} parent=0 // pred_check_branch
    %11 = sbr.rel (0) target = $region9
  $region8: #{netg_forward.12} parent=0 // pred_region
    _
  $region9: #{netg_forward.12} parent=0 // pred_fallthru
    _
  // Predicated region
  $region10: #{netg_forward.12} parent=0 // pred_check
    _
  $region11: #{netg_forward.12} parent=0 // pred_check_branch
    %13 = sbr.rel (0) target = $region13
  $region12: #{netg_forward.12} parent=0 // pred_region
    _
  $region13: #{netg_forward.12} parent=0 // pred_fallthru
    _
  %v14 = vld [vmem:[%s0] sm:$0xff]
  %v15 = vld [vmem:[%s0 + $0x8] sm:$0xff]
  %v16 = vld [vmem:[%s0 + $0x10] sm:$0xff]
  %v17 = vld [vmem:[%s0 + $0x18] sm:$0xff]
  %v18 = vld [vmem:[%s0 + $0x20] sm:$0xff]
  %v19 = vld [vmem:[%s0 + $0x28] sm:$0xff]
  %v20 = vld [vmem:[%s0 + $0x30] sm:$0xff]
  %v21 = vld [vmem:[%s0 + $0x38] sm:$0xff]
  %v22 = vld [vmem:[%s0 + $0x40] sm:$0xff]
  %v23 = vld [vmem:[%s0 + $0x48] sm:$0xff]
  %v24 = vld [vmem:[%s0 + $0x50] sm:$0xff]
  %v25 = vld [vmem:[%s0 + $0x58] sm:$0xff]
  %v26 = vld [vmem:[%s0 + $0x60] sm:$0xff]
  %v27 = vld [vmem:[%s0 + $0x68] sm:$0xff]
  %v28 = vld [vmem:[%s0 + $0x70] sm:$0xff]
  %v29 = vld [vmem:[%s0 + $0x78] sm:$0xff]
  %v30 = vld [vmem:[%s1] sm:$0x1]
  %v32 = vlaneseq
  %v33 = vshrl.u32 %v32, 7
  %v34 = vsub.s32 0, %v33
  %v35 = vrot.slane %v30, %v34
  %v37 = vmul.f32 %v14, %v35
  %v38 = vmul.f32 %v15, %v35
  %v39 = vmul.f32 %v16, %v35
  %v40 = vmul.f32 %v17, %v35
  %v41 = vmul.f32 %v18, %v35
  %v42 = vmul.f32 %v19, %v35
  %v43 = vmul.f32 %v20, %v35
  %v44 = vmul.f32 %v21, %v35
  %v45 = vmul.f32 %v22, %v35
  %v46 = vmul.f32 %v23, %v35
  %v47 = vmul.f32 %v24, %v35
  %v48 = vmul.f32 %v25, %v35
  %v49 = vmul.f32 %v26, %v35
  %v50 = vmul.f32 %v27, %v35
  %v51 = vmul.f32 %v28, %v35
  %v52 = vmul.f32 %v29, %v35
  %v53 = vld [vmem:[%s2] sm:$0x1]
  %v55 = vlaneseq
  %v56 = vshrl.u32 %v55, 7
  %v57 = vsub.s32 0, %v56
  %v58 = vrot.slane %v53, %v57
  %v60 = vadd.f32 %v37, %v58
  %v61 = vadd.f32 %v38, %v58
  %v62 = vadd.f32 %v39, %v58
  %v63 = vadd.f32 %v40, %v58
  %v64 = vadd.f32 %v41, %v58
  %v65 = vadd.f32 %v42, %v58
  %v66 = vadd.f32 %v43, %v58
  %v67 = vadd.f32 %v44, %v58
  %v68 = vadd.f32 %v45, %v58
  %v69 = vadd.f32 %v46, %v58
  %v70 = vadd.f32 %v47, %v58
  %v71 = vadd.f32 %v48, %v58
  %v72 = vadd.f32 %v49, %v58
  %v73 = vadd.f32 %v50, %v58
  %v74 = vadd.f32 %v51, %v58
  %v75 = vadd.f32 %v52, %v58
  %v76 = vmax.f32 %v60, 0.0
  %v77 = vmax.f32 %v61, 0.0
  %v78 = vmax.f32 %v62, 0.0
  %v79 = vmax.f32 %v63, 0.0
  %v80 = vmax.f32 %v64, 0.0
  %v81 = vmax.f32 %v65, 0.0
  %v82 = vmax.f32 %v66, 0.0
  %v83 = vmax.f32 %v67, 0.0
  %v84 = vmax.f32 %v68, 0.0
  %v85 = vmax.f32 %v69, 0.0
  %v86 = vmax.f32 %v70, 0.0
  %v87 = vmax.f32 %v71, 0.0
  %v88 = vmax.f32 %v72, 0.0
  %v89 = vmax.f32 %v73, 0.0
  %v90 = vmax.f32 %v74, 0.0
  %v91 = vmax.f32 %v75, 0.0
  %v92 = vpack.c.bf16 %v77, %v76
  %v93 = vpack.c.bf16 %v79, %v78
  %v94 = vpack.c.bf16 %v81, %v80
  %v95 = vpack.c.bf16 %v83, %v82
  %v96 = vpack.c.bf16 %v85, %v84
  %v97 = vpack.c.bf16 %v87, %v86
  %v98 = vpack.c.bf16 %v89, %v88
  %v99 = vpack.c.bf16 %v91, %v90
  %v108 = vunpack.c.l.b16 %v92
  %v109 = vunpack.c.h.b16 %v92
  %v110 = vunpack.c.l.b16 %v93
  %v111 = vunpack.c.h.b16 %v93
  %v112 = vunpack.c.l.b16 %v94
  %v113 = vunpack.c.h.b16 %v94
  %v114 = vunpack.c.l.b16 %v95
  %v115 = vunpack.c.h.b16 %v95
  %v116 = vunpack.c.l.b16 %v96
  %v117 = vunpack.c.h.b16 %v96
  %v118 = vunpack.c.l.b16 %v97
  %v119 = vunpack.c.h.b16 %v97
  %v120 = vunpack.c.l.b16 %v98
  %v121 = vunpack.c.h.b16 %v98
  %v122 = vunpack.c.l.b16 %v99
  %v123 = vunpack.c.h.b16 %v99
  %v124 = vpack.c.b16 %v108, %v108
  %v125 = vpack.c.b16 %v109, %v109
  %v126 = vpack.c.b16 %v110, %v110
  %v127 = vpack.c.b16 %v111, %v111
  %v128 = vpack.c.b16 %v112, %v112
  %v129 = vpack.c.b16 %v113, %v113
  %v130 = vpack.c.b16 %v114, %v114
  %v131 = vpack.c.b16 %v115, %v115
  %v132 = vpack.c.b16 %v116, %v116
  %v133 = vpack.c.b16 %v117, %v117
  %v134 = vpack.c.b16 %v118, %v118
  %v135 = vpack.c.b16 %v119, %v119
  %v136 = vpack.c.b16 %v120, %v120
  %v137 = vpack.c.b16 %v121, %v121
  %v138 = vpack.c.b16 %v122, %v122
  %v139 = vpack.c.b16 %v123, %v123
  %156 = vst [vmem:[%s3] sm:$0xf] %v124
  %157 = vst [vmem:[%s3 + $0x4] sm:$0xf] %v125
  %158 = vst [vmem:[%s3 + $0x8] sm:$0xf] %v126
  %159 = vst [vmem:[%s3 + $0xc] sm:$0xf] %v127
  %160 = vst [vmem:[%s3 + $0x10] sm:$0xf] %v128
  %161 = vst [vmem:[%s3 + $0x14] sm:$0xf] %v129
  %162 = vst [vmem:[%s3 + $0x18] sm:$0xf] %v130
  %163 = vst [vmem:[%s3 + $0x1c] sm:$0xf] %v131
  %164 = vst [vmem:[%s3 + $0x20] sm:$0xf] %v132
  %165 = vst [vmem:[%s3 + $0x24] sm:$0xf] %v133
  %166 = vst [vmem:[%s3 + $0x28] sm:$0xf] %v134
  %167 = vst [vmem:[%s3 + $0x2c] sm:$0xf] %v135
  %168 = vst [vmem:[%s3 + $0x30] sm:$0xf] %v136
  %169 = vst [vmem:[%s3 + $0x34] sm:$0xf] %v137
  %170 = vst [vmem:[%s3 + $0x38] sm:$0xf] %v138
  %171 = vst [vmem:[%s3 + $0x3c] sm:$0xf] %v139
  // Predicated region
  $region14: #{netg_forward.12} parent=0 // pred_check
    _
  $region15: #{netg_forward.12} parent=0 // pred_check_branch
    %173 = sbr.rel (0) target = $region17
  $region16: #{netg_forward.12} parent=0 // pred_region
    _
  $region17: #{netg_forward.12} parent=0 // pred_fallthru
    _
  // Predicated region
  $region18: #{netg_forward.12} parent=0 // pred_check
    _
  $region19: #{netg_forward.12} parent=0 // pred_check_branch
    %175 = sbr.rel (0) target = $region21
  $region20: #{netg_forward.12} parent=0 // pred_region
    _
  $region21: #{netg_forward.12} parent=0 // pred_fallthru
    _

// kernel: netg_forward.13
$region0: #{netg_forward.13}
  #allocation0 [shape = 'u32[]', space=smem, size = 0x4, offset = 0x4, fixed_abs, tag = 'smem constant byte address 0x4 - core index']
  #allocation1 [shape = 'u32[144,128]{1,0:T(1,128)}', space=vmem, size = 0x12000, scoped, tag = 'internal scratch']
  %s0 = inlined_call_operand.vmem [shape: bf16[4,128,128], index: 0, kind: input, shape index: {}]
  %s1 = inlined_call_operand.vmem [shape: bf16[4,128,128], index: 1, kind: input, shape index: {}]
  %s2 = inlined_call_operand.vmem [shape: f32[4,128,128], index: 2, kind: output, shape index: {0}]
  %s3 = inlined_call_operand.vmem [shape: f32[4,1,2,128], index: 3, kind: output, shape index: {1}]
  %4 = xla_tuple %s2, %s3
  %s5 = sld [smem:[#allocation0]]
  $region57: #{netg_forward.13} parent=0
    _
  %s7 = ssub.s32 1, %s5
  %s8 = scalar_select 0, %s7, %s5
  loop: start=0, step=1, limit=6
  $region2: #{netg_forward.13} parent=0 // loop_pre_header
    _
  $region3: #{netg_forward.13} parent=0 // loop_header
    %s10 = sphi 0, %s14
    %p11 = scmp.ge.s32.totalorder %s10, 6
    %s17 = sphi 0, %s36
    %s18 = sphi 0, %s32
    %s19 = sphi 0, %s28
    %s20 = sphi 0, %s17
    %s21 = sphi 0, %s18
    %s22 = sphi 0, %s19
    %s23 = sphi 0, %s20
    %s24 = sphi 0, %s21
    %s25 = sphi 0, %s22
    %s43 = sphi 0, %s45
    %s46 = sphi 0, %s43
    %s47 = sphi 0, %s46
    %s63 = sphi 0, %s47
    %s71 = sphi 0, %s73
    %s74 = sphi 0, %s71
    %s75 = sphi 0, %s74
    %s91 = sphi 0, %s75
    %s99 = sphi 0, %s101
    %s102 = sphi 0, %s99
    %s103 = sphi 0, %s102
    %s119 = sphi 0, %s103
    %s127 = sphi 0, %s129
    %s130 = sphi 0, %s127
    %s131 = sphi 0, %s130
    %s147 = sphi 0, %s131
  $region4: #{netg_forward.13} parent=0 // loop_header_branch
    %13 = sbr.rel (%p11) target = $region8
  $region5: #{netg_forward.13} parent=0 // loop_body
    %s15 = ssub.s32 %s10, 1
    %s16 = ssub.s32 %s10, 2
    %s26 = sadd.s32 1, %s19
    %p27 = scmp.ge.s32.totalorder %s26, 1
    %s28 = scalar_select %p27, 0, %s26
    %s29 = sadd.s32 1, %s18
    %s30 = scalar_select %p27, %s29, %s18
    %p31 = scmp.ge.s32.totalorder %s30, 1
    %s32 = scalar_select %p31, 0, %s30
    %s33 = sadd.s32 1, %s17
    %s34 = scalar_select %p31, %s33, %s17
    %p35 = scmp.ge.s32.totalorder %s34, 4
    %s36 = scalar_select %p35, 0, %s34
    %s37 = ssub.s32 %s17, %s36
    %s38 = ssub.s32 %s18, %s32
    %s39 = sor.u32 %s37, %s38
    %s40 = ssub.s32 %s19, %s28
    %s41 = sor.u32 %s39, %s40
    %p42 = scmp.eq.s32.totalorder %s41, 0
    %s44 = sadd.s32 %s43, 1
    %s45 = scalar_select %p42, %s43, %s44
    %p48 = pneg %p42
    %p49 = scmp.eq.s32.totalorder %s10, 3
    %p50 = por %p48, %p49
    %p51 = scmp.ne.s32.totalorder %s43, %s46
    %p52 = scmp.eq.s32.totalorder %s10, 0
    %p53 = por %p51, %p52
    %p54 = scmp.ne.s32.totalorder %s43, %s46
    %p55 = scmp.eq.s32.totalorder %s15, 3
    %p56 = por %p54, %p55
    %p57 = scmp.ne.s32.totalorder %s46, %s47
    %p58 = scmp.eq.s32.totalorder %s15, 0
    %p59 = por %p57, %p58
    %p60 = scmp.ne.s32.totalorder %s46, %s47
    %p61 = scmp.eq.s32.totalorder %s16, 3
    %p62 = por %p60, %p61
    %p64 = scmp.ne.s32.totalorder %s47, %s63
    %p65 = scmp.eq.s32.totalorder %s16, 0
    %p66 = por %p64, %p65
    %s67 = ssub.s32 %s17, %s36
    %s68 = ssub.s32 %s19, %s28
    %s69 = sor.u32 %s67, %s68
    %p70 = scmp.eq.s32.totalorder %s69, 0
    %s72 = sadd.s32 %s71, 1
    %s73 = scalar_select %p70, %s71, %s72
    %p76 = pneg %p70
    %p77 = scmp.eq.s32.totalorder %s10, 3
    %p78 = por %p76, %p77
    %p79 = scmp.ne.s32.totalorder %s71, %s74
    %p80 = scmp.eq.s32.totalorder %s10, 0
    %p81 = por %p79, %p80
    %p82 = scmp.ne.s32.totalorder %s71, %s74
    %p83 = scmp.eq.s32.totalorder %s15, 3
    %p84 = por %p82, %p83
    %p85 = scmp.ne.s32.totalorder %s74, %s75
    %p86 = scmp.eq.s32.totalorder %s15, 0
    %p87 = por %p85, %p86
    %p88 = scmp.ne.s32.totalorder %s74, %s75
    %p89 = scmp.eq.s32.totalorder %s16, 3
    %p90 = por %p88, %p89
    %p92 = scmp.ne.s32.totalorder %s75, %s91
    %p93 = scmp.eq.s32.totalorder %s16, 0
    %p94 = por %p92, %p93
    %s95 = ssub.s32 %s17, %s36
    %s96 = ssub.s32 %s18, %s32
    %s97 = sor.u32 %s95, %s96
    %p98 = scmp.eq.s32.totalorder %s97, 0
    %s100 = sadd.s32 %s99, 1
    %s101 = scalar_select %p98, %s99, %s100
    %p104 = pneg %p98
    %p105 = scmp.eq.s32.totalorder %s10, 3
    %p106 = por %p104, %p105
    %p107 = scmp.ne.s32.totalorder %s99, %s102
    %p108 = scmp.eq.s32.totalorder %s10, 0
    %p109 = por %p107, %p108
    %p110 = scmp.ne.s32.totalorder %s99, %s102
    %p111 = scmp.eq.s32.totalorder %s15, 3
    %p112 = por %p110, %p111
    %p113 = scmp.ne.s32.totalorder %s102, %s103
    %p114 = scmp.eq.s32.totalorder %s15, 0
    %p115 = por %p113, %p114
    %p116 = scmp.ne.s32.totalorder %s102, %s103
    %p117 = scmp.eq.s32.totalorder %s16, 3
    %p118 = por %p116, %p117
    %p120 = scmp.ne.s32.totalorder %s103, %s119
    %p121 = scmp.eq.s32.totalorder %s16, 0
    %p122 = por %p120, %p121
    %s123 = ssub.s32 %s17, %s36
    %s124 = ssub.s32 %s18, %s32
    %s125 = sor.u32 %s123, %s124
    %p126 = scmp.eq.s32.totalorder %s125, 0
    %s128 = sadd.s32 %s127, 1
    %s129 = scalar_select %p126, %s127, %s128
    %p132 = pneg %p126
    %p133 = scmp.eq.s32.totalorder %s10, 3
    %p134 = por %p132, %p133
    %p135 = scmp.ne.s32.totalorder %s127, %s130
    %p136 = scmp.eq.s32.totalorder %s10, 0
    %p137 = por %p135, %p136
    %p138 = scmp.ne.s32.totalorder %s127, %s130
    %p139 = scmp.eq.s32.totalorder %s15, 3
    %p140 = por %p138, %p139
    %p141 = scmp.ne.s32.totalorder %s130, %s131
    %p142 = scmp.eq.s32.totalorder %s15, 0
    %p143 = por %p141, %p142
    %p144 = scmp.ne.s32.totalorder %s130, %s131
    %p145 = scmp.eq.s32.totalorder %s16, 3
    %p146 = por %p144, %p145
    %p148 = scmp.ne.s32.totalorder %s131, %s147
    %p149 = scmp.eq.s32.totalorder %s16, 0
    %p150 = por %p148, %p149
    %p151 = scmp.le.s32.totalorder 1, %s10
    %p152 = scmp.lt.s32.totalorder %s10, 5
    %p153 = pnand %p151, %p152
    %p154 = pneg %p153
    // Predicated region
    $region9: #{netg_forward.13} parent=5 // pred_check
      _
    $region10: #{netg_forward.13} parent=5 // pred_check_branch
      %156 = sbr.rel (%p153) target = $region12
    $region11: #{netg_forward.13} parent=5 // pred_region
      %s157 = ssub.s32 %s10, 1
    $region12: #{netg_forward.13} parent=5 // pred_fallthru
      _
    %p158 = scmp.lt.s32.totalorder %s10, 4
    // Predicated region
    $region13: #{netg_forward.13} parent=5 // pred_check
      %p159 = pneg %p158
    $region14: #{netg_forward.13} parent=5 // pred_check_branch
      %161 = sbr.rel (%p159) target = $region16
    $region15: #{netg_forward.13} parent=5 // pred_region
      // Predicated region
      $region17: #{netg_forward.13} parent=15 // pred_check
        %p162 = pneg %p53
      $region18: #{netg_forward.13} parent=15 // pred_check_branch
        %164 = sbr.rel (%p162) target = $region20
      $region19: #{netg_forward.13} parent=15 // pred_region
        %s165 = smul.u32 16, %s18
        %p166 = scmp.lt.s32.totalorder %s17, 3
        %s167 = scalar_select %p166, %s17, 3
        %p168 = scmp.lt.s32.totalorder %s165, 15
        %s169 = scalar_select %p168, %s165, 15
        %p170 = scmp.lt.s32.totalorder %s19, 0
        %s171 = scalar_select %p170, %s19, 0
        %s172 = sadd.s32 %s171, %s169
        %s173 = smul.addr %s167, 16
        %s174 = sadd.s32 %s172, %s173
        %s175 = smul.addr %s174, 4
        %s176 = scalar_lea.vmem %s0, %s175
        %s177 = smul.u32 16, %s18
      $region20: #{netg_forward.13} parent=15 // pred_fallthru
        _
      // Predicated region
      $region21: #{netg_forward.13} parent=15 // pred_check
        %p178 = pneg %p81
      $region22: #{netg_forward.13} parent=15 // pred_check_branch
        %180 = sbr.rel (%p178) target = $region24
      $region23: #{netg_forward.13} parent=15 // pred_region
        %s181 = smul.u32 16, %s19
        %p182 = scmp.lt.s32.totalorder %s17, 3
        %s183 = scalar_select %p182, %s17, 3
        %p184 = scmp.lt.s32.totalorder %s181, 15
        %s185 = scalar_select %p184, %s181, 15
        %s186 = smul.addr %s183, 16
        %s187 = sadd.s32 %s185, %s186
        %s188 = smul.addr %s187, 4
        %s189 = scalar_lea.vmem %s1, %s188
        %s190 = smul.u32 16, %s19
      $region24: #{netg_forward.13} parent=15 // pred_fallthru
        _
    $region16: #{netg_forward.13} parent=5 // pred_fallthru
      _
    %p191 = scmp.le.s32.totalorder 1, %s10
    %p192 = scmp.lt.s32.totalorder %s10, 5
    %p193 = pnand %p191, %p192
    %p194 = pneg %p193
    // Predicated region
    $region25: #{netg_forward.13} parent=5 // pred_check
      _
    $region26: #{netg_forward.13} parent=5 // pred_check_branch
      %196 = sbr.rel (%p193) target = $region28
    $region27: #{netg_forward.13} parent=5 // pred_region
      %s197 = ssub.s32 %s10, 1
      %s198 = smul.u32 16, %s21
      %p199 = scmp.lt.s32.totalorder %s20, 3
      %s200 = scalar_select %p199, %s20, 3
      %p201 = scmp.lt.s32.totalorder %s198, 15
      %s202 = scalar_select %p201, %s198, 15
      %p203 = scmp.lt.s32.totalorder %s22, 0
      %s204 = scalar_select %p203, %s22, 0
      %s205 = sadd.s32 %s204, %s202
      %s206 = smul.addr %s200, 16
      %s207 = sadd.s32 %s205, %s206
      %s208 = smul.addr %s207, 4
      %s209 = scalar_lea.vmem %s0, %s208
      %p210 = pneg %p59
      %p211 = pneg %p56
      %s212 = smul.u32 16, %s22
      %p213 = scmp.lt.s32.totalorder %s20, 3
      %s214 = scalar_select %p213, %s20, 3
      %p215 = scmp.lt.s32.totalorder %s212, 15
      %s216 = scalar_select %p215, %s212, 15
      %s217 = smul.addr %s214, 16
      %s218 = sadd.s32 %s216, %s217
      %s219 = smul.addr %s218, 4
      %s220 = scalar_lea.vmem %s1, %s219
      %p221 = pneg %p87
      %p222 = pneg %p84
      %p223 = pneg %p115
      %p224 = pneg %p112
      %s225 = smul.u32 16, %s21
      %p226 = scmp.lt.s32.totalorder %s20, 3
      %s227 = scalar_select %p226, %s20, 3
      %p228 = scmp.lt.s32.totalorder %s225, 15
      %s229 = scalar_select %p228, %s225, 15
      %s230 = smul.addr %s227, 16
      %s231 = sadd.s32 %s229, %s230
      %s232 = smul.addr %s231, 8
      %s233 = scalar_lea.vmem %s2, %s232
      %p234 = pneg %p143
      %p235 = pneg %p140
      %p236 = scmp.lt.s32.totalorder %s20, 3
      %s237 = scalar_select %p236, %s20, 3
      %p238 = scmp.lt.s32.totalorder %s21, 0
      %s239 = scalar_select %p238, %s21, 0
      %s240 = sadd.s32 %s239, %s237
      %s241 = smul.addr %s240, 2
      %s242 = scalar_lea.vmem %s3, %s241
      %s243 = smul.u32 16, %s21
      %p244 = scmp.lt.s32.totalorder %s20, 3
      %s245 = scalar_select %p244, %s20, 3
      %p246 = scmp.lt.s32.totalorder %s243, 15
      %s247 = scalar_select %p246, %s243, 15
      %p248 = scmp.lt.s32.totalorder %s22, 0
      %s249 = scalar_select %p248, %s22, 0
      %s250 = sadd.s32 %s249, %s247
      %s251 = smul.addr %s245, 16
      %s252 = sadd.s32 %s250, %s251
      %s253 = smul.addr %s252, 4
      %s254 = scalar_lea.vmem %s0, %s253
      %s255 = smul.u32 16, %s21
      %s256 = smul.u32 16, %s22
      %p257 = scmp.lt.s32.totalorder %s20, 3
      %s258 = scalar_select %p257, %s20, 3
      %p259 = scmp.lt.s32.totalorder %s256, 15
      %s260 = scalar_select %p259, %s256, 15
      %s261 = smul.addr %s258, 16
      %s262 = sadd.s32 %s260, %s261
      %s263 = smul.addr %s262, 4
      %s264 = scalar_lea.vmem %s1, %s263
      %s265 = smul.u32 16, %s22
      %s266 = smul.u32 16, %s21
      %p267 = scmp.lt.s32.totalorder %s20, 3
      %s268 = scalar_select %p267, %s20, 3
      %p269 = scmp.lt.s32.totalorder %s266, 15
      %s270 = scalar_select %p269, %s266, 15
      %s271 = smul.addr %s268, 16
      %s272 = sadd.s32 %s270, %s271
      %s273 = smul.addr %s272, 8
      %s274 = scalar_lea.vmem %s2, %s273
      %s275 = smul.u32 16, %s21
      %p276 = scmp.lt.s32.totalorder %s20, 3
      %s277 = scalar_select %p276, %s20, 3
      %p278 = scmp.lt.s32.totalorder %s21, 0
      %s279 = scalar_select %p278, %s21, 0
      %s280 = sadd.s32 %s279, %s277
      %s281 = smul.addr %s280, 2
      %s282 = scalar_lea.vmem %s3, %s281
      %p284 = scmp.eq.s32.totalorder %s22, 0
      // Predicated region
      $region29: #{netg_forward.13} parent=27 // pred_check
        %p285 = pneg %p284
      $region30: #{netg_forward.13} parent=27 // pred_check_branch
        %287 = sbr.rel (%p285) target = $region32
      $region31: #{netg_forward.13} parent=27 // pred_region
        %288 = vst [vmem:[%s274] sm:$0xff] 0.0
        %289 = vst [vmem:[%s274 + $0x8] sm:$0xff] 0.0
        %290 = vst [vmem:[%s274 + $0x10] sm:$0xff] 0.0
        %291 = vst [vmem:[%s274 + $0x18] sm:$0xff] 0.0
        %292 = vst [vmem:[%s274 + $0x20] sm:$0xff] 0.0
        %293 = vst [vmem:[%s274 + $0x28] sm:$0xff] 0.0
        %294 = vst [vmem:[%s274 + $0x30] sm:$0xff] 0.0
        %295 = vst [vmem:[%s274 + $0x38] sm:$0xff] 0.0
        %296 = vst [vmem:[%s274 + $0x40] sm:$0xff] 0.0
        %297 = vst [vmem:[%s274 + $0x48] sm:$0xff] 0.0
        %298 = vst [vmem:[%s274 + $0x50] sm:$0xff] 0.0
        %299 = vst [vmem:[%s274 + $0x58] sm:$0xff] 0.0
        %300 = vst [vmem:[%s274 + $0x60] sm:$0xff] 0.0
        %301 = vst [vmem:[%s274 + $0x68] sm:$0xff] 0.0
        %302 = vst [vmem:[%s274 + $0x70] sm:$0xff] 0.0
        %303 = vst [vmem:[%s274 + $0x78] sm:$0xff] 0.0
      $region32: #{netg_forward.13} parent=27 // pred_fallthru
        _
      %v304 = vld [vmem:[%s274] sm:$0xff]
      %v305 = vld [vmem:[%s274 + $0x8] sm:$0xff]
      %v306 = vld [vmem:[%s274 + $0x10] sm:$0xff]
      %v307 = vld [vmem:[%s274 + $0x18] sm:$0xff]
      %v308 = vld [vmem:[%s274 + $0x20] sm:$0xff]
      %v309 = vld [vmem:[%s274 + $0x28] sm:$0xff]
      %v310 = vld [vmem:[%s274 + $0x30] sm:$0xff]
      %v311 = vld [vmem:[%s274 + $0x38] sm:$0xff]
      %v312 = vld [vmem:[%s274 + $0x40] sm:$0xff]
      %v313 = vld [vmem:[%s274 + $0x48] sm:$0xff]
      %v314 = vld [vmem:[%s274 + $0x50] sm:$0xff]
      %v315 = vld [vmem:[%s274 + $0x58] sm:$0xff]
      %v316 = vld [vmem:[%s274 + $0x60] sm:$0xff]
      %v317 = vld [vmem:[%s274 + $0x68] sm:$0xff]
      %v318 = vld [vmem:[%s274 + $0x70] sm:$0xff]
      %v319 = vld [vmem:[%s274 + $0x78] sm:$0xff]
      %v320 = vld [vmem:[%s254] sm:$0xf]
      %v321 = vld [vmem:[%s254 + $0x4] sm:$0xf]
      %v322 = vld [vmem:[%s254 + $0x8] sm:$0xf]
      %v323 = vld [vmem:[%s254 + $0xc] sm:$0xf]
      %v324 = vld [vmem:[%s254 + $0x10] sm:$0xf]
      %v325 = vld [vmem:[%s254 + $0x14] sm:$0xf]
      %v326 = vld [vmem:[%s254 + $0x18] sm:$0xf]
      %v327 = vld [vmem:[%s254 + $0x1c] sm:$0xf]
      %v328 = vld [vmem:[%s254 + $0x20] sm:$0xf]
      %v329 = vld [vmem:[%s254 + $0x24] sm:$0xf]
      %v330 = vld [vmem:[%s254 + $0x28] sm:$0xf]
      %v331 = vld [vmem:[%s254 + $0x2c] sm:$0xf]
      %v332 = vld [vmem:[%s254 + $0x30] sm:$0xf]
      %v333 = vld [vmem:[%s254 + $0x34] sm:$0xf]
      %v334 = vld [vmem:[%s254 + $0x38] sm:$0xf]
      %v335 = vld [vmem:[%s254 + $0x3c] sm:$0xf]
      %v336 = vld [vmem:[%s264] sm:$0xf]
      %v337 = vld [vmem:[%s264 + $0x4] sm:$0xf]
      %v338 = vld [vmem:[%s264 + $0x8] sm:$0xf]
      %v339 = vld [vmem:[%s264 + $0xc] sm:$0xf]
      %v340 = vld [vmem:[%s264 + $0x10] sm:$0xf]
      %v341 = vld [vmem:[%s264 + $0x14] sm:$0xf]
      %v342 = vld [vmem:[%s264 + $0x18] sm:$0xf]
      %v343 = vld [vmem:[%s264 + $0x1c] sm:$0xf]
      %v344 = vld [vmem:[%s264 + $0x20] sm:$0xf]
      %v345 = vld [vmem:[%s264 + $0x24] sm:$0xf]
      %v346 = vld [vmem:[%s264 + $0x28] sm:$0xf]
      %v347 = vld [vmem:[%s264 + $0x2c] sm:$0xf]
      %v348 = vld [vmem:[%s264 + $0x30] sm:$0xf]
      %v349 = vld [vmem:[%s264 + $0x34] sm:$0xf]
      %v350 = vld [vmem:[%s264 + $0x38] sm:$0xf]
      %v351 = vld [vmem:[%s264 + $0x3c] sm:$0xf]
      %v368 = vunpack.c.l.b16 %v320
      %v369 = vunpack.c.l.b16 %v321
      %v370 = vunpack.c.l.b16 %v322
      %v371 = vunpack.c.l.b16 %v323
      %v372 = vunpack.c.l.b16 %v324
      %v373 = vunpack.c.l.b16 %v325
      %v374 = vunpack.c.l.b16 %v326
      %v375 = vunpack.c.l.b16 %v327
      %v376 = vunpack.c.l.b16 %v328
      %v377 = vunpack.c.l.b16 %v329
      %v378 = vunpack.c.l.b16 %v330
      %v379 = vunpack.c.l.b16 %v331
      %v380 = vunpack.c.l.b16 %v332
      %v381 = vunpack.c.l.b16 %v333
      %v382 = vunpack.c.l.b16 %v334
      %v383 = vunpack.c.l.b16 %v335
      %v384 = vpack.c.b16 %v369, %v368
      %v385 = vpack.c.b16 %v371, %v370
      %v386 = vpack.c.b16 %v373, %v372
      %v387 = vpack.c.b16 %v375, %v374
      %v388 = vpack.c.b16 %v377, %v376
      %v389 = vpack.c.b16 %v379, %v378
      %v390 = vpack.c.b16 %v381, %v380
      %v391 = vpack.c.b16 %v383, %v382
      %v416 = vunpack.c.l.b16 %v336
      %v417 = vunpack.c.l.b16 %v337
      %v418 = vunpack.c.l.b16 %v338
      %v419 = vunpack.c.l.b16 %v339
      %v420 = vunpack.c.l.b16 %v340
      %v421 = vunpack.c.l.b16 %v341
      %v422 = vunpack.c.l.b16 %v342
      %v423 = vunpack.c.l.b16 %v343
      %v424 = vunpack.c.l.b16 %v344
      %v425 = vunpack.c.l.b16 %v345
      %v426 = vunpack.c.l.b16 %v346
      %v427 = vunpack.c.l.b16 %v347
      %v428 = vunpack.c.l.b16 %v348
      %v429 = vunpack.c.l.b16 %v349
      %v430 = vunpack.c.l.b16 %v350
      %v431 = vunpack.c.l.b16 %v351
      %v432 = vpack.c.b16 %v417, %v416
      %v433 = vpack.c.b16 %v419, %v418
      %v434 = vpack.c.b16 %v421, %v420
      %v435 = vpack.c.b16 %v423, %v422
      %v436 = vpack.c.b16 %v425, %v424
      %v437 = vpack.c.b16 %v427, %v426
      %v438 = vpack.c.b16 %v429, %v428
      %v439 = vpack.c.b16 %v431, %v430
      %448 = vmatprep.subr.bf16.mxu0 0
      %449 = vmatpush1.bf16.msra.mxu0 %v439
      %450 = vmatprep.subr.bf16.mxu0 0
      %451 = vmatpush1.bf16.msra.mxu0 %v438
      %452 = vmatprep.subr.bf16.mxu0 0
      %453 = vmatpush1.bf16.msra.mxu0 %v437
      %454 = vmatprep.subr.bf16.mxu0 0
      %455 = vmatpush1.bf16.msra.mxu0 %v436
      %456 = vmatprep.subr.bf16.mxu0 0
      %457 = vmatpush1.bf16.msra.mxu0 %v435
      %458 = vmatprep.subr.bf16.mxu0 0
      %459 = vmatpush1.bf16.msra.mxu0 %v434
      %460 = vmatprep.subr.bf16.mxu0 0
      %461 = vmatpush1.bf16.msra.mxu0 %v433
      %462 = vmatprep.subr.bf16.mxu0 0
      %463 = vmatpush1.bf16.msra.mxu0 %v432
      %464 = vmatprep.subr.bf16.mxu0 0
      %465 = vmatpush2.bf16.msra.mxu0 0
      %466 = vmatprep.subr.bf16.mxu0 0
      %467 = vmatpush2.bf16.msra.mxu0 0
      %468 = vmatprep.subr.bf16.mxu0 0
      %469 = vmatpush2.bf16.msra.mxu0 0
      %470 = vmatprep.subr.bf16.mxu0 0
      %471 = vmatpush2.bf16.msra.mxu0 0
      %472 = vmatprep.subr.bf16.mxu0 0
      %473 = vmatpush2.bf16.msra.mxu0 0
      %474 = vmatprep.subr.bf16.mxu0 0
      %475 = vmatpush2.bf16.msra.mxu0 0
      %476 = vmatprep.subr.bf16.mxu0 0
      %477 = vmatpush2.bf16.msra.mxu0 0
      %478 = vmatprep.subr.bf16.mxu0 0
      %479 = vmatpush2.bf16.msra.mxu0 0
      %480 = vmatprep.mubr.bf16.mxu0 0
      %481 = vmatmul.mubr.bf16.gmra.mxu0 %v384
      %v482 = vpop.f32.mrf.mxu0
      %v483 = vadd.f32 0.0, %v482
      %v484 = vpop.f32.mrf.mxu0
      %v485 = vpop.f32.mrf.mxu0
      %v486 = vadd.f32 0.0, %v485
      %v487 = vpop.f32.mrf.mxu0
      %488 = vmatprep.mubr.bf16.mxu0 0
      %489 = vmatmul.mubr.bf16.gmra.mxu0 %v385
      %v490 = vpop.f32.mrf.mxu0
      %v491 = vadd.f32 0.0, %v490
      %v492 = vpop.f32.mrf.mxu0
      %v493 = vpop.f32.mrf.mxu0
      %v494 = vadd.f32 0.0, %v493
      %v495 = vpop.f32.mrf.mxu0
      %496 = vmatprep.mubr.bf16.mxu0 0
      %497 = vmatmul.mubr.bf16.gmra.mxu0 %v386
      %v498 = vpop.f32.mrf.mxu0
      %v499 = vadd.f32 0.0, %v498
      %v500 = vpop.f32.mrf.mxu0
      %v501 = vpop.f32.mrf.mxu0
      %v502 = vadd.f32 0.0, %v501
      %v503 = vpop.f32.mrf.mxu0
      %504 = vmatprep.mubr.bf16.mxu0 0
      %505 = vmatmul.mubr.bf16.gmra.mxu0 %v387
      %v506 = vpop.f32.mrf.mxu0
      %v507 = vadd.f32 0.0, %v506
      %v508 = vpop.f32.mrf.mxu0
      %v509 = vpop.f32.mrf.mxu0
      %v510 = vadd.f32 0.0, %v509
      %v511 = vpop.f32.mrf.mxu0
      %512 = vmatprep.mubr.bf16.mxu0 0
      %513 = vmatmul.mubr.bf16.gmra.mxu0 %v388
      %v514 = vpop.f32.mrf.mxu0
      %v515 = vadd.f32 0.0, %v514
      %v516 = vpop.f32.mrf.mxu0
      %v517 = vpop.f32.mrf.mxu0
      %v518 = vadd.f32 0.0, %v517
      %v519 = vpop.f32.mrf.mxu0
      %520 = vmatprep.mubr.bf16.mxu0 0
      %521 = vmatmul.mubr.bf16.gmra.mxu0 %v389
      %v522 = vpop.f32.mrf.mxu0
      %v523 = vadd.f32 0.0, %v522
      %v524 = vpop.f32.mrf.mxu0
      %v525 = vpop.f32.mrf.mxu0
      %v526 = vadd.f32 0.0, %v525
      %v527 = vpop.f32.mrf.mxu0
      %528 = vmatprep.mubr.bf16.mxu0 0
      %529 = vmatmul.mubr.bf16.gmra.mxu0 %v390
      %v530 = vpop.f32.mrf.mxu0
      %v531 = vadd.f32 0.0, %v530
      %v532 = vpop.f32.mrf.mxu0
      %v533 = vpop.f32.mrf.mxu0
      %v534 = vadd.f32 0.0, %v533
      %v535 = vpop.f32.mrf.mxu0
      %536 = vmatprep.mubr.bf16.mxu0 0
      %537 = vmatmul.mubr.bf16.gmra.mxu0 %v391
      %v538 = vpop.f32.mrf.mxu0
      %v539 = vadd.f32 0.0, %v538
      %v540 = vpop.f32.mrf.mxu0
      %v541 = vpop.f32.mrf.mxu0
      %v542 = vadd.f32 0.0, %v541
      %v543 = vpop.f32.mrf.mxu0
      %544 = vdwg.mxu0
      %v545 = vadd.f32 %v304, %v483
      %v546 = vadd.f32 %v305, %v486
      %v547 = vadd.f32 %v306, %v491
      %v548 = vadd.f32 %v307, %v494
      %v549 = vadd.f32 %v308, %v499
      %v550 = vadd.f32 %v309, %v502
      %v551 = vadd.f32 %v310, %v507
      %v552 = vadd.f32 %v311, %v510
      %v553 = vadd.f32 %v312, %v515
      %v554 = vadd.f32 %v313, %v518
      %v555 = vadd.f32 %v314, %v523
      %v556 = vadd.f32 %v315, %v526
      %v557 = vadd.f32 %v316, %v531
      %v558 = vadd.f32 %v317, %v534
      %v559 = vadd.f32 %v318, %v539
      %v560 = vadd.f32 %v319, %v542
      %561 = vst [vmem:[%s274] sm:$0xff] %v545
      %562 = vst [vmem:[%s274 + $0x8] sm:$0xff] %v546
      %563 = vst [vmem:[%s274 + $0x10] sm:$0xff] %v547
      %564 = vst [vmem:[%s274 + $0x18] sm:$0xff] %v548
      %565 = vst [vmem:[%s274 + $0x20] sm:$0xff] %v549
      %566 = vst [vmem:[%s274 + $0x28] sm:$0xff] %v550
      %567 = vst [vmem:[%s274 + $0x30] sm:$0xff] %v551
      %568 = vst [vmem:[%s274 + $0x38] sm:$0xff] %v552
      %569 = vst [vmem:[%s274 + $0x40] sm:$0xff] %v553
      %570 = vst [vmem:[%s274 + $0x48] sm:$0xff] %v554
      %571 = vst [vmem:[%s274 + $0x50] sm:$0xff] %v555
      %572 = vst [vmem:[%s274 + $0x58] sm:$0xff] %v556
      %573 = vst [vmem:[%s274 + $0x60] sm:$0xff] %v557
      %574 = vst [vmem:[%s274 + $0x68] sm:$0xff] %v558
      %575 = vst [vmem:[%s274 + $0x70] sm:$0xff] %v559
      %576 = vst [vmem:[%s274 + $0x78] sm:$0xff] %v560
      // Predicated region
      $region33: #{netg_forward.13} parent=27 // pred_check
        %p577 = pneg %p284
      $region34: #{netg_forward.13} parent=27 // pred_check_branch
        %579 = sbr.rel (%p577) target = $region36
      $region35: #{netg_forward.13} parent=27 // pred_region
        %v580 = vld [vmem:[%s274] sm:$0xff]
        %v581 = vld [vmem:[%s274 + $0x8] sm:$0xff]
        %v582 = vld [vmem:[%s274 + $0x10] sm:$0xff]
        %v583 = vld [vmem:[%s274 + $0x18] sm:$0xff]
        %v584 = vld [vmem:[%s274 + $0x20] sm:$0xff]
        %v585 = vld [vmem:[%s274 + $0x28] sm:$0xff]
        %v586 = vld [vmem:[%s274 + $0x30] sm:$0xff]
        %v587 = vld [vmem:[%s274 + $0x38] sm:$0xff]
        %v588 = vld [vmem:[%s274 + $0x40] sm:$0xff]
        %v589 = vld [vmem:[%s274 + $0x48] sm:$0xff]
        %v590 = vld [vmem:[%s274 + $0x50] sm:$0xff]
        %v591 = vld [vmem:[%s274 + $0x58] sm:$0xff]
        %v592 = vld [vmem:[%s274 + $0x60] sm:$0xff]
        %v593 = vld [vmem:[%s274 + $0x68] sm:$0xff]
        %v594 = vld [vmem:[%s274 + $0x70] sm:$0xff]
        %v595 = vld [vmem:[%s274 + $0x78] sm:$0xff]
        %v596 = vadd.f32 %v580, %v581
        %v597 = vadd.f32 %v596, %v582
        %v598 = vadd.f32 %v597, %v583
        %v599 = vadd.f32 %v598, %v584
        %v600 = vadd.f32 %v599, %v585
        %v601 = vadd.f32 %v600, %v586
        %v602 = vadd.f32 %v601, %v587
        %v603 = vadd.f32 %v602, %v588
        %v604 = vadd.f32 %v603, %v589
        %v605 = vadd.f32 %v604, %v590
        %v606 = vadd.f32 %v605, %v591
        %v607 = vadd.f32 %v606, %v592
        %v608 = vadd.f32 %v607, %v593
        %v609 = vadd.f32 %v608, %v594
        %v610 = vadd.f32 %v609, %v595
        %v611 = vrot.slane %v610, 4
        %v612 = vadd.f32 %v610, %v611
        %v613 = vrot.slane %v612, 2
        %v614 = vadd.f32 %v612, %v613
        %v615 = vrot.slane %v614, 1
        %v616 = vadd.f32 %v614, %v615
        %v617 = vmul.f32 %v580, %v580
        %v618 = vmul.f32 %v581, %v581
        %v619 = vmul.f32 %v582, %v582
        %v620 = vmul.f32 %v583, %v583
        %v621 = vmul.f32 %v584, %v584
        %v622 = vmul.f32 %v585, %v585
        %v623 = vmul.f32 %v586, %v586
        %v624 = vmul.f32 %v587, %v587
        %v625 = vmul.f32 %v588, %v588
        %v626 = vmul.f32 %v589, %v589
        %v627 = vmul.f32 %v590, %v590
        %v628 = vmul.f32 %v591, %v591
        %v629 = vmul.f32 %v592, %v592
        %v630 = vmul.f32 %v593, %v593
        %v631 = vmul.f32 %v594, %v594
        %v632 = vmul.f32 %v595, %v595
        %v633 = vadd.f32 %v617, %v618
        %v634 = vadd.f32 %v633, %v619
        %v635 = vadd.f32 %v634, %v620
        %v636 = vadd.f32 %v635, %v621
        %v637 = vadd.f32 %v636, %v622
        %v638 = vadd.f32 %v637, %v623
        %v639 = vadd.f32 %v638, %v624
        %v640 = vadd.f32 %v639, %v625
        %v641 = vadd.f32 %v640, %v626
        %v642 = vadd.f32 %v641, %v627
        %v643 = vadd.f32 %v642, %v628
        %v644 = vadd.f32 %v643, %v629
        %v645 = vadd.f32 %v644, %v630
        %v646 = vadd.f32 %v645, %v631
        %v647 = vadd.f32 %v646, %v632
        %v648 = vrot.slane %v647, 4
        %v649 = vadd.f32 %v647, %v648
        %v650 = vrot.slane %v649, 2
        %v651 = vadd.f32 %v649, %v650
        %v652 = vrot.slane %v651, 1
        %v653 = vadd.f32 %v651, %v652
        %vm654 = vcmask 1040384
        %v655 = vsel %vm654, %v616, %v653
        %656 = vst [vmem:[%s282] sm:$0x3] %v655
      $region36: #{netg_forward.13} parent=27 // pred_fallthru
        _
      %s657 = smul.u32 16, %s21
      %p658 = scmp.lt.s32.totalorder %s20, 3
      %s659 = scalar_select %p658, %s20, 3
      %p660 = scmp.lt.s32.totalorder %s657, 15
      %s661 = scalar_select %p660, %s657, 15
      %s662 = smul.addr %s659, 16
      %s663 = sadd.s32 %s661, %s662
      %s664 = smul.addr %s663, 8
      %s665 = scalar_lea.vmem %s2, %s664
      %p666 = scmp.lt.s32.totalorder %s20, 3
      %s667 = scalar_select %p666, %s20, 3
      %p668 = scmp.lt.s32.totalorder %s21, 0
      %s669 = scalar_select %p668, %s21, 0
      %s670 = sadd.s32 %s669, %s667
      %s671 = smul.addr %s670, 2
      %s672 = scalar_lea.vmem %s3, %s671
      // Predicated region
      $region37: #{netg_forward.13} parent=27 // pred_check
        %p673 = pneg %p112
      $region38: #{netg_forward.13} parent=27 // pred_check_branch
        %675 = sbr.rel (%p673) target = $region40
      $region39: #{netg_forward.13} parent=27 // pred_region
        %s676 = smul.u32 16, %s21
      $region40: #{netg_forward.13} parent=27 // pred_fallthru
        _
      // Predicated region
      $region41: #{netg_forward.13} parent=27 // pred_check
        %p677 = pneg %p140
      $region42: #{netg_forward.13} parent=27 // pred_check_branch
        %679 = sbr.rel (%p677) target = $region44
      $region43: #{netg_forward.13} parent=27 // pred_region
        _
      $region44: #{netg_forward.13} parent=27 // pred_fallthru
        _
    $region28: #{netg_forward.13} parent=5 // pred_fallthru
      _
    %p680 = scmp.le.s32.totalorder 2, %s10
    // Predicated region
    $region45: #{netg_forward.13} parent=5 // pred_check
      %p681 = pneg %p680
    $region46: #{netg_forward.13} parent=5 // pred_check_branch
      %683 = sbr.rel (%p681) target = $region48
    $region47: #{netg_forward.13} parent=5 // pred_region
      %s684 = ssub.s32 %s10, 2
      // Predicated region
      $region49: #{netg_forward.13} parent=47 // pred_check
        %p685 = pneg %p118
      $region50: #{netg_forward.13} parent=47 // pred_check_branch
        %687 = sbr.rel (%p685) target = $region52
      $region51: #{netg_forward.13} parent=47 // pred_region
        %s688 = smul.u32 16, %s24
        %p689 = scmp.lt.s32.totalorder %s23, 3
        %s690 = scalar_select %p689, %s23, 3
        %p691 = scmp.lt.s32.totalorder %s688, 15
        %s692 = scalar_select %p691, %s688, 15
        %s693 = smul.addr %s690, 16
        %s694 = sadd.s32 %s692, %s693
        %s695 = smul.addr %s694, 8
        %s696 = scalar_lea.vmem %s2, %s695
      $region52: #{netg_forward.13} parent=47 // pred_fallthru
        _
      // Predicated region
      $region53: #{netg_forward.13} parent=47 // pred_check
        %p697 = pneg %p146
      $region54: #{netg_forward.13} parent=47 // pred_check_branch
        %699 = sbr.rel (%p697) target = $region56
      $region55: #{netg_forward.13} parent=47 // pred_region
        %p700 = scmp.lt.s32.totalorder %s23, 3
        %s701 = scalar_select %p700, %s23, 3
        %p702 = scmp.lt.s32.totalorder %s24, 0
        %s703 = scalar_select %p702, %s24, 0
        %s704 = sadd.s32 %s703, %s701
        %s705 = smul.addr %s704, 2
        %s706 = scalar_lea.vmem %s3, %s705
      $region56: #{netg_forward.13} parent=47 // pred_fallthru
        _
    $region48: #{netg_forward.13} parent=5 // pred_fallthru
      _
  $region6: #{netg_forward.13} parent=0 // loop_footer
    %s14 = sadd.s32 1, %s10
  $region7: #{netg_forward.13} parent=0 // loop_footer_branch
    %9 = sbr.rel target = $region3
  $region8: #{netg_forward.13} parent=0 // loop_exit
    _

// kernel: netg_forward.14
$region0: #{netg_forward.14}
  #allocation0 [shape = 'u32[]', space=smem, size = 0x4, offset = 0x4, fixed_abs, tag = 'smem constant byte address 0x4 - core index']
  #allocation1 [shape = 'u32[144,128]{1,0:T(1,128)}', space=vmem, size = 0x12000, scoped, tag = 'internal scratch']
  %s0 = inlined_call_operand.vmem [shape: f32[512,128], index: 0, kind: input, shape index: {}]
  %s1 = inlined_call_operand.vmem [shape: f32[1,128], index: 1, kind: input, shape index: {}]
  %s2 = inlined_call_operand.vmem [shape: f32[1,128], index: 2, kind: input, shape index: {}]
  %s3 = inlined_call_operand.vmem [shape: bf16[512,128], index: 3, kind: output, shape index: {}]
  %s4 = sld [smem:[#allocation0]]
  $region22: #{netg_forward.14} parent=0
    _
  %s6 = ssub.s32 1, %s4
  %s7 = scalar_select 0, %s6, %s4
  // Predicated region
  $region2: #{netg_forward.14} parent=0 // pred_check
    _
  $region3: #{netg_forward.14} parent=0 // pred_check_branch
    %9 = sbr.rel (0) target = $region5
  $region4: #{netg_forward.14} parent=0 // pred_region
    _
  $region5: #{netg_forward.14} parent=0 // pred_fallthru
    _
  // Predicated region
  $region6: #{netg_forward.14} parent=0 // pred_check
    _
  $region7: #{netg_forward.14} parent=0 // pred_check_branch
    %11 = sbr.rel (0) target = $region9
  $region8: #{netg_forward.14} parent=0 // pred_region
    _
  $region9: #{netg_forward.14} parent=0 // pred_fallthru
    _
  // Predicated region
  $region10: #{netg_forward.14} parent=0 // pred_check
    _
  $region11: #{netg_forward.14} parent=0 // pred_check_branch
    %13 = sbr.rel (0) target = $region13
  $region12: #{netg_forward.14} parent=0 // pred_region
    _
  $region13: #{netg_forward.14} parent=0 // pred_fallthru
    _
  %v14 = vld [vmem:[%s0] sm:$0xff]
  %v15 = vld [vmem:[%s0 + $0x8] sm:$0xff]
  %v16 = vld [vmem:[%s0 + $0x10] sm:$0xff]
  %v17 = vld [vmem:[%s0 + $0x18] sm:$0xff]
  %v18 = vld [vmem:[%s0 + $0x20] sm:$0xff]
  %v19 = vld [vmem:[%s0 + $0x28] sm:$0xff]
  %v20 = vld [vmem:[%s0 + $0x30] sm:$0xff]
  %v21 = vld [vmem:[%s0 + $0x38] sm:$0xff]
  %v22 = vld [vmem:[%s0 + $0x40] sm:$0xff]
  %v23 = vld [vmem:[%s0 + $0x48] sm:$0xff]
  %v24 = vld [vmem:[%s0 + $0x50] sm:$0xff]
  %v25 = vld [vmem:[%s0 + $0x58] sm:$0xff]
  %v26 = vld [vmem:[%s0 + $0x60] sm:$0xff]
  %v27 = vld [vmem:[%s0 + $0x68] sm:$0xff]
  %v28 = vld [vmem:[%s0 + $0x70] sm:$0xff]
  %v29 = vld [vmem:[%s0 + $0x78] sm:$0xff]
  %v30 = vld [vmem:[%s0 + $0x80] sm:$0xff]
  %v31 = vld [vmem:[%s0 + $0x88] sm:$0xff]
  %v32 = vld [vmem:[%s0 + $0x90] sm:$0xff]
  %v33 = vld [vmem:[%s0 + $0x98] sm:$0xff]
  %v34 = vld [vmem:[%s0 + $0xa0] sm:$0xff]
  %v35 = vld [vmem:[%s0 + $0xa8] sm:$0xff]
  %v36 = vld [vmem:[%s0 + $0xb0] sm:$0xff]
  %v37 = vld [vmem:[%s0 + $0xb8] sm:$0xff]
  %v38 = vld [vmem:[%s0 + $0xc0] sm:$0xff]
  %v39 = vld [vmem:[%s0 + $0xc8] sm:$0xff]
  %v40 = vld [vmem:[%s0 + $0xd0] sm:$0xff]
  %v41 = vld [vmem:[%s0 + $0xd8] sm:$0xff]
  %v42 = vld [vmem:[%s0 + $0xe0] sm:$0xff]
  %v43 = vld [vmem:[%s0 + $0xe8] sm:$0xff]
  %v44 = vld [vmem:[%s0 + $0xf0] sm:$0xff]
  %v45 = vld [vmem:[%s0 + $0xf8] sm:$0xff]
  %v46 = vld [vmem:[%s0 + $0x100] sm:$0xff]
  %v47 = vld [vmem:[%s0 + $0x108] sm:$0xff]
  %v48 = vld [vmem:[%s0 + $0x110] sm:$0xff]
  %v49 = vld [vmem:[%s0 + $0x118] sm:$0xff]
  %v50 = vld [vmem:[%s0 + $0x120] sm:$0xff]
  %v51 = vld [vmem:[%s0 + $0x128] sm:$0xff]
  %v52 = vld [vmem:[%s0 + $0x130] sm:$0xff]
  %v53 = vld [vmem:[%s0 + $0x138] sm:$0xff]
  %v54 = vld [vmem:[%s0 + $0x140] sm:$0xff]
  %v55 = vld [vmem:[%s0 + $0x148] sm:$0xff]
  %v56 = vld [vmem:[%s0 + $0x150] sm:$0xff]
  %v57 = vld [vmem:[%s0 + $0x158] sm:$0xff]
  %v58 = vld [vmem:[%s0 + $0x160] sm:$0xff]
  %v59 = vld [vmem:[%s0 + $0x168] sm:$0xff]
  %v60 = vld [vmem:[%s0 + $0x170] sm:$0xff]
  %v61 = vld [vmem:[%s0 + $0x178] sm:$0xff]
  %v62 = vld [vmem:[%s0 + $0x180] sm:$0xff]
  %v63 = vld [vmem:[%s0 + $0x188] sm:$0xff]
  %v64 = vld [vmem:[%s0 + $0x190] sm:$0xff]
  %v65 = vld [vmem:[%s0 + $0x198] sm:$0xff]
  %v66 = vld [vmem:[%s0 + $0x1a0] sm:$0xff]
  %v67 = vld [vmem:[%s0 + $0x1a8] sm:$0xff]
  %v68 = vld [vmem:[%s0 + $0x1b0] sm:$0xff]
  %v69 = vld [vmem:[%s0 + $0x1b8] sm:$0xff]
  %v70 = vld [vmem:[%s0 + $0x1c0] sm:$0xff]
  %v71 = vld [vmem:[%s0 + $0x1c8] sm:$0xff]
  %v72 = vld [vmem:[%s0 + $0x1d0] sm:$0xff]
  %v73 = vld [vmem:[%s0 + $0x1d8] sm:$0xff]
  %v74 = vld [vmem:[%s0 + $0x1e0] sm:$0xff]
  %v75 = vld [vmem:[%s0 + $0x1e8] sm:$0xff]
  %v76 = vld [vmem:[%s0 + $0x1f0] sm:$0xff]
  %v77 = vld [vmem:[%s0 + $0x1f8] sm:$0xff]
  %v78 = vld [vmem:[%s1] sm:$0x1]
  %v80 = vlaneseq
  %v81 = vshrl.u32 %v80, 7
  %v82 = vsub.s32 0, %v81
  %v83 = vrot.slane %v78, %v82
  %v85 = vmul.f32 %v14, %v83
  %v86 = vmul.f32 %v15, %v83
  %v87 = vmul.f32 %v16, %v83
  %v88 = vmul.f32 %v17, %v83
  %v89 = vmul.f32 %v18, %v83
  %v90 = vmul.f32 %v19, %v83
  %v91 = vmul.f32 %v20, %v83
  %v92 = vmul.f32 %v21, %v83
  %v93 = vmul.f32 %v22, %v83
  %v94 = vmul.f32 %v23, %v83
  %v95 = vmul.f32 %v24, %v83
  %v96 = vmul.f32 %v25, %v83
  %v97 = vmul.f32 %v26, %v83
  %v98 = vmul.f32 %v27, %v83
  %v99 = vmul.f32 %v28, %v83
  %v100 = vmul.f32 %v29, %v83
  %v101 = vmul.f32 %v30, %v83
  %v102 = vmul.f32 %v31, %v83
  %v103 = vmul.f32 %v32, %v83
  %v104 = vmul.f32 %v33, %v83
  %v105 = vmul.f32 %v34, %v83
  %v106 = vmul.f32 %v35, %v83
  %v107 = vmul.f32 %v36, %v83
  %v108 = vmul.f32 %v37, %v83
  %v109 = vmul.f32 %v38, %v83
  %v110 = vmul.f32 %v39, %v83
  %v111 = vmul.f32 %v40, %v83
  %v112 = vmul.f32 %v41, %v83
  %v113 = vmul.f32 %v42, %v83
  %v114 = vmul.f32 %v43, %v83
  %v115 = vmul.f32 %v44, %v83
  %v116 = vmul.f32 %v45, %v83
  %v117 = vmul.f32 %v46, %v83
  %v118 = vmul.f32 %v47, %v83
  %v119 = vmul.f32 %v48, %v83
  %v120 = vmul.f32 %v49, %v83
  %v121 = vmul.f32 %v50, %v83
  %v122 = vmul.f32 %v51, %v83
  %v123 = vmul.f32 %v52, %v83
  %v124 = vmul.f32 %v53, %v83
  %v125 = vmul.f32 %v54, %v83
  %v126 = vmul.f32 %v55, %v83
  %v127 = vmul.f32 %v56, %v83
  %v128 = vmul.f32 %v57, %v83
  %v129 = vmul.f32 %v58, %v83
  %v130 = vmul.f32 %v59, %v83
  %v131 = vmul.f32 %v60, %v83
  %v132 = vmul.f32 %v61, %v83
  %v133 = vmul.f32 %v62, %v83
  %v134 = vmul.f32 %v63, %v83
  %v135 = vmul.f32 %v64, %v83
  %v136 = vmul.f32 %v65, %v83
  %v137 = vmul.f32 %v66, %v83
  %v138 = vmul.f32 %v67, %v83
  %v139 = vmul.f32 %v68, %v83
  %v140 = vmul.f32 %v69, %v83
  %v141 = vmul.f32 %v70, %v83
  %v142 = vmul.f32 %v71, %v83
  %v143 = vmul.f32 %v72, %v83
  %v144 = vmul.f32 %v73, %v83
  %v145 = vmul.f32 %v74, %v83
  %v146 = vmul.f32 %v75, %v83
  %v147 = vmul.f32 %v76, %v83
  %v148 = vmul.f32 %v77, %v83
  %v149 = vld [vmem:[%s2] sm:$0x1]
  %v151 = vlaneseq
  %v152 = vshrl.u32 %v151, 7
  %v153 = vsub.s32 0, %v152
  %v154 = vrot.slane %v149, %v153
  %v156 = vadd.f32 %v85, %v154
  %v157 = vadd.f32 %v86, %v154
  %v158 = vadd.f32 %v87, %v154
  %v159 = vadd.f32 %v88, %v154
  %v160 = vadd.f32 %v89, %v154
  %v161 = vadd.f32 %v90, %v154
  %v162 = vadd.f32 %v91, %v154
  %v163 = vadd.f32 %v92, %v154
  %v164 = vadd.f32 %v93, %v154
  %v165 = vadd.f32 %v94, %v154
  %v166 = vadd.f32 %v95, %v154
  %v167 = vadd.f32 %v96, %v154
  %v168 = vadd.f32 %v97, %v154
  %v169 = vadd.f32 %v98, %v154
  %v170 = vadd.f32 %v99, %v154
  %v171 = vadd.f32 %v100, %v154
  %v172 = vadd.f32 %v101, %v154
  %v173 = vadd.f32 %v102, %v154
  %v174 = vadd.f32 %v103, %v154
  %v175 = vadd.f32 %v104, %v154
  %v176 = vadd.f32 %v105, %v154
  %v177 = vadd.f32 %v106, %v154
  %v178 = vadd.f32 %v107, %v154
  %v179 = vadd.f32 %v108, %v154
  %v180 = vadd.f32 %v109, %v154
  %v181 = vadd.f32 %v110, %v154
  %v182 = vadd.f32 %v111, %v154
  %v183 = vadd.f32 %v112, %v154
  %v184 = vadd.f32 %v113, %v154
  %v185 = vadd.f32 %v114, %v154
  %v186 = vadd.f32 %v115, %v154
  %v187 = vadd.f32 %v116, %v154
  %v188 = vadd.f32 %v117, %v154
  %v189 = vadd.f32 %v118, %v154
  %v190 = vadd.f32 %v119, %v154
  %v191 = vadd.f32 %v120, %v154
  %v192 = vadd.f32 %v121, %v154
  %v193 = vadd.f32 %v122, %v154
  %v194 = vadd.f32 %v123, %v154
  %v195 = vadd.f32 %v124, %v154
  %v196 = vadd.f32 %v125, %v154
  %v197 = vadd.f32 %v126, %v154
  %v198 = vadd.f32 %v127, %v154
  %v199 = vadd.f32 %v128, %v154
  %v200 = vadd.f32 %v129, %v154
  %v201 = vadd.f32 %v130, %v154
  %v202 = vadd.f32 %v131, %v154
  %v203 = vadd.f32 %v132, %v154
  %v204 = vadd.f32 %v133, %v154
  %v205 = vadd.f32 %v134, %v154
  %v206 = vadd.f32 %v135, %v154
  %v207 = vadd.f32 %v136, %v154
  %v208 = vadd.f32 %v137, %v154
  %v209 = vadd.f32 %v138, %v154
  %v210 = vadd.f32 %v139, %v154
  %v211 = vadd.f32 %v140, %v154
  %v212 = vadd.f32 %v141, %v154
  %v213 = vadd.f32 %v142, %v154
  %v214 = vadd.f32 %v143, %v154
  %v215 = vadd.f32 %v144, %v154
  %v216 = vadd.f32 %v145, %v154
  %v217 = vadd.f32 %v146, %v154
  %v218 = vadd.f32 %v147, %v154
  %v219 = vadd.f32 %v148, %v154
  %v220 = vmax.f32 %v156, 0.0
  %v221 = vmax.f32 %v157, 0.0
  %v222 = vmax.f32 %v158, 0.0
  %v223 = vmax.f32 %v159, 0.0
  %v224 = vmax.f32 %v160, 0.0
  %v225 = vmax.f32 %v161, 0.0
  %v226 = vmax.f32 %v162, 0.0
  %v227 = vmax.f32 %v163, 0.0
  %v228 = vmax.f32 %v164, 0.0
  %v229 = vmax.f32 %v165, 0.0
  %v230 = vmax.f32 %v166, 0.0
  %v231 = vmax.f32 %v167, 0.0
  %v232 = vmax.f32 %v168, 0.0
  %v233 = vmax.f32 %v169, 0.0
  %v234 = vmax.f32 %v170, 0.0
  %v235 = vmax.f32 %v171, 0.0
  %v236 = vmax.f32 %v172, 0.0
  %v237 = vmax.f32 %v173, 0.0
  %v238 = vmax.f32 %v174, 0.0
  %v239 = vmax.f32 %v175, 0.0
  %v240 = vmax.f32 %v176, 0.0
  %v241 = vmax.f32 %v177, 0.0
  %v242 = vmax.f32 %v178, 0.0
  %v243 = vmax.f32 %v179, 0.0
  %v244 = vmax.f32 %v180, 0.0
  %v245 = vmax.f32 %v181, 0.0
  %v246 = vmax.f32 %v182, 0.0
  %v247 = vmax.f32 %v183, 0.0
  %v248 = vmax.f32 %v184, 0.0
  %v249 = vmax.f32 %v185, 0.0
  %v250 = vmax.f32 %v186, 0.0
  %v251 = vmax.f32 %v187, 0.0
  %v252 = vmax.f32 %v188, 0.0
  %v253 = vmax.f32 %v189, 0.0
  %v254 = vmax.f32 %v190, 0.0
  %v255 = vmax.f32 %v191, 0.0
  %v256 = vmax.f32 %v192, 0.0
  %v257 = vmax.f32 %v193, 0.0
  %v258 = vmax.f32 %v194, 0.0
  %v259 = vmax.f32 %v195, 0.0
  %v260 = vmax.f32 %v196, 0.0
  %v261 = vmax.f32 %v197, 0.0
  %v262 = vmax.f32 %v198, 0.0
  %v263 = vmax.f32 %v199, 0.0
  %v264 = vmax.f32 %v200, 0.0
  %v265 = vmax.f32 %v201, 0.0
  %v266 = vmax.f32 %v202, 0.0
  %v267 = vmax.f32 %v203, 0.0
  %v268 = vmax.f32 %v204, 0.0
  %v269 = vmax.f32 %v205, 0.0
  %v270 = vmax.f32 %v206, 0.0
  %v271 = vmax.f32 %v207, 0.0
  %v272 = vmax.f32 %v208, 0.0
  %v273 = vmax.f32 %v209, 0.0
  %v274 = vmax.f32 %v210, 0.0
  %v275 = vmax.f32 %v211, 0.0
  %v276 = vmax.f32 %v212, 0.0
  %v277 = vmax.f32 %v213, 0.0
  %v278 = vmax.f32 %v214, 0.0
  %v279 = vmax.f32 %v215, 0.0
  %v280 = vmax.f32 %v216, 0.0
  %v281 = vmax.f32 %v217, 0.0
  %v282 = vmax.f32 %v218, 0.0
  %v283 = vmax.f32 %v219, 0.0
  %v284 = vpack.c.bf16 %v221, %v220
  %v285 = vpack.c.bf16 %v223, %v222
  %v286 = vpack.c.bf16 %v225, %v224
  %v287 = vpack.c.bf16 %v227, %v226
  %v288 = vpack.c.bf16 %v229, %v228
  %v289 = vpack.c.bf16 %v231, %v230
  %v290 = vpack.c.bf16 %v233, %v232
  %v291 = vpack.c.bf16 %v235, %v234
  %v292 = vpack.c.bf16 %v237, %v236
  %v293 = vpack.c.bf16 %v239, %v238
  %v294 = vpack.c.bf16 %v241, %v240
  %v295 = vpack.c.bf16 %v243, %v242
  %v296 = vpack.c.bf16 %v245, %v244
  %v297 = vpack.c.bf16 %v247, %v246
  %v298 = vpack.c.bf16 %v249, %v248
  %v299 = vpack.c.bf16 %v251, %v250
  %v300 = vpack.c.bf16 %v253, %v252
  %v301 = vpack.c.bf16 %v255, %v254
  %v302 = vpack.c.bf16 %v257, %v256
  %v303 = vpack.c.bf16 %v259, %v258
  %v304 = vpack.c.bf16 %v261, %v260
  %v305 = vpack.c.bf16 %v263, %v262
  %v306 = vpack.c.bf16 %v265, %v264
  %v307 = vpack.c.bf16 %v267, %v266
  %v308 = vpack.c.bf16 %v269, %v268
  %v309 = vpack.c.bf16 %v271, %v270
  %v310 = vpack.c.bf16 %v273, %v272
  %v311 = vpack.c.bf16 %v275, %v274
  %v312 = vpack.c.bf16 %v277, %v276
  %v313 = vpack.c.bf16 %v279, %v278
  %v314 = vpack.c.bf16 %v281, %v280
  %v315 = vpack.c.bf16 %v283, %v282
  %v348 = vunpack.c.l.b16 %v284
  %v349 = vunpack.c.h.b16 %v284
  %v350 = vunpack.c.l.b16 %v285
  %v351 = vunpack.c.h.b16 %v285
  %v352 = vunpack.c.l.b16 %v286
  %v353 = vunpack.c.h.b16 %v286
  %v354 = vunpack.c.l.b16 %v287
  %v355 = vunpack.c.h.b16 %v287
  %v356 = vunpack.c.l.b16 %v288
  %v357 = vunpack.c.h.b16 %v288
  %v358 = vunpack.c.l.b16 %v289
  %v359 = vunpack.c.h.b16 %v289
  %v360 = vunpack.c.l.b16 %v290
  %v361 = vunpack.c.h.b16 %v290
  %v362 = vunpack.c.l.b16 %v291
  %v363 = vunpack.c.h.b16 %v291
  %v364 = vunpack.c.l.b16 %v292
  %v365 = vunpack.c.h.b16 %v292
  %v366 = vunpack.c.l.b16 %v293
  %v367 = vunpack.c.h.b16 %v293
  %v368 = vunpack.c.l.b16 %v294
  %v369 = vunpack.c.h.b16 %v294
  %v370 = vunpack.c.l.b16 %v295
  %v371 = vunpack.c.h.b16 %v295
  %v372 = vunpack.c.l.b16 %v296
  %v373 = vunpack.c.h.b16 %v296
  %v374 = vunpack.c.l.b16 %v297
  %v375 = vunpack.c.h.b16 %v297
  %v376 = vunpack.c.l.b16 %v298
  %v377 = vunpack.c.h.b16 %v298
  %v378 = vunpack.c.l.b16 %v299
  %v379 = vunpack.c.h.b16 %v299
  %v380 = vunpack.c.l.b16 %v300
  %v381 = vunpack.c.h.b16 %v300
  %v382 = vunpack.c.l.b16 %v301
  %v383 = vunpack.c.h.b16 %v301
  %v384 = vunpack.c.l.b16 %v302
  %v385 = vunpack.c.h.b16 %v302
  %v386 = vunpack.c.l.b16 %v303
  %v387 = vunpack.c.h.b16 %v303
  %v388 = vunpack.c.l.b16 %v304
  %v389 = vunpack.c.h.b16 %v304
  %v390 = vunpack.c.l.b16 %v305
  %v391 = vunpack.c.h.b16 %v305
  %v392 = vunpack.c.l.b16 %v306
  %v393 = vunpack.c.h.b16 %v306
  %v394 = vunpack.c.l.b16 %v307
  %v395 = vunpack.c.h.b16 %v307
  %v396 = vunpack.c.l.b16 %v308
  %v397 = vunpack.c.h.b16 %v308
  %v398 = vunpack.c.l.b16 %v309
  %v399 = vunpack.c.h.b16 %v309
  %v400 = vunpack.c.l.b16 %v310
  %v401 = vunpack.c.h.b16 %v310
  %v402 = vunpack.c.l.b16 %v311
  %v403 = vunpack.c.h.b16 %v311
  %v404 = vunpack.c.l.b16 %v312
  %v405 = vunpack.c.h.b16 %v312
  %v406 = vunpack.c.l.b16 %v313
  %v407 = vunpack.c.h.b16 %v313
  %v408 = vunpack.c.l.b16 %v314
  %v409 = vunpack.c.h.b16 %v314
  %v410 = vunpack.c.l.b16 %v315
  %v411 = vunpack.c.h.b16 %v315
  %v412 = vpack.c.b16 %v348, %v348
  %v413 = vpack.c.b16 %v349, %v349
  %v414 = vpack.c.b16 %v350, %v350
  %v415 = vpack.c.b16 %v351, %v351
  %v416 = vpack.c.b16 %v352, %v352
  %v417 = vpack.c.b16 %v353, %v353
  %v418 = vpack.c.b16 %v354, %v354
  %v419 = vpack.c.b16 %v355, %v355
  %v420 = vpack.c.b16 %v356, %v356
  %v421 = vpack.c.b16 %v357, %v357
  %v422 = vpack.c.b16 %v358, %v358
  %v423 = vpack.c.b16 %v359, %v359
  %v424 = vpack.c.b16 %v360, %v360
  %v425 = vpack.c.b16 %v361, %v361
  %v426 = vpack.c.b16 %v362, %v362
  %v427 = vpack.c.b16 %v363, %v363
  %v428 = vpack.c.b16 %v364, %v364
  %v429 = vpack.c.b16 %v365, %v365
  %v430 = vpack.c.b16 %v366, %v366
  %v431 = vpack.c.b16 %v367, %v367
  %v432 = vpack.c.b16 %v368, %v368
  %v433 = vpack.c.b16 %v369, %v369
  %v434 = vpack.c.b16 %v370, %v370
  %v435 = vpack.c.b16 %v371, %v371
  %v436 = vpack.c.b16 %v372, %v372
  %v437 = vpack.c.b16 %v373, %v373
  %v438 = vpack.c.b16 %v374, %v374
  %v439 = vpack.c.b16 %v375, %v375
  %v440 = vpack.c.b16 %v376, %v376
  %v441 = vpack.c.b16 %v377, %v377
  %v442 = vpack.c.b16 %v378, %v378
  %v443 = vpack.c.b16 %v379, %v379
  %v444 = vpack.c.b16 %v380, %v380
  %v445 = vpack.c.b16 %v381, %v381
  %v446 = vpack.c.b16 %v382, %v382
  %v447 = vpack.c.b16 %v383, %v383
  %v448 = vpack.c.b16 %v384, %v384
  %v449 = vpack.c.b16 %v385, %v385
  %v450 = vpack.c.b16 %v386, %v386
  %v451 = vpack.c.b16 %v387, %v387
  %v452 = vpack.c.b16 %v388, %v388
  %v453 = vpack.c.b16 %v389, %v389
  %v454 = vpack.c.b16 %v390, %v390
  %v455 = vpack.c.b16 %v391, %v391
  %v456 = vpack.c.b16 %v392, %v392
  %v457 = vpack.c.b16 %v393, %v393
  %v458 = vpack.c.b16 %v394, %v394
  %v459 = vpack.c.b16 %v395, %v395
  %v460 = vpack.c.b16 %v396, %v396
  %v461 = vpack.c.b16 %v397, %v397
  %v462 = vpack.c.b16 %v398, %v398
  %v463 = vpack.c.b16 %v399, %v399
  %v464 = vpack.c.b16 %v400, %v400
  %v465 = vpack.c.b16 %v401, %v401
  %v466 = vpack.c.b16 %v402, %v402
  %v467 = vpack.c.b16 %v403, %v403
  %v468 = vpack.c.b16 %v404, %v404
  %v469 = vpack.c.b16 %v405, %v405
  %v470 = vpack.c.b16 %v406, %v406
  %v471 = vpack.c.b16 %v407, %v407
  %v472 = vpack.c.b16 %v408, %v408
  %v473 = vpack.c.b16 %v409, %v409
  %v474 = vpack.c.b16 %v410, %v410
  %v475 = vpack.c.b16 %v411, %v411
  %540 = vst [vmem:[%s3] sm:$0xf] %v412
  %541 = vst [vmem:[%s3 + $0x4] sm:$0xf] %v413
  %542 = vst [vmem:[%s3 + $0x8] sm:$0xf] %v414
  %543 = vst [vmem:[%s3 + $0xc] sm:$0xf] %v415
  %544 = vst [vmem:[%s3 + $0x10] sm:$0xf] %v416
  %545 = vst [vmem:[%s3 + $0x14] sm:$0xf] %v417
  %546 = vst [vmem:[%s3 + $0x18] sm:$0xf] %v418
  %547 = vst [vmem:[%s3 + $0x1c] sm:$0xf] %v419
  %548 = vst [vmem:[%s3 + $0x20] sm:$0xf] %v420
  %549 = vst [vmem:[%s3 + $0x24] sm:$0xf] %v421
  %550 = vst [vmem:[%s3 + $0x28] sm:$0xf] %v422
  %551 = vst [vmem:[%s3 + $0x2c] sm:$0xf] %v423
  %552 = vst [vmem:[%s3 + $0x30] sm:$0xf] %v424
  %553 = vst [vmem:[%s3 + $0x34] sm:$0xf] %v425
  %554 = vst [vmem:[%s3 + $0x38] sm:$0xf] %v426
  %555 = vst [vmem:[%s3 + $0x3c] sm:$0xf] %v427
  %556 = vst [vmem:[%s3 + $0x40] sm:$0xf] %v428
  %557 = vst [vmem:[%s3 + $0x44] sm:$0xf] %v429
  %558 = vst [vmem:[%s3 + $0x48] sm:$0xf] %v430
  %559 = vst [vmem:[%s3 + $0x4c] sm:$0xf] %v431
  %560 = vst [vmem:[%s3 + $0x50] sm:$0xf] %v432
  %561 = vst [vmem:[%s3 + $0x54] sm:$0xf] %v433
  %562 = vst [vmem:[%s3 + $0x58] sm:$0xf] %v434
  %563 = vst [vmem:[%s3 + $0x5c] sm:$0xf] %v435
  %564 = vst [vmem:[%s3 + $0x60] sm:$0xf] %v436
  %565 = vst [vmem:[%s3 + $0x64] sm:$0xf] %v437
  %566 = vst [vmem:[%s3 + $0x68] sm:$0xf] %v438
  %567 = vst [vmem:[%s3 + $0x6c] sm:$0xf] %v439
  %568 = vst [vmem:[%s3 + $0x70] sm:$0xf] %v440
  %569 = vst [vmem:[%s3 + $0x74] sm:$0xf] %v441
  %570 = vst [vmem:[%s3 + $0x78] sm:$0xf] %v442
  %571 = vst [vmem:[%s3 + $0x7c] sm:$0xf] %v443
  %572 = vst [vmem:[%s3 + $0x80] sm:$0xf] %v444
  %573 = vst [vmem:[%s3 + $0x84] sm:$0xf] %v445
  %574 = vst [vmem:[%s3 + $0x88] sm:$0xf] %v446
  %575 = vst [vmem:[%s3 + $0x8c] sm:$0xf] %v447
  %576 = vst [vmem:[%s3 + $0x90] sm:$0xf] %v448
  %577 = vst [vmem:[%s3 + $0x94] sm:$0xf] %v449
  %578 = vst [vmem:[%s3 + $0x98] sm:$0xf] %v450
  %579 = vst [vmem:[%s3 + $0x9c] sm:$0xf] %v451
  %580 = vst [vmem:[%s3 + $0xa0] sm:$0xf] %v452
  %581 = vst [vmem:[%s3 + $0xa4] sm:$0xf] %v453
  %582 = vst [vmem:[%s3 + $0xa8] sm:$0xf] %v454
  %583 = vst [vmem:[%s3 + $0xac] sm:$0xf] %v455
  %584 = vst [vmem:[%s3 + $0xb0] sm:$0xf] %v456
  %585 = vst [vmem:[%s3 + $0xb4] sm:$0xf] %v457
  %586 = vst [vmem:[%s3 + $0xb8] sm:$0xf] %v458
  %587 = vst [vmem:[%s3 + $0xbc] sm:$0xf] %v459
  %588 = vst [vmem:[%s3 + $0xc0] sm:$0xf] %v460
  %589 = vst [vmem:[%s3 + $0xc4] sm:$0xf] %v461
  %590 = vst [vmem:[%s3 + $0xc8] sm:$0xf] %v462
  %591 = vst [vmem:[%s3 + $0xcc] sm:$0xf] %v463
  %592 = vst [vmem:[%s3 + $0xd0] sm:$0xf] %v464
  %593 = vst [vmem:[%s3 + $0xd4] sm:$0xf] %v465
  %594 = vst [vmem:[%s3 + $0xd8] sm:$0xf] %v466
  %595 = vst [vmem:[%s3 + $0xdc] sm:$0xf] %v467
  %596 = vst [vmem:[%s3 + $0xe0] sm:$0xf] %v468
  %597 = vst [vmem:[%s3 + $0xe4] sm:$0xf] %v469
  %598 = vst [vmem:[%s3 + $0xe8] sm:$0xf] %v470
  %599 = vst [vmem:[%s3 + $0xec] sm:$0xf] %v471
  %600 = vst [vmem:[%s3 + $0xf0] sm:$0xf] %v472
  %601 = vst [vmem:[%s3 + $0xf4] sm:$0xf] %v473
  %602 = vst [vmem:[%s3 + $0xf8] sm:$0xf] %v474
  %603 = vst [vmem:[%s3 + $0xfc] sm:$0xf] %v475
  // Predicated region
  $region14: #{netg_forward.14} parent=0 // pred_check
    _
  $region15: #{netg_forward.14} parent=0 // pred_check_branch
    %605 = sbr.rel (0) target = $region17
  $region16: #{netg_forward.14} parent=0 // pred_region
    _
  $region17: #{netg_forward.14} parent=0 // pred_fallthru
    _
  // Predicated region
  $region18: #{netg_forward.14} parent=0 // pred_check
    _
  $region19: #{netg_forward.14} parent=0 // pred_check_branch
    %607 = sbr.rel (0) target = $region21
  $region20: #{netg_forward.14} parent=0 // pred_region
    _
  $region21: #{netg_forward.14} parent=0 // pred_fallthru
    _

// kernel: netg_forward.16
$region0: #{netg_forward.16}
  #allocation0 [shape = 'u32[]', space=smem, size = 0x4, offset = 0x4, fixed_abs, tag = 'smem constant byte address 0x4 - core index']
  #allocation1 [shape = 'u32[144,128]{1,0:T(1,128)}', space=vmem, size = 0x12000, scoped, tag = 'internal scratch']
  %s0 = inlined_call_operand.vmem [shape: f32[2048,128], index: 0, kind: input, shape index: {}]
  %s1 = inlined_call_operand.vmem [shape: f32[1,128], index: 1, kind: input, shape index: {}]
  %s2 = inlined_call_operand.vmem [shape: f32[1,128], index: 2, kind: input, shape index: {}]
  %s3 = inlined_call_operand.vmem [shape: bf16[2048,128], index: 3, kind: output, shape index: {}]
  %s4 = sld [smem:[#allocation0]]
  $region45: #{netg_forward.16} parent=0
    _
  %s6 = ssub.s32 1, %s4
  %s7 = scalar_select 0, %s6, %s4
  loop: start=0, step=1, limit=6
  $region2: #{netg_forward.16} parent=0 // loop_pre_header
    _
  $region3: #{netg_forward.16} parent=0 // loop_header
    %s9 = sphi 0, %s13
    %p10 = scmp.ge.s32.totalorder %s9, 6
    %s19 = sphi 0, %s21
    %s22 = sphi 0, %s19
    %s23 = sphi 0, %s22
    %s39 = sphi 0, %s23
    %s43 = sphi 0, %s43
    %s45 = sphi 0, %s43
    %s46 = sphi 0, %s45
    %s60 = sphi 0, %s46
    %s64 = sphi 0, %s64
    %s66 = sphi 0, %s64
    %s67 = sphi 0, %s66
    %s81 = sphi 0, %s67
    %s87 = sphi 0, %s89
    %s90 = sphi 0, %s87
    %s91 = sphi 0, %s90
    %s107 = sphi 0, %s91
  $region4: #{netg_forward.16} parent=0 // loop_header_branch
    %12 = sbr.rel (%p10) target = $region8
  $region5: #{netg_forward.16} parent=0 // loop_body
    %s14 = ssub.s32 %s9, 1
    %s15 = ssub.s32 %s9, 2
    %s16 = sadd.s32 %s9, 1
    %s17 = ssub.s32 %s9, %s16
    %p18 = scmp.eq.s32.totalorder %s17, 0
    %s20 = sadd.s32 %s19, 1
    %s21 = scalar_select %p18, %s19, %s20
    %p24 = pneg %p18
    %p25 = scmp.eq.s32.totalorder %s9, 3
    %p26 = por %p24, %p25
    %p27 = scmp.ne.s32.totalorder %s19, %s22
    %p28 = scmp.eq.s32.totalorder %s9, 0
    %p29 = por %p27, %p28
    %p30 = scmp.ne.s32.totalorder %s19, %s22
    %p31 = scmp.eq.s32.totalorder %s14, 3
    %p32 = por %p30, %p31
    %p33 = scmp.ne.s32.totalorder %s22, %s23
    %p34 = scmp.eq.s32.totalorder %s14, 0
    %p35 = por %p33, %p34
    %p36 = scmp.ne.s32.totalorder %s22, %s23
    %p37 = scmp.eq.s32.totalorder %s15, 3
    %p38 = por %p36, %p37
    %p40 = scmp.ne.s32.totalorder %s23, %s39
    %p41 = scmp.eq.s32.totalorder %s15, 0
    %p42 = por %p40, %p41
    %s44 = sadd.s32 %s43, 1
    %p47 = scmp.eq.s32.totalorder %s9, 3
    %p48 = scmp.ne.s32.totalorder %s43, %s45
    %p49 = scmp.eq.s32.totalorder %s9, 0
    %p50 = por %p48, %p49
    %p51 = scmp.ne.s32.totalorder %s43, %s45
    %p52 = scmp.eq.s32.totalorder %s14, 3
    %p53 = por %p51, %p52
    %p54 = scmp.ne.s32.totalorder %s45, %s46
    %p55 = scmp.eq.s32.totalorder %s14, 0
    %p56 = por %p54, %p55
    %p57 = scmp.ne.s32.totalorder %s45, %s46
    %p58 = scmp.eq.s32.totalorder %s15, 3
    %p59 = por %p57, %p58
    %p61 = scmp.ne.s32.totalorder %s46, %s60
    %p62 = scmp.eq.s32.totalorder %s15, 0
    %p63 = por %p61, %p62
    %s65 = sadd.s32 %s64, 1
    %p68 = scmp.eq.s32.totalorder %s9, 3
    %p69 = scmp.ne.s32.totalorder %s64, %s66
    %p70 = scmp.eq.s32.totalorder %s9, 0
    %p71 = por %p69, %p70
    %p72 = scmp.ne.s32.totalorder %s64, %s66
    %p73 = scmp.eq.s32.totalorder %s14, 3
    %p74 = por %p72, %p73
    %p75 = scmp.ne.s32.totalorder %s66, %s67
    %p76 = scmp.eq.s32.totalorder %s14, 0
    %p77 = por %p75, %p76
    %p78 = scmp.ne.s32.totalorder %s66, %s67
    %p79 = scmp.eq.s32.totalorder %s15, 3
    %p80 = por %p78, %p79
    %p82 = scmp.ne.s32.totalorder %s67, %s81
    %p83 = scmp.eq.s32.totalorder %s15, 0
    %p84 = por %p82, %p83
    %s85 = ssub.s32 %s9, %s16
    %p86 = scmp.eq.s32.totalorder %s85, 0
    %s88 = sadd.s32 %s87, 1
    %s89 = scalar_select %p86, %s87, %s88
    %p92 = pneg %p86
    %p93 = scmp.eq.s32.totalorder %s9, 3
    %p94 = por %p92, %p93
    %p95 = scmp.ne.s32.totalorder %s87, %s90
    %p96 = scmp.eq.s32.totalorder %s9, 0
    %p97 = por %p95, %p96
    %p98 = scmp.ne.s32.totalorder %s87, %s90
    %p99 = scmp.eq.s32.totalorder %s14, 3
    %p100 = por %p98, %p99
    %p101 = scmp.ne.s32.totalorder %s90, %s91
    %p102 = scmp.eq.s32.totalorder %s14, 0
    %p103 = por %p101, %p102
    %p104 = scmp.ne.s32.totalorder %s90, %s91
    %p105 = scmp.eq.s32.totalorder %s15, 3
    %p106 = por %p104, %p105
    %p108 = scmp.ne.s32.totalorder %s91, %s107
    %p109 = scmp.eq.s32.totalorder %s15, 0
    %p110 = por %p108, %p109
    %p111 = scmp.le.s32.totalorder 1, %s9
    %p112 = scmp.lt.s32.totalorder %s9, 5
    %p113 = pnand %p111, %p112
    %p114 = pneg %p113
    // Predicated region
    $region9: #{netg_forward.16} parent=5 // pred_check
      _
    $region10: #{netg_forward.16} parent=5 // pred_check_branch
      %116 = sbr.rel (%p113) target = $region12
    $region11: #{netg_forward.16} parent=5 // pred_region
      %s117 = ssub.s32 %s9, 1
      // Predicated region
      $region13: #{netg_forward.16} parent=11 // pred_check
        %p118 = pneg %p56
      $region14: #{netg_forward.16} parent=11 // pred_check_branch
        %120 = sbr.rel (%p118) target = $region16
      $region15: #{netg_forward.16} parent=11 // pred_region
        _
      $region16: #{netg_forward.16} parent=11 // pred_fallthru
        _
      // Predicated region
      $region17: #{netg_forward.16} parent=11 // pred_check
        %p121 = pneg %p77
      $region18: #{netg_forward.16} parent=11 // pred_check_branch
        %123 = sbr.rel (%p121) target = $region20
      $region19: #{netg_forward.16} parent=11 // pred_region
        _
      $region20: #{netg_forward.16} parent=11 // pred_fallthru
        _
    $region12: #{netg_forward.16} parent=5 // pred_fallthru
      _
    %p124 = scmp.lt.s32.totalorder %s9, 4
    // Predicated region
    $region21: #{netg_forward.16} parent=5 // pred_check
      %p125 = pneg %p124
    $region22: #{netg_forward.16} parent=5 // pred_check_branch
      %127 = sbr.rel (%p125) target = $region24
    $region23: #{netg_forward.16} parent=5 // pred_region
      // Predicated region
      $region25: #{netg_forward.16} parent=23 // pred_check
        %p128 = pneg %p29
      $region26: #{netg_forward.16} parent=23 // pred_check_branch
        %130 = sbr.rel (%p128) target = $region28
      $region27: #{netg_forward.16} parent=23 // pred_region
        %s131 = smul.u32 64, %s9
        %p132 = scmp.lt.s32.totalorder %s131, 255
        %s133 = scalar_select %p132, %s131, 255
        %s134 = smul.addr %s133, 8
        %s135 = scalar_lea.vmem %s0, %s134
        %s136 = smul.u32 64, %s9
      $region28: #{netg_forward.16} parent=23 // pred_fallthru
        _
    $region24: #{netg_forward.16} parent=5 // pred_fallthru
      _
    %p137 = scmp.le.s32.totalorder 1, %s9
    %p138 = scmp.lt.s32.totalorder %s9, 5
    %p139 = pnand %p137, %p138
    %p140 = pneg %p139
    // Predicated region
    $region29: #{netg_forward.16} parent=5 // pred_check
      _
    $region30: #{netg_forward.16} parent=5 // pred_check_branch
      %142 = sbr.rel (%p139) target = $region32
    $region31: #{netg_forward.16} parent=5 // pred_region
      %s143 = ssub.s32 %s9, 1
      %s144 = smul.u32 64, %s14
      %p145 = scmp.lt.s32.totalorder %s144, 255
      %s146 = scalar_select %p145, %s144, 255
      %s147 = smul.addr %s146, 8
      %s148 = scalar_lea.vmem %s0, %s147
      %p149 = pneg %p35
      %p150 = pneg %p32
      %p151 = pneg %p56
      %p152 = pneg %p53
      %p153 = pneg %p77
      %p154 = pneg %p74
      %p155 = pneg %p103
      %p156 = pneg %p100
      %s157 = smul.u32 64, %s14
      %p158 = scmp.lt.s32.totalorder %s157, 255
      %s159 = scalar_select %p158, %s157, 255
      %s160 = smul.addr %s159, 4
      %s161 = scalar_lea.vmem %s3, %s160
      %s162 = smul.u32 64, %s14
      %p163 = scmp.lt.s32.totalorder %s162, 255
      %s164 = scalar_select %p163, %s162, 255
      %s165 = smul.addr %s164, 8
      %s166 = scalar_lea.vmem %s0, %s165
      %s167 = smul.u32 64, %s14
      %s168 = smul.u32 64, %s14
      %p169 = scmp.lt.s32.totalorder %s168, 255
      %s170 = scalar_select %p169, %s168, 255
      %s171 = smul.addr %s170, 4
      %s172 = scalar_lea.vmem %s3, %s171
      %s173 = smul.u32 64, %s14
      %v174 = vld [vmem:[%s166] sm:$0xff]
      %v175 = vld [vmem:[%s166 + $0x8] sm:$0xff]
      %v176 = vld [vmem:[%s166 + $0x10] sm:$0xff]
      %v177 = vld [vmem:[%s166 + $0x18] sm:$0xff]
      %v178 = vld [vmem:[%s166 + $0x20] sm:$0xff]
      %v179 = vld [vmem:[%s166 + $0x28] sm:$0xff]
      %v180 = vld [vmem:[%s166 + $0x30] sm:$0xff]
      %v181 = vld [vmem:[%s166 + $0x38] sm:$0xff]
      %v182 = vld [vmem:[%s166 + $0x40] sm:$0xff]
      %v183 = vld [vmem:[%s166 + $0x48] sm:$0xff]
      %v184 = vld [vmem:[%s166 + $0x50] sm:$0xff]
      %v185 = vld [vmem:[%s166 + $0x58] sm:$0xff]
      %v186 = vld [vmem:[%s166 + $0x60] sm:$0xff]
      %v187 = vld [vmem:[%s166 + $0x68] sm:$0xff]
      %v188 = vld [vmem:[%s166 + $0x70] sm:$0xff]
      %v189 = vld [vmem:[%s166 + $0x78] sm:$0xff]
      %v190 = vld [vmem:[%s166 + $0x80] sm:$0xff]
      %v191 = vld [vmem:[%s166 + $0x88] sm:$0xff]
      %v192 = vld [vmem:[%s166 + $0x90] sm:$0xff]
      %v193 = vld [vmem:[%s166 + $0x98] sm:$0xff]
      %v194 = vld [vmem:[%s166 + $0xa0] sm:$0xff]
      %v195 = vld [vmem:[%s166 + $0xa8] sm:$0xff]
      %v196 = vld [vmem:[%s166 + $0xb0] sm:$0xff]
      %v197 = vld [vmem:[%s166 + $0xb8] sm:$0xff]
      %v198 = vld [vmem:[%s166 + $0xc0] sm:$0xff]
      %v199 = vld [vmem:[%s166 + $0xc8] sm:$0xff]
      %v200 = vld [vmem:[%s166 + $0xd0] sm:$0xff]
      %v201 = vld [vmem:[%s166 + $0xd8] sm:$0xff]
      %v202 = vld [vmem:[%s166 + $0xe0] sm:$0xff]
      %v203 = vld [vmem:[%s166 + $0xe8] sm:$0xff]
      %v204 = vld [vmem:[%s166 + $0xf0] sm:$0xff]
      %v205 = vld [vmem:[%s166 + $0xf8] sm:$0xff]
      %v206 = vld [vmem:[%s166 + $0x100] sm:$0xff]
      %v207 = vld [vmem:[%s166 + $0x108] sm:$0xff]
      %v208 = vld [vmem:[%s166 + $0x110] sm:$0xff]
      %v209 = vld [vmem:[%s166 + $0x118] sm:$0xff]
      %v210 = vld [vmem:[%s166 + $0x120] sm:$0xff]
      %v211 = vld [vmem:[%s166 + $0x128] sm:$0xff]
      %v212 = vld [vmem:[%s166 + $0x130] sm:$0xff]
      %v213 = vld [vmem:[%s166 + $0x138] sm:$0xff]
      %v214 = vld [vmem:[%s166 + $0x140] sm:$0xff]
      %v215 = vld [vmem:[%s166 + $0x148] sm:$0xff]
      %v216 = vld [vmem:[%s166 + $0x150] sm:$0xff]
      %v217 = vld [vmem:[%s166 + $0x158] sm:$0xff]
      %v218 = vld [vmem:[%s166 + $0x160] sm:$0xff]
      %v219 = vld [vmem:[%s166 + $0x168] sm:$0xff]
      %v220 = vld [vmem:[%s166 + $0x170] sm:$0xff]
      %v221 = vld [vmem:[%s166 + $0x178] sm:$0xff]
      %v222 = vld [vmem:[%s166 + $0x180] sm:$0xff]
      %v223 = vld [vmem:[%s166 + $0x188] sm:$0xff]
      %v224 = vld [vmem:[%s166 + $0x190] sm:$0xff]
      %v225 = vld [vmem:[%s166 + $0x198] sm:$0xff]
      %v226 = vld [vmem:[%s166 + $0x1a0] sm:$0xff]
      %v227 = vld [vmem:[%s166 + $0x1a8] sm:$0xff]
      %v228 = vld [vmem:[%s166 + $0x1b0] sm:$0xff]
      %v229 = vld [vmem:[%s166 + $0x1b8] sm:$0xff]
      %v230 = vld [vmem:[%s166 + $0x1c0] sm:$0xff]
      %v231 = vld [vmem:[%s166 + $0x1c8] sm:$0xff]
      %v232 = vld [vmem:[%s166 + $0x1d0] sm:$0xff]
      %v233 = vld [vmem:[%s166 + $0x1d8] sm:$0xff]
      %v234 = vld [vmem:[%s166 + $0x1e0] sm:$0xff]
      %v235 = vld [vmem:[%s166 + $0x1e8] sm:$0xff]
      %v236 = vld [vmem:[%s166 + $0x1f0] sm:$0xff]
      %v237 = vld [vmem:[%s166 + $0x1f8] sm:$0xff]
      %v238 = vld [vmem:[%s1] sm:$0x1]
      %v240 = vlaneseq
      %v241 = vshrl.u32 %v240, 7
      %v242 = vsub.s32 0, %v241
      %v243 = vrot.slane %v238, %v242
      %v245 = vmul.f32 %v174, %v243
      %v246 = vmul.f32 %v175, %v243
      %v247 = vmul.f32 %v176, %v243
      %v248 = vmul.f32 %v177, %v243
      %v249 = vmul.f32 %v178, %v243
      %v250 = vmul.f32 %v179, %v243
      %v251 = vmul.f32 %v180, %v243
      %v252 = vmul.f32 %v181, %v243
      %v253 = vmul.f32 %v182, %v243
      %v254 = vmul.f32 %v183, %v243
      %v255 = vmul.f32 %v184, %v243
      %v256 = vmul.f32 %v185, %v243
      %v257 = vmul.f32 %v186, %v243
      %v258 = vmul.f32 %v187, %v243
      %v259 = vmul.f32 %v188, %v243
      %v260 = vmul.f32 %v189, %v243
      %v261 = vmul.f32 %v190, %v243
      %v262 = vmul.f32 %v191, %v243
      %v263 = vmul.f32 %v192, %v243
      %v264 = vmul.f32 %v193, %v243
      %v265 = vmul.f32 %v194, %v243
      %v266 = vmul.f32 %v195, %v243
      %v267 = vmul.f32 %v196, %v243
      %v268 = vmul.f32 %v197, %v243
      %v269 = vmul.f32 %v198, %v243
      %v270 = vmul.f32 %v199, %v243
      %v271 = vmul.f32 %v200, %v243
      %v272 = vmul.f32 %v201, %v243
      %v273 = vmul.f32 %v202, %v243
      %v274 = vmul.f32 %v203, %v243
      %v275 = vmul.f32 %v204, %v243
      %v276 = vmul.f32 %v205, %v243
      %v277 = vmul.f32 %v206, %v243
      %v278 = vmul.f32 %v207, %v243
      %v279 = vmul.f32 %v208, %v243
      %v280 = vmul.f32 %v209, %v243
      %v281 = vmul.f32 %v210, %v243
      %v282 = vmul.f32 %v211, %v243
      %v283 = vmul.f32 %v212, %v243
      %v284 = vmul.f32 %v213, %v243
      %v285 = vmul.f32 %v214, %v243
      %v286 = vmul.f32 %v215, %v243
      %v287 = vmul.f32 %v216, %v243
      %v288 = vmul.f32 %v217, %v243
      %v289 = vmul.f32 %v218, %v243
      %v290 = vmul.f32 %v219, %v243
      %v291 = vmul.f32 %v220, %v243
      %v292 = vmul.f32 %v221, %v243
      %v293 = vmul.f32 %v222, %v243
      %v294 = vmul.f32 %v223, %v243
      %v295 = vmul.f32 %v224, %v243
      %v296 = vmul.f32 %v225, %v243
      %v297 = vmul.f32 %v226, %v243
      %v298 = vmul.f32 %v227, %v243
      %v299 = vmul.f32 %v228, %v243
      %v300 = vmul.f32 %v229, %v243
      %v301 = vmul.f32 %v230, %v243
      %v302 = vmul.f32 %v231, %v243
      %v303 = vmul.f32 %v232, %v243
      %v304 = vmul.f32 %v233, %v243
      %v305 = vmul.f32 %v234, %v243
      %v306 = vmul.f32 %v235, %v243
      %v307 = vmul.f32 %v236, %v243
      %v308 = vmul.f32 %v237, %v243
      %v309 = vld [vmem:[%s2] sm:$0x1]
      %v311 = vlaneseq
      %v312 = vshrl.u32 %v311, 7
      %v313 = vsub.s32 0, %v312
      %v314 = vrot.slane %v309, %v313
      %v316 = vadd.f32 %v245, %v314
      %v317 = vadd.f32 %v246, %v314
      %v318 = vadd.f32 %v247, %v314
      %v319 = vadd.f32 %v248, %v314
      %v320 = vadd.f32 %v249, %v314
      %v321 = vadd.f32 %v250, %v314
      %v322 = vadd.f32 %v251, %v314
      %v323 = vadd.f32 %v252, %v314
      %v324 = vadd.f32 %v253, %v314
      %v325 = vadd.f32 %v254, %v314
      %v326 = vadd.f32 %v255, %v314
      %v327 = vadd.f32 %v256, %v314
      %v328 = vadd.f32 %v257, %v314
      %v329 = vadd.f32 %v258, %v314
      %v330 = vadd.f32 %v259, %v314
      %v331 = vadd.f32 %v260, %v314
      %v332 = vadd.f32 %v261, %v314
      %v333 = vadd.f32 %v262, %v314
      %v334 = vadd.f32 %v263, %v314
      %v335 = vadd.f32 %v264, %v314
      %v336 = vadd.f32 %v265, %v314
      %v337 = vadd.f32 %v266, %v314
      %v338 = vadd.f32 %v267, %v314
      %v339 = vadd.f32 %v268, %v314
      %v340 = vadd.f32 %v269, %v314
      %v341 = vadd.f32 %v270, %v314
      %v342 = vadd.f32 %v271, %v314
      %v343 = vadd.f32 %v272, %v314
      %v344 = vadd.f32 %v273, %v314
      %v345 = vadd.f32 %v274, %v314
      %v346 = vadd.f32 %v275, %v314
      %v347 = vadd.f32 %v276, %v314
      %v348 = vadd.f32 %v277, %v314
      %v349 = vadd.f32 %v278, %v314
      %v350 = vadd.f32 %v279, %v314
      %v351 = vadd.f32 %v280, %v314
      %v352 = vadd.f32 %v281, %v314
      %v353 = vadd.f32 %v282, %v314
      %v354 = vadd.f32 %v283, %v314
      %v355 = vadd.f32 %v284, %v314
      %v356 = vadd.f32 %v285, %v314
      %v357 = vadd.f32 %v286, %v314
      %v358 = vadd.f32 %v287, %v314
      %v359 = vadd.f32 %v288, %v314
      %v360 = vadd.f32 %v289, %v314
      %v361 = vadd.f32 %v290, %v314
      %v362 = vadd.f32 %v291, %v314
      %v363 = vadd.f32 %v292, %v314
      %v364 = vadd.f32 %v293, %v314
      %v365 = vadd.f32 %v294, %v314
      %v366 = vadd.f32 %v295, %v314
      %v367 = vadd.f32 %v296, %v314
      %v368 = vadd.f32 %v297, %v314
      %v369 = vadd.f32 %v298, %v314
      %v370 = vadd.f32 %v299, %v314
      %v371 = vadd.f32 %v300, %v314
      %v372 = vadd.f32 %v301, %v314
      %v373 = vadd.f32 %v302, %v314
      %v374 = vadd.f32 %v303, %v314
      %v375 = vadd.f32 %v304, %v314
      %v376 = vadd.f32 %v305, %v314
      %v377 = vadd.f32 %v306, %v314
      %v378 = vadd.f32 %v307, %v314
      %v379 = vadd.f32 %v308, %v314
      %v380 = vmax.f32 %v316, 0.0
      %v381 = vmax.f32 %v317, 0.0
      %v382 = vmax.f32 %v318, 0.0
      %v383 = vmax.f32 %v319, 0.0
      %v384 = vmax.f32 %v320, 0.0
      %v385 = vmax.f32 %v321, 0.0
      %v386 = vmax.f32 %v322, 0.0
      %v387 = vmax.f32 %v323, 0.0
      %v388 = vmax.f32 %v324, 0.0
      %v389 = vmax.f32 %v325, 0.0
      %v390 = vmax.f32 %v326, 0.0
      %v391 = vmax.f32 %v327, 0.0
      %v392 = vmax.f32 %v328, 0.0
      %v393 = vmax.f32 %v329, 0.0
      %v394 = vmax.f32 %v330, 0.0
      %v395 = vmax.f32 %v331, 0.0
      %v396 = vmax.f32 %v332, 0.0
      %v397 = vmax.f32 %v333, 0.0
      %v398 = vmax.f32 %v334, 0.0
      %v399 = vmax.f32 %v335, 0.0
      %v400 = vmax.f32 %v336, 0.0
      %v401 = vmax.f32 %v337, 0.0
      %v402 = vmax.f32 %v338, 0.0
      %v403 = vmax.f32 %v339, 0.0
      %v404 = vmax.f32 %v340, 0.0
      %v405 = vmax.f32 %v341, 0.0
      %v406 = vmax.f32 %v342, 0.0
      %v407 = vmax.f32 %v343, 0.0
      %v408 = vmax.f32 %v344, 0.0
      %v409 = vmax.f32 %v345, 0.0
      %v410 = vmax.f32 %v346, 0.0
      %v411 = vmax.f32 %v347, 0.0
      %v412 = vmax.f32 %v348, 0.0
      %v413 = vmax.f32 %v349, 0.0
      %v414 = vmax.f32 %v350, 0.0
      %v415 = vmax.f32 %v351, 0.0
      %v416 = vmax.f32 %v352, 0.0
      %v417 = vmax.f32 %v353, 0.0
      %v418 = vmax.f32 %v354, 0.0
      %v419 = vmax.f32 %v355, 0.0
      %v420 = vmax.f32 %v356, 0.0
      %v421 = vmax.f32 %v357, 0.0
      %v422 = vmax.f32 %v358, 0.0
      %v423 = vmax.f32 %v359, 0.0
      %v424 = vmax.f32 %v360, 0.0
      %v425 = vmax.f32 %v361, 0.0
      %v426 = vmax.f32 %v362, 0.0
      %v427 = vmax.f32 %v363, 0.0
      %v428 = vmax.f32 %v364, 0.0
      %v429 = vmax.f32 %v365, 0.0
      %v430 = vmax.f32 %v366, 0.0
      %v431 = vmax.f32 %v367, 0.0
      %v432 = vmax.f32 %v368, 0.0
      %v433 = vmax.f32 %v369, 0.0
      %v434 = vmax.f32 %v370, 0.0
      %v435 = vmax.f32 %v371, 0.0
      %v436 = vmax.f32 %v372, 0.0
      %v437 = vmax.f32 %v373, 0.0
      %v438 = vmax.f32 %v374, 0.0
      %v439 = vmax.f32 %v375, 0.0
      %v440 = vmax.f32 %v376, 0.0
      %v441 = vmax.f32 %v377, 0.0
      %v442 = vmax.f32 %v378, 0.0
      %v443 = vmax.f32 %v379, 0.0
      %v444 = vpack.c.bf16 %v381, %v380
      %v445 = vpack.c.bf16 %v383, %v382
      %v446 = vpack.c.bf16 %v385, %v384
      %v447 = vpack.c.bf16 %v387, %v386
      %v448 = vpack.c.bf16 %v389, %v388
      %v449 = vpack.c.bf16 %v391, %v390
      %v450 = vpack.c.bf16 %v393, %v392
      %v451 = vpack.c.bf16 %v395, %v394
      %v452 = vpack.c.bf16 %v397, %v396
      %v453 = vpack.c.bf16 %v399, %v398
      %v454 = vpack.c.bf16 %v401, %v400
      %v455 = vpack.c.bf16 %v403, %v402
      %v456 = vpack.c.bf16 %v405, %v404
      %v457 = vpack.c.bf16 %v407, %v406
      %v458 = vpack.c.bf16 %v409, %v408
      %v459 = vpack.c.bf16 %v411, %v410
      %v460 = vpack.c.bf16 %v413, %v412
      %v461 = vpack.c.bf16 %v415, %v414
      %v462 = vpack.c.bf16 %v417, %v416
      %v463 = vpack.c.bf16 %v419, %v418
      %v464 = vpack.c.bf16 %v421, %v420
      %v465 = vpack.c.bf16 %v423, %v422
      %v466 = vpack.c.bf16 %v425, %v424
      %v467 = vpack.c.bf16 %v427, %v426
      %v468 = vpack.c.bf16 %v429, %v428
      %v469 = vpack.c.bf16 %v431, %v430
      %v470 = vpack.c.bf16 %v433, %v432
      %v471 = vpack.c.bf16 %v435, %v434
      %v472 = vpack.c.bf16 %v437, %v436
      %v473 = vpack.c.bf16 %v439, %v438
      %v474 = vpack.c.bf16 %v441, %v440
      %v475 = vpack.c.bf16 %v443, %v442
      %v508 = vunpack.c.l.b16 %v444
      %v509 = vunpack.c.h.b16 %v444
      %v510 = vunpack.c.l.b16 %v445
      %v511 = vunpack.c.h.b16 %v445
      %v512 = vunpack.c.l.b16 %v446
      %v513 = vunpack.c.h.b16 %v446
      %v514 = vunpack.c.l.b16 %v447
      %v515 = vunpack.c.h.b16 %v447
      %v516 = vunpack.c.l.b16 %v448
      %v517 = vunpack.c.h.b16 %v448
      %v518 = vunpack.c.l.b16 %v449
      %v519 = vunpack.c.h.b16 %v449
      %v520 = vunpack.c.l.b16 %v450
      %v521 = vunpack.c.h.b16 %v450
      %v522 = vunpack.c.l.b16 %v451
      %v523 = vunpack.c.h.b16 %v451
      %v524 = vunpack.c.l.b16 %v452
      %v525 = vunpack.c.h.b16 %v452
      %v526 = vunpack.c.l.b16 %v453
      %v527 = vunpack.c.h.b16 %v453
      %v528 = vunpack.c.l.b16 %v454
      %v529 = vunpack.c.h.b16 %v454
      %v530 = vunpack.c.l.b16 %v455
      %v531 = vunpack.c.h.b16 %v455
      %v532 = vunpack.c.l.b16 %v456
      %v533 = vunpack.c.h.b16 %v456
      %v534 = vunpack.c.l.b16 %v457
      %v535 = vunpack.c.h.b16 %v457
      %v536 = vunpack.c.l.b16 %v458
      %v537 = vunpack.c.h.b16 %v458
      %v538 = vunpack.c.l.b16 %v459
      %v539 = vunpack.c.h.b16 %v459
      %v540 = vunpack.c.l.b16 %v460
      %v541 = vunpack.c.h.b16 %v460
      %v542 = vunpack.c.l.b16 %v461
      %v543 = vunpack.c.h.b16 %v461
      %v544 = vunpack.c.l.b16 %v462
      %v545 = vunpack.c.h.b16 %v462
      %v546 = vunpack.c.l.b16 %v463
      %v547 = vunpack.c.h.b16 %v463
      %v548 = vunpack.c.l.b16 %v464
      %v549 = vunpack.c.h.b16 %v464
      %v550 = vunpack.c.l.b16 %v465
      %v551 = vunpack.c.h.b16 %v465
      %v552 = vunpack.c.l.b16 %v466
      %v553 = vunpack.c.h.b16 %v466
      %v554 = vunpack.c.l.b16 %v467
      %v555 = vunpack.c.h.b16 %v467
      %v556 = vunpack.c.l.b16 %v468
      %v557 = vunpack.c.h.b16 %v468
      %v558 = vunpack.c.l.b16 %v469
      %v559 = vunpack.c.h.b16 %v469
      %v560 = vunpack.c.l.b16 %v470
      %v561 = vunpack.c.h.b16 %v470
      %v562 = vunpack.c.l.b16 %v471
      %v563 = vunpack.c.h.b16 %v471
      %v564 = vunpack.c.l.b16 %v472
      %v565 = vunpack.c.h.b16 %v472
      %v566 = vunpack.c.l.b16 %v473
      %v567 = vunpack.c.h.b16 %v473
      %v568 = vunpack.c.l.b16 %v474
      %v569 = vunpack.c.h.b16 %v474
      %v570 = vunpack.c.l.b16 %v475
      %v571 = vunpack.c.h.b16 %v475
      %v572 = vpack.c.b16 %v508, %v508
      %v573 = vpack.c.b16 %v509, %v509
      %v574 = vpack.c.b16 %v510, %v510
      %v575 = vpack.c.b16 %v511, %v511
      %v576 = vpack.c.b16 %v512, %v512
      %v577 = vpack.c.b16 %v513, %v513
      %v578 = vpack.c.b16 %v514, %v514
      %v579 = vpack.c.b16 %v515, %v515
      %v580 = vpack.c.b16 %v516, %v516
      %v581 = vpack.c.b16 %v517, %v517
      %v582 = vpack.c.b16 %v518, %v518
      %v583 = vpack.c.b16 %v519, %v519
      %v584 = vpack.c.b16 %v520, %v520
      %v585 = vpack.c.b16 %v521, %v521
      %v586 = vpack.c.b16 %v522, %v522
      %v587 = vpack.c.b16 %v523, %v523
      %v588 = vpack.c.b16 %v524, %v524
      %v589 = vpack.c.b16 %v525, %v525
      %v590 = vpack.c.b16 %v526, %v526
      %v591 = vpack.c.b16 %v527, %v527
      %v592 = vpack.c.b16 %v528, %v528
      %v593 = vpack.c.b16 %v529, %v529
      %v594 = vpack.c.b16 %v530, %v530
      %v595 = vpack.c.b16 %v531, %v531
      %v596 = vpack.c.b16 %v532, %v532
      %v597 = vpack.c.b16 %v533, %v533
      %v598 = vpack.c.b16 %v534, %v534
      %v599 = vpack.c.b16 %v535, %v535
      %v600 = vpack.c.b16 %v536, %v536
      %v601 = vpack.c.b16 %v537, %v537
      %v602 = vpack.c.b16 %v538, %v538
      %v603 = vpack.c.b16 %v539, %v539
      %v604 = vpack.c.b16 %v540, %v540
      %v605 = vpack.c.b16 %v541, %v541
      %v606 = vpack.c.b16 %v542, %v542
      %v607 = vpack.c.b16 %v543, %v543
      %v608 = vpack.c.b16 %v544, %v544
      %v609 = vpack.c.b16 %v545, %v545
      %v610 = vpack.c.b16 %v546, %v546
      %v611 = vpack.c.b16 %v547, %v547
      %v612 = vpack.c.b16 %v548, %v548
      %v613 = vpack.c.b16 %v549, %v549
      %v614 = vpack.c.b16 %v550, %v550
      %v615 = vpack.c.b16 %v551, %v551
      %v616 = vpack.c.b16 %v552, %v552
      %v617 = vpack.c.b16 %v553, %v553
      %v618 = vpack.c.b16 %v554, %v554
      %v619 = vpack.c.b16 %v555, %v555
      %v620 = vpack.c.b16 %v556, %v556
      %v621 = vpack.c.b16 %v557, %v557
      %v622 = vpack.c.b16 %v558, %v558
      %v623 = vpack.c.b16 %v559, %v559
      %v624 = vpack.c.b16 %v560, %v560
      %v625 = vpack.c.b16 %v561, %v561
      %v626 = vpack.c.b16 %v562, %v562
      %v627 = vpack.c.b16 %v563, %v563
      %v628 = vpack.c.b16 %v564, %v564
      %v629 = vpack.c.b16 %v565, %v565
      %v630 = vpack.c.b16 %v566, %v566
      %v631 = vpack.c.b16 %v567, %v567
      %v632 = vpack.c.b16 %v568, %v568
      %v633 = vpack.c.b16 %v569, %v569
      %v634 = vpack.c.b16 %v570, %v570
      %v635 = vpack.c.b16 %v571, %v571
      %700 = vst [vmem:[%s172] sm:$0xf] %v572
      %701 = vst [vmem:[%s172 + $0x4] sm:$0xf] %v573
      %702 = vst [vmem:[%s172 + $0x8] sm:$0xf] %v574
      %703 = vst [vmem:[%s172 + $0xc] sm:$0xf] %v575
      %704 = vst [vmem:[%s172 + $0x10] sm:$0xf] %v576
      %705 = vst [vmem:[%s172 + $0x14] sm:$0xf] %v577
      %706 = vst [vmem:[%s172 + $0x18] sm:$0xf] %v578
      %707 = vst [vmem:[%s172 + $0x1c] sm:$0xf] %v579
      %708 = vst [vmem:[%s172 + $0x20] sm:$0xf] %v580
      %709 = vst [vmem:[%s172 + $0x24] sm:$0xf] %v581
      %710 = vst [vmem:[%s172 + $0x28] sm:$0xf] %v582
      %711 = vst [vmem:[%s172 + $0x2c] sm:$0xf] %v583
      %712 = vst [vmem:[%s172 + $0x30] sm:$0xf] %v584
      %713 = vst [vmem:[%s172 + $0x34] sm:$0xf] %v585
      %714 = vst [vmem:[%s172 + $0x38] sm:$0xf] %v586
      %715 = vst [vmem:[%s172 + $0x3c] sm:$0xf] %v587
      %716 = vst [vmem:[%s172 + $0x40] sm:$0xf] %v588
      %717 = vst [vmem:[%s172 + $0x44] sm:$0xf] %v589
      %718 = vst [vmem:[%s172 + $0x48] sm:$0xf] %v590
      %719 = vst [vmem:[%s172 + $0x4c] sm:$0xf] %v591
      %720 = vst [vmem:[%s172 + $0x50] sm:$0xf] %v592
      %721 = vst [vmem:[%s172 + $0x54] sm:$0xf] %v593
      %722 = vst [vmem:[%s172 + $0x58] sm:$0xf] %v594
      %723 = vst [vmem:[%s172 + $0x5c] sm:$0xf] %v595
      %724 = vst [vmem:[%s172 + $0x60] sm:$0xf] %v596
      %725 = vst [vmem:[%s172 + $0x64] sm:$0xf] %v597
      %726 = vst [vmem:[%s172 + $0x68] sm:$0xf] %v598
      %727 = vst [vmem:[%s172 + $0x6c] sm:$0xf] %v599
      %728 = vst [vmem:[%s172 + $0x70] sm:$0xf] %v600
      %729 = vst [vmem:[%s172 + $0x74] sm:$0xf] %v601
      %730 = vst [vmem:[%s172 + $0x78] sm:$0xf] %v602
      %731 = vst [vmem:[%s172 + $0x7c] sm:$0xf] %v603
      %732 = vst [vmem:[%s172 + $0x80] sm:$0xf] %v604
      %733 = vst [vmem:[%s172 + $0x84] sm:$0xf] %v605
      %734 = vst [vmem:[%s172 + $0x88] sm:$0xf] %v606
      %735 = vst [vmem:[%s172 + $0x8c] sm:$0xf] %v607
      %736 = vst [vmem:[%s172 + $0x90] sm:$0xf] %v608
      %737 = vst [vmem:[%s172 + $0x94] sm:$0xf] %v609
      %738 = vst [vmem:[%s172 + $0x98] sm:$0xf] %v610
      %739 = vst [vmem:[%s172 + $0x9c] sm:$0xf] %v611
      %740 = vst [vmem:[%s172 + $0xa0] sm:$0xf] %v612
      %741 = vst [vmem:[%s172 + $0xa4] sm:$0xf] %v613
      %742 = vst [vmem:[%s172 + $0xa8] sm:$0xf] %v614
      %743 = vst [vmem:[%s172 + $0xac] sm:$0xf] %v615
      %744 = vst [vmem:[%s172 + $0xb0] sm:$0xf] %v616
      %745 = vst [vmem:[%s172 + $0xb4] sm:$0xf] %v617
      %746 = vst [vmem:[%s172 + $0xb8] sm:$0xf] %v618
      %747 = vst [vmem:[%s172 + $0xbc] sm:$0xf] %v619
      %748 = vst [vmem:[%s172 + $0xc0] sm:$0xf] %v620
      %749 = vst [vmem:[%s172 + $0xc4] sm:$0xf] %v621
      %750 = vst [vmem:[%s172 + $0xc8] sm:$0xf] %v622
      %751 = vst [vmem:[%s172 + $0xcc] sm:$0xf] %v623
      %752 = vst [vmem:[%s172 + $0xd0] sm:$0xf] %v624
      %753 = vst [vmem:[%s172 + $0xd4] sm:$0xf] %v625
      %754 = vst [vmem:[%s172 + $0xd8] sm:$0xf] %v626
      %755 = vst [vmem:[%s172 + $0xdc] sm:$0xf] %v627
      %756 = vst [vmem:[%s172 + $0xe0] sm:$0xf] %v628
      %757 = vst [vmem:[%s172 + $0xe4] sm:$0xf] %v629
      %758 = vst [vmem:[%s172 + $0xe8] sm:$0xf] %v630
      %759 = vst [vmem:[%s172 + $0xec] sm:$0xf] %v631
      %760 = vst [vmem:[%s172 + $0xf0] sm:$0xf] %v632
      %761 = vst [vmem:[%s172 + $0xf4] sm:$0xf] %v633
      %762 = vst [vmem:[%s172 + $0xf8] sm:$0xf] %v634
      %763 = vst [vmem:[%s172 + $0xfc] sm:$0xf] %v635
      %s764 = smul.u32 64, %s14
      %p765 = scmp.lt.s32.totalorder %s764, 255
      %s766 = scalar_select %p765, %s764, 255
      %s767 = smul.addr %s766, 4
      %s768 = scalar_lea.vmem %s3, %s767
      // Predicated region
      $region33: #{netg_forward.16} parent=31 // pred_check
        %p769 = pneg %p100
      $region34: #{netg_forward.16} parent=31 // pred_check_branch
        %771 = sbr.rel (%p769) target = $region36
      $region35: #{netg_forward.16} parent=31 // pred_region
        %s772 = smul.u32 64, %s14
      $region36: #{netg_forward.16} parent=31 // pred_fallthru
        _
    $region32: #{netg_forward.16} parent=5 // pred_fallthru
      _
    %p773 = scmp.le.s32.totalorder 2, %s9
    // Predicated region
    $region37: #{netg_forward.16} parent=5 // pred_check
      %p774 = pneg %p773
    $region38: #{netg_forward.16} parent=5 // pred_check_branch
      %776 = sbr.rel (%p774) target = $region40
    $region39: #{netg_forward.16} parent=5 // pred_region
      %s777 = ssub.s32 %s9, 2
      // Predicated region
      $region41: #{netg_forward.16} parent=39 // pred_check
        %p778 = pneg %p106
      $region42: #{netg_forward.16} parent=39 // pred_check_branch
        %780 = sbr.rel (%p778) target = $region44
      $region43: #{netg_forward.16} parent=39 // pred_region
        %s781 = smul.u32 64, %s15
        %p782 = scmp.lt.s32.totalorder %s781, 255
        %s783 = scalar_select %p782, %s781, 255
        %s784 = smul.addr %s783, 4
        %s785 = scalar_lea.vmem %s3, %s784
      $region44: #{netg_forward.16} parent=39 // pred_fallthru
        _
    $region40: #{netg_forward.16} parent=5 // pred_fallthru
      _
  $region6: #{netg_forward.16} parent=0 // loop_footer
    %s13 = sadd.s32 1, %s9
  $region7: #{netg_forward.16} parent=0 // loop_footer_branch
    %8 = sbr.rel target = $region3
  $region8: #{netg_forward.16} parent=0 // loop_exit
    _

// kernel: netg_forward.15
$region0: #{netg_forward.15}
  #allocation0 [shape = 'u32[]', space=smem, size = 0x4, offset = 0x4, fixed_abs, tag = 'smem constant byte address 0x4 - core index']
  #allocation1 [shape = 'u32[144,128]{1,0:T(1,128)}', space=vmem, size = 0x12000, scoped, tag = 'internal scratch']
  %s0 = inlined_call_operand.vmem [shape: bf16[4,512,64], index: 0, kind: input, shape index: {}]
  %s1 = inlined_call_operand.vmem [shape: bf16[4,64,128], index: 1, kind: input, shape index: {}]
  %s2 = inlined_call_operand.vmem [shape: f32[4,512,128], index: 2, kind: output, shape index: {0}]
  %s3 = inlined_call_operand.vmem [shape: f32[4,1,2,128], index: 3, kind: output, shape index: {1}]
  %4 = xla_tuple %s2, %s3
  %s5 = sld [smem:[#allocation0]]
  $region57: #{netg_forward.15} parent=0
    _
  %s7 = ssub.s32 1, %s5
  %s8 = scalar_select 0, %s7, %s5
  loop: start=0, step=1, limit=6
  $region2: #{netg_forward.15} parent=0 // loop_pre_header
    _
  $region3: #{netg_forward.15} parent=0 // loop_header
    %s10 = sphi 0, %s14
    %p11 = scmp.ge.s32.totalorder %s10, 6
    %s17 = sphi 0, %s36
    %s18 = sphi 0, %s32
    %s19 = sphi 0, %s28
    %s20 = sphi 0, %s17
    %s21 = sphi 0, %s18
    %s22 = sphi 0, %s19
    %s23 = sphi 0, %s20
    %s24 = sphi 0, %s21
    %s25 = sphi 0, %s22
    %s43 = sphi 0, %s45
    %s46 = sphi 0, %s43
    %s47 = sphi 0, %s46
    %s63 = sphi 0, %s47
    %s71 = sphi 0, %s73
    %s74 = sphi 0, %s71
    %s75 = sphi 0, %s74
    %s91 = sphi 0, %s75
    %s99 = sphi 0, %s101
    %s102 = sphi 0, %s99
    %s103 = sphi 0, %s102
    %s119 = sphi 0, %s103
    %s127 = sphi 0, %s129
    %s130 = sphi 0, %s127
    %s131 = sphi 0, %s130
    %s147 = sphi 0, %s131
  $region4: #{netg_forward.15} parent=0 // loop_header_branch
    %13 = sbr.rel (%p11) target = $region8
  $region5: #{netg_forward.15} parent=0 // loop_body
    %s15 = ssub.s32 %s10, 1
    %s16 = ssub.s32 %s10, 2
    %s26 = sadd.s32 1, %s19
    %p27 = scmp.ge.s32.totalorder %s26, 1
    %s28 = scalar_select %p27, 0, %s26
    %s29 = sadd.s32 1, %s18
    %s30 = scalar_select %p27, %s29, %s18
    %p31 = scmp.ge.s32.totalorder %s30, 1
    %s32 = scalar_select %p31, 0, %s30
    %s33 = sadd.s32 1, %s17
    %s34 = scalar_select %p31, %s33, %s17
    %p35 = scmp.ge.s32.totalorder %s34, 4
    %s36 = scalar_select %p35, 0, %s34
    %s37 = ssub.s32 %s17, %s36
    %s38 = ssub.s32 %s18, %s32
    %s39 = sor.u32 %s37, %s38
    %s40 = ssub.s32 %s19, %s28
    %s41 = sor.u32 %s39, %s40
    %p42 = scmp.eq.s32.totalorder %s41, 0
    %s44 = sadd.s32 %s43, 1
    %s45 = scalar_select %p42, %s43, %s44
    %p48 = pneg %p42
    %p49 = scmp.eq.s32.totalorder %s10, 3
    %p50 = por %p48, %p49
    %p51 = scmp.ne.s32.totalorder %s43, %s46
    %p52 = scmp.eq.s32.totalorder %s10, 0
    %p53 = por %p51, %p52
    %p54 = scmp.ne.s32.totalorder %s43, %s46
    %p55 = scmp.eq.s32.totalorder %s15, 3
    %p56 = por %p54, %p55
    %p57 = scmp.ne.s32.totalorder %s46, %s47
    %p58 = scmp.eq.s32.totalorder %s15, 0
    %p59 = por %p57, %p58
    %p60 = scmp.ne.s32.totalorder %s46, %s47
    %p61 = scmp.eq.s32.totalorder %s16, 3
    %p62 = por %p60, %p61
    %p64 = scmp.ne.s32.totalorder %s47, %s63
    %p65 = scmp.eq.s32.totalorder %s16, 0
    %p66 = por %p64, %p65
    %s67 = ssub.s32 %s17, %s36
    %s68 = ssub.s32 %s19, %s28
    %s69 = sor.u32 %s67, %s68
    %p70 = scmp.eq.s32.totalorder %s69, 0
    %s72 = sadd.s32 %s71, 1
    %s73 = scalar_select %p70, %s71, %s72
    %p76 = pneg %p70
    %p77 = scmp.eq.s32.totalorder %s10, 3
    %p78 = por %p76, %p77
    %p79 = scmp.ne.s32.totalorder %s71, %s74
    %p80 = scmp.eq.s32.totalorder %s10, 0
    %p81 = por %p79, %p80
    %p82 = scmp.ne.s32.totalorder %s71, %s74
    %p83 = scmp.eq.s32.totalorder %s15, 3
    %p84 = por %p82, %p83
    %p85 = scmp.ne.s32.totalorder %s74, %s75
    %p86 = scmp.eq.s32.totalorder %s15, 0
    %p87 = por %p85, %p86
    %p88 = scmp.ne.s32.totalorder %s74, %s75
    %p89 = scmp.eq.s32.totalorder %s16, 3
    %p90 = por %p88, %p89
    %p92 = scmp.ne.s32.totalorder %s75, %s91
    %p93 = scmp.eq.s32.totalorder %s16, 0
    %p94 = por %p92, %p93
    %s95 = ssub.s32 %s17, %s36
    %s96 = ssub.s32 %s18, %s32
    %s97 = sor.u32 %s95, %s96
    %p98 = scmp.eq.s32.totalorder %s97, 0
    %s100 = sadd.s32 %s99, 1
    %s101 = scalar_select %p98, %s99, %s100
    %p104 = pneg %p98
    %p105 = scmp.eq.s32.totalorder %s10, 3
    %p106 = por %p104, %p105
    %p107 = scmp.ne.s32.totalorder %s99, %s102
    %p108 = scmp.eq.s32.totalorder %s10, 0
    %p109 = por %p107, %p108
    %p110 = scmp.ne.s32.totalorder %s99, %s102
    %p111 = scmp.eq.s32.totalorder %s15, 3
    %p112 = por %p110, %p111
    %p113 = scmp.ne.s32.totalorder %s102, %s103
    %p114 = scmp.eq.s32.totalorder %s15, 0
    %p115 = por %p113, %p114
    %p116 = scmp.ne.s32.totalorder %s102, %s103
    %p117 = scmp.eq.s32.totalorder %s16, 3
    %p118 = por %p116, %p117
    %p120 = scmp.ne.s32.totalorder %s103, %s119
    %p121 = scmp.eq.s32.totalorder %s16, 0
    %p122 = por %p120, %p121
    %s123 = ssub.s32 %s17, %s36
    %s124 = ssub.s32 %s18, %s32
    %s125 = sor.u32 %s123, %s124
    %p126 = scmp.eq.s32.totalorder %s125, 0
    %s128 = sadd.s32 %s127, 1
    %s129 = scalar_select %p126, %s127, %s128
    %p132 = pneg %p126
    %p133 = scmp.eq.s32.totalorder %s10, 3
    %p134 = por %p132, %p133
    %p135 = scmp.ne.s32.totalorder %s127, %s130
    %p136 = scmp.eq.s32.totalorder %s10, 0
    %p137 = por %p135, %p136
    %p138 = scmp.ne.s32.totalorder %s127, %s130
    %p139 = scmp.eq.s32.totalorder %s15, 3
    %p140 = por %p138, %p139
    %p141 = scmp.ne.s32.totalorder %s130, %s131
    %p142 = scmp.eq.s32.totalorder %s15, 0
    %p143 = por %p141, %p142
    %p144 = scmp.ne.s32.totalorder %s130, %s131
    %p145 = scmp.eq.s32.totalorder %s16, 3
    %p146 = por %p144, %p145
    %p148 = scmp.ne.s32.totalorder %s131, %s147
    %p149 = scmp.eq.s32.totalorder %s16, 0
    %p150 = por %p148, %p149
    %p151 = scmp.le.s32.totalorder 1, %s10
    %p152 = scmp.lt.s32.totalorder %s10, 5
    %p153 = pnand %p151, %p152
    %p154 = pneg %p153
    // Predicated region
    $region9: #{netg_forward.15} parent=5 // pred_check
      _
    $region10: #{netg_forward.15} parent=5 // pred_check_branch
      %156 = sbr.rel (%p153) target = $region12
    $region11: #{netg_forward.15} parent=5 // pred_region
      %s157 = ssub.s32 %s10, 1
    $region12: #{netg_forward.15} parent=5 // pred_fallthru
      _
    %p158 = scmp.lt.s32.totalorder %s10, 4
    // Predicated region
    $region13: #{netg_forward.15} parent=5 // pred_check
      %p159 = pneg %p158
    $region14: #{netg_forward.15} parent=5 // pred_check_branch
      %161 = sbr.rel (%p159) target = $region16
    $region15: #{netg_forward.15} parent=5 // pred_region
      // Predicated region
      $region17: #{netg_forward.15} parent=15 // pred_check
        %p162 = pneg %p53
      $region18: #{netg_forward.15} parent=15 // pred_check_branch
        %164 = sbr.rel (%p162) target = $region20
      $region19: #{netg_forward.15} parent=15 // pred_region
        %s165 = smul.u32 64, %s18
        %p166 = scmp.lt.s32.totalorder %s17, 3
        %s167 = scalar_select %p166, %s17, 3
        %p168 = scmp.lt.s32.totalorder %s165, 63
        %s169 = scalar_select %p168, %s165, 63
        %p170 = scmp.lt.s32.totalorder %s19, 0
        %s171 = scalar_select %p170, %s19, 0
        %s172 = sadd.s32 %s171, %s169
        %s173 = smul.addr %s167, 64
        %s174 = sadd.s32 %s172, %s173
        %s175 = smul.addr %s174, 4
        %s176 = scalar_lea.vmem %s0, %s175
        %s177 = smul.u32 64, %s18
      $region20: #{netg_forward.15} parent=15 // pred_fallthru
        _
      // Predicated region
      $region21: #{netg_forward.15} parent=15 // pred_check
        %p178 = pneg %p81
      $region22: #{netg_forward.15} parent=15 // pred_check_branch
        %180 = sbr.rel (%p178) target = $region24
      $region23: #{netg_forward.15} parent=15 // pred_region
        %s181 = smul.u32 8, %s19
        %p182 = scmp.lt.s32.totalorder %s17, 3
        %s183 = scalar_select %p182, %s17, 3
        %p184 = scmp.lt.s32.totalorder %s181, 7
        %s185 = scalar_select %p184, %s181, 7
        %s186 = smul.addr %s183, 8
        %s187 = sadd.s32 %s185, %s186
        %s188 = smul.addr %s187, 4
        %s189 = scalar_lea.vmem %s1, %s188
        %s190 = smul.u32 8, %s19
      $region24: #{netg_forward.15} parent=15 // pred_fallthru
        _
    $region16: #{netg_forward.15} parent=5 // pred_fallthru
      _
    %p191 = scmp.le.s32.totalorder 1, %s10
    %p192 = scmp.lt.s32.totalorder %s10, 5
    %p193 = pnand %p191, %p192
    %p194 = pneg %p193
    // Predicated region
    $region25: #{netg_forward.15} parent=5 // pred_check
      _
    $region26: #{netg_forward.15} parent=5 // pred_check_branch
      %196 = sbr.rel (%p193) target = $region28
    $region27: #{netg_forward.15} parent=5 // pred_region
      %s197 = ssub.s32 %s10, 1
      %s198 = smul.u32 64, %s21
      %p199 = scmp.lt.s32.totalorder %s20, 3
      %s200 = scalar_select %p199, %s20, 3
      %p201 = scmp.lt.s32.totalorder %s198, 63
      %s202 = scalar_select %p201, %s198, 63
      %p203 = scmp.lt.s32.totalorder %s22, 0
      %s204 = scalar_select %p203, %s22, 0
      %s205 = sadd.s32 %s204, %s202
      %s206 = smul.addr %s200, 64
      %s207 = sadd.s32 %s205, %s206
      %s208 = smul.addr %s207, 4
      %s209 = scalar_lea.vmem %s0, %s208
      %p210 = pneg %p59
      %p211 = pneg %p56
      %s212 = smul.u32 8, %s22
      %p213 = scmp.lt.s32.totalorder %s20, 3
      %s214 = scalar_select %p213, %s20, 3
      %p215 = scmp.lt.s32.totalorder %s212, 7
      %s216 = scalar_select %p215, %s212, 7
      %s217 = smul.addr %s214, 8
      %s218 = sadd.s32 %s216, %s217
      %s219 = smul.addr %s218, 4
      %s220 = scalar_lea.vmem %s1, %s219
      %p221 = pneg %p87
      %p222 = pneg %p84
      %p223 = pneg %p115
      %p224 = pneg %p112
      %s225 = smul.u32 64, %s21
      %p226 = scmp.lt.s32.totalorder %s20, 3
      %s227 = scalar_select %p226, %s20, 3
      %p228 = scmp.lt.s32.totalorder %s225, 63
      %s229 = scalar_select %p228, %s225, 63
      %s230 = smul.addr %s227, 64
      %s231 = sadd.s32 %s229, %s230
      %s232 = smul.addr %s231, 8
      %s233 = scalar_lea.vmem %s2, %s232
      %p234 = pneg %p143
      %p235 = pneg %p140
      %p236 = scmp.lt.s32.totalorder %s20, 3
      %s237 = scalar_select %p236, %s20, 3
      %p238 = scmp.lt.s32.totalorder %s21, 0
      %s239 = scalar_select %p238, %s21, 0
      %s240 = sadd.s32 %s239, %s237
      %s241 = smul.addr %s240, 2
      %s242 = scalar_lea.vmem %s3, %s241
      %s243 = smul.u32 64, %s21
      %p244 = scmp.lt.s32.totalorder %s20, 3
      %s245 = scalar_select %p244, %s20, 3
      %p246 = scmp.lt.s32.totalorder %s243, 63
      %s247 = scalar_select %p246, %s243, 63
      %p248 = scmp.lt.s32.totalorder %s22, 0
      %s249 = scalar_select %p248, %s22, 0
      %s250 = sadd.s32 %s249, %s247
      %s251 = smul.addr %s245, 64
      %s252 = sadd.s32 %s250, %s251
      %s253 = smul.addr %s252, 4
      %s254 = scalar_lea.vmem %s0, %s253
      %s255 = smul.u32 64, %s21
      %s256 = smul.u32 8, %s22
      %p257 = scmp.lt.s32.totalorder %s20, 3
      %s258 = scalar_select %p257, %s20, 3
      %p259 = scmp.lt.s32.totalorder %s256, 7
      %s260 = scalar_select %p259, %s256, 7
      %s261 = smul.addr %s258, 8
      %s262 = sadd.s32 %s260, %s261
      %s263 = smul.addr %s262, 4
      %s264 = scalar_lea.vmem %s1, %s263
      %s265 = smul.u32 8, %s22
      %s266 = smul.u32 64, %s21
      %p267 = scmp.lt.s32.totalorder %s20, 3
      %s268 = scalar_select %p267, %s20, 3
      %p269 = scmp.lt.s32.totalorder %s266, 63
      %s270 = scalar_select %p269, %s266, 63
      %s271 = smul.addr %s268, 64
      %s272 = sadd.s32 %s270, %s271
      %s273 = smul.addr %s272, 8
      %s274 = scalar_lea.vmem %s2, %s273
      %s275 = smul.u32 64, %s21
      %p276 = scmp.lt.s32.totalorder %s20, 3
      %s277 = scalar_select %p276, %s20, 3
      %p278 = scmp.lt.s32.totalorder %s21, 0
      %s279 = scalar_select %p278, %s21, 0
      %s280 = sadd.s32 %s279, %s277
      %s281 = smul.addr %s280, 2
      %s282 = scalar_lea.vmem %s3, %s281
      %p284 = scmp.eq.s32.totalorder %s22, 0
      // Predicated region
      $region29: #{netg_forward.15} parent=27 // pred_check
        %p285 = pneg %p284
      $region30: #{netg_forward.15} parent=27 // pred_check_branch
        %287 = sbr.rel (%p285) target = $region32
      $region31: #{netg_forward.15} parent=27 // pred_region
        %288 = vst [vmem:[%s274] sm:$0xff] 0.0
        %289 = vst [vmem:[%s274 + $0x8] sm:$0xff] 0.0
        %290 = vst [vmem:[%s274 + $0x10] sm:$0xff] 0.0
        %291 = vst [vmem:[%s274 + $0x18] sm:$0xff] 0.0
        %292 = vst [vmem:[%s274 + $0x20] sm:$0xff] 0.0
        %293 = vst [vmem:[%s274 + $0x28] sm:$0xff] 0.0
        %294 = vst [vmem:[%s274 + $0x30] sm:$0xff] 0.0
        %295 = vst [vmem:[%s274 + $0x38] sm:$0xff] 0.0
        %296 = vst [vmem:[%s274 + $0x40] sm:$0xff] 0.0
        %297 = vst [vmem:[%s274 + $0x48] sm:$0xff] 0.0
        %298 = vst [vmem:[%s274 + $0x50] sm:$0xff] 0.0
        %299 = vst [vmem:[%s274 + $0x58] sm:$0xff] 0.0
        %300 = vst [vmem:[%s274 + $0x60] sm:$0xff] 0.0
        %301 = vst [vmem:[%s274 + $0x68] sm:$0xff] 0.0
        %302 = vst [vmem:[%s274 + $0x70] sm:$0xff] 0.0
        %303 = vst [vmem:[%s274 + $0x78] sm:$0xff] 0.0
        %304 = vst [vmem:[%s274 + $0x80] sm:$0xff] 0.0
        %305 = vst [vmem:[%s274 + $0x88] sm:$0xff] 0.0
        %306 = vst [vmem:[%s274 + $0x90] sm:$0xff] 0.0
        %307 = vst [vmem:[%s274 + $0x98] sm:$0xff] 0.0
        %308 = vst [vmem:[%s274 + $0xa0] sm:$0xff] 0.0
        %309 = vst [vmem:[%s274 + $0xa8] sm:$0xff] 0.0
        %310 = vst [vmem:[%s274 + $0xb0] sm:$0xff] 0.0
        %311 = vst [vmem:[%s274 + $0xb8] sm:$0xff] 0.0
        %312 = vst [vmem:[%s274 + $0xc0] sm:$0xff] 0.0
        %313 = vst [vmem:[%s274 + $0xc8] sm:$0xff] 0.0
        %314 = vst [vmem:[%s274 + $0xd0] sm:$0xff] 0.0
        %315 = vst [vmem:[%s274 + $0xd8] sm:$0xff] 0.0
        %316 = vst [vmem:[%s274 + $0xe0] sm:$0xff] 0.0
        %317 = vst [vmem:[%s274 + $0xe8] sm:$0xff] 0.0
        %318 = vst [vmem:[%s274 + $0xf0] sm:$0xff] 0.0
        %319 = vst [vmem:[%s274 + $0xf8] sm:$0xff] 0.0
        %320 = vst [vmem:[%s274 + $0x100] sm:$0xff] 0.0
        %321 = vst [vmem:[%s274 + $0x108] sm:$0xff] 0.0
        %322 = vst [vmem:[%s274 + $0x110] sm:$0xff] 0.0
        %323 = vst [vmem:[%s274 + $0x118] sm:$0xff] 0.0
        %324 = vst [vmem:[%s274 + $0x120] sm:$0xff] 0.0
        %325 = vst [vmem:[%s274 + $0x128] sm:$0xff] 0.0
        %326 = vst [vmem:[%s274 + $0x130] sm:$0xff] 0.0
        %327 = vst [vmem:[%s274 + $0x138] sm:$0xff] 0.0
        %328 = vst [vmem:[%s274 + $0x140] sm:$0xff] 0.0
        %329 = vst [vmem:[%s274 + $0x148] sm:$0xff] 0.0
        %330 = vst [vmem:[%s274 + $0x150] sm:$0xff] 0.0
        %331 = vst [vmem:[%s274 + $0x158] sm:$0xff] 0.0
        %332 = vst [vmem:[%s274 + $0x160] sm:$0xff] 0.0
        %333 = vst [vmem:[%s274 + $0x168] sm:$0xff] 0.0
        %334 = vst [vmem:[%s274 + $0x170] sm:$0xff] 0.0
        %335 = vst [vmem:[%s274 + $0x178] sm:$0xff] 0.0
        %336 = vst [vmem:[%s274 + $0x180] sm:$0xff] 0.0
        %337 = vst [vmem:[%s274 + $0x188] sm:$0xff] 0.0
        %338 = vst [vmem:[%s274 + $0x190] sm:$0xff] 0.0
        %339 = vst [vmem:[%s274 + $0x198] sm:$0xff] 0.0
        %340 = vst [vmem:[%s274 + $0x1a0] sm:$0xff] 0.0
        %341 = vst [vmem:[%s274 + $0x1a8] sm:$0xff] 0.0
        %342 = vst [vmem:[%s274 + $0x1b0] sm:$0xff] 0.0
        %343 = vst [vmem:[%s274 + $0x1b8] sm:$0xff] 0.0
        %344 = vst [vmem:[%s274 + $0x1c0] sm:$0xff] 0.0
        %345 = vst [vmem:[%s274 + $0x1c8] sm:$0xff] 0.0
        %346 = vst [vmem:[%s274 + $0x1d0] sm:$0xff] 0.0
        %347 = vst [vmem:[%s274 + $0x1d8] sm:$0xff] 0.0
        %348 = vst [vmem:[%s274 + $0x1e0] sm:$0xff] 0.0
        %349 = vst [vmem:[%s274 + $0x1e8] sm:$0xff] 0.0
        %350 = vst [vmem:[%s274 + $0x1f0] sm:$0xff] 0.0
        %351 = vst [vmem:[%s274 + $0x1f8] sm:$0xff] 0.0
      $region32: #{netg_forward.15} parent=27 // pred_fallthru
        _
      %v352 = vld [vmem:[%s274] sm:$0xff]
      %v353 = vld [vmem:[%s274 + $0x8] sm:$0xff]
      %v354 = vld [vmem:[%s274 + $0x10] sm:$0xff]
      %v355 = vld [vmem:[%s274 + $0x18] sm:$0xff]
      %v356 = vld [vmem:[%s274 + $0x20] sm:$0xff]
      %v357 = vld [vmem:[%s274 + $0x28] sm:$0xff]
      %v358 = vld [vmem:[%s274 + $0x30] sm:$0xff]
      %v359 = vld [vmem:[%s274 + $0x38] sm:$0xff]
      %v360 = vld [vmem:[%s274 + $0x40] sm:$0xff]
      %v361 = vld [vmem:[%s274 + $0x48] sm:$0xff]
      %v362 = vld [vmem:[%s274 + $0x50] sm:$0xff]
      %v363 = vld [vmem:[%s274 + $0x58] sm:$0xff]
      %v364 = vld [vmem:[%s274 + $0x60] sm:$0xff]
      %v365 = vld [vmem:[%s274 + $0x68] sm:$0xff]
      %v366 = vld [vmem:[%s274 + $0x70] sm:$0xff]
      %v367 = vld [vmem:[%s274 + $0x78] sm:$0xff]
      %v368 = vld [vmem:[%s274 + $0x80] sm:$0xff]
      %v369 = vld [vmem:[%s274 + $0x88] sm:$0xff]
      %v370 = vld [vmem:[%s274 + $0x90] sm:$0xff]
      %v371 = vld [vmem:[%s274 + $0x98] sm:$0xff]
      %v372 = vld [vmem:[%s274 + $0xa0] sm:$0xff]
      %v373 = vld [vmem:[%s274 + $0xa8] sm:$0xff]
      %v374 = vld [vmem:[%s274 + $0xb0] sm:$0xff]
      %v375 = vld [vmem:[%s274 + $0xb8] sm:$0xff]
      %v376 = vld [vmem:[%s274 + $0xc0] sm:$0xff]
      %v377 = vld [vmem:[%s274 + $0xc8] sm:$0xff]
      %v378 = vld [vmem:[%s274 + $0xd0] sm:$0xff]
      %v379 = vld [vmem:[%s274 + $0xd8] sm:$0xff]
      %v380 = vld [vmem:[%s274 + $0xe0] sm:$0xff]
      %v381 = vld [vmem:[%s274 + $0xe8] sm:$0xff]
      %v382 = vld [vmem:[%s274 + $0xf0] sm:$0xff]
      %v383 = vld [vmem:[%s274 + $0xf8] sm:$0xff]
      %v384 = vld [vmem:[%s274 + $0x100] sm:$0xff]
      %v385 = vld [vmem:[%s274 + $0x108] sm:$0xff]
      %v386 = vld [vmem:[%s274 + $0x110] sm:$0xff]
      %v387 = vld [vmem:[%s274 + $0x118] sm:$0xff]
      %v388 = vld [vmem:[%s274 + $0x120] sm:$0xff]
      %v389 = vld [vmem:[%s274 + $0x128] sm:$0xff]
      %v390 = vld [vmem:[%s274 + $0x130] sm:$0xff]
      %v391 = vld [vmem:[%s274 + $0x138] sm:$0xff]
      %v392 = vld [vmem:[%s274 + $0x140] sm:$0xff]
      %v393 = vld [vmem:[%s274 + $0x148] sm:$0xff]
      %v394 = vld [vmem:[%s274 + $0x150] sm:$0xff]
      %v395 = vld [vmem:[%s274 + $0x158] sm:$0xff]
      %v396 = vld [vmem:[%s274 + $0x160] sm:$0xff]
      %v397 = vld [vmem:[%s274 + $0x168] sm:$0xff]
      %v398 = vld [vmem:[%s274 + $0x170] sm:$0xff]
      %v399 = vld [vmem:[%s274 + $0x178] sm:$0xff]
      %v400 = vld [vmem:[%s274 + $0x180] sm:$0xff]
      %v401 = vld [vmem:[%s274 + $0x188] sm:$0xff]
      %v402 = vld [vmem:[%s274 + $0x190] sm:$0xff]
      %v403 = vld [vmem:[%s274 + $0x198] sm:$0xff]
      %v404 = vld [vmem:[%s274 + $0x1a0] sm:$0xff]
      %v405 = vld [vmem:[%s274 + $0x1a8] sm:$0xff]
      %v406 = vld [vmem:[%s274 + $0x1b0] sm:$0xff]
      %v407 = vld [vmem:[%s274 + $0x1b8] sm:$0xff]
      %v408 = vld [vmem:[%s274 + $0x1c0] sm:$0xff]
      %v409 = vld [vmem:[%s274 + $0x1c8] sm:$0xff]
      %v410 = vld [vmem:[%s274 + $0x1d0] sm:$0xff]
      %v411 = vld [vmem:[%s274 + $0x1d8] sm:$0xff]
      %v412 = vld [vmem:[%s274 + $0x1e0] sm:$0xff]
      %v413 = vld [vmem:[%s274 + $0x1e8] sm:$0xff]
      %v414 = vld [vmem:[%s274 + $0x1f0] sm:$0xff]
      %v415 = vld [vmem:[%s274 + $0x1f8] sm:$0xff]
      %v416 = vld [vmem:[%s254] sm:$0xf]
      %v417 = vld [vmem:[%s254 + $0x4] sm:$0xf]
      %v418 = vld [vmem:[%s254 + $0x8] sm:$0xf]
      %v419 = vld [vmem:[%s254 + $0xc] sm:$0xf]
      %v420 = vld [vmem:[%s254 + $0x10] sm:$0xf]
      %v421 = vld [vmem:[%s254 + $0x14] sm:$0xf]
      %v422 = vld [vmem:[%s254 + $0x18] sm:$0xf]
      %v423 = vld [vmem:[%s254 + $0x1c] sm:$0xf]
      %v424 = vld [vmem:[%s254 + $0x20] sm:$0xf]
      %v425 = vld [vmem:[%s254 + $0x24] sm:$0xf]
      %v426 = vld [vmem:[%s254 + $0x28] sm:$0xf]
      %v427 = vld [vmem:[%s254 + $0x2c] sm:$0xf]
      %v428 = vld [vmem:[%s254 + $0x30] sm:$0xf]
      %v429 = vld [vmem:[%s254 + $0x34] sm:$0xf]
      %v430 = vld [vmem:[%s254 + $0x38] sm:$0xf]
      %v431 = vld [vmem:[%s254 + $0x3c] sm:$0xf]
      %v432 = vld [vmem:[%s254 + $0x40] sm:$0xf]
      %v433 = vld [vmem:[%s254 + $0x44] sm:$0xf]
      %v434 = vld [vmem:[%s254 + $0x48] sm:$0xf]
      %v435 = vld [vmem:[%s254 + $0x4c] sm:$0xf]
      %v436 = vld [vmem:[%s254 + $0x50] sm:$0xf]
      %v437 = vld [vmem:[%s254 + $0x54] sm:$0xf]
      %v438 = vld [vmem:[%s254 + $0x58] sm:$0xf]
      %v439 = vld [vmem:[%s254 + $0x5c] sm:$0xf]
      %v440 = vld [vmem:[%s254 + $0x60] sm:$0xf]
      %v441 = vld [vmem:[%s254 + $0x64] sm:$0xf]
      %v442 = vld [vmem:[%s254 + $0x68] sm:$0xf]
      %v443 = vld [vmem:[%s254 + $0x6c] sm:$0xf]
      %v444 = vld [vmem:[%s254 + $0x70] sm:$0xf]
      %v445 = vld [vmem:[%s254 + $0x74] sm:$0xf]
      %v446 = vld [vmem:[%s254 + $0x78] sm:$0xf]
      %v447 = vld [vmem:[%s254 + $0x7c] sm:$0xf]
      %v448 = vld [vmem:[%s254 + $0x80] sm:$0xf]
      %v449 = vld [vmem:[%s254 + $0x84] sm:$0xf]
      %v450 = vld [vmem:[%s254 + $0x88] sm:$0xf]
      %v451 = vld [vmem:[%s254 + $0x8c] sm:$0xf]
      %v452 = vld [vmem:[%s254 + $0x90] sm:$0xf]
      %v453 = vld [vmem:[%s254 + $0x94] sm:$0xf]
      %v454 = vld [vmem:[%s254 + $0x98] sm:$0xf]
      %v455 = vld [vmem:[%s254 + $0x9c] sm:$0xf]
      %v456 = vld [vmem:[%s254 + $0xa0] sm:$0xf]
      %v457 = vld [vmem:[%s254 + $0xa4] sm:$0xf]
      %v458 = vld [vmem:[%s254 + $0xa8] sm:$0xf]
      %v459 = vld [vmem:[%s254 + $0xac] sm:$0xf]
      %v460 = vld [vmem:[%s254 + $0xb0] sm:$0xf]
      %v461 = vld [vmem:[%s254 + $0xb4] sm:$0xf]
      %v462 = vld [vmem:[%s254 + $0xb8] sm:$0xf]
      %v463 = vld [vmem:[%s254 + $0xbc] sm:$0xf]
      %v464 = vld [vmem:[%s254 + $0xc0] sm:$0xf]
      %v465 = vld [vmem:[%s254 + $0xc4] sm:$0xf]
      %v466 = vld [vmem:[%s254 + $0xc8] sm:$0xf]
      %v467 = vld [vmem:[%s254 + $0xcc] sm:$0xf]
      %v468 = vld [vmem:[%s254 + $0xd0] sm:$0xf]
      %v469 = vld [vmem:[%s254 + $0xd4] sm:$0xf]
      %v470 = vld [vmem:[%s254 + $0xd8] sm:$0xf]
      %v471 = vld [vmem:[%s254 + $0xdc] sm:$0xf]
      %v472 = vld [vmem:[%s254 + $0xe0] sm:$0xf]
      %v473 = vld [vmem:[%s254 + $0xe4] sm:$0xf]
      %v474 = vld [vmem:[%s254 + $0xe8] sm:$0xf]
      %v475 = vld [vmem:[%s254 + $0xec] sm:$0xf]
      %v476 = vld [vmem:[%s254 + $0xf0] sm:$0xf]
      %v477 = vld [vmem:[%s254 + $0xf4] sm:$0xf]
      %v478 = vld [vmem:[%s254 + $0xf8] sm:$0xf]
      %v479 = vld [vmem:[%s254 + $0xfc] sm:$0xf]
      %v480 = vld [vmem:[%s264] sm:$0xf]
      %v481 = vld [vmem:[%s264 + $0x4] sm:$0xf]
      %v482 = vld [vmem:[%s264 + $0x8] sm:$0xf]
      %v483 = vld [vmem:[%s264 + $0xc] sm:$0xf]
      %v484 = vld [vmem:[%s264 + $0x10] sm:$0xf]
      %v485 = vld [vmem:[%s264 + $0x14] sm:$0xf]
      %v486 = vld [vmem:[%s264 + $0x18] sm:$0xf]
      %v487 = vld [vmem:[%s264 + $0x1c] sm:$0xf]
      %v552 = vunpack.c.l.b16 %v416
      %v553 = vunpack.c.l.b16 %v417
      %v554 = vunpack.c.l.b16 %v418
      %v555 = vunpack.c.l.b16 %v419
      %v556 = vunpack.c.l.b16 %v420
      %v557 = vunpack.c.l.b16 %v421
      %v558 = vunpack.c.l.b16 %v422
      %v559 = vunpack.c.l.b16 %v423
      %v560 = vunpack.c.l.b16 %v424
      %v561 = vunpack.c.l.b16 %v425
      %v562 = vunpack.c.l.b16 %v426
      %v563 = vunpack.c.l.b16 %v427
      %v564 = vunpack.c.l.b16 %v428
      %v565 = vunpack.c.l.b16 %v429
      %v566 = vunpack.c.l.b16 %v430
      %v567 = vunpack.c.l.b16 %v431
      %v568 = vunpack.c.l.b16 %v432
      %v569 = vunpack.c.l.b16 %v433
      %v570 = vunpack.c.l.b16 %v434
      %v571 = vunpack.c.l.b16 %v435
      %v572 = vunpack.c.l.b16 %v436
      %v573 = vunpack.c.l.b16 %v437
      %v574 = vunpack.c.l.b16 %v438
      %v575 = vunpack.c.l.b16 %v439
      %v576 = vunpack.c.l.b16 %v440
      %v577 = vunpack.c.l.b16 %v441
      %v578 = vunpack.c.l.b16 %v442
      %v579 = vunpack.c.l.b16 %v443
      %v580 = vunpack.c.l.b16 %v444
      %v581 = vunpack.c.l.b16 %v445
      %v582 = vunpack.c.l.b16 %v446
      %v583 = vunpack.c.l.b16 %v447
      %v584 = vunpack.c.l.b16 %v448
      %v585 = vunpack.c.l.b16 %v449
      %v586 = vunpack.c.l.b16 %v450
      %v587 = vunpack.c.l.b16 %v451
      %v588 = vunpack.c.l.b16 %v452
      %v589 = vunpack.c.l.b16 %v453
      %v590 = vunpack.c.l.b16 %v454
      %v591 = vunpack.c.l.b16 %v455
      %v592 = vunpack.c.l.b16 %v456
      %v593 = vunpack.c.l.b16 %v457
      %v594 = vunpack.c.l.b16 %v458
      %v595 = vunpack.c.l.b16 %v459
      %v596 = vunpack.c.l.b16 %v460
      %v597 = vunpack.c.l.b16 %v461
      %v598 = vunpack.c.l.b16 %v462
      %v599 = vunpack.c.l.b16 %v463
      %v600 = vunpack.c.l.b16 %v464
      %v601 = vunpack.c.l.b16 %v465
      %v602 = vunpack.c.l.b16 %v466
      %v603 = vunpack.c.l.b16 %v467
      %v604 = vunpack.c.l.b16 %v468
      %v605 = vunpack.c.l.b16 %v469
      %v606 = vunpack.c.l.b16 %v470
      %v607 = vunpack.c.l.b16 %v471
      %v608 = vunpack.c.l.b16 %v472
      %v609 = vunpack.c.l.b16 %v473
      %v610 = vunpack.c.l.b16 %v474
      %v611 = vunpack.c.l.b16 %v475
      %v612 = vunpack.c.l.b16 %v476
      %v613 = vunpack.c.l.b16 %v477
      %v614 = vunpack.c.l.b16 %v478
      %v615 = vunpack.c.l.b16 %v479
      %v616 = vpack.c.b16 %v553, %v552
      %v617 = vpack.c.b16 %v555, %v554
      %v618 = vpack.c.b16 %v557, %v556
      %v619 = vpack.c.b16 %v559, %v558
      %v620 = vpack.c.b16 %v561, %v560
      %v621 = vpack.c.b16 %v563, %v562
      %v622 = vpack.c.b16 %v565, %v564
      %v623 = vpack.c.b16 %v567, %v566
      %v624 = vpack.c.b16 %v569, %v568
      %v625 = vpack.c.b16 %v571, %v570
      %v626 = vpack.c.b16 %v573, %v572
      %v627 = vpack.c.b16 %v575, %v574
      %v628 = vpack.c.b16 %v577, %v576
      %v629 = vpack.c.b16 %v579, %v578
      %v630 = vpack.c.b16 %v581, %v580
      %v631 = vpack.c.b16 %v583, %v582
      %v632 = vpack.c.b16 %v585, %v584
      %v633 = vpack.c.b16 %v587, %v586
      %v634 = vpack.c.b16 %v589, %v588
      %v635 = vpack.c.b16 %v591, %v590
      %v636 = vpack.c.b16 %v593, %v592
      %v637 = vpack.c.b16 %v595, %v594
      %v638 = vpack.c.b16 %v597, %v596
      %v639 = vpack.c.b16 %v599, %v598
      %v640 = vpack.c.b16 %v601, %v600
      %v641 = vpack.c.b16 %v603, %v602
      %v642 = vpack.c.b16 %v605, %v604
      %v643 = vpack.c.b16 %v607, %v606
      %v644 = vpack.c.b16 %v609, %v608
      %v645 = vpack.c.b16 %v611, %v610
      %v646 = vpack.c.b16 %v613, %v612
      %v647 = vpack.c.b16 %v615, %v614
      %v656 = vunpack.c.l.b16 %v480
      %v657 = vunpack.c.l.b16 %v481
      %v658 = vunpack.c.l.b16 %v482
      %v659 = vunpack.c.l.b16 %v483
      %v660 = vunpack.c.l.b16 %v484
      %v661 = vunpack.c.l.b16 %v485
      %v662 = vunpack.c.l.b16 %v486
      %v663 = vunpack.c.l.b16 %v487
      %v664 = vpack.c.b16 %v657, %v656
      %v665 = vpack.c.b16 %v659, %v658
      %v666 = vpack.c.b16 %v661, %v660
      %v667 = vpack.c.b16 %v663, %v662
      %vm672 = vcmask 523264
      %v674 = vsel %vm672, %v616, 0
      %v677 = vsel %vm672, %v617, 0
      %v680 = vsel %vm672, %v618, 0
      %v683 = vsel %vm672, %v619, 0
      %v686 = vsel %vm672, %v620, 0
      %v689 = vsel %vm672, %v621, 0
      %v692 = vsel %vm672, %v622, 0
      %v695 = vsel %vm672, %v623, 0
      %v698 = vsel %vm672, %v624, 0
      %v701 = vsel %vm672, %v625, 0
      %v704 = vsel %vm672, %v626, 0
      %v707 = vsel %vm672, %v627, 0
      %v710 = vsel %vm672, %v628, 0
      %v713 = vsel %vm672, %v629, 0
      %v716 = vsel %vm672, %v630, 0
      %v719 = vsel %vm672, %v631, 0
      %v722 = vsel %vm672, %v632, 0
      %v725 = vsel %vm672, %v633, 0
      %v728 = vsel %vm672, %v634, 0
      %v731 = vsel %vm672, %v635, 0
      %v734 = vsel %vm672, %v636, 0
      %v737 = vsel %vm672, %v637, 0
      %v740 = vsel %vm672, %v638, 0
      %v743 = vsel %vm672, %v639, 0
      %v746 = vsel %vm672, %v640, 0
      %v749 = vsel %vm672, %v641, 0
      %v752 = vsel %vm672, %v642, 0
      %v755 = vsel %vm672, %v643, 0
      %v758 = vsel %vm672, %v644, 0
      %v761 = vsel %vm672, %v645, 0
      %v764 = vsel %vm672, %v646, 0
      %v767 = vsel %vm672, %v647, 0
      %769 = vmatprep.subr.bf16.mxu0 0
      %770 = vmatpush1.bf16.msra.mxu0 0
      %771 = vmatprep.subr.bf16.mxu0 0
      %772 = vmatpush1.bf16.msra.mxu0 0
      %773 = vmatprep.subr.bf16.mxu0 0
      %774 = vmatpush1.bf16.msra.mxu0 0
      %775 = vmatprep.subr.bf16.mxu0 0
      %776 = vmatpush1.bf16.msra.mxu0 0
      %777 = vmatprep.subr.bf16.mxu0 0
      %778 = vmatpush1.bf16.msra.mxu0 %v667
      %779 = vmatprep.subr.bf16.mxu0 0
      %780 = vmatpush1.bf16.msra.mxu0 %v666
      %781 = vmatprep.subr.bf16.mxu0 0
      %782 = vmatpush1.bf16.msra.mxu0 %v665
      %783 = vmatprep.subr.bf16.mxu0 0
      %784 = vmatpush1.bf16.msra.mxu0 %v664
      %785 = vmatprep.subr.bf16.mxu0 0
      %786 = vmatpush2.bf16.msra.mxu0 0
      %787 = vmatprep.subr.bf16.mxu0 0
      %788 = vmatpush2.bf16.msra.mxu0 0
      %789 = vmatprep.subr.bf16.mxu0 0
      %790 = vmatpush2.bf16.msra.mxu0 0
      %791 = vmatprep.subr.bf16.mxu0 0
      %792 = vmatpush2.bf16.msra.mxu0 0
      %793 = vmatprep.subr.bf16.mxu0 0
      %794 = vmatpush2.bf16.msra.mxu0 0
      %795 = vmatprep.subr.bf16.mxu0 0
      %796 = vmatpush2.bf16.msra.mxu0 0
      %797 = vmatprep.subr.bf16.mxu0 0
      %798 = vmatpush2.bf16.msra.mxu0 0
      %799 = vmatprep.subr.bf16.mxu0 0
      %800 = vmatpush2.bf16.msra.mxu0 0
      %801 = vmatprep.mubr.bf16.mxu0 0
      %802 = vmatmul.mubr.bf16.gmra.mxu0 %v674
      %v803 = vpop.f32.mrf.mxu0
      %v804 = vadd.f32 0.0, %v803
      %v805 = vpop.f32.mrf.mxu0
      %v806 = vpop.f32.mrf.mxu0
      %v807 = vadd.f32 0.0, %v806
      %v808 = vpop.f32.mrf.mxu0
      %809 = vmatprep.mubr.bf16.mxu0 0
      %810 = vmatmul.mubr.bf16.gmra.mxu0 %v677
      %v811 = vpop.f32.mrf.mxu0
      %v812 = vadd.f32 0.0, %v811
      %v813 = vpop.f32.mrf.mxu0
      %v814 = vpop.f32.mrf.mxu0
      %v815 = vadd.f32 0.0, %v814
      %v816 = vpop.f32.mrf.mxu0
      %817 = vmatprep.mubr.bf16.mxu0 0
      %818 = vmatmul.mubr.bf16.gmra.mxu0 %v680
      %v819 = vpop.f32.mrf.mxu0
      %v820 = vadd.f32 0.0, %v819
      %v821 = vpop.f32.mrf.mxu0
      %v822 = vpop.f32.mrf.mxu0
      %v823 = vadd.f32 0.0, %v822
      %v824 = vpop.f32.mrf.mxu0
      %825 = vmatprep.mubr.bf16.mxu0 0
      %826 = vmatmul.mubr.bf16.gmra.mxu0 %v683
      %v827 = vpop.f32.mrf.mxu0
      %v828 = vadd.f32 0.0, %v827
      %v829 = vpop.f32.mrf.mxu0
      %v830 = vpop.f32.mrf.mxu0
      %v831 = vadd.f32 0.0, %v830
      %v832 = vpop.f32.mrf.mxu0
      %833 = vmatprep.mubr.bf16.mxu0 0
      %834 = vmatmul.mubr.bf16.gmra.mxu0 %v686
      %v835 = vpop.f32.mrf.mxu0
      %v836 = vadd.f32 0.0, %v835
      %v837 = vpop.f32.mrf.mxu0
      %v838 = vpop.f32.mrf.mxu0
      %v839 = vadd.f32 0.0, %v838
      %v840 = vpop.f32.mrf.mxu0
      %841 = vmatprep.mubr.bf16.mxu0 0
      %842 = vmatmul.mubr.bf16.gmra.mxu0 %v689
      %v843 = vpop.f32.mrf.mxu0
      %v844 = vadd.f32 0.0, %v843
      %v845 = vpop.f32.mrf.mxu0
      %v846 = vpop.f32.mrf.mxu0
      %v847 = vadd.f32 0.0, %v846
      %v848 = vpop.f32.mrf.mxu0
      %849 = vmatprep.mubr.bf16.mxu0 0
      %850 = vmatmul.mubr.bf16.gmra.mxu0 %v692
      %v851 = vpop.f32.mrf.mxu0
      %v852 = vadd.f32 0.0, %v851
      %v853 = vpop.f32.mrf.mxu0
      %v854 = vpop.f32.mrf.mxu0
      %v855 = vadd.f32 0.0, %v854
      %v856 = vpop.f32.mrf.mxu0
      %857 = vmatprep.mubr.bf16.mxu0 0
      %858 = vmatmul.mubr.bf16.gmra.mxu0 %v695
      %v859 = vpop.f32.mrf.mxu0
      %v860 = vadd.f32 0.0, %v859
      %v861 = vpop.f32.mrf.mxu0
      %v862 = vpop.f32.mrf.mxu0
      %v863 = vadd.f32 0.0, %v862
      %v864 = vpop.f32.mrf.mxu0
      %865 = vmatprep.mubr.bf16.mxu0 0
      %866 = vmatmul.mubr.bf16.gmra.mxu0 %v698
      %v867 = vpop.f32.mrf.mxu0
      %v868 = vadd.f32 0.0, %v867
      %v869 = vpop.f32.mrf.mxu0
      %v870 = vpop.f32.mrf.mxu0
      %v871 = vadd.f32 0.0, %v870
      %v872 = vpop.f32.mrf.mxu0
      %873 = vmatprep.mubr.bf16.mxu0 0
      %874 = vmatmul.mubr.bf16.gmra.mxu0 %v701
      %v875 = vpop.f32.mrf.mxu0
      %v876 = vadd.f32 0.0, %v875
      %v877 = vpop.f32.mrf.mxu0
      %v878 = vpop.f32.mrf.mxu0
      %v879 = vadd.f32 0.0, %v878
      %v880 = vpop.f32.mrf.mxu0
      %881 = vmatprep.mubr.bf16.mxu0 0
      %882 = vmatmul.mubr.bf16.gmra.mxu0 %v704
      %v883 = vpop.f32.mrf.mxu0
      %v884 = vadd.f32 0.0, %v883
      %v885 = vpop.f32.mrf.mxu0
      %v886 = vpop.f32.mrf.mxu0
      %v887 = vadd.f32 0.0, %v886
      %v888 = vpop.f32.mrf.mxu0
      %889 = vmatprep.mubr.bf16.mxu0 0
      %890 = vmatmul.mubr.bf16.gmra.mxu0 %v707
      %v891 = vpop.f32.mrf.mxu0
      %v892 = vadd.f32 0.0, %v891
      %v893 = vpop.f32.mrf.mxu0
      %v894 = vpop.f32.mrf.mxu0
      %v895 = vadd.f32 0.0, %v894
      %v896 = vpop.f32.mrf.mxu0
      %897 = vmatprep.mubr.bf16.mxu0 0
      %898 = vmatmul.mubr.bf16.gmra.mxu0 %v710
      %v899 = vpop.f32.mrf.mxu0
      %v900 = vadd.f32 0.0, %v899
      %v901 = vpop.f32.mrf.mxu0
      %v902 = vpop.f32.mrf.mxu0
      %v903 = vadd.f32 0.0, %v902
      %v904 = vpop.f32.mrf.mxu0
      %905 = vmatprep.mubr.bf16.mxu0 0
      %906 = vmatmul.mubr.bf16.gmra.mxu0 %v713
      %v907 = vpop.f32.mrf.mxu0
      %v908 = vadd.f32 0.0, %v907
      %v909 = vpop.f32.mrf.mxu0
      %v910 = vpop.f32.mrf.mxu0
      %v911 = vadd.f32 0.0, %v910
      %v912 = vpop.f32.mrf.mxu0
      %913 = vmatprep.mubr.bf16.mxu0 0
      %914 = vmatmul.mubr.bf16.gmra.mxu0 %v716
      %v915 = vpop.f32.mrf.mxu0
      %v916 = vadd.f32 0.0, %v915
      %v917 = vpop.f32.mrf.mxu0
      %v918 = vpop.f32.mrf.mxu0
      %v919 = vadd.f32 0.0, %v918
      %v920 = vpop.f32.mrf.mxu0
      %921 = vmatprep.mubr.bf16.mxu0 0
      %922 = vmatmul.mubr.bf16.gmra.mxu0 %v719
      %v923 = vpop.f32.mrf.mxu0
      %v924 = vadd.f32 0.0, %v923
      %v925 = vpop.f32.mrf.mxu0
      %v926 = vpop.f32.mrf.mxu0
      %v927 = vadd.f32 0.0, %v926
      %v928 = vpop.f32.mrf.mxu0
      %929 = vmatprep.mubr.bf16.mxu0 0
      %930 = vmatmul.mubr.bf16.gmra.mxu0 %v722
      %v931 = vpop.f32.mrf.mxu0
      %v932 = vadd.f32 0.0, %v931
      %v933 = vpop.f32.mrf.mxu0
      %v934 = vpop.f32.mrf.mxu0
      %v935 = vadd.f32 0.0, %v934
      %v936 = vpop.f32.mrf.mxu0
      %937 = vmatprep.mubr.bf16.mxu0 0
      %938 = vmatmul.mubr.bf16.gmra.mxu0 %v725
      %v939 = vpop.f32.mrf.mxu0
      %v940 = vadd.f32 0.0, %v939
      %v941 = vpop.f32.mrf.mxu0
      %v942 = vpop.f32.mrf.mxu0
      %v943 = vadd.f32 0.0, %v942
      %v944 = vpop.f32.mrf.mxu0
      %945 = vmatprep.mubr.bf16.mxu0 0
      %946 = vmatmul.mubr.bf16.gmra.mxu0 %v728
      %v947 = vpop.f32.mrf.mxu0
      %v948 = vadd.f32 0.0, %v947
      %v949 = vpop.f32.mrf.mxu0
      %v950 = vpop.f32.mrf.mxu0
      %v951 = vadd.f32 0.0, %v950
      %v952 = vpop.f32.mrf.mxu0
      %953 = vmatprep.mubr.bf16.mxu0 0
      %954 = vmatmul.mubr.bf16.gmra.mxu0 %v731
      %v955 = vpop.f32.mrf.mxu0
      %v956 = vadd.f32 0.0, %v955
      %v957 = vpop.f32.mrf.mxu0
      %v958 = vpop.f32.mrf.mxu0
      %v959 = vadd.f32 0.0, %v958
      %v960 = vpop.f32.mrf.mxu0
      %961 = vmatprep.mubr.bf16.mxu0 0
      %962 = vmatmul.mubr.bf16.gmra.mxu0 %v734
      %v963 = vpop.f32.mrf.mxu0
      %v964 = vadd.f32 0.0, %v963
      %v965 = vpop.f32.mrf.mxu0
      %v966 = vpop.f32.mrf.mxu0
      %v967 = vadd.f32 0.0, %v966
      %v968 = vpop.f32.mrf.mxu0
      %969 = vmatprep.mubr.bf16.mxu0 0
      %970 = vmatmul.mubr.bf16.gmra.mxu0 %v737
      %v971 = vpop.f32.mrf.mxu0
      %v972 = vadd.f32 0.0, %v971
      %v973 = vpop.f32.mrf.mxu0
      %v974 = vpop.f32.mrf.mxu0
      %v975 = vadd.f32 0.0, %v974
      %v976 = vpop.f32.mrf.mxu0
      %977 = vmatprep.mubr.bf16.mxu0 0
      %978 = vmatmul.mubr.bf16.gmra.mxu0 %v740
      %v979 = vpop.f32.mrf.mxu0
      %v980 = vadd.f32 0.0, %v979
      %v981 = vpop.f32.mrf.mxu0
      %v982 = vpop.f32.mrf.mxu0
      %v983 = vadd.f32 0.0, %v982
      %v984 = vpop.f32.mrf.mxu0
      %985 = vmatprep.mubr.bf16.mxu0 0
      %986 = vmatmul.mubr.bf16.gmra.mxu0 %v743
      %v987 = vpop.f32.mrf.mxu0
      %v988 = vadd.f32 0.0, %v987
      %v989 = vpop.f32.mrf.mxu0
      %v990 = vpop.f32.mrf.mxu0
      %v991 = vadd.f32 0.0, %v990
      %v992 = vpop.f32.mrf.mxu0
      %993 = vmatprep.mubr.bf16.mxu0 0
      %994 = vmatmul.mubr.bf16.gmra.mxu0 %v746
      %v995 = vpop.f32.mrf.mxu0
      %v996 = vadd.f32 0.0, %v995
      %v997 = vpop.f32.mrf.mxu0
      %v998 = vpop.f32.mrf.mxu0
      %v999 = vadd.f32 0.0, %v998
      %v1000 = vpop.f32.mrf.mxu0
      %1001 = vmatprep.mubr.bf16.mxu0 0
      %1002 = vmatmul.mubr.bf16.gmra.mxu0 %v749
      %v1003 = vpop.f32.mrf.mxu0
      %v1004 = vadd.f32 0.0, %v1003
      %v1005 = vpop.f32.mrf.mxu0
      %v1006 = vpop.f32.mrf.mxu0
      %v1007 = vadd.f32 0.0, %v1006
      %v1008 = vpop.f32.mrf.mxu0
      %1009 = vmatprep.mubr.bf16.mxu0 0
      %1010 = vmatmul.mubr.bf16.gmra.mxu0 %v752
      %v1011 = vpop.f32.mrf.mxu0
      %v1012 = vadd.f32 0.0, %v1011
      %v1013 = vpop.f32.mrf.mxu0
      %v1014 = vpop.f32.mrf.mxu0
      %v1015 = vadd.f32 0.0, %v1014
      %v1016 = vpop.f32.mrf.mxu0
      %1017 = vmatprep.mubr.bf16.mxu0 0
      %1018 = vmatmul.mubr.bf16.gmra.mxu0 %v755
      %v1019 = vpop.f32.mrf.mxu0
      %v1020 = vadd.f32 0.0, %v1019
      %v1021 = vpop.f32.mrf.mxu0
      %v1022 = vpop.f32.mrf.mxu0
      %v1023 = vadd.f32 0.0, %v1022
      %v1024 = vpop.f32.mrf.mxu0
      %1025 = vmatprep.mubr.bf16.mxu0 0
      %1026 = vmatmul.mubr.bf16.gmra.mxu0 %v758
      %v1027 = vpop.f32.mrf.mxu0
      %v1028 = vadd.f32 0.0, %v1027
      %v1029 = vpop.f32.mrf.mxu0
      %v1030 = vpop.f32.mrf.mxu0
      %v1031 = vadd.f32 0.0, %v1030
      %v1032 = vpop.f32.mrf.mxu0
      %1033 = vmatprep.mubr.bf16.mxu0 0
      %1034 = vmatmul.mubr.bf16.gmra.mxu0 %v761
      %v1035 = vpop.f32.mrf.mxu0
      %v1036 = vadd.f32 0.0, %v1035
      %v1037 = vpop.f32.mrf.mxu0
      %v1038 = vpop.f32.mrf.mxu0
      %v1039 = vadd.f32 0.0, %v1038
      %v1040 = vpop.f32.mrf.mxu0
      %1041 = vmatprep.mubr.bf16.mxu0 0
      %1042 = vmatmul.mubr.bf16.gmra.mxu0 %v764
      %v1043 = vpop.f32.mrf.mxu0
      %v1044 = vadd.f32 0.0, %v1043
      %v1045 = vpop.f32.mrf.mxu0
      %v1046 = vpop.f32.mrf.mxu0
      %v1047 = vadd.f32 0.0, %v1046
      %v1048 = vpop.f32.mrf.mxu0
      %1049 = vmatprep.mubr.bf16.mxu0 0
      %1050 = vmatmul.mubr.bf16.gmra.mxu0 %v767
      %v1051 = vpop.f32.mrf.mxu0
      %v1052 = vadd.f32 0.0, %v1051
      %v1053 = vpop.f32.mrf.mxu0
      %v1054 = vpop.f32.mrf.mxu0
      %v1055 = vadd.f32 0.0, %v1054
      %v1056 = vpop.f32.mrf.mxu0
      %1057 = vdwg.mxu0
      %v1058 = vadd.f32 %v352, %v804
      %v1059 = vadd.f32 %v353, %v807
      %v1060 = vadd.f32 %v354, %v812
      %v1061 = vadd.f32 %v355, %v815
      %v1062 = vadd.f32 %v356, %v820
      %v1063 = vadd.f32 %v357, %v823
      %v1064 = vadd.f32 %v358, %v828
      %v1065 = vadd.f32 %v359, %v831
      %v1066 = vadd.f32 %v360, %v836
      %v1067 = vadd.f32 %v361, %v839
      %v1068 = vadd.f32 %v362, %v844
      %v1069 = vadd.f32 %v363, %v847
      %v1070 = vadd.f32 %v364, %v852
      %v1071 = vadd.f32 %v365, %v855
      %v1072 = vadd.f32 %v366, %v860
      %v1073 = vadd.f32 %v367, %v863
      %v1074 = vadd.f32 %v368, %v868
      %v1075 = vadd.f32 %v369, %v871
      %v1076 = vadd.f32 %v370, %v876
      %v1077 = vadd.f32 %v371, %v879
      %v1078 = vadd.f32 %v372, %v884
      %v1079 = vadd.f32 %v373, %v887
      %v1080 = vadd.f32 %v374, %v892
      %v1081 = vadd.f32 %v375, %v895
      %v1082 = vadd.f32 %v376, %v900
      %v1083 = vadd.f32 %v377, %v903
      %v1084 = vadd.f32 %v378, %v908
      %v1085 = vadd.f32 %v379, %v911
      %v1086 = vadd.f32 %v380, %v916
      %v1087 = vadd.f32 %v381, %v919
      %v1088 = vadd.f32 %v382, %v924
      %v1089 = vadd.f32 %v383, %v927
      %v1090 = vadd.f32 %v384, %v932
      %v1091 = vadd.f32 %v385, %v935
      %v1092 = vadd.f32 %v386, %v940
      %v1093 = vadd.f32 %v387, %v943
      %v1094 = vadd.f32 %v388, %v948
      %v1095 = vadd.f32 %v389, %v951
      %v1096 = vadd.f32 %v390, %v956
      %v1097 = vadd.f32 %v391, %v959
      %v1098 = vadd.f32 %v392, %v964
      %v1099 = vadd.f32 %v393, %v967
      %v1100 = vadd.f32 %v394, %v972
      %v1101 = vadd.f32 %v395, %v975
      %v1102 = vadd.f32 %v396, %v980
      %v1103 = vadd.f32 %v397, %v983
      %v1104 = vadd.f32 %v398, %v988
      %v1105 = vadd.f32 %v399, %v991
      %v1106 = vadd.f32 %v400, %v996
      %v1107 = vadd.f32 %v401, %v999
      %v1108 = vadd.f32 %v402, %v1004
      %v1109 = vadd.f32 %v403, %v1007
      %v1110 = vadd.f32 %v404, %v1012
      %v1111 = vadd.f32 %v405, %v1015
      %v1112 = vadd.f32 %v406, %v1020
      %v1113 = vadd.f32 %v407, %v1023
      %v1114 = vadd.f32 %v408, %v1028
      %v1115 = vadd.f32 %v409, %v1031
      %v1116 = vadd.f32 %v410, %v1036
      %v1117 = vadd.f32 %v411, %v1039
      %v1118 = vadd.f32 %v412, %v1044
      %v1119 = vadd.f32 %v413, %v1047
      %v1120 = vadd.f32 %v414, %v1052
      %v1121 = vadd.f32 %v415, %v1055
      %1122 = vst [vmem:[%s274] sm:$0xff] %v1058
      %1123 = vst [vmem:[%s274 + $0x8] sm:$0xff] %v1059
      %1124 = vst [vmem:[%s274 + $0x10] sm:$0xff] %v1060
      %1125 = vst [vmem:[%s274 + $0x18] sm:$0xff] %v1061
      %1126 = vst [vmem:[%s274 + $0x20] sm:$0xff] %v1062
      %1127 = vst [vmem:[%s274 + $0x28] sm:$0xff] %v1063
      %1128 = vst [vmem:[%s274 + $0x30] sm:$0xff] %v1064
      %1129 = vst [vmem:[%s274 + $0x38] sm:$0xff] %v1065
      %1130 = vst [vmem:[%s274 + $0x40] sm:$0xff] %v1066
      %1131 = vst [vmem:[%s274 + $0x48] sm:$0xff] %v1067
      %1132 = vst [vmem:[%s274 + $0x50] sm:$0xff] %v1068
      %1133 = vst [vmem:[%s274 + $0x58] sm:$0xff] %v1069
      %1134 = vst [vmem:[%s274 + $0x60] sm:$0xff] %v1070
      %1135 = vst [vmem:[%s274 + $0x68] sm:$0xff] %v1071
      %1136 = vst [vmem:[%s274 + $0x70] sm:$0xff] %v1072
      %1137 = vst [vmem:[%s274 + $0x78] sm:$0xff] %v1073
      %1138 = vst [vmem:[%s274 + $0x80] sm:$0xff] %v1074
      %1139 = vst [vmem:[%s274 + $0x88] sm:$0xff] %v1075
      %1140 = vst [vmem:[%s274 + $0x90] sm:$0xff] %v1076
      %1141 = vst [vmem:[%s274 + $0x98] sm:$0xff] %v1077
      %1142 = vst [vmem:[%s274 + $0xa0] sm:$0xff] %v1078
      %1143 = vst [vmem:[%s274 + $0xa8] sm:$0xff] %v1079
      %1144 = vst [vmem:[%s274 + $0xb0] sm:$0xff] %v1080
      %1145 = vst [vmem:[%s274 + $0xb8] sm:$0xff] %v1081
      %1146 = vst [vmem:[%s274 + $0xc0] sm:$0xff] %v1082
      %1147 = vst [vmem:[%s274 + $0xc8] sm:$0xff] %v1083
      %1148 = vst [vmem:[%s274 + $0xd0] sm:$0xff] %v1084
      %1149 = vst [vmem:[%s274 + $0xd8] sm:$0xff] %v1085
      %1150 = vst [vmem:[%s274 + $0xe0] sm:$0xff] %v1086
      %1151 = vst [vmem:[%s274 + $0xe8] sm:$0xff] %v1087
      %1152 = vst [vmem:[%s274 + $0xf0] sm:$0xff] %v1088
      %1153 = vst [vmem:[%s274 + $0xf8] sm:$0xff] %v1089
      %1154 = vst [vmem:[%s274 + $0x100] sm:$0xff] %v1090
      %1155 = vst [vmem:[%s274 + $0x108] sm:$0xff] %v1091
      %1156 = vst [vmem:[%s274 + $0x110] sm:$0xff] %v1092
      %1157 = vst [vmem:[%s274 + $0x118] sm:$0xff] %v1093
      %1158 = vst [vmem:[%s274 + $0x120] sm:$0xff] %v1094
      %1159 = vst [vmem:[%s274 + $0x128] sm:$0xff] %v1095
      %1160 = vst [vmem:[%s274 + $0x130] sm:$0xff] %v1096
      %1161 = vst [vmem:[%s274 + $0x138] sm:$0xff] %v1097
      %1162 = vst [vmem:[%s274 + $0x140] sm:$0xff] %v1098
      %1163 = vst [vmem:[%s274 + $0x148] sm:$0xff] %v1099
      %1164 = vst [vmem:[%s274 + $0x150] sm:$0xff] %v1100
      %1165 = vst [vmem:[%s274 + $0x158] sm:$0xff] %v1101
      %1166 = vst [vmem:[%s274 + $0x160] sm:$0xff] %v1102
      %1167 = vst [vmem:[%s274 + $0x168] sm:$0xff] %v1103
      %1168 = vst [vmem:[%s274 + $0x170] sm:$0xff] %v1104
      %1169 = vst [vmem:[%s274 + $0x178] sm:$0xff] %v1105
      %1170 = vst [vmem:[%s274 + $0x180] sm:$0xff] %v1106
      %1171 = vst [vmem:[%s274 + $0x188] sm:$0xff] %v1107
      %1172 = vst [vmem:[%s274 + $0x190] sm:$0xff] %v1108
      %1173 = vst [vmem:[%s274 + $0x198] sm:$0xff] %v1109
      %1174 = vst [vmem:[%s274 + $0x1a0] sm:$0xff] %v1110
      %1175 = vst [vmem:[%s274 + $0x1a8] sm:$0xff] %v1111
      %1176 = vst [vmem:[%s274 + $0x1b0] sm:$0xff] %v1112
      %1177 = vst [vmem:[%s274 + $0x1b8] sm:$0xff] %v1113
      %1178 = vst [vmem:[%s274 + $0x1c0] sm:$0xff] %v1114
      %1179 = vst [vmem:[%s274 + $0x1c8] sm:$0xff] %v1115
      %1180 = vst [vmem:[%s274 + $0x1d0] sm:$0xff] %v1116
      %1181 = vst [vmem:[%s274 + $0x1d8] sm:$0xff] %v1117
      %1182 = vst [vmem:[%s274 + $0x1e0] sm:$0xff] %v1118
      %1183 = vst [vmem:[%s274 + $0x1e8] sm:$0xff] %v1119
      %1184 = vst [vmem:[%s274 + $0x1f0] sm:$0xff] %v1120
      %1185 = vst [vmem:[%s274 + $0x1f8] sm:$0xff] %v1121
      // Predicated region
      $region33: #{netg_forward.15} parent=27 // pred_check
        %p1186 = pneg %p284
      $region34: #{netg_forward.15} parent=27 // pred_check_branch
        %1188 = sbr.rel (%p1186) target = $region36
      $region35: #{netg_forward.15} parent=27 // pred_region
        %v1189 = vld [vmem:[%s274] sm:$0xff]
        %v1190 = vld [vmem:[%s274 + $0x8] sm:$0xff]
        %v1191 = vld [vmem:[%s274 + $0x10] sm:$0xff]
        %v1192 = vld [vmem:[%s274 + $0x18] sm:$0xff]
        %v1193 = vld [vmem:[%s274 + $0x20] sm:$0xff]
        %v1194 = vld [vmem:[%s274 + $0x28] sm:$0xff]
        %v1195 = vld [vmem:[%s274 + $0x30] sm:$0xff]
        %v1196 = vld [vmem:[%s274 + $0x38] sm:$0xff]
        %v1197 = vld [vmem:[%s274 + $0x40] sm:$0xff]
        %v1198 = vld [vmem:[%s274 + $0x48] sm:$0xff]
        %v1199 = vld [vmem:[%s274 + $0x50] sm:$0xff]
        %v1200 = vld [vmem:[%s274 + $0x58] sm:$0xff]
        %v1201 = vld [vmem:[%s274 + $0x60] sm:$0xff]
        %v1202 = vld [vmem:[%s274 + $0x68] sm:$0xff]
        %v1203 = vld [vmem:[%s274 + $0x70] sm:$0xff]
        %v1204 = vld [vmem:[%s274 + $0x78] sm:$0xff]
        %v1205 = vld [vmem:[%s274 + $0x80] sm:$0xff]
        %v1206 = vld [vmem:[%s274 + $0x88] sm:$0xff]
        %v1207 = vld [vmem:[%s274 + $0x90] sm:$0xff]
        %v1208 = vld [vmem:[%s274 + $0x98] sm:$0xff]
        %v1209 = vld [vmem:[%s274 + $0xa0] sm:$0xff]
        %v1210 = vld [vmem:[%s274 + $0xa8] sm:$0xff]
        %v1211 = vld [vmem:[%s274 + $0xb0] sm:$0xff]
        %v1212 = vld [vmem:[%s274 + $0xb8] sm:$0xff]
        %v1213 = vld [vmem:[%s274 + $0xc0] sm:$0xff]
        %v1214 = vld [vmem:[%s274 + $0xc8] sm:$0xff]
        %v1215 = vld [vmem:[%s274 + $0xd0] sm:$0xff]
        %v1216 = vld [vmem:[%s274 + $0xd8] sm:$0xff]
        %v1217 = vld [vmem:[%s274 + $0xe0] sm:$0xff]
        %v1218 = vld [vmem:[%s274 + $0xe8] sm:$0xff]
        %v1219 = vld [vmem:[%s274 + $0xf0] sm:$0xff]
        %v1220 = vld [vmem:[%s274 + $0xf8] sm:$0xff]
        %v1221 = vld [vmem:[%s274 + $0x100] sm:$0xff]
        %v1222 = vld [vmem:[%s274 + $0x108] sm:$0xff]
        %v1223 = vld [vmem:[%s274 + $0x110] sm:$0xff]
        %v1224 = vld [vmem:[%s274 + $0x118] sm:$0xff]
        %v1225 = vld [vmem:[%s274 + $0x120] sm:$0xff]
        %v1226 = vld [vmem:[%s274 + $0x128] sm:$0xff]
        %v1227 = vld [vmem:[%s274 + $0x130] sm:$0xff]
        %v1228 = vld [vmem:[%s274 + $0x138] sm:$0xff]
        %v1229 = vld [vmem:[%s274 + $0x140] sm:$0xff]
        %v1230 = vld [vmem:[%s274 + $0x148] sm:$0xff]
        %v1231 = vld [vmem:[%s274 + $0x150] sm:$0xff]
        %v1232 = vld [vmem:[%s274 + $0x158] sm:$0xff]
        %v1233 = vld [vmem:[%s274 + $0x160] sm:$0xff]
        %v1234 = vld [vmem:[%s274 + $0x168] sm:$0xff]
        %v1235 = vld [vmem:[%s274 + $0x170] sm:$0xff]
        %v1236 = vld [vmem:[%s274 + $0x178] sm:$0xff]
        %v1237 = vld [vmem:[%s274 + $0x180] sm:$0xff]
        %v1238 = vld [vmem:[%s274 + $0x188] sm:$0xff]
        %v1239 = vld [vmem:[%s274 + $0x190] sm:$0xff]
        %v1240 = vld [vmem:[%s274 + $0x198] sm:$0xff]
        %v1241 = vld [vmem:[%s274 + $0x1a0] sm:$0xff]
        %v1242 = vld [vmem:[%s274 + $0x1a8] sm:$0xff]
        %v1243 = vld [vmem:[%s274 + $0x1b0] sm:$0xff]
        %v1244 = vld [vmem:[%s274 + $0x1b8] sm:$0xff]
        %v1245 = vld [vmem:[%s274 + $0x1c0] sm:$0xff]
        %v1246 = vld [vmem:[%s274 + $0x1c8] sm:$0xff]
        %v1247 = vld [vmem:[%s274 + $0x1d0] sm:$0xff]
        %v1248 = vld [vmem:[%s274 + $0x1d8] sm:$0xff]
        %v1249 = vld [vmem:[%s274 + $0x1e0] sm:$0xff]
        %v1250 = vld [vmem:[%s274 + $0x1e8] sm:$0xff]
        %v1251 = vld [vmem:[%s274 + $0x1f0] sm:$0xff]
        %v1252 = vld [vmem:[%s274 + $0x1f8] sm:$0xff]
        %v1253 = vadd.f32 %v1189, %v1190
        %v1254 = vadd.f32 %v1253, %v1191
        %v1255 = vadd.f32 %v1254, %v1192
        %v1256 = vadd.f32 %v1255, %v1193
        %v1257 = vadd.f32 %v1256, %v1194
        %v1258 = vadd.f32 %v1257, %v1195
        %v1259 = vadd.f32 %v1258, %v1196
        %v1260 = vadd.f32 %v1259, %v1197
        %v1261 = vadd.f32 %v1260, %v1198
        %v1262 = vadd.f32 %v1261, %v1199
        %v1263 = vadd.f32 %v1262, %v1200
        %v1264 = vadd.f32 %v1263, %v1201
        %v1265 = vadd.f32 %v1264, %v1202
        %v1266 = vadd.f32 %v1265, %v1203
        %v1267 = vadd.f32 %v1266, %v1204
        %v1268 = vadd.f32 %v1267, %v1205
        %v1269 = vadd.f32 %v1268, %v1206
        %v1270 = vadd.f32 %v1269, %v1207
        %v1271 = vadd.f32 %v1270, %v1208
        %v1272 = vadd.f32 %v1271, %v1209
        %v1273 = vadd.f32 %v1272, %v1210
        %v1274 = vadd.f32 %v1273, %v1211
        %v1275 = vadd.f32 %v1274, %v1212
        %v1276 = vadd.f32 %v1275, %v1213
        %v1277 = vadd.f32 %v1276, %v1214
        %v1278 = vadd.f32 %v1277, %v1215
        %v1279 = vadd.f32 %v1278, %v1216
        %v1280 = vadd.f32 %v1279, %v1217
        %v1281 = vadd.f32 %v1280, %v1218
        %v1282 = vadd.f32 %v1281, %v1219
        %v1283 = vadd.f32 %v1282, %v1220
        %v1284 = vadd.f32 %v1283, %v1221
        %v1285 = vadd.f32 %v1284, %v1222
        %v1286 = vadd.f32 %v1285, %v1223
        %v1287 = vadd.f32 %v1286, %v1224
        %v1288 = vadd.f32 %v1287, %v1225
        %v1289 = vadd.f32 %v1288, %v1226
        %v1290 = vadd.f32 %v1289, %v1227
        %v1291 = vadd.f32 %v1290, %v1228
        %v1292 = vadd.f32 %v1291, %v1229
        %v1293 = vadd.f32 %v1292, %v1230
        %v1294 = vadd.f32 %v1293, %v1231
        %v1295 = vadd.f32 %v1294, %v1232
        %v1296 = vadd.f32 %v1295, %v1233
        %v1297 = vadd.f32 %v1296, %v1234
        %v1298 = vadd.f32 %v1297, %v1235
        %v1299 = vadd.f32 %v1298, %v1236
        %v1300 = vadd.f32 %v1299, %v1237
        %v1301 = vadd.f32 %v1300, %v1238
        %v1302 = vadd.f32 %v1301, %v1239
        %v1303 = vadd.f32 %v1302, %v1240
        %v1304 = vadd.f32 %v1303, %v1241
        %v1305 = vadd.f32 %v1304, %v1242
        %v1306 = vadd.f32 %v1305, %v1243
        %v1307 = vadd.f32 %v1306, %v1244
        %v1308 = vadd.f32 %v1307, %v1245
        %v1309 = vadd.f32 %v1308, %v1246
        %v1310 = vadd.f32 %v1309, %v1247
        %v1311 = vadd.f32 %v1310, %v1248
        %v1312 = vadd.f32 %v1311, %v1249
        %v1313 = vadd.f32 %v1312, %v1250
        %v1314 = vadd.f32 %v1313, %v1251
        %v1315 = vadd.f32 %v1314, %v1252
        %v1316 = vrot.slane %v1315, 4
        %v1317 = vadd.f32 %v1315, %v1316
        %v1318 = vrot.slane %v1317, 2
        %v1319 = vadd.f32 %v1317, %v1318
        %v1320 = vrot.slane %v1319, 1
        %v1321 = vadd.f32 %v1319, %v1320
        %v1322 = vmul.f32 %v1189, %v1189
        %v1323 = vmul.f32 %v1190, %v1190
        %v1324 = vmul.f32 %v1191, %v1191
        %v1325 = vmul.f32 %v1192, %v1192
        %v1326 = vmul.f32 %v1193, %v1193
        %v1327 = vmul.f32 %v1194, %v1194
        %v1328 = vmul.f32 %v1195, %v1195
        %v1329 = vmul.f32 %v1196, %v1196
        %v1330 = vmul.f32 %v1197, %v1197
        %v1331 = vmul.f32 %v1198, %v1198
        %v1332 = vmul.f32 %v1199, %v1199
        %v1333 = vmul.f32 %v1200, %v1200
        %v1334 = vmul.f32 %v1201, %v1201
        %v1335 = vmul.f32 %v1202, %v1202
        %v1336 = vmul.f32 %v1203, %v1203
        %v1337 = vmul.f32 %v1204, %v1204
        %v1338 = vmul.f32 %v1205, %v1205
        %v1339 = vmul.f32 %v1206, %v1206
        %v1340 = vmul.f32 %v1207, %v1207
        %v1341 = vmul.f32 %v1208, %v1208
        %v1342 = vmul.f32 %v1209, %v1209
        %v1343 = vmul.f32 %v1210, %v1210
        %v1344 = vmul.f32 %v1211, %v1211
        %v1345 = vmul.f32 %v1212, %v1212
        %v1346 = vmul.f32 %v1213, %v1213
        %v1347 = vmul.f32 %v1214, %v1214
        %v1348 = vmul.f32 %v1215, %v1215
        %v1349 = vmul.f32 %v1216, %v1216
        %v1350 = vmul.f32 %v1217, %v1217
        %v1351 = vmul.f32 %v1218, %v1218
        %v1352 = vmul.f32 %v1219, %v1219
        %v1353 = vmul.f32 %v1220, %v1220
        %v1354 = vmul.f32 %v1221, %v1221
        %v1355 = vmul.f32 %v1222, %v1222
        %v1356 = vmul.f32 %v1223, %v1223
        %v1357 = vmul.f32 %v1224, %v1224
        %v1358 = vmul.f32 %v1225, %v1225
        %v1359 = vmul.f32 %v1226, %v1226
        %v1360 = vmul.f32 %v1227, %v1227
        %v1361 = vmul.f32 %v1228, %v1228
        %v1362 = vmul.f32 %v1229, %v1229
        %v1363 = vmul.f32 %v1230, %v1230
        %v1364 = vmul.f32 %v1231, %v1231
        %v1365 = vmul.f32 %v1232, %v1232
        %v1366 = vmul.f32 %v1233, %v1233
        %v1367 = vmul.f32 %v1234, %v1234
        %v1368 = vmul.f32 %v1235, %v1235
        %v1369 = vmul.f32 %v1236, %v1236
        %v1370 = vmul.f32 %v1237, %v1237
        %v1371 = vmul.f32 %v1238, %v1238
        %v1372 = vmul.f32 %v1239, %v1239
        %v1373 = vmul.f32 %v1240, %v1240
        %v1374 = vmul.f32 %v1241, %v1241
        %v1375 = vmul.f32 %v1242, %v1242
        %v1376 = vmul.f32 %v1243, %v1243
        %v1377 = vmul.f32 %v1244, %v1244
        %v1378 = vmul.f32 %v1245, %v1245
        %v1379 = vmul.f32 %v1246, %v1246
        %v1380 = vmul.f32 %v1247, %v1247
        %v1381 = vmul.f32 %v1248, %v1248
        %v1382 = vmul.f32 %v1249, %v1249
        %v1383 = vmul.f32 %v1250, %v1250
        %v1384 = vmul.f32 %v1251, %v1251
        %v1385 = vmul.f32 %v1252, %v1252
        %v1386 = vadd.f32 %v1322, %v1323
        %v1387 = vadd.f32 %v1386, %v1324
        %v1388 = vadd.f32 %v1387, %v1325
        %v1389 = vadd.f32 %v1388, %v1326
        %v1390 = vadd.f32 %v1389, %v1327
        %v1391 = vadd.f32 %v1390, %v1328
        %v1392 = vadd.f32 %v1391, %v1329
        %v1393 = vadd.f32 %v1392, %v1330
        %v1394 = vadd.f32 %v1393, %v1331
        %v1395 = vadd.f32 %v1394, %v1332
        %v1396 = vadd.f32 %v1395, %v1333
        %v1397 = vadd.f32 %v1396, %v1334
        %v1398 = vadd.f32 %v1397, %v1335
        %v1399 = vadd.f32 %v1398, %v1336
        %v1400 = vadd.f32 %v1399, %v1337
        %v1401 = vadd.f32 %v1400, %v1338
        %v1402 = vadd.f32 %v1401, %v1339
        %v1403 = vadd.f32 %v1402, %v1340
        %v1404 = vadd.f32 %v1403, %v1341
        %v1405 = vadd.f32 %v1404, %v1342
        %v1406 = vadd.f32 %v1405, %v1343
        %v1407 = vadd.f32 %v1406, %v1344
        %v1408 = vadd.f32 %v1407, %v1345
        %v1409 = vadd.f32 %v1408, %v1346
        %v1410 = vadd.f32 %v1409, %v1347
        %v1411 = vadd.f32 %v1410, %v1348
        %v1412 = vadd.f32 %v1411, %v1349
        %v1413 = vadd.f32 %v1412, %v1350
        %v1414 = vadd.f32 %v1413, %v1351
        %v1415 = vadd.f32 %v1414, %v1352
        %v1416 = vadd.f32 %v1415, %v1353
        %v1417 = vadd.f32 %v1416, %v1354
        %v1418 = vadd.f32 %v1417, %v1355
        %v1419 = vadd.f32 %v1418, %v1356
        %v1420 = vadd.f32 %v1419, %v1357
        %v1421 = vadd.f32 %v1420, %v1358
        %v1422 = vadd.f32 %v1421, %v1359
        %v1423 = vadd.f32 %v1422, %v1360
        %v1424 = vadd.f32 %v1423, %v1361
        %v1425 = vadd.f32 %v1424, %v1362
        %v1426 = vadd.f32 %v1425, %v1363
        %v1427 = vadd.f32 %v1426, %v1364
        %v1428 = vadd.f32 %v1427, %v1365
        %v1429 = vadd.f32 %v1428, %v1366
        %v1430 = vadd.f32 %v1429, %v1367
        %v1431 = vadd.f32 %v1430, %v1368
        %v1432 = vadd.f32 %v1431, %v1369
        %v1433 = vadd.f32 %v1432, %v1370
        %v1434 = vadd.f32 %v1433, %v1371
        %v1435 = vadd.f32 %v1434, %v1372
        %v1436 = vadd.f32 %v1435, %v1373
        %v1437 = vadd.f32 %v1436, %v1374
        %v1438 = vadd.f32 %v1437, %v1375
        %v1439 = vadd.f32 %v1438, %v1376
        %v1440 = vadd.f32 %v1439, %v1377
        %v1441 = vadd.f32 %v1440, %v1378
        %v1442 = vadd.f32 %v1441, %v1379
        %v1443 = vadd.f32 %v1442, %v1380
        %v1444 = vadd.f32 %v1443, %v1381
        %v1445 = vadd.f32 %v1444, %v1382
        %v1446 = vadd.f32 %v1445, %v1383
        %v1447 = vadd.f32 %v1446, %v1384
        %v1448 = vadd.f32 %v1447, %v1385
        %v1449 = vrot.slane %v1448, 4
        %v1450 = vadd.f32 %v1448, %v1449
        %v1451 = vrot.slane %v1450, 2
        %v1452 = vadd.f32 %v1450, %v1451
        %v1453 = vrot.slane %v1452, 1
        %v1454 = vadd.f32 %v1452, %v1453
        %vm1455 = vcmask 1040384
        %v1456 = vsel %vm1455, %v1321, %v1454
        %1457 = vst [vmem:[%s282] sm:$0x3] %v1456
      $region36: #{netg_forward.15} parent=27 // pred_fallthru
        _
      %s1458 = smul.u32 64, %s21
      %p1459 = scmp.lt.s32.totalorder %s20, 3
      %s1460 = scalar_select %p1459, %s20, 3
      %p1461 = scmp.lt.s32.totalorder %s1458, 63
      %s1462 = scalar_select %p1461, %s1458, 63
      %s1463 = smul.addr %s1460, 64
      %s1464 = sadd.s32 %s1462, %s1463
      %s1465 = smul.addr %s1464, 8
      %s1466 = scalar_lea.vmem %s2, %s1465
      %p1467 = scmp.lt.s32.totalorder %s20, 3
      %s1468 = scalar_select %p1467, %s20, 3
      %p1469 = scmp.lt.s32.totalorder %s21, 0
      %s1470 = scalar_select %p1469, %s21, 0
      %s1471 = sadd.s32 %s1470, %s1468
      %s1472 = smul.addr %s1471, 2
      %s1473 = scalar_lea.vmem %s3, %s1472
      // Predicated region
      $region37: #{netg_forward.15} parent=27 // pred_check
        %p1474 = pneg %p112
      $region38: #{netg_forward.15} parent=27 // pred_check_branch
        %1476 = sbr.rel (%p1474) target = $region40
      $region39: #{netg_forward.15} parent=27 // pred_region
        %s1477 = smul.u32 64, %s21
      $region40: #{netg_forward.15} parent=27 // pred_fallthru
        _
      // Predicated region
      $region41: #{netg_forward.15} parent=27 // pred_check
        %p1478 = pneg %p140
      $region42: #{netg_forward.15} parent=27 // pred_check_branch
        %1480 = sbr.rel (%p1478) target = $region44
      $region43: #{netg_forward.15} parent=27 // pred_region
        _
      $region44: #{netg_forward.15} parent=27 // pred_fallthru
        _
    $region28: #{netg_forward.15} parent=5 // pred_fallthru
      _
    %p1481 = scmp.le.s32.totalorder 2, %s10
    // Predicated region
    $region45: #{netg_forward.15} parent=5 // pred_check
      %p1482 = pneg %p1481
    $region46: #{netg_forward.15} parent=5 // pred_check_branch
      %1484 = sbr.rel (%p1482) target = $region48
    $region47: #{netg_forward.15} parent=5 // pred_region
      %s1485 = ssub.s32 %s10, 2
      // Predicated region
      $region49: #{netg_forward.15} parent=47 // pred_check
        %p1486 = pneg %p118
      $region50: #{netg_forward.15} parent=47 // pred_check_branch
        %1488 = sbr.rel (%p1486) target = $region52
      $region51: #{netg_forward.15} parent=47 // pred_region
        %s1489 = smul.u32 64, %s24
        %p1490 = scmp.lt.s32.totalorder %s23, 3
        %s1491 = scalar_select %p1490, %s23, 3
        %p1492 = scmp.lt.s32.totalorder %s1489, 63
        %s1493 = scalar_select %p1492, %s1489, 63
        %s1494 = smul.addr %s1491, 64
        %s1495 = sadd.s32 %s1493, %s1494
        %s1496 = smul.addr %s1495, 8
        %s1497 = scalar_lea.vmem %s2, %s1496
      $region52: #{netg_forward.15} parent=47 // pred_fallthru
        _
      // Predicated region
      $region53: #{netg_forward.15} parent=47 // pred_check
        %p1498 = pneg %p146
      $region54: #{netg_forward.15} parent=47 // pred_check_branch
        %1500 = sbr.rel (%p1498) target = $region56
      $region55: #{netg_forward.15} parent=47 // pred_region
        %p1501 = scmp.lt.s32.totalorder %s23, 3
        %s1502 = scalar_select %p1501, %s23, 3
        %p1503 = scmp.lt.s32.totalorder %s24, 0
        %s1504 = scalar_select %p1503, %s24, 0
        %s1505 = sadd.s32 %s1504, %s1502
        %s1506 = smul.addr %s1505, 2
        %s1507 = scalar_lea.vmem %s3, %s1506
      $region56: #{netg_forward.15} parent=47 // pred_fallthru
        _
    $region48: #{netg_forward.15} parent=5 // pred_fallthru
      _
  $region6: #{netg_forward.15} parent=0 // loop_footer
    %s14 = sadd.s32 1, %s10
  $region7: #{netg_forward.15} parent=0 // loop_footer_branch
    %9 = sbr.rel target = $region3
  $region8: #{netg_forward.15} parent=0 // loop_exit
    _

// kernel: netg_forward.17
$region0: #{netg_forward.17}
  #allocation0 [shape = 'u32[]', space=smem, size = 0x4, offset = 0x4, fixed_abs, tag = 'smem constant byte address 0x4 - core index']
  #allocation1 [shape = 'u32[144,128]{1,0:T(1,128)}', space=vmem, size = 0x12000, scoped, tag = 'internal scratch']
  %s0 = inlined_call_operand.vmem [shape: bf16[4,2048,32], index: 0, kind: input, shape index: {}]
  %s1 = inlined_call_operand.vmem [shape: bf16[4,32,128], index: 1, kind: input, shape index: {}]
  %s2 = inlined_call_operand.vmem [shape: f32[4,2048,128], index: 2, kind: output, shape index: {}]
  %s3 = sld [smem:[#allocation0]]
  $region49: #{netg_forward.17} parent=0
    _
  %s5 = ssub.s32 1, %s3
  %s6 = scalar_select 0, %s5, %s3
  loop: start=0, step=1, limit=18
  $region2: #{netg_forward.17} parent=0 // loop_pre_header
    _
  $region3: #{netg_forward.17} parent=0 // loop_header
    %s8 = sphi 0, %s12
    %p9 = scmp.ge.s32.totalorder %s8, 18
    %s15 = sphi 0, %s34
    %s16 = sphi 0, %s30
    %s17 = sphi 0, %s26
    %s18 = sphi 0, %s15
    %s19 = sphi 0, %s16
    %s20 = sphi 0, %s17
    %s21 = sphi 0, %s18
    %s22 = sphi 0, %s19
    %s23 = sphi 0, %s20
    %s41 = sphi 0, %s43
    %s44 = sphi 0, %s41
    %s45 = sphi 0, %s44
    %s61 = sphi 0, %s45
    %s69 = sphi 0, %s71
    %s72 = sphi 0, %s69
    %s73 = sphi 0, %s72
    %s89 = sphi 0, %s73
    %s97 = sphi 0, %s99
    %s100 = sphi 0, %s97
    %s101 = sphi 0, %s100
    %s117 = sphi 0, %s101
  $region4: #{netg_forward.17} parent=0 // loop_header_branch
    %11 = sbr.rel (%p9) target = $region8
  $region5: #{netg_forward.17} parent=0 // loop_body
    %s13 = ssub.s32 %s8, 1
    %s14 = ssub.s32 %s8, 2
    %s24 = sadd.s32 1, %s17
    %p25 = scmp.ge.s32.totalorder %s24, 1
    %s26 = scalar_select %p25, 0, %s24
    %s27 = sadd.s32 1, %s16
    %s28 = scalar_select %p25, %s27, %s16
    %p29 = scmp.ge.s32.totalorder %s28, 4
    %s30 = scalar_select %p29, 0, %s28
    %s31 = sadd.s32 1, %s15
    %s32 = scalar_select %p29, %s31, %s15
    %p33 = scmp.ge.s32.totalorder %s32, 4
    %s34 = scalar_select %p33, 0, %s32
    %s35 = ssub.s32 %s15, %s34
    %s36 = ssub.s32 %s16, %s30
    %s37 = sor.u32 %s35, %s36
    %s38 = ssub.s32 %s17, %s26
    %s39 = sor.u32 %s37, %s38
    %p40 = scmp.eq.s32.totalorder %s39, 0
    %s42 = sadd.s32 %s41, 1
    %s43 = scalar_select %p40, %s41, %s42
    %p46 = pneg %p40
    %p47 = scmp.eq.s32.totalorder %s8, 15
    %p48 = por %p46, %p47
    %p49 = scmp.ne.s32.totalorder %s41, %s44
    %p50 = scmp.eq.s32.totalorder %s8, 0
    %p51 = por %p49, %p50
    %p52 = scmp.ne.s32.totalorder %s41, %s44
    %p53 = scmp.eq.s32.totalorder %s13, 15
    %p54 = por %p52, %p53
    %p55 = scmp.ne.s32.totalorder %s44, %s45
    %p56 = scmp.eq.s32.totalorder %s13, 0
    %p57 = por %p55, %p56
    %p58 = scmp.ne.s32.totalorder %s44, %s45
    %p59 = scmp.eq.s32.totalorder %s14, 15
    %p60 = por %p58, %p59
    %p62 = scmp.ne.s32.totalorder %s45, %s61
    %p63 = scmp.eq.s32.totalorder %s14, 0
    %p64 = por %p62, %p63
    %s65 = ssub.s32 %s15, %s34
    %s66 = ssub.s32 %s17, %s26
    %s67 = sor.u32 %s65, %s66
    %p68 = scmp.eq.s32.totalorder %s67, 0
    %s70 = sadd.s32 %s69, 1
    %s71 = scalar_select %p68, %s69, %s70
    %p74 = pneg %p68
    %p75 = scmp.eq.s32.totalorder %s8, 15
    %p76 = por %p74, %p75
    %p77 = scmp.ne.s32.totalorder %s69, %s72
    %p78 = scmp.eq.s32.totalorder %s8, 0
    %p79 = por %p77, %p78
    %p80 = scmp.ne.s32.totalorder %s69, %s72
    %p81 = scmp.eq.s32.totalorder %s13, 15
    %p82 = por %p80, %p81
    %p83 = scmp.ne.s32.totalorder %s72, %s73
    %p84 = scmp.eq.s32.totalorder %s13, 0
    %p85 = por %p83, %p84
    %p86 = scmp.ne.s32.totalorder %s72, %s73
    %p87 = scmp.eq.s32.totalorder %s14, 15
    %p88 = por %p86, %p87
    %p90 = scmp.ne.s32.totalorder %s73, %s89
    %p91 = scmp.eq.s32.totalorder %s14, 0
    %p92 = por %p90, %p91
    %s93 = ssub.s32 %s15, %s34
    %s94 = ssub.s32 %s16, %s30
    %s95 = sor.u32 %s93, %s94
    %p96 = scmp.eq.s32.totalorder %s95, 0
    %s98 = sadd.s32 %s97, 1
    %s99 = scalar_select %p96, %s97, %s98
    %p102 = pneg %p96
    %p103 = scmp.eq.s32.totalorder %s8, 15
    %p104 = por %p102, %p103
    %p105 = scmp.ne.s32.totalorder %s97, %s100
    %p106 = scmp.eq.s32.totalorder %s8, 0
    %p107 = por %p105, %p106
    %p108 = scmp.ne.s32.totalorder %s97, %s100
    %p109 = scmp.eq.s32.totalorder %s13, 15
    %p110 = por %p108, %p109
    %p111 = scmp.ne.s32.totalorder %s100, %s101
    %p112 = scmp.eq.s32.totalorder %s13, 0
    %p113 = por %p111, %p112
    %p114 = scmp.ne.s32.totalorder %s100, %s101
    %p115 = scmp.eq.s32.totalorder %s14, 15
    %p116 = por %p114, %p115
    %p118 = scmp.ne.s32.totalorder %s101, %s117
    %p119 = scmp.eq.s32.totalorder %s14, 0
    %p120 = por %p118, %p119
    %p121 = scmp.le.s32.totalorder 1, %s8
    %p122 = scmp.lt.s32.totalorder %s8, 17
    %p123 = pnand %p121, %p122
    %p124 = pneg %p123
    // Predicated region
    $region9: #{netg_forward.17} parent=5 // pred_check
      _
    $region10: #{netg_forward.17} parent=5 // pred_check_branch
      %126 = sbr.rel (%p123) target = $region12
    $region11: #{netg_forward.17} parent=5 // pred_region
      %s127 = ssub.s32 %s8, 1
    $region12: #{netg_forward.17} parent=5 // pred_fallthru
      _
    %p128 = scmp.lt.s32.totalorder %s8, 16
    // Predicated region
    $region13: #{netg_forward.17} parent=5 // pred_check
      %p129 = pneg %p128
    $region14: #{netg_forward.17} parent=5 // pred_check_branch
      %131 = sbr.rel (%p129) target = $region16
    $region15: #{netg_forward.17} parent=5 // pred_region
      // Predicated region
      $region17: #{netg_forward.17} parent=15 // pred_check
        %p132 = pneg %p51
      $region18: #{netg_forward.17} parent=15 // pred_check_branch
        %134 = sbr.rel (%p132) target = $region20
      $region19: #{netg_forward.17} parent=15 // pred_region
        %s135 = smul.u32 64, %s16
        %p136 = scmp.lt.s32.totalorder %s15, 3
        %s137 = scalar_select %p136, %s15, 3
        %p138 = scmp.lt.s32.totalorder %s135, 255
        %s139 = scalar_select %p138, %s135, 255
        %p140 = scmp.lt.s32.totalorder %s17, 0
        %s141 = scalar_select %p140, %s17, 0
        %s142 = sadd.s32 %s141, %s139
        %s143 = smul.addr %s137, 256
        %s144 = sadd.s32 %s142, %s143
        %s145 = smul.addr %s144, 4
        %s146 = scalar_lea.vmem %s0, %s145
        %s147 = smul.u32 64, %s16
      $region20: #{netg_forward.17} parent=15 // pred_fallthru
        _
      // Predicated region
      $region21: #{netg_forward.17} parent=15 // pred_check
        %p148 = pneg %p79
      $region22: #{netg_forward.17} parent=15 // pred_check_branch
        %150 = sbr.rel (%p148) target = $region24
      $region23: #{netg_forward.17} parent=15 // pred_region
        %s151 = smul.u32 4, %s17
        %p152 = scmp.lt.s32.totalorder %s15, 3
        %s153 = scalar_select %p152, %s15, 3
        %p154 = scmp.lt.s32.totalorder %s151, 3
        %s155 = scalar_select %p154, %s151, 3
        %s156 = smul.addr %s153, 4
        %s157 = sadd.s32 %s155, %s156
        %s158 = smul.addr %s157, 4
        %s159 = scalar_lea.vmem %s1, %s158
        %s160 = smul.u32 4, %s17
      $region24: #{netg_forward.17} parent=15 // pred_fallthru
        _
    $region16: #{netg_forward.17} parent=5 // pred_fallthru
      _
    %p161 = scmp.le.s32.totalorder 1, %s8
    %p162 = scmp.lt.s32.totalorder %s8, 17
    %p163 = pnand %p161, %p162
    %p164 = pneg %p163
    // Predicated region
    $region25: #{netg_forward.17} parent=5 // pred_check
      _
    $region26: #{netg_forward.17} parent=5 // pred_check_branch
      %166 = sbr.rel (%p163) target = $region28
    $region27: #{netg_forward.17} parent=5 // pred_region
      %s167 = ssub.s32 %s8, 1
      %s168 = smul.u32 64, %s19
      %p169 = scmp.lt.s32.totalorder %s18, 3
      %s170 = scalar_select %p169, %s18, 3
      %p171 = scmp.lt.s32.totalorder %s168, 255
      %s172 = scalar_select %p171, %s168, 255
      %p173 = scmp.lt.s32.totalorder %s20, 0
      %s174 = scalar_select %p173, %s20, 0
      %s175 = sadd.s32 %s174, %s172
      %s176 = smul.addr %s170, 256
      %s177 = sadd.s32 %s175, %s176
      %s178 = smul.addr %s177, 4
      %s179 = scalar_lea.vmem %s0, %s178
      %p180 = pneg %p57
      %p181 = pneg %p54
      %s182 = smul.u32 4, %s20
      %p183 = scmp.lt.s32.totalorder %s18, 3
      %s184 = scalar_select %p183, %s18, 3
      %p185 = scmp.lt.s32.totalorder %s182, 3
      %s186 = scalar_select %p185, %s182, 3
      %s187 = smul.addr %s184, 4
      %s188 = sadd.s32 %s186, %s187
      %s189 = smul.addr %s188, 4
      %s190 = scalar_lea.vmem %s1, %s189
      %p191 = pneg %p85
      %p192 = pneg %p82
      %p193 = pneg %p113
      %p194 = pneg %p110
      %s195 = smul.u32 64, %s19
      %p196 = scmp.lt.s32.totalorder %s18, 3
      %s197 = scalar_select %p196, %s18, 3
      %p198 = scmp.lt.s32.totalorder %s195, 255
      %s199 = scalar_select %p198, %s195, 255
      %s200 = smul.addr %s197, 256
      %s201 = sadd.s32 %s199, %s200
      %s202 = smul.addr %s201, 8
      %s203 = scalar_lea.vmem %s2, %s202
      %s204 = smul.u32 64, %s19
      %p205 = scmp.lt.s32.totalorder %s18, 3
      %s206 = scalar_select %p205, %s18, 3
      %p207 = scmp.lt.s32.totalorder %s204, 255
      %s208 = scalar_select %p207, %s204, 255
      %p209 = scmp.lt.s32.totalorder %s20, 0
      %s210 = scalar_select %p209, %s20, 0
      %s211 = sadd.s32 %s210, %s208
      %s212 = smul.addr %s206, 256
      %s213 = sadd.s32 %s211, %s212
      %s214 = smul.addr %s213, 4
      %s215 = scalar_lea.vmem %s0, %s214
      %s216 = smul.u32 64, %s19
      %s217 = smul.u32 4, %s20
      %p218 = scmp.lt.s32.totalorder %s18, 3
      %s219 = scalar_select %p218, %s18, 3
      %p220 = scmp.lt.s32.totalorder %s217, 3
      %s221 = scalar_select %p220, %s217, 3
      %s222 = smul.addr %s219, 4
      %s223 = sadd.s32 %s221, %s222
      %s224 = smul.addr %s223, 4
      %s225 = scalar_lea.vmem %s1, %s224
      %s226 = smul.u32 4, %s20
      %s227 = smul.u32 64, %s19
      %p228 = scmp.lt.s32.totalorder %s18, 3
      %s229 = scalar_select %p228, %s18, 3
      %p230 = scmp.lt.s32.totalorder %s227, 255
      %s231 = scalar_select %p230, %s227, 255
      %s232 = smul.addr %s229, 256
      %s233 = sadd.s32 %s231, %s232
      %s234 = smul.addr %s233, 8
      %s235 = scalar_lea.vmem %s2, %s234
      %s236 = smul.u32 64, %s19
      %p238 = scmp.eq.s32.totalorder %s20, 0
      // Predicated region
      $region29: #{netg_forward.17} parent=27 // pred_check
        %p239 = pneg %p238
      $region30: #{netg_forward.17} parent=27 // pred_check_branch
        %241 = sbr.rel (%p239) target = $region32
      $region31: #{netg_forward.17} parent=27 // pred_region
        %242 = vst [vmem:[%s235] sm:$0xff] 0.0
        %243 = vst [vmem:[%s235 + $0x8] sm:$0xff] 0.0
        %244 = vst [vmem:[%s235 + $0x10] sm:$0xff] 0.0
        %245 = vst [vmem:[%s235 + $0x18] sm:$0xff] 0.0
        %246 = vst [vmem:[%s235 + $0x20] sm:$0xff] 0.0
        %247 = vst [vmem:[%s235 + $0x28] sm:$0xff] 0.0
        %248 = vst [vmem:[%s235 + $0x30] sm:$0xff] 0.0
        %249 = vst [vmem:[%s235 + $0x38] sm:$0xff] 0.0
        %250 = vst [vmem:[%s235 + $0x40] sm:$0xff] 0.0
        %251 = vst [vmem:[%s235 + $0x48] sm:$0xff] 0.0
        %252 = vst [vmem:[%s235 + $0x50] sm:$0xff] 0.0
        %253 = vst [vmem:[%s235 + $0x58] sm:$0xff] 0.0
        %254 = vst [vmem:[%s235 + $0x60] sm:$0xff] 0.0
        %255 = vst [vmem:[%s235 + $0x68] sm:$0xff] 0.0
        %256 = vst [vmem:[%s235 + $0x70] sm:$0xff] 0.0
        %257 = vst [vmem:[%s235 + $0x78] sm:$0xff] 0.0
        %258 = vst [vmem:[%s235 + $0x80] sm:$0xff] 0.0
        %259 = vst [vmem:[%s235 + $0x88] sm:$0xff] 0.0
        %260 = vst [vmem:[%s235 + $0x90] sm:$0xff] 0.0
        %261 = vst [vmem:[%s235 + $0x98] sm:$0xff] 0.0
        %262 = vst [vmem:[%s235 + $0xa0] sm:$0xff] 0.0
        %263 = vst [vmem:[%s235 + $0xa8] sm:$0xff] 0.0
        %264 = vst [vmem:[%s235 + $0xb0] sm:$0xff] 0.0
        %265 = vst [vmem:[%s235 + $0xb8] sm:$0xff] 0.0
        %266 = vst [vmem:[%s235 + $0xc0] sm:$0xff] 0.0
        %267 = vst [vmem:[%s235 + $0xc8] sm:$0xff] 0.0
        %268 = vst [vmem:[%s235 + $0xd0] sm:$0xff] 0.0
        %269 = vst [vmem:[%s235 + $0xd8] sm:$0xff] 0.0
        %270 = vst [vmem:[%s235 + $0xe0] sm:$0xff] 0.0
        %271 = vst [vmem:[%s235 + $0xe8] sm:$0xff] 0.0
        %272 = vst [vmem:[%s235 + $0xf0] sm:$0xff] 0.0
        %273 = vst [vmem:[%s235 + $0xf8] sm:$0xff] 0.0
        %274 = vst [vmem:[%s235 + $0x100] sm:$0xff] 0.0
        %275 = vst [vmem:[%s235 + $0x108] sm:$0xff] 0.0
        %276 = vst [vmem:[%s235 + $0x110] sm:$0xff] 0.0
        %277 = vst [vmem:[%s235 + $0x118] sm:$0xff] 0.0
        %278 = vst [vmem:[%s235 + $0x120] sm:$0xff] 0.0
        %279 = vst [vmem:[%s235 + $0x128] sm:$0xff] 0.0
        %280 = vst [vmem:[%s235 + $0x130] sm:$0xff] 0.0
        %281 = vst [vmem:[%s235 + $0x138] sm:$0xff] 0.0
        %282 = vst [vmem:[%s235 + $0x140] sm:$0xff] 0.0
        %283 = vst [vmem:[%s235 + $0x148] sm:$0xff] 0.0
        %284 = vst [vmem:[%s235 + $0x150] sm:$0xff] 0.0
        %285 = vst [vmem:[%s235 + $0x158] sm:$0xff] 0.0
        %286 = vst [vmem:[%s235 + $0x160] sm:$0xff] 0.0
        %287 = vst [vmem:[%s235 + $0x168] sm:$0xff] 0.0
        %288 = vst [vmem:[%s235 + $0x170] sm:$0xff] 0.0
        %289 = vst [vmem:[%s235 + $0x178] sm:$0xff] 0.0
        %290 = vst [vmem:[%s235 + $0x180] sm:$0xff] 0.0
        %291 = vst [vmem:[%s235 + $0x188] sm:$0xff] 0.0
        %292 = vst [vmem:[%s235 + $0x190] sm:$0xff] 0.0
        %293 = vst [vmem:[%s235 + $0x198] sm:$0xff] 0.0
        %294 = vst [vmem:[%s235 + $0x1a0] sm:$0xff] 0.0
        %295 = vst [vmem:[%s235 + $0x1a8] sm:$0xff] 0.0
        %296 = vst [vmem:[%s235 + $0x1b0] sm:$0xff] 0.0
        %297 = vst [vmem:[%s235 + $0x1b8] sm:$0xff] 0.0
        %298 = vst [vmem:[%s235 + $0x1c0] sm:$0xff] 0.0
        %299 = vst [vmem:[%s235 + $0x1c8] sm:$0xff] 0.0
        %300 = vst [vmem:[%s235 + $0x1d0] sm:$0xff] 0.0
        %301 = vst [vmem:[%s235 + $0x1d8] sm:$0xff] 0.0
        %302 = vst [vmem:[%s235 + $0x1e0] sm:$0xff] 0.0
        %303 = vst [vmem:[%s235 + $0x1e8] sm:$0xff] 0.0
        %304 = vst [vmem:[%s235 + $0x1f0] sm:$0xff] 0.0
        %305 = vst [vmem:[%s235 + $0x1f8] sm:$0xff] 0.0
      $region32: #{netg_forward.17} parent=27 // pred_fallthru
        _
      %v306 = vld [vmem:[%s235] sm:$0xff]
      %v307 = vld [vmem:[%s235 + $0x8] sm:$0xff]
      %v308 = vld [vmem:[%s235 + $0x10] sm:$0xff]
      %v309 = vld [vmem:[%s235 + $0x18] sm:$0xff]
      %v310 = vld [vmem:[%s235 + $0x20] sm:$0xff]
      %v311 = vld [vmem:[%s235 + $0x28] sm:$0xff]
      %v312 = vld [vmem:[%s235 + $0x30] sm:$0xff]
      %v313 = vld [vmem:[%s235 + $0x38] sm:$0xff]
      %v314 = vld [vmem:[%s235 + $0x40] sm:$0xff]
      %v315 = vld [vmem:[%s235 + $0x48] sm:$0xff]
      %v316 = vld [vmem:[%s235 + $0x50] sm:$0xff]
      %v317 = vld [vmem:[%s235 + $0x58] sm:$0xff]
      %v318 = vld [vmem:[%s235 + $0x60] sm:$0xff]
      %v319 = vld [vmem:[%s235 + $0x68] sm:$0xff]
      %v320 = vld [vmem:[%s235 + $0x70] sm:$0xff]
      %v321 = vld [vmem:[%s235 + $0x78] sm:$0xff]
      %v322 = vld [vmem:[%s235 + $0x80] sm:$0xff]
      %v323 = vld [vmem:[%s235 + $0x88] sm:$0xff]
      %v324 = vld [vmem:[%s235 + $0x90] sm:$0xff]
      %v325 = vld [vmem:[%s235 + $0x98] sm:$0xff]
      %v326 = vld [vmem:[%s235 + $0xa0] sm:$0xff]
      %v327 = vld [vmem:[%s235 + $0xa8] sm:$0xff]
      %v328 = vld [vmem:[%s235 + $0xb0] sm:$0xff]
      %v329 = vld [vmem:[%s235 + $0xb8] sm:$0xff]
      %v330 = vld [vmem:[%s235 + $0xc0] sm:$0xff]
      %v331 = vld [vmem:[%s235 + $0xc8] sm:$0xff]
      %v332 = vld [vmem:[%s235 + $0xd0] sm:$0xff]
      %v333 = vld [vmem:[%s235 + $0xd8] sm:$0xff]
      %v334 = vld [vmem:[%s235 + $0xe0] sm:$0xff]
      %v335 = vld [vmem:[%s235 + $0xe8] sm:$0xff]
      %v336 = vld [vmem:[%s235 + $0xf0] sm:$0xff]
      %v337 = vld [vmem:[%s235 + $0xf8] sm:$0xff]
      %v338 = vld [vmem:[%s235 + $0x100] sm:$0xff]
      %v339 = vld [vmem:[%s235 + $0x108] sm:$0xff]
      %v340 = vld [vmem:[%s235 + $0x110] sm:$0xff]
      %v341 = vld [vmem:[%s235 + $0x118] sm:$0xff]
      %v342 = vld [vmem:[%s235 + $0x120] sm:$0xff]
      %v343 = vld [vmem:[%s235 + $0x128] sm:$0xff]
      %v344 = vld [vmem:[%s235 + $0x130] sm:$0xff]
      %v345 = vld [vmem:[%s235 + $0x138] sm:$0xff]
      %v346 = vld [vmem:[%s235 + $0x140] sm:$0xff]
      %v347 = vld [vmem:[%s235 + $0x148] sm:$0xff]
      %v348 = vld [vmem:[%s235 + $0x150] sm:$0xff]
      %v349 = vld [vmem:[%s235 + $0x158] sm:$0xff]
      %v350 = vld [vmem:[%s235 + $0x160] sm:$0xff]
      %v351 = vld [vmem:[%s235 + $0x168] sm:$0xff]
      %v352 = vld [vmem:[%s235 + $0x170] sm:$0xff]
      %v353 = vld [vmem:[%s235 + $0x178] sm:$0xff]
      %v354 = vld [vmem:[%s235 + $0x180] sm:$0xff]
      %v355 = vld [vmem:[%s235 + $0x188] sm:$0xff]
      %v356 = vld [vmem:[%s235 + $0x190] sm:$0xff]
      %v357 = vld [vmem:[%s235 + $0x198] sm:$0xff]
      %v358 = vld [vmem:[%s235 + $0x1a0] sm:$0xff]
      %v359 = vld [vmem:[%s235 + $0x1a8] sm:$0xff]
      %v360 = vld [vmem:[%s235 + $0x1b0] sm:$0xff]
      %v361 = vld [vmem:[%s235 + $0x1b8] sm:$0xff]
      %v362 = vld [vmem:[%s235 + $0x1c0] sm:$0xff]
      %v363 = vld [vmem:[%s235 + $0x1c8] sm:$0xff]
      %v364 = vld [vmem:[%s235 + $0x1d0] sm:$0xff]
      %v365 = vld [vmem:[%s235 + $0x1d8] sm:$0xff]
      %v366 = vld [vmem:[%s235 + $0x1e0] sm:$0xff]
      %v367 = vld [vmem:[%s235 + $0x1e8] sm:$0xff]
      %v368 = vld [vmem:[%s235 + $0x1f0] sm:$0xff]
      %v369 = vld [vmem:[%s235 + $0x1f8] sm:$0xff]
      %v370 = vld [vmem:[%s215] sm:$0xf]
      %v371 = vld [vmem:[%s215 + $0x4] sm:$0xf]
      %v372 = vld [vmem:[%s215 + $0x8] sm:$0xf]
      %v373 = vld [vmem:[%s215 + $0xc] sm:$0xf]
      %v374 = vld [vmem:[%s215 + $0x10] sm:$0xf]
      %v375 = vld [vmem:[%s215 + $0x14] sm:$0xf]
      %v376 = vld [vmem:[%s215 + $0x18] sm:$0xf]
      %v377 = vld [vmem:[%s215 + $0x1c] sm:$0xf]
      %v378 = vld [vmem:[%s215 + $0x20] sm:$0xf]
      %v379 = vld [vmem:[%s215 + $0x24] sm:$0xf]
      %v380 = vld [vmem:[%s215 + $0x28] sm:$0xf]
      %v381 = vld [vmem:[%s215 + $0x2c] sm:$0xf]
      %v382 = vld [vmem:[%s215 + $0x30] sm:$0xf]
      %v383 = vld [vmem:[%s215 + $0x34] sm:$0xf]
      %v384 = vld [vmem:[%s215 + $0x38] sm:$0xf]
      %v385 = vld [vmem:[%s215 + $0x3c] sm:$0xf]
      %v386 = vld [vmem:[%s215 + $0x40] sm:$0xf]
      %v387 = vld [vmem:[%s215 + $0x44] sm:$0xf]
      %v388 = vld [vmem:[%s215 + $0x48] sm:$0xf]
      %v389 = vld [vmem:[%s215 + $0x4c] sm:$0xf]
      %v390 = vld [vmem:[%s215 + $0x50] sm:$0xf]
      %v391 = vld [vmem:[%s215 + $0x54] sm:$0xf]
      %v392 = vld [vmem:[%s215 + $0x58] sm:$0xf]
      %v393 = vld [vmem:[%s215 + $0x5c] sm:$0xf]
      %v394 = vld [vmem:[%s215 + $0x60] sm:$0xf]
      %v395 = vld [vmem:[%s215 + $0x64] sm:$0xf]
      %v396 = vld [vmem:[%s215 + $0x68] sm:$0xf]
      %v397 = vld [vmem:[%s215 + $0x6c] sm:$0xf]
      %v398 = vld [vmem:[%s215 + $0x70] sm:$0xf]
      %v399 = vld [vmem:[%s215 + $0x74] sm:$0xf]
      %v400 = vld [vmem:[%s215 + $0x78] sm:$0xf]
      %v401 = vld [vmem:[%s215 + $0x7c] sm:$0xf]
      %v402 = vld [vmem:[%s215 + $0x80] sm:$0xf]
      %v403 = vld [vmem:[%s215 + $0x84] sm:$0xf]
      %v404 = vld [vmem:[%s215 + $0x88] sm:$0xf]
      %v405 = vld [vmem:[%s215 + $0x8c] sm:$0xf]
      %v406 = vld [vmem:[%s215 + $0x90] sm:$0xf]
      %v407 = vld [vmem:[%s215 + $0x94] sm:$0xf]
      %v408 = vld [vmem:[%s215 + $0x98] sm:$0xf]
      %v409 = vld [vmem:[%s215 + $0x9c] sm:$0xf]
      %v410 = vld [vmem:[%s215 + $0xa0] sm:$0xf]
      %v411 = vld [vmem:[%s215 + $0xa4] sm:$0xf]
      %v412 = vld [vmem:[%s215 + $0xa8] sm:$0xf]
      %v413 = vld [vmem:[%s215 + $0xac] sm:$0xf]
      %v414 = vld [vmem:[%s215 + $0xb0] sm:$0xf]
      %v415 = vld [vmem:[%s215 + $0xb4] sm:$0xf]
      %v416 = vld [vmem:[%s215 + $0xb8] sm:$0xf]
      %v417 = vld [vmem:[%s215 + $0xbc] sm:$0xf]
      %v418 = vld [vmem:[%s215 + $0xc0] sm:$0xf]
      %v419 = vld [vmem:[%s215 + $0xc4] sm:$0xf]
      %v420 = vld [vmem:[%s215 + $0xc8] sm:$0xf]
      %v421 = vld [vmem:[%s215 + $0xcc] sm:$0xf]
      %v422 = vld [vmem:[%s215 + $0xd0] sm:$0xf]
      %v423 = vld [vmem:[%s215 + $0xd4] sm:$0xf]
      %v424 = vld [vmem:[%s215 + $0xd8] sm:$0xf]
      %v425 = vld [vmem:[%s215 + $0xdc] sm:$0xf]
      %v426 = vld [vmem:[%s215 + $0xe0] sm:$0xf]
      %v427 = vld [vmem:[%s215 + $0xe4] sm:$0xf]
      %v428 = vld [vmem:[%s215 + $0xe8] sm:$0xf]
      %v429 = vld [vmem:[%s215 + $0xec] sm:$0xf]
      %v430 = vld [vmem:[%s215 + $0xf0] sm:$0xf]
      %v431 = vld [vmem:[%s215 + $0xf4] sm:$0xf]
      %v432 = vld [vmem:[%s215 + $0xf8] sm:$0xf]
      %v433 = vld [vmem:[%s215 + $0xfc] sm:$0xf]
      %v434 = vld [vmem:[%s225] sm:$0xf]
      %v435 = vld [vmem:[%s225 + $0x4] sm:$0xf]
      %v436 = vld [vmem:[%s225 + $0x8] sm:$0xf]
      %v437 = vld [vmem:[%s225 + $0xc] sm:$0xf]
      %v502 = vunpack.c.l.b16 %v370
      %v503 = vunpack.c.l.b16 %v371
      %v504 = vunpack.c.l.b16 %v372
      %v505 = vunpack.c.l.b16 %v373
      %v506 = vunpack.c.l.b16 %v374
      %v507 = vunpack.c.l.b16 %v375
      %v508 = vunpack.c.l.b16 %v376
      %v509 = vunpack.c.l.b16 %v377
      %v510 = vunpack.c.l.b16 %v378
      %v511 = vunpack.c.l.b16 %v379
      %v512 = vunpack.c.l.b16 %v380
      %v513 = vunpack.c.l.b16 %v381
      %v514 = vunpack.c.l.b16 %v382
      %v515 = vunpack.c.l.b16 %v383
      %v516 = vunpack.c.l.b16 %v384
      %v517 = vunpack.c.l.b16 %v385
      %v518 = vunpack.c.l.b16 %v386
      %v519 = vunpack.c.l.b16 %v387
      %v520 = vunpack.c.l.b16 %v388
      %v521 = vunpack.c.l.b16 %v389
      %v522 = vunpack.c.l.b16 %v390
      %v523 = vunpack.c.l.b16 %v391
      %v524 = vunpack.c.l.b16 %v392
      %v525 = vunpack.c.l.b16 %v393
      %v526 = vunpack.c.l.b16 %v394
      %v527 = vunpack.c.l.b16 %v395
      %v528 = vunpack.c.l.b16 %v396
      %v529 = vunpack.c.l.b16 %v397
      %v530 = vunpack.c.l.b16 %v398
      %v531 = vunpack.c.l.b16 %v399
      %v532 = vunpack.c.l.b16 %v400
      %v533 = vunpack.c.l.b16 %v401
      %v534 = vunpack.c.l.b16 %v402
      %v535 = vunpack.c.l.b16 %v403
      %v536 = vunpack.c.l.b16 %v404
      %v537 = vunpack.c.l.b16 %v405
      %v538 = vunpack.c.l.b16 %v406
      %v539 = vunpack.c.l.b16 %v407
      %v540 = vunpack.c.l.b16 %v408
      %v541 = vunpack.c.l.b16 %v409
      %v542 = vunpack.c.l.b16 %v410
      %v543 = vunpack.c.l.b16 %v411
      %v544 = vunpack.c.l.b16 %v412
      %v545 = vunpack.c.l.b16 %v413
      %v546 = vunpack.c.l.b16 %v414
      %v547 = vunpack.c.l.b16 %v415
      %v548 = vunpack.c.l.b16 %v416
      %v549 = vunpack.c.l.b16 %v417
      %v550 = vunpack.c.l.b16 %v418
      %v551 = vunpack.c.l.b16 %v419
      %v552 = vunpack.c.l.b16 %v420
      %v553 = vunpack.c.l.b16 %v421
      %v554 = vunpack.c.l.b16 %v422
      %v555 = vunpack.c.l.b16 %v423
      %v556 = vunpack.c.l.b16 %v424
      %v557 = vunpack.c.l.b16 %v425
      %v558 = vunpack.c.l.b16 %v426
      %v559 = vunpack.c.l.b16 %v427
      %v560 = vunpack.c.l.b16 %v428
      %v561 = vunpack.c.l.b16 %v429
      %v562 = vunpack.c.l.b16 %v430
      %v563 = vunpack.c.l.b16 %v431
      %v564 = vunpack.c.l.b16 %v432
      %v565 = vunpack.c.l.b16 %v433
      %v566 = vpack.c.b16 %v503, %v502
      %v567 = vpack.c.b16 %v505, %v504
      %v568 = vpack.c.b16 %v507, %v506
      %v569 = vpack.c.b16 %v509, %v508
      %v570 = vpack.c.b16 %v511, %v510
      %v571 = vpack.c.b16 %v513, %v512
      %v572 = vpack.c.b16 %v515, %v514
      %v573 = vpack.c.b16 %v517, %v516
      %v574 = vpack.c.b16 %v519, %v518
      %v575 = vpack.c.b16 %v521, %v520
      %v576 = vpack.c.b16 %v523, %v522
      %v577 = vpack.c.b16 %v525, %v524
      %v578 = vpack.c.b16 %v527, %v526
      %v579 = vpack.c.b16 %v529, %v528
      %v580 = vpack.c.b16 %v531, %v530
      %v581 = vpack.c.b16 %v533, %v532
      %v582 = vpack.c.b16 %v535, %v534
      %v583 = vpack.c.b16 %v537, %v536
      %v584 = vpack.c.b16 %v539, %v538
      %v585 = vpack.c.b16 %v541, %v540
      %v586 = vpack.c.b16 %v543, %v542
      %v587 = vpack.c.b16 %v545, %v544
      %v588 = vpack.c.b16 %v547, %v546
      %v589 = vpack.c.b16 %v549, %v548
      %v590 = vpack.c.b16 %v551, %v550
      %v591 = vpack.c.b16 %v553, %v552
      %v592 = vpack.c.b16 %v555, %v554
      %v593 = vpack.c.b16 %v557, %v556
      %v594 = vpack.c.b16 %v559, %v558
      %v595 = vpack.c.b16 %v561, %v560
      %v596 = vpack.c.b16 %v563, %v562
      %v597 = vpack.c.b16 %v565, %v564
      %v602 = vunpack.c.l.b16 %v434
      %v603 = vunpack.c.l.b16 %v435
      %v604 = vunpack.c.l.b16 %v436
      %v605 = vunpack.c.l.b16 %v437
      %v606 = vpack.c.b16 %v603, %v602
      %v607 = vpack.c.b16 %v605, %v604
      %vm610 = vcmask 261120
      %v612 = vsel %vm610, %v566, 0
      %v615 = vsel %vm610, %v567, 0
      %v618 = vsel %vm610, %v568, 0
      %v621 = vsel %vm610, %v569, 0
      %v624 = vsel %vm610, %v570, 0
      %v627 = vsel %vm610, %v571, 0
      %v630 = vsel %vm610, %v572, 0
      %v633 = vsel %vm610, %v573, 0
      %v636 = vsel %vm610, %v574, 0
      %v639 = vsel %vm610, %v575, 0
      %v642 = vsel %vm610, %v576, 0
      %v645 = vsel %vm610, %v577, 0
      %v648 = vsel %vm610, %v578, 0
      %v651 = vsel %vm610, %v579, 0
      %v654 = vsel %vm610, %v580, 0
      %v657 = vsel %vm610, %v581, 0
      %v660 = vsel %vm610, %v582, 0
      %v663 = vsel %vm610, %v583, 0
      %v666 = vsel %vm610, %v584, 0
      %v669 = vsel %vm610, %v585, 0
      %v672 = vsel %vm610, %v586, 0
      %v675 = vsel %vm610, %v587, 0
      %v678 = vsel %vm610, %v588, 0
      %v681 = vsel %vm610, %v589, 0
      %v684 = vsel %vm610, %v590, 0
      %v687 = vsel %vm610, %v591, 0
      %v690 = vsel %vm610, %v592, 0
      %v693 = vsel %vm610, %v593, 0
      %v696 = vsel %vm610, %v594, 0
      %v699 = vsel %vm610, %v595, 0
      %v702 = vsel %vm610, %v596, 0
      %v705 = vsel %vm610, %v597, 0
      %707 = vmatprep.subr.bf16.mxu0 0
      %708 = vmatpush1.bf16.msra.mxu0 0
      %709 = vmatprep.subr.bf16.mxu0 0
      %710 = vmatpush1.bf16.msra.mxu0 0
      %711 = vmatprep.subr.bf16.mxu0 0
      %712 = vmatpush1.bf16.msra.mxu0 0
      %713 = vmatprep.subr.bf16.mxu0 0
      %714 = vmatpush1.bf16.msra.mxu0 0
      %715 = vmatprep.subr.bf16.mxu0 0
      %716 = vmatpush1.bf16.msra.mxu0 0
      %717 = vmatprep.subr.bf16.mxu0 0
      %718 = vmatpush1.bf16.msra.mxu0 0
      %719 = vmatprep.subr.bf16.mxu0 0
      %720 = vmatpush1.bf16.msra.mxu0 %v607
      %721 = vmatprep.subr.bf16.mxu0 0
      %722 = vmatpush1.bf16.msra.mxu0 %v606
      %723 = vmatprep.subr.bf16.mxu0 0
      %724 = vmatpush2.bf16.msra.mxu0 0
      %725 = vmatprep.subr.bf16.mxu0 0
      %726 = vmatpush2.bf16.msra.mxu0 0
      %727 = vmatprep.subr.bf16.mxu0 0
      %728 = vmatpush2.bf16.msra.mxu0 0
      %729 = vmatprep.subr.bf16.mxu0 0
      %730 = vmatpush2.bf16.msra.mxu0 0
      %731 = vmatprep.subr.bf16.mxu0 0
      %732 = vmatpush2.bf16.msra.mxu0 0
      %733 = vmatprep.subr.bf16.mxu0 0
      %734 = vmatpush2.bf16.msra.mxu0 0
      %735 = vmatprep.subr.bf16.mxu0 0
      %736 = vmatpush2.bf16.msra.mxu0 0
      %737 = vmatprep.subr.bf16.mxu0 0
      %738 = vmatpush2.bf16.msra.mxu0 0
      %739 = vmatprep.mubr.bf16.mxu0 0
      %740 = vmatmul.mubr.bf16.gmra.mxu0 %v612
      %v741 = vpop.f32.mrf.mxu0
      %v742 = vadd.f32 0.0, %v741
      %v743 = vpop.f32.mrf.mxu0
      %v744 = vpop.f32.mrf.mxu0
      %v745 = vadd.f32 0.0, %v744
      %v746 = vpop.f32.mrf.mxu0
      %747 = vmatprep.mubr.bf16.mxu0 0
      %748 = vmatmul.mubr.bf16.gmra.mxu0 %v615
      %v749 = vpop.f32.mrf.mxu0
      %v750 = vadd.f32 0.0, %v749
      %v751 = vpop.f32.mrf.mxu0
      %v752 = vpop.f32.mrf.mxu0
      %v753 = vadd.f32 0.0, %v752
      %v754 = vpop.f32.mrf.mxu0
      %755 = vmatprep.mubr.bf16.mxu0 0
      %756 = vmatmul.mubr.bf16.gmra.mxu0 %v618
      %v757 = vpop.f32.mrf.mxu0
      %v758 = vadd.f32 0.0, %v757
      %v759 = vpop.f32.mrf.mxu0
      %v760 = vpop.f32.mrf.mxu0
      %v761 = vadd.f32 0.0, %v760
      %v762 = vpop.f32.mrf.mxu0
      %763 = vmatprep.mubr.bf16.mxu0 0
      %764 = vmatmul.mubr.bf16.gmra.mxu0 %v621
      %v765 = vpop.f32.mrf.mxu0
      %v766 = vadd.f32 0.0, %v765
      %v767 = vpop.f32.mrf.mxu0
      %v768 = vpop.f32.mrf.mxu0
      %v769 = vadd.f32 0.0, %v768
      %v770 = vpop.f32.mrf.mxu0
      %771 = vmatprep.mubr.bf16.mxu0 0
      %772 = vmatmul.mubr.bf16.gmra.mxu0 %v624
      %v773 = vpop.f32.mrf.mxu0
      %v774 = vadd.f32 0.0, %v773
      %v775 = vpop.f32.mrf.mxu0
      %v776 = vpop.f32.mrf.mxu0
      %v777 = vadd.f32 0.0, %v776
      %v778 = vpop.f32.mrf.mxu0
      %779 = vmatprep.mubr.bf16.mxu0 0
      %780 = vmatmul.mubr.bf16.gmra.mxu0 %v627
      %v781 = vpop.f32.mrf.mxu0
      %v782 = vadd.f32 0.0, %v781
      %v783 = vpop.f32.mrf.mxu0
      %v784 = vpop.f32.mrf.mxu0
      %v785 = vadd.f32 0.0, %v784
      %v786 = vpop.f32.mrf.mxu0
      %787 = vmatprep.mubr.bf16.mxu0 0
      %788 = vmatmul.mubr.bf16.gmra.mxu0 %v630
      %v789 = vpop.f32.mrf.mxu0
      %v790 = vadd.f32 0.0, %v789
      %v791 = vpop.f32.mrf.mxu0
      %v792 = vpop.f32.mrf.mxu0
      %v793 = vadd.f32 0.0, %v792
      %v794 = vpop.f32.mrf.mxu0
      %795 = vmatprep.mubr.bf16.mxu0 0
      %796 = vmatmul.mubr.bf16.gmra.mxu0 %v633
      %v797 = vpop.f32.mrf.mxu0
      %v798 = vadd.f32 0.0, %v797
      %v799 = vpop.f32.mrf.mxu0
      %v800 = vpop.f32.mrf.mxu0
      %v801 = vadd.f32 0.0, %v800
      %v802 = vpop.f32.mrf.mxu0
      %803 = vmatprep.mubr.bf16.mxu0 0
      %804 = vmatmul.mubr.bf16.gmra.mxu0 %v636
      %v805 = vpop.f32.mrf.mxu0
      %v806 = vadd.f32 0.0, %v805
      %v807 = vpop.f32.mrf.mxu0
      %v808 = vpop.f32.mrf.mxu0
      %v809 = vadd.f32 0.0, %v808
      %v810 = vpop.f32.mrf.mxu0
      %811 = vmatprep.mubr.bf16.mxu0 0
      %812 = vmatmul.mubr.bf16.gmra.mxu0 %v639
      %v813 = vpop.f32.mrf.mxu0
      %v814 = vadd.f32 0.0, %v813
      %v815 = vpop.f32.mrf.mxu0
      %v816 = vpop.f32.mrf.mxu0
      %v817 = vadd.f32 0.0, %v816
      %v818 = vpop.f32.mrf.mxu0
      %819 = vmatprep.mubr.bf16.mxu0 0
      %820 = vmatmul.mubr.bf16.gmra.mxu0 %v642
      %v821 = vpop.f32.mrf.mxu0
      %v822 = vadd.f32 0.0, %v821
      %v823 = vpop.f32.mrf.mxu0
      %v824 = vpop.f32.mrf.mxu0
      %v825 = vadd.f32 0.0, %v824
      %v826 = vpop.f32.mrf.mxu0
      %827 = vmatprep.mubr.bf16.mxu0 0
      %828 = vmatmul.mubr.bf16.gmra.mxu0 %v645
      %v829 = vpop.f32.mrf.mxu0
      %v830 = vadd.f32 0.0, %v829
      %v831 = vpop.f32.mrf.mxu0
      %v832 = vpop.f32.mrf.mxu0
      %v833 = vadd.f32 0.0, %v832
      %v834 = vpop.f32.mrf.mxu0
      %835 = vmatprep.mubr.bf16.mxu0 0
      %836 = vmatmul.mubr.bf16.gmra.mxu0 %v648
      %v837 = vpop.f32.mrf.mxu0
      %v838 = vadd.f32 0.0, %v837
      %v839 = vpop.f32.mrf.mxu0
      %v840 = vpop.f32.mrf.mxu0
      %v841 = vadd.f32 0.0, %v840
      %v842 = vpop.f32.mrf.mxu0
      %843 = vmatprep.mubr.bf16.mxu0 0
      %844 = vmatmul.mubr.bf16.gmra.mxu0 %v651
      %v845 = vpop.f32.mrf.mxu0
      %v846 = vadd.f32 0.0, %v845
      %v847 = vpop.f32.mrf.mxu0
      %v848 = vpop.f32.mrf.mxu0
      %v849 = vadd.f32 0.0, %v848
      %v850 = vpop.f32.mrf.mxu0
      %851 = vmatprep.mubr.bf16.mxu0 0
      %852 = vmatmul.mubr.bf16.gmra.mxu0 %v654
      %v853 = vpop.f32.mrf.mxu0
      %v854 = vadd.f32 0.0, %v853
      %v855 = vpop.f32.mrf.mxu0
      %v856 = vpop.f32.mrf.mxu0
      %v857 = vadd.f32 0.0, %v856
      %v858 = vpop.f32.mrf.mxu0
      %859 = vmatprep.mubr.bf16.mxu0 0
      %860 = vmatmul.mubr.bf16.gmra.mxu0 %v657
      %v861 = vpop.f32.mrf.mxu0
      %v862 = vadd.f32 0.0, %v861
      %v863 = vpop.f32.mrf.mxu0
      %v864 = vpop.f32.mrf.mxu0
      %v865 = vadd.f32 0.0, %v864
      %v866 = vpop.f32.mrf.mxu0
      %867 = vmatprep.mubr.bf16.mxu0 0
      %868 = vmatmul.mubr.bf16.gmra.mxu0 %v660
      %v869 = vpop.f32.mrf.mxu0
      %v870 = vadd.f32 0.0, %v869
      %v871 = vpop.f32.mrf.mxu0
      %v872 = vpop.f32.mrf.mxu0
      %v873 = vadd.f32 0.0, %v872
      %v874 = vpop.f32.mrf.mxu0
      %875 = vmatprep.mubr.bf16.mxu0 0
      %876 = vmatmul.mubr.bf16.gmra.mxu0 %v663
      %v877 = vpop.f32.mrf.mxu0
      %v878 = vadd.f32 0.0, %v877
      %v879 = vpop.f32.mrf.mxu0
      %v880 = vpop.f32.mrf.mxu0
      %v881 = vadd.f32 0.0, %v880
      %v882 = vpop.f32.mrf.mxu0
      %883 = vmatprep.mubr.bf16.mxu0 0
      %884 = vmatmul.mubr.bf16.gmra.mxu0 %v666
      %v885 = vpop.f32.mrf.mxu0
      %v886 = vadd.f32 0.0, %v885
      %v887 = vpop.f32.mrf.mxu0
      %v888 = vpop.f32.mrf.mxu0
      %v889 = vadd.f32 0.0, %v888
      %v890 = vpop.f32.mrf.mxu0
      %891 = vmatprep.mubr.bf16.mxu0 0
      %892 = vmatmul.mubr.bf16.gmra.mxu0 %v669
      %v893 = vpop.f32.mrf.mxu0
      %v894 = vadd.f32 0.0, %v893
      %v895 = vpop.f32.mrf.mxu0
      %v896 = vpop.f32.mrf.mxu0
      %v897 = vadd.f32 0.0, %v896
      %v898 = vpop.f32.mrf.mxu0
      %899 = vmatprep.mubr.bf16.mxu0 0
      %900 = vmatmul.mubr.bf16.gmra.mxu0 %v672
      %v901 = vpop.f32.mrf.mxu0
      %v902 = vadd.f32 0.0, %v901
      %v903 = vpop.f32.mrf.mxu0
      %v904 = vpop.f32.mrf.mxu0
      %v905 = vadd.f32 0.0, %v904
      %v906 = vpop.f32.mrf.mxu0
      %907 = vmatprep.mubr.bf16.mxu0 0
      %908 = vmatmul.mubr.bf16.gmra.mxu0 %v675
      %v909 = vpop.f32.mrf.mxu0
      %v910 = vadd.f32 0.0, %v909
      %v911 = vpop.f32.mrf.mxu0
      %v912 = vpop.f32.mrf.mxu0
      %v913 = vadd.f32 0.0, %v912
      %v914 = vpop.f32.mrf.mxu0
      %915 = vmatprep.mubr.bf16.mxu0 0
      %916 = vmatmul.mubr.bf16.gmra.mxu0 %v678
      %v917 = vpop.f32.mrf.mxu0
      %v918 = vadd.f32 0.0, %v917
      %v919 = vpop.f32.mrf.mxu0
      %v920 = vpop.f32.mrf.mxu0
      %v921 = vadd.f32 0.0, %v920
      %v922 = vpop.f32.mrf.mxu0
      %923 = vmatprep.mubr.bf16.mxu0 0
      %924 = vmatmul.mubr.bf16.gmra.mxu0 %v681
      %v925 = vpop.f32.mrf.mxu0
      %v926 = vadd.f32 0.0, %v925
      %v927 = vpop.f32.mrf.mxu0
      %v928 = vpop.f32.mrf.mxu0
      %v929 = vadd.f32 0.0, %v928
      %v930 = vpop.f32.mrf.mxu0
      %931 = vmatprep.mubr.bf16.mxu0 0
      %932 = vmatmul.mubr.bf16.gmra.mxu0 %v684
      %v933 = vpop.f32.mrf.mxu0
      %v934 = vadd.f32 0.0, %v933
      %v935 = vpop.f32.mrf.mxu0
      %v936 = vpop.f32.mrf.mxu0
      %v937 = vadd.f32 0.0, %v936
      %v938 = vpop.f32.mrf.mxu0
      %939 = vmatprep.mubr.bf16.mxu0 0
      %940 = vmatmul.mubr.bf16.gmra.mxu0 %v687
      %v941 = vpop.f32.mrf.mxu0
      %v942 = vadd.f32 0.0, %v941
      %v943 = vpop.f32.mrf.mxu0
      %v944 = vpop.f32.mrf.mxu0
      %v945 = vadd.f32 0.0, %v944
      %v946 = vpop.f32.mrf.mxu0
      %947 = vmatprep.mubr.bf16.mxu0 0
      %948 = vmatmul.mubr.bf16.gmra.mxu0 %v690
      %v949 = vpop.f32.mrf.mxu0
      %v950 = vadd.f32 0.0, %v949
      %v951 = vpop.f32.mrf.mxu0
      %v952 = vpop.f32.mrf.mxu0
      %v953 = vadd.f32 0.0, %v952
      %v954 = vpop.f32.mrf.mxu0
      %955 = vmatprep.mubr.bf16.mxu0 0
      %956 = vmatmul.mubr.bf16.gmra.mxu0 %v693
      %v957 = vpop.f32.mrf.mxu0
      %v958 = vadd.f32 0.0, %v957
      %v959 = vpop.f32.mrf.mxu0
      %v960 = vpop.f32.mrf.mxu0
      %v961 = vadd.f32 0.0, %v960
      %v962 = vpop.f32.mrf.mxu0
      %963 = vmatprep.mubr.bf16.mxu0 0
      %964 = vmatmul.mubr.bf16.gmra.mxu0 %v696
      %v965 = vpop.f32.mrf.mxu0
      %v966 = vadd.f32 0.0, %v965
      %v967 = vpop.f32.mrf.mxu0
      %v968 = vpop.f32.mrf.mxu0
      %v969 = vadd.f32 0.0, %v968
      %v970 = vpop.f32.mrf.mxu0
      %971 = vmatprep.mubr.bf16.mxu0 0
      %972 = vmatmul.mubr.bf16.gmra.mxu0 %v699
      %v973 = vpop.f32.mrf.mxu0
      %v974 = vadd.f32 0.0, %v973
      %v975 = vpop.f32.mrf.mxu0
      %v976 = vpop.f32.mrf.mxu0
      %v977 = vadd.f32 0.0, %v976
      %v978 = vpop.f32.mrf.mxu0
      %979 = vmatprep.mubr.bf16.mxu0 0
      %980 = vmatmul.mubr.bf16.gmra.mxu0 %v702
      %v981 = vpop.f32.mrf.mxu0
      %v982 = vadd.f32 0.0, %v981
      %v983 = vpop.f32.mrf.mxu0
      %v984 = vpop.f32.mrf.mxu0
      %v985 = vadd.f32 0.0, %v984
      %v986 = vpop.f32.mrf.mxu0
      %987 = vmatprep.mubr.bf16.mxu0 0
      %988 = vmatmul.mubr.bf16.gmra.mxu0 %v705
      %v989 = vpop.f32.mrf.mxu0
      %v990 = vadd.f32 0.0, %v989
      %v991 = vpop.f32.mrf.mxu0
      %v992 = vpop.f32.mrf.mxu0
      %v993 = vadd.f32 0.0, %v992
      %v994 = vpop.f32.mrf.mxu0
      %995 = vdwg.mxu0
      %v996 = vadd.f32 %v306, %v742
      %v997 = vadd.f32 %v307, %v745
      %v998 = vadd.f32 %v308, %v750
      %v999 = vadd.f32 %v309, %v753
      %v1000 = vadd.f32 %v310, %v758
      %v1001 = vadd.f32 %v311, %v761
      %v1002 = vadd.f32 %v312, %v766
      %v1003 = vadd.f32 %v313, %v769
      %v1004 = vadd.f32 %v314, %v774
      %v1005 = vadd.f32 %v315, %v777
      %v1006 = vadd.f32 %v316, %v782
      %v1007 = vadd.f32 %v317, %v785
      %v1008 = vadd.f32 %v318, %v790
      %v1009 = vadd.f32 %v319, %v793
      %v1010 = vadd.f32 %v320, %v798
      %v1011 = vadd.f32 %v321, %v801
      %v1012 = vadd.f32 %v322, %v806
      %v1013 = vadd.f32 %v323, %v809
      %v1014 = vadd.f32 %v324, %v814
      %v1015 = vadd.f32 %v325, %v817
      %v1016 = vadd.f32 %v326, %v822
      %v1017 = vadd.f32 %v327, %v825
      %v1018 = vadd.f32 %v328, %v830
      %v1019 = vadd.f32 %v329, %v833
      %v1020 = vadd.f32 %v330, %v838
      %v1021 = vadd.f32 %v331, %v841
      %v1022 = vadd.f32 %v332, %v846
      %v1023 = vadd.f32 %v333, %v849
      %v1024 = vadd.f32 %v334, %v854
      %v1025 = vadd.f32 %v335, %v857
      %v1026 = vadd.f32 %v336, %v862
      %v1027 = vadd.f32 %v337, %v865
      %v1028 = vadd.f32 %v338, %v870
      %v1029 = vadd.f32 %v339, %v873
      %v1030 = vadd.f32 %v340, %v878
      %v1031 = vadd.f32 %v341, %v881
      %v1032 = vadd.f32 %v342, %v886
      %v1033 = vadd.f32 %v343, %v889
      %v1034 = vadd.f32 %v344, %v894
      %v1035 = vadd.f32 %v345, %v897
      %v1036 = vadd.f32 %v346, %v902
      %v1037 = vadd.f32 %v347, %v905
      %v1038 = vadd.f32 %v348, %v910
      %v1039 = vadd.f32 %v349, %v913
      %v1040 = vadd.f32 %v350, %v918
      %v1041 = vadd.f32 %v351, %v921
      %v1042 = vadd.f32 %v352, %v926
      %v1043 = vadd.f32 %v353, %v929
      %v1044 = vadd.f32 %v354, %v934
      %v1045 = vadd.f32 %v355, %v937
      %v1046 = vadd.f32 %v356, %v942
      %v1047 = vadd.f32 %v357, %v945
      %v1048 = vadd.f32 %v358, %v950
      %v1049 = vadd.f32 %v359, %v953
      %v1050 = vadd.f32 %v360, %v958
      %v1051 = vadd.f32 %v361, %v961
      %v1052 = vadd.f32 %v362, %v966
      %v1053 = vadd.f32 %v363, %v969
      %v1054 = vadd.f32 %v364, %v974
      %v1055 = vadd.f32 %v365, %v977
      %v1056 = vadd.f32 %v366, %v982
      %v1057 = vadd.f32 %v367, %v985
      %v1058 = vadd.f32 %v368, %v990
      %v1059 = vadd.f32 %v369, %v993
      %1060 = vst [vmem:[%s235] sm:$0xff] %v996
      %1061 = vst [vmem:[%s235 + $0x8] sm:$0xff] %v997
      %1062 = vst [vmem:[%s235 + $0x10] sm:$0xff] %v998
      %1063 = vst [vmem:[%s235 + $0x18] sm:$0xff] %v999
      %1064 = vst [vmem:[%s235 + $0x20] sm:$0xff] %v1000
      %1065 = vst [vmem:[%s235 + $0x28] sm:$0xff] %v1001
      %1066 = vst [vmem:[%s235 + $0x30] sm:$0xff] %v1002
      %1067 = vst [vmem:[%s235 + $0x38] sm:$0xff] %v1003
      %1068 = vst [vmem:[%s235 + $0x40] sm:$0xff] %v1004
      %1069 = vst [vmem:[%s235 + $0x48] sm:$0xff] %v1005
      %1070 = vst [vmem:[%s235 + $0x50] sm:$0xff] %v1006
      %1071 = vst [vmem:[%s235 + $0x58] sm:$0xff] %v1007
      %1072 = vst [vmem:[%s235 + $0x60] sm:$0xff] %v1008
      %1073 = vst [vmem:[%s235 + $0x68] sm:$0xff] %v1009
      %1074 = vst [vmem:[%s235 + $0x70] sm:$0xff] %v1010
      %1075 = vst [vmem:[%s235 + $0x78] sm:$0xff] %v1011
      %1076 = vst [vmem:[%s235 + $0x80] sm:$0xff] %v1012
      %1077 = vst [vmem:[%s235 + $0x88] sm:$0xff] %v1013
      %1078 = vst [vmem:[%s235 + $0x90] sm:$0xff] %v1014
      %1079 = vst [vmem:[%s235 + $0x98] sm:$0xff] %v1015
      %1080 = vst [vmem:[%s235 + $0xa0] sm:$0xff] %v1016
      %1081 = vst [vmem:[%s235 + $0xa8] sm:$0xff] %v1017
      %1082 = vst [vmem:[%s235 + $0xb0] sm:$0xff] %v1018
      %1083 = vst [vmem:[%s235 + $0xb8] sm:$0xff] %v1019
      %1084 = vst [vmem:[%s235 + $0xc0] sm:$0xff] %v1020
      %1085 = vst [vmem:[%s235 + $0xc8] sm:$0xff] %v1021
      %1086 = vst [vmem:[%s235 + $0xd0] sm:$0xff] %v1022
      %1087 = vst [vmem:[%s235 + $0xd8] sm:$0xff] %v1023
      %1088 = vst [vmem:[%s235 + $0xe0] sm:$0xff] %v1024
      %1089 = vst [vmem:[%s235 + $0xe8] sm:$0xff] %v1025
      %1090 = vst [vmem:[%s235 + $0xf0] sm:$0xff] %v1026
      %1091 = vst [vmem:[%s235 + $0xf8] sm:$0xff] %v1027
      %1092 = vst [vmem:[%s235 + $0x100] sm:$0xff] %v1028
      %1093 = vst [vmem:[%s235 + $0x108] sm:$0xff] %v1029
      %1094 = vst [vmem:[%s235 + $0x110] sm:$0xff] %v1030
      %1095 = vst [vmem:[%s235 + $0x118] sm:$0xff] %v1031
      %1096 = vst [vmem:[%s235 + $0x120] sm:$0xff] %v1032
      %1097 = vst [vmem:[%s235 + $0x128] sm:$0xff] %v1033
      %1098 = vst [vmem:[%s235 + $0x130] sm:$0xff] %v1034
      %1099 = vst [vmem:[%s235 + $0x138] sm:$0xff] %v1035
      %1100 = vst [vmem:[%s235 + $0x140] sm:$0xff] %v1036
      %1101 = vst [vmem:[%s235 + $0x148] sm:$0xff] %v1037
      %1102 = vst [vmem:[%s235 + $0x150] sm:$0xff] %v1038
      %1103 = vst [vmem:[%s235 + $0x158] sm:$0xff] %v1039
      %1104 = vst [vmem:[%s235 + $0x160] sm:$0xff] %v1040
      %1105 = vst [vmem:[%s235 + $0x168] sm:$0xff] %v1041
      %1106 = vst [vmem:[%s235 + $0x170] sm:$0xff] %v1042
      %1107 = vst [vmem:[%s235 + $0x178] sm:$0xff] %v1043
      %1108 = vst [vmem:[%s235 + $0x180] sm:$0xff] %v1044
      %1109 = vst [vmem:[%s235 + $0x188] sm:$0xff] %v1045
      %1110 = vst [vmem:[%s235 + $0x190] sm:$0xff] %v1046
      %1111 = vst [vmem:[%s235 + $0x198] sm:$0xff] %v1047
      %1112 = vst [vmem:[%s235 + $0x1a0] sm:$0xff] %v1048
      %1113 = vst [vmem:[%s235 + $0x1a8] sm:$0xff] %v1049
      %1114 = vst [vmem:[%s235 + $0x1b0] sm:$0xff] %v1050
      %1115 = vst [vmem:[%s235 + $0x1b8] sm:$0xff] %v1051
      %1116 = vst [vmem:[%s235 + $0x1c0] sm:$0xff] %v1052
      %1117 = vst [vmem:[%s235 + $0x1c8] sm:$0xff] %v1053
      %1118 = vst [vmem:[%s235 + $0x1d0] sm:$0xff] %v1054
      %1119 = vst [vmem:[%s235 + $0x1d8] sm:$0xff] %v1055
      %1120 = vst [vmem:[%s235 + $0x1e0] sm:$0xff] %v1056
      %1121 = vst [vmem:[%s235 + $0x1e8] sm:$0xff] %v1057
      %1122 = vst [vmem:[%s235 + $0x1f0] sm:$0xff] %v1058
      %1123 = vst [vmem:[%s235 + $0x1f8] sm:$0xff] %v1059
      // Predicated region
      $region33: #{netg_forward.17} parent=27 // pred_check
        %p1124 = pneg %p238
      $region34: #{netg_forward.17} parent=27 // pred_check_branch
        %1126 = sbr.rel (%p1124) target = $region36
      $region35: #{netg_forward.17} parent=27 // pred_region
        %v1127 = vld [vmem:[%s235] sm:$0xff]
        %v1128 = vld [vmem:[%s235 + $0x8] sm:$0xff]
        %v1129 = vld [vmem:[%s235 + $0x10] sm:$0xff]
        %v1130 = vld [vmem:[%s235 + $0x18] sm:$0xff]
        %v1131 = vld [vmem:[%s235 + $0x20] sm:$0xff]
        %v1132 = vld [vmem:[%s235 + $0x28] sm:$0xff]
        %v1133 = vld [vmem:[%s235 + $0x30] sm:$0xff]
        %v1134 = vld [vmem:[%s235 + $0x38] sm:$0xff]
        %v1135 = vld [vmem:[%s235 + $0x40] sm:$0xff]
        %v1136 = vld [vmem:[%s235 + $0x48] sm:$0xff]
        %v1137 = vld [vmem:[%s235 + $0x50] sm:$0xff]
        %v1138 = vld [vmem:[%s235 + $0x58] sm:$0xff]
        %v1139 = vld [vmem:[%s235 + $0x60] sm:$0xff]
        %v1140 = vld [vmem:[%s235 + $0x68] sm:$0xff]
        %v1141 = vld [vmem:[%s235 + $0x70] sm:$0xff]
        %v1142 = vld [vmem:[%s235 + $0x78] sm:$0xff]
        %v1143 = vld [vmem:[%s235 + $0x80] sm:$0xff]
        %v1144 = vld [vmem:[%s235 + $0x88] sm:$0xff]
        %v1145 = vld [vmem:[%s235 + $0x90] sm:$0xff]
        %v1146 = vld [vmem:[%s235 + $0x98] sm:$0xff]
        %v1147 = vld [vmem:[%s235 + $0xa0] sm:$0xff]
        %v1148 = vld [vmem:[%s235 + $0xa8] sm:$0xff]
        %v1149 = vld [vmem:[%s235 + $0xb0] sm:$0xff]
        %v1150 = vld [vmem:[%s235 + $0xb8] sm:$0xff]
        %v1151 = vld [vmem:[%s235 + $0xc0] sm:$0xff]
        %v1152 = vld [vmem:[%s235 + $0xc8] sm:$0xff]
        %v1153 = vld [vmem:[%s235 + $0xd0] sm:$0xff]
        %v1154 = vld [vmem:[%s235 + $0xd8] sm:$0xff]
        %v1155 = vld [vmem:[%s235 + $0xe0] sm:$0xff]
        %v1156 = vld [vmem:[%s235 + $0xe8] sm:$0xff]
        %v1157 = vld [vmem:[%s235 + $0xf0] sm:$0xff]
        %v1158 = vld [vmem:[%s235 + $0xf8] sm:$0xff]
        %v1159 = vld [vmem:[%s235 + $0x100] sm:$0xff]
        %v1160 = vld [vmem:[%s235 + $0x108] sm:$0xff]
        %v1161 = vld [vmem:[%s235 + $0x110] sm:$0xff]
        %v1162 = vld [vmem:[%s235 + $0x118] sm:$0xff]
        %v1163 = vld [vmem:[%s235 + $0x120] sm:$0xff]
        %v1164 = vld [vmem:[%s235 + $0x128] sm:$0xff]
        %v1165 = vld [vmem:[%s235 + $0x130] sm:$0xff]
        %v1166 = vld [vmem:[%s235 + $0x138] sm:$0xff]
        %v1167 = vld [vmem:[%s235 + $0x140] sm:$0xff]
        %v1168 = vld [vmem:[%s235 + $0x148] sm:$0xff]
        %v1169 = vld [vmem:[%s235 + $0x150] sm:$0xff]
        %v1170 = vld [vmem:[%s235 + $0x158] sm:$0xff]
        %v1171 = vld [vmem:[%s235 + $0x160] sm:$0xff]
        %v1172 = vld [vmem:[%s235 + $0x168] sm:$0xff]
        %v1173 = vld [vmem:[%s235 + $0x170] sm:$0xff]
        %v1174 = vld [vmem:[%s235 + $0x178] sm:$0xff]
        %v1175 = vld [vmem:[%s235 + $0x180] sm:$0xff]
        %v1176 = vld [vmem:[%s235 + $0x188] sm:$0xff]
        %v1177 = vld [vmem:[%s235 + $0x190] sm:$0xff]
        %v1178 = vld [vmem:[%s235 + $0x198] sm:$0xff]
        %v1179 = vld [vmem:[%s235 + $0x1a0] sm:$0xff]
        %v1180 = vld [vmem:[%s235 + $0x1a8] sm:$0xff]
        %v1181 = vld [vmem:[%s235 + $0x1b0] sm:$0xff]
        %v1182 = vld [vmem:[%s235 + $0x1b8] sm:$0xff]
        %v1183 = vld [vmem:[%s235 + $0x1c0] sm:$0xff]
        %v1184 = vld [vmem:[%s235 + $0x1c8] sm:$0xff]
        %v1185 = vld [vmem:[%s235 + $0x1d0] sm:$0xff]
        %v1186 = vld [vmem:[%s235 + $0x1d8] sm:$0xff]
        %v1187 = vld [vmem:[%s235 + $0x1e0] sm:$0xff]
        %v1188 = vld [vmem:[%s235 + $0x1e8] sm:$0xff]
        %v1189 = vld [vmem:[%s235 + $0x1f0] sm:$0xff]
        %v1190 = vld [vmem:[%s235 + $0x1f8] sm:$0xff]
        %v1191 = vtanh.pop %v1127
        %v1192 = vtanh.pop %v1128
        %v1193 = vtanh.pop %v1129
        %v1194 = vtanh.pop %v1130
        %v1195 = vtanh.pop %v1131
        %v1196 = vtanh.pop %v1132
        %v1197 = vtanh.pop %v1133
        %v1198 = vtanh.pop %v1134
        %v1199 = vtanh.pop %v1135
        %v1200 = vtanh.pop %v1136
        %v1201 = vtanh.pop %v1137
        %v1202 = vtanh.pop %v1138
        %v1203 = vtanh.pop %v1139
        %v1204 = vtanh.pop %v1140
        %v1205 = vtanh.pop %v1141
        %v1206 = vtanh.pop %v1142
        %v1207 = vtanh.pop %v1143
        %v1208 = vtanh.pop %v1144
        %v1209 = vtanh.pop %v1145
        %v1210 = vtanh.pop %v1146
        %v1211 = vtanh.pop %v1147
        %v1212 = vtanh.pop %v1148
        %v1213 = vtanh.pop %v1149
        %v1214 = vtanh.pop %v1150
        %v1215 = vtanh.pop %v1151
        %v1216 = vtanh.pop %v1152
        %v1217 = vtanh.pop %v1153
        %v1218 = vtanh.pop %v1154
        %v1219 = vtanh.pop %v1155
        %v1220 = vtanh.pop %v1156
        %v1221 = vtanh.pop %v1157
        %v1222 = vtanh.pop %v1158
        %v1223 = vtanh.pop %v1159
        %v1224 = vtanh.pop %v1160
        %v1225 = vtanh.pop %v1161
        %v1226 = vtanh.pop %v1162
        %v1227 = vtanh.pop %v1163
        %v1228 = vtanh.pop %v1164
        %v1229 = vtanh.pop %v1165
        %v1230 = vtanh.pop %v1166
        %v1231 = vtanh.pop %v1167
        %v1232 = vtanh.pop %v1168
        %v1233 = vtanh.pop %v1169
        %v1234 = vtanh.pop %v1170
        %v1235 = vtanh.pop %v1171
        %v1236 = vtanh.pop %v1172
        %v1237 = vtanh.pop %v1173
        %v1238 = vtanh.pop %v1174
        %v1239 = vtanh.pop %v1175
        %v1240 = vtanh.pop %v1176
        %v1241 = vtanh.pop %v1177
        %v1242 = vtanh.pop %v1178
        %v1243 = vtanh.pop %v1179
        %v1244 = vtanh.pop %v1180
        %v1245 = vtanh.pop %v1181
        %v1246 = vtanh.pop %v1182
        %v1247 = vtanh.pop %v1183
        %v1248 = vtanh.pop %v1184
        %v1249 = vtanh.pop %v1185
        %v1250 = vtanh.pop %v1186
        %v1251 = vtanh.pop %v1187
        %v1252 = vtanh.pop %v1188
        %v1253 = vtanh.pop %v1189
        %v1254 = vtanh.pop %v1190
        %1255 = vst [vmem:[%s235] sm:$0xff] %v1191
        %1256 = vst [vmem:[%s235 + $0x8] sm:$0xff] %v1192
        %1257 = vst [vmem:[%s235 + $0x10] sm:$0xff] %v1193
        %1258 = vst [vmem:[%s235 + $0x18] sm:$0xff] %v1194
        %1259 = vst [vmem:[%s235 + $0x20] sm:$0xff] %v1195
        %1260 = vst [vmem:[%s235 + $0x28] sm:$0xff] %v1196
        %1261 = vst [vmem:[%s235 + $0x30] sm:$0xff] %v1197
        %1262 = vst [vmem:[%s235 + $0x38] sm:$0xff] %v1198
        %1263 = vst [vmem:[%s235 + $0x40] sm:$0xff] %v1199
        %1264 = vst [vmem:[%s235 + $0x48] sm:$0xff] %v1200
        %1265 = vst [vmem:[%s235 + $0x50] sm:$0xff] %v1201
        %1266 = vst [vmem:[%s235 + $0x58] sm:$0xff] %v1202
        %1267 = vst [vmem:[%s235 + $0x60] sm:$0xff] %v1203
        %1268 = vst [vmem:[%s235 + $0x68] sm:$0xff] %v1204
        %1269 = vst [vmem:[%s235 + $0x70] sm:$0xff] %v1205
        %1270 = vst [vmem:[%s235 + $0x78] sm:$0xff] %v1206
        %1271 = vst [vmem:[%s235 + $0x80] sm:$0xff] %v1207
        %1272 = vst [vmem:[%s235 + $0x88] sm:$0xff] %v1208
        %1273 = vst [vmem:[%s235 + $0x90] sm:$0xff] %v1209
        %1274 = vst [vmem:[%s235 + $0x98] sm:$0xff] %v1210
        %1275 = vst [vmem:[%s235 + $0xa0] sm:$0xff] %v1211
        %1276 = vst [vmem:[%s235 + $0xa8] sm:$0xff] %v1212
        %1277 = vst [vmem:[%s235 + $0xb0] sm:$0xff] %v1213
        %1278 = vst [vmem:[%s235 + $0xb8] sm:$0xff] %v1214
        %1279 = vst [vmem:[%s235 + $0xc0] sm:$0xff] %v1215
        %1280 = vst [vmem:[%s235 + $0xc8] sm:$0xff] %v1216
        %1281 = vst [vmem:[%s235 + $0xd0] sm:$0xff] %v1217
        %1282 = vst [vmem:[%s235 + $0xd8] sm:$0xff] %v1218
        %1283 = vst [vmem:[%s235 + $0xe0] sm:$0xff] %v1219
        %1284 = vst [vmem:[%s235 + $0xe8] sm:$0xff] %v1220
        %1285 = vst [vmem:[%s235 + $0xf0] sm:$0xff] %v1221
        %1286 = vst [vmem:[%s235 + $0xf8] sm:$0xff] %v1222
        %1287 = vst [vmem:[%s235 + $0x100] sm:$0xff] %v1223
        %1288 = vst [vmem:[%s235 + $0x108] sm:$0xff] %v1224
        %1289 = vst [vmem:[%s235 + $0x110] sm:$0xff] %v1225
        %1290 = vst [vmem:[%s235 + $0x118] sm:$0xff] %v1226
        %1291 = vst [vmem:[%s235 + $0x120] sm:$0xff] %v1227
        %1292 = vst [vmem:[%s235 + $0x128] sm:$0xff] %v1228
        %1293 = vst [vmem:[%s235 + $0x130] sm:$0xff] %v1229
        %1294 = vst [vmem:[%s235 + $0x138] sm:$0xff] %v1230
        %1295 = vst [vmem:[%s235 + $0x140] sm:$0xff] %v1231
        %1296 = vst [vmem:[%s235 + $0x148] sm:$0xff] %v1232
        %1297 = vst [vmem:[%s235 + $0x150] sm:$0xff] %v1233
        %1298 = vst [vmem:[%s235 + $0x158] sm:$0xff] %v1234
        %1299 = vst [vmem:[%s235 + $0x160] sm:$0xff] %v1235
        %1300 = vst [vmem:[%s235 + $0x168] sm:$0xff] %v1236
        %1301 = vst [vmem:[%s235 + $0x170] sm:$0xff] %v1237
        %1302 = vst [vmem:[%s235 + $0x178] sm:$0xff] %v1238
        %1303 = vst [vmem:[%s235 + $0x180] sm:$0xff] %v1239
        %1304 = vst [vmem:[%s235 + $0x188] sm:$0xff] %v1240
        %1305 = vst [vmem:[%s235 + $0x190] sm:$0xff] %v1241
        %1306 = vst [vmem:[%s235 + $0x198] sm:$0xff] %v1242
        %1307 = vst [vmem:[%s235 + $0x1a0] sm:$0xff] %v1243
        %1308 = vst [vmem:[%s235 + $0x1a8] sm:$0xff] %v1244
        %1309 = vst [vmem:[%s235 + $0x1b0] sm:$0xff] %v1245
        %1310 = vst [vmem:[%s235 + $0x1b8] sm:$0xff] %v1246
        %1311 = vst [vmem:[%s235 + $0x1c0] sm:$0xff] %v1247
        %1312 = vst [vmem:[%s235 + $0x1c8] sm:$0xff] %v1248
        %1313 = vst [vmem:[%s235 + $0x1d0] sm:$0xff] %v1249
        %1314 = vst [vmem:[%s235 + $0x1d8] sm:$0xff] %v1250
        %1315 = vst [vmem:[%s235 + $0x1e0] sm:$0xff] %v1251
        %1316 = vst [vmem:[%s235 + $0x1e8] sm:$0xff] %v1252
        %1317 = vst [vmem:[%s235 + $0x1f0] sm:$0xff] %v1253
        %1318 = vst [vmem:[%s235 + $0x1f8] sm:$0xff] %v1254
      $region36: #{netg_forward.17} parent=27 // pred_fallthru
        _
      %s1319 = smul.u32 64, %s19
      %p1320 = scmp.lt.s32.totalorder %s18, 3
      %s1321 = scalar_select %p1320, %s18, 3
      %p1322 = scmp.lt.s32.totalorder %s1319, 255
      %s1323 = scalar_select %p1322, %s1319, 255
      %s1324 = smul.addr %s1321, 256
      %s1325 = sadd.s32 %s1323, %s1324
      %s1326 = smul.addr %s1325, 8
      %s1327 = scalar_lea.vmem %s2, %s1326
      // Predicated region
      $region37: #{netg_forward.17} parent=27 // pred_check
        %p1328 = pneg %p110
      $region38: #{netg_forward.17} parent=27 // pred_check_branch
        %1330 = sbr.rel (%p1328) target = $region40
      $region39: #{netg_forward.17} parent=27 // pred_region
        %s1331 = smul.u32 64, %s19
      $region40: #{netg_forward.17} parent=27 // pred_fallthru
        _
    $region28: #{netg_forward.17} parent=5 // pred_fallthru
      _
    %p1332 = scmp.le.s32.totalorder 2, %s8
    // Predicated region
    $region41: #{netg_forward.17} parent=5 // pred_check
      %p1333 = pneg %p1332
    $region42: #{netg_forward.17} parent=5 // pred_check_branch
      %1335 = sbr.rel (%p1333) target = $region44
    $region43: #{netg_forward.17} parent=5 // pred_region
      %s1336 = ssub.s32 %s8, 2
      // Predicated region
      $region45: #{netg_forward.17} parent=43 // pred_check
        %p1337 = pneg %p116
      $region46: #{netg_forward.17} parent=43 // pred_check_branch
        %1339 = sbr.rel (%p1337) target = $region48
      $region47: #{netg_forward.17} parent=43 // pred_region
        %s1340 = smul.u32 64, %s22
        %p1341 = scmp.lt.s32.totalorder %s21, 3
        %s1342 = scalar_select %p1341, %s21, 3
        %p1343 = scmp.lt.s32.totalorder %s1340, 255
        %s1344 = scalar_select %p1343, %s1340, 255
        %s1345 = smul.addr %s1342, 256
        %s1346 = sadd.s32 %s1344, %s1345
        %s1347 = smul.addr %s1346, 8
        %s1348 = scalar_lea.vmem %s2, %s1347
      $region48: #{netg_forward.17} parent=43 // pred_fallthru
        _
    $region44: #{netg_forward.17} parent=5 // pred_fallthru
      _
  $region6: #{netg_forward.17} parent=0 // loop_footer
    %s12 = sadd.s32 1, %s8
  $region7: #{netg_forward.17} parent=0 // loop_footer_branch
    %7 = sbr.rel target = $region3
  $region8: #{netg_forward.17} parent=0 // loop_exit
    _

</llo_original>
